<compile_context>
chip_gen: v7x
topology: tpu7x:2x2x1
jax: 0.10.0
libtpu: 0.0.40
codegen_flags: <defaults>
</compile_context>

<pallas_src>
import jax
import jax.numpy as jnp
from jax import lax
from jax.experimental import pallas as pl
from jax.experimental.pallas import tpu as pltpu


# ----------------------------------------------------------------------------
# Fused kernel: Conv1d -> MaxPool1d -> 2-layer BiLSTM -> fc
# ----------------------------------------------------------------------------
def cnn_bilstm_kernel(xflat_ref, scal_ref, w_ref, b_ref, out_ref,
                      projf_ref, projb_ref):
    f32 = jnp.float32
    bf16 = jnp.bfloat16
    B = out_ref.shape[0]
    fourH = w_ref.shape[1]
    H = fourH // 4
    S = projf_ref.shape[0] // B

    # -------- Conv1d(k=3,p=1) + MaxPool1d(3,1,1), time-major flat layout ----
    # xflat row k*B + b = x[b, k-2] (zero padded), k in [0, S+4).
    xpf = xflat_ref[...]                                   # ((S+4)*B, 1)
    w0 = scal_ref[0, 0]
    w1 = scal_ref[0, 1]
    w2 = scal_ref[0, 2]
    conv_bias = scal_ref[0, 3]
    fc_bias = scal_ref[0, 4]

    n_ext = (S + 2) * B                  # conv output on extended t in [-1, S]
    y_ext = (w0 * xpf[0:n_ext, :] + w1 * xpf[B:n_ext + B, :]
             + w2 * xpf[2 * B:n_ext + 2 * B, :] + conv_bias)
    row = lax.broadcasted_iota(jnp.int32, (n_ext, 1), 0)
    ninf = jnp.float32(-jnp.inf)
    # rows t = -1 and t = S act as MaxPool1d's implicit -inf padding
    y_ext = jnp.where((row < B) | (row >= (S + 1) * B), ninf, y_ext)
    # MaxPool1d(k=3, s=1, p=1): y[t] = max(y_ext[t-1], y_ext[t], y_ext[t+1])
    y = jnp.maximum(jnp.maximum(y_ext[0:S * B, :], y_ext[B:(S + 1) * B, :]),
                    y_ext[2 * B:(S + 2) * B, :])           # (S*B, 1)

    # -------- packed weights (sliced once from the bf16 VMEM ref) ------------
    whh0fT = w_ref[0 * H:1 * H, :]       # (H, 4H) bf16
    whh0bT = w_ref[1 * H:2 * H, :]
    whh1fT = w_ref[2 * H:3 * H, :]
    whh1bT = w_ref[3 * H:4 * H, :]
    wih1f_top = w_ref[4 * H:5 * H, :]    # multiplies layer-0 forward hidden
    wih1f_bot = w_ref[5 * H:6 * H, :]    # multiplies layer-0 backward hidden
    wih1b_top = w_ref[6 * H:7 * H, :]
    wih1b_bot = w_ref[7 * H:8 * H, :]
    bv = b_ref[...]                      # (7, 4H) f32
    b0f, b0b = bv[0:1, :], bv[1:2, :]
    b1f, b1b = bv[2:3, :], bv[3:4, :]
    wih0f, wih0b = bv[4:5, :], bv[5:6, :]
    fcrow = bv[6:7, :]                   # [fc_w_fwd (H) | fc_w_bwd (H) | 0]

    # Hoisted layer-0 input projections (off the serial chain): one broadcast
    # multiply produces the per-(t, b) gate pre-activations of the Wih path.
    ypre_f = y * wih0f + b0f             # (S*B, 4H) f32
    ypre_b = y * wih0b + b0b             # (S*B, 4H) f32

    def lstm_cell(gates, c):
        # gate order [i, f, o, g] (repacked in prepare_params):
        # one sigmoid over 3H lanes + one tanh -> fewer EUP dispatches.
        act = jax.nn.sigmoid(gates[:, 0:3 * H])
        i = act[:, 0:H]
        f = act[:, H:2 * H]
        o = act[:, 2 * H:3 * H]
        g = jnp.tanh(gates[:, 3 * H:4 * H])
        c_new = f * c + i * g
        return o * jnp.tanh(c_new), c_new

    zeros_f32 = jnp.zeros((B, H), f32)
    zeros_bf16 = jnp.zeros((B, H), bf16)

    # -------- layer 0: forward & backward, fully unrolled, bf16 matmuls ------
    hf, cf = zeros_f32, zeros_f32
    hb, cb = zeros_f32, zeros_f32
    hf16, hb16 = zeros_bf16, zeros_bf16
    hb16_at_last_t = zeros_bf16          # backward hidden at t = S-1
    for idx in range(S):
        tb = S - 1 - idx
        # forward direction, time step idx
        gates_f = (ypre_f[B * idx:B * (idx + 1), :]
                   + jnp.dot(hf16, whh0fT, preferred_element_type=f32))
        hf, cf = lstm_cell(gates_f, cf)
        hf16 = hf.astype(bf16)
        # lane-dense (B, 4H) layer-1 input projection, off the h->h chain
        projf_ref[B * idx:B * (idx + 1), :] = jnp.dot(
            hf16, wih1f_top, preferred_element_type=f32)

        # backward direction, time step tb (independent chain; interleaves)
        gates_b = (ypre_b[B * tb:B * (tb + 1), :]
                   + jnp.dot(hb16, whh0bT, preferred_element_type=f32))
        hb, cb = lstm_cell(gates_b, cb)
        hb16 = hb.astype(bf16)
        projb_ref[B * tb:B * (tb + 1), :] = jnp.dot(
            hb16, wih1f_bot, preferred_element_type=f32)
        if idx == 0:
            hb16_at_last_t = hb16

    hf16_last = hf16                     # forward hidden at t = S-1

    # -------- layer 1 forward: only the recurrent matmul per step ------------
    h1, c1 = zeros_f32, zeros_f32
    h116 = zeros_bf16
    for t in range(S):
        gates = (projf_ref[B * t:B * (t + 1), :]
                 + projb_ref[B * t:B * (t + 1), :] + b1f
                 + jnp.dot(h116, whh1fT, preferred_element_type=f32))
        h1, c1 = lstm_cell(gates, c1)
        h116 = h1.astype(bf16)
    h1f_last = h1

    # -------- layer 1 backward: only its state at t = S-1 is needed ----------
    # Reverse scan starts at t = S-1 from zero state -> exactly one cell step.
    gates_b1 = (jnp.dot(hf16_last, wih1b_top, preferred_element_type=f32)
                + jnp.dot(hb16_at_last_t, wih1b_bot, preferred_element_type=f32)
                + b1b)
    h1b_last, _ = lstm_cell(gates_b1, zeros_f32)

    # -------- fc(concat(h1f_last, h1b_last)) ---------------------------------
    contrib = h1f_last * fcrow[:, 0:H] + h1b_last * fcrow[:, H:2 * H]
    out_ref[...] = jnp.sum(contrib, axis=1, keepdims=True) + fc_bias


# ----------------------------------------------------------------------------
# Wrapper: one pallas_call for the whole forward pass.
# ----------------------------------------------------------------------------
def cnn_bilstm_forward(x, prepped):
    B, C, S = x.shape
    assert C == 1
    fourH = prepped['Wstack'].shape[1]
    # time-major flat layout with 2 zero rows per side:
    # xflat[k*B + b] = x[b, k-2] (zeros for k in {0,1,S+2,S+3})
    xpad = jnp.pad(x[:, 0, :].astype(jnp.float32), ((0, 0), (2, 2)))  # (B, S+4)
    xflat = jnp.transpose(xpad).reshape((S + 4) * B, 1)
    return pl.pallas_call(
        cnn_bilstm_kernel,
        out_shape=jax.ShapeDtypeStruct((B, 1), jnp.float32),
        in_specs=[
            pl.BlockSpec(memory_space=pltpu.MemorySpace.VMEM),   # xflat
            pl.BlockSpec(memory_space=pltpu.MemorySpace.SMEM),   # scalars
            pl.BlockSpec(memory_space=pltpu.MemorySpace.VMEM),   # Wstack (bf16)
            pl.BlockSpec(memory_space=pltpu.MemorySpace.VMEM),   # Bstack (f32)
        ],
        out_specs=pl.BlockSpec(memory_space=pltpu.MemorySpace.VMEM),
        scratch_shapes=[pltpu.VMEM((S * B, fourH), jnp.float32),  # projf
                        pltpu.VMEM((S * B, fourH), jnp.float32)], # projb
    )(xflat, prepped['scal'], prepped['Wstack'], prepped['Bstack'])


# ----------------------------------------------------------------------------
# Parameter initialization (PyTorch layout) and one-time packing.
# ----------------------------------------------------------------------------
def init_params(key, hidden_size):
    H = hidden_size
    keys = list(jax.random.split(key, 20))
    k = iter(keys)

    def u(kk, shape, scale):
        return jax.random.uniform(kk, shape, jnp.float32, -scale, scale)

    s = float(1.0 / jnp.sqrt(H))
    p = {}
    p['conv_w'] = u(next(k), (3,), float(1.0 / jnp.sqrt(3.0)))
    p['conv_b'] = u(next(k), (1,), float(1.0 / jnp.sqrt(3.0)))
    for layer, in_size in ((0, 1), (1, 2 * H)):
        for d in ('f', 'b'):
            p[f'wih{layer}{d}'] = u(next(k), (4 * H, in_size), s)
            p[f'whh{layer}{d}'] = u(next(k), (4 * H, H), s)
            p[f'bih{layer}{d}'] = u(next(k), (4 * H,), s)
            p[f'bhh{layer}{d}'] = u(next(k), (4 * H,), s)
    sf = float(1.0 / jnp.sqrt(2.0 * H))
    p['fc_w'] = u(next(k), (1, 2 * H), sf)
    p['fc_b'] = u(next(k), (1,), sf)
    return p


def prepare_params(p, H):
    """One-time repack into kernel-ready tensors (no per-forward XLA prep)."""
    f32 = jnp.float32
    bf16 = jnp.bfloat16
    # Gate-order repack: PyTorch [i, f, g, o] -> kernel [i, f, o, g] so the
    # cell does one sigmoid over lanes [0, 3H) and one tanh over [3H, 4H).
    perm = jnp.concatenate([jnp.arange(0, 2 * H),
                            jnp.arange(3 * H, 4 * H),
                            jnp.arange(2 * H, 3 * H)])

    def TP(w):   # (4H, K) -> (K, 4H) with gate columns permuted
        return jnp.transpose(w.astype(f32))[:, perm]

    def brow(v):  # (4H,) -> (1, 4H) with gate lanes permuted
        return v.astype(f32)[perm].reshape(1, 4 * H)

    # (8H, 4H) bf16: [whh0fT; whh0bT; whh1fT; whh1bT; wih1fT; wih1bT]
    Wstack = jnp.concatenate(
        [TP(p['whh0f']), TP(p['whh0b']), TP(p['whh1f']), TP(p['whh1b']),
         TP(p['wih1f']), TP(p['wih1b'])], axis=0).astype(bf16)

    Bstack = jnp.concatenate(
        [brow(p['bih0f'] + p['bhh0f']),
         brow(p['bih0b'] + p['bhh0b']),
         brow(p['bih1f'] + p['bhh1f']),
         brow(p['bih1b'] + p['bhh1b']),
         brow(p['wih0f'].reshape(4 * H)),
         brow(p['wih0b'].reshape(4 * H)),
         jnp.concatenate([p['fc_w'].reshape(1, 2 * H),
                          jnp.zeros((1, 2 * H), f32)], axis=1)],
        axis=0).astype(f32)                                       # (7, 4H)

    scal = jnp.concatenate(
        [p['conv_w'].reshape(1, 3), p['conv_b'].reshape(1, 1),
         p['fc_b'].reshape(1, 1)], axis=1).astype(f32)            # (1, 5)

    return {'scal': scal, 'Wstack': Wstack, 'Bstack': Bstack}


# ----------------------------------------------------------------------------
# Pure-JAX reference (mirrors the PyTorch module).  mm_dtype controls the
# matmul-operand precision so we can validate the kernel's bf16-MXU numerics
# tightly and still sanity-check against full f32.
# ----------------------------------------------------------------------------
def reference_forward(x, p, mm_dtype=jnp.float32):
    f32 = jnp.float32
    B, _, S = x.shape
    H = p['whh0f'].shape[1]
    xs = x[:, 0, :].astype(f32)
    xp = jnp.pad(xs, ((0, 0), (1, 1)))
    w = p['conv_w']
    y = (w[0] * xp[:, 0:S] + w[1] * xp[:, 1:S + 1] + w[2] * xp[:, 2:S + 2]
         + p['conv_b'][0])
    yp = jnp.pad(y, ((0, 0), (1, 1)), constant_values=-jnp.inf)
    y = jnp.maximum(jnp.maximum(yp[:, 0:S], yp[:, 1:S + 1]), yp[:, 2:S + 2])

    def mm(a, b):
        return jnp.dot(a.astype(mm_dtype), b.astype(mm_dtype),
                       preferred_element_type=f32)

    def cell(gates, c):
        i, f, g, o = jnp.split(gates, 4, axis=1)
        i, f, o = jax.nn.sigmoid(i), jax.nn.sigmoid(f), jax.nn.sigmoid(o)
        g = jnp.tanh(g)
        c = f * c + i * g
        return o * jnp.tanh(c), c

    def run_dir(seq, wih, whh, bih, bhh, reverse, scalar_input):
        order = range(S - 1, -1, -1) if reverse else range(S)
        h = jnp.zeros((B, H), f32)
        c = jnp.zeros((B, H), f32)
        outs = [None] * S
        for t in order:
            if scalar_input:
                gx = seq[t] * wih.T                  # (B,1)*(1,4H), f32 (VPU path)
            else:
                gx = mm(seq[t], wih.T)
            gates = gx + mm(h, whh.T) + bih + bhh
            h, c = cell(gates, c)
            outs[t] = h
        return outs

    seq0 = [y[:, t:t + 1] for t in range(S)]
    f0 = run_dir(seq0, p['wih0f'], p['whh0f'], p['bih0f'], p['bhh0f'], False, True)
    b0 = run_dir(seq0, p['wih0b'], p['whh0b'], p['bih0b'], p['bhh0b'], True, True)
    seq1 = [jnp.concatenate([f0[t], b0[t]], axis=1) for t in range(S)]
    f1 = run_dir(seq1, p['wih1f'], p['whh1f'], p['bih1f'], p['bhh1f'], False, False)
    b1 = run_dir(seq1, p['wih1b'], p['whh1b'], p['bih1b'], p['bhh1b'], True, False)
    last = jnp.concatenate([f1[S - 1], b1[S - 1]], axis=1)      # (B, 2H)
    return last @ p['fc_w'].T + p['fc_b']


if __name__ == "__main__":
    B, S, H = 2, 16, 32          # batch, sequence length, LSTM hidden size
    key = jax.random.PRNGKey(0)
    kx, kp = jax.random.split(key)
    x = jax.random.normal(kx, (B, 1, S), jnp.float32)   # PyTorch NCL Conv1d input
    raw = init_params(kp, H)
    prepped = prepare_params(raw, H)

    fwd = jax.jit(cnn_bilstm_forward)
    out = jax.block_until_ready(fwd(x, prepped))
    assert out.shape == (B, 1) and out.dtype == jnp.float32
    assert bool(jnp.all(jnp.isfinite(out)))

    # Tight check vs a reference with matched numerics (bf16 MXU operands,
    # f32 accumulation & elementwise) -- validates the kernel implementation.
    ref_mm16 = jax.block_until_ready(
        jax.jit(lambda xx: reference_forward(xx, raw, jnp.bfloat16))(x))
    err16 = float(jnp.max(jnp.abs(out - ref_mm16)))
    assert err16 < 5e-3, f"kernel vs matched-numerics reference: {err16}"

    # Loose sanity check vs the full-f32 reference (bounds total bf16 drift).
    ref_f32 = jax.block_until_ready(
        jax.jit(lambda xx: reference_forward(xx, raw, jnp.float32))(x))
    err32 = float(jnp.max(jnp.abs(out - ref_f32)))
    assert err32 < 1e-1, f"kernel vs f32 reference: {err32}"

    print("KERNEL_OK")
</pallas_src>

<mosaic_0001>
module attributes {stable_mosaic.version = 11 : i64} {
  func.func @cnn_bilstm_kernel(%arg0: memref<40x1xf32, #tpu.memory_space<vmem>>, %arg1: memref<1x5xf32, #tpu.memory_space<smem>>, %arg2: memref<256x128xbf16, #tpu.memory_space<vmem>>, %arg3: memref<7x128xf32, #tpu.memory_space<vmem>>, %arg4: memref<2x1xf32, #tpu.memory_space<vmem>>, %arg5: memref<32x128xf32, #tpu.memory_space<vmem>>, %arg6: memref<32x128xf32, #tpu.memory_space<vmem>>) attributes {dimension_semantics = [], scalar_prefetch = 0 : i64, scratch_operands = 2 : i64, tpu.core_type = #tpu.core_type<tc>} {
    %c0 = arith.constant 0 : index
    %c0_0 = arith.constant 0 : index
    %0 = vector.load %arg0[%c0, %c0_0] : memref<40x1xf32, #tpu.memory_space<vmem>>, vector<40x1xf32>
    %c0_1 = arith.constant 0 : index
    %c0_2 = arith.constant 0 : index
    %1 = memref.load %arg1[%c0_1, %c0_2] : memref<1x5xf32, #tpu.memory_space<smem>>
    %c0_3 = arith.constant 0 : index
    %c1 = arith.constant 1 : index
    %2 = memref.load %arg1[%c0_3, %c1] : memref<1x5xf32, #tpu.memory_space<smem>>
    %c0_4 = arith.constant 0 : index
    %c2 = arith.constant 2 : index
    %3 = memref.load %arg1[%c0_4, %c2] : memref<1x5xf32, #tpu.memory_space<smem>>
    %c0_5 = arith.constant 0 : index
    %c3 = arith.constant 3 : index
    %4 = memref.load %arg1[%c0_5, %c3] : memref<1x5xf32, #tpu.memory_space<smem>>
    %c0_6 = arith.constant 0 : index
    %c4 = arith.constant 4 : index
    %5 = memref.load %arg1[%c0_6, %c4] : memref<1x5xf32, #tpu.memory_space<smem>>
    %6 = vector.extract_strided_slice %0 {offsets = [0, 0], sizes = [36, 1], strides = [1, 1]} : vector<40x1xf32> to vector<36x1xf32>
    %7 = vector.broadcast %1 : f32 to vector<36x1xf32>
    %8 = arith.mulf %7, %6 : vector<36x1xf32>
    %9 = vector.extract_strided_slice %0 {offsets = [2, 0], sizes = [36, 1], strides = [1, 1]} : vector<40x1xf32> to vector<36x1xf32>
    %10 = vector.broadcast %2 : f32 to vector<36x1xf32>
    %11 = arith.mulf %10, %9 : vector<36x1xf32>
    %12 = arith.addf %8, %11 : vector<36x1xf32>
    %13 = vector.extract_strided_slice %0 {offsets = [4, 0], sizes = [36, 1], strides = [1, 1]} : vector<40x1xf32> to vector<36x1xf32>
    %14 = vector.broadcast %3 : f32 to vector<36x1xf32>
    %15 = arith.mulf %14, %13 : vector<36x1xf32>
    %16 = arith.addf %12, %15 : vector<36x1xf32>
    %17 = vector.broadcast %4 : f32 to vector<36x1xf32>
    %18 = arith.addf %16, %17 : vector<36x1xf32>
    %19 = tpu.iota {dimensions = array<i32: 0>} : vector<36x1xi32>
    %c2_i32 = arith.constant 2 : i32
    %20 = vector.broadcast %c2_i32 : i32 to vector<36x1xi32>
    %21 = arith.cmpi slt, %19, %20 : vector<36x1xi32>
    %c34_i32 = arith.constant 34 : i32
    %22 = vector.broadcast %c34_i32 : i32 to vector<36x1xi32>
    %23 = arith.cmpi sge, %19, %22 : vector<36x1xi32>
    %24 = arith.ori %21, %23 : vector<36x1xi1>
    %cst = arith.constant 0xFF800000 : f32
    %25 = vector.broadcast %cst : f32 to vector<36x1xf32>
    %26 = arith.select %24, %25, %18 : vector<36x1xi1>, vector<36x1xf32>
    %27 = vector.extract_strided_slice %26 {offsets = [0, 0], sizes = [32, 1], strides = [1, 1]} : vector<36x1xf32> to vector<32x1xf32>
    %28 = vector.extract_strided_slice %26 {offsets = [2, 0], sizes = [32, 1], strides = [1, 1]} : vector<36x1xf32> to vector<32x1xf32>
    %29 = arith.maximumf %27, %28 : vector<32x1xf32>
    %30 = vector.extract_strided_slice %26 {offsets = [4, 0], sizes = [32, 1], strides = [1, 1]} : vector<36x1xf32> to vector<32x1xf32>
    %31 = arith.maximumf %29, %30 : vector<32x1xf32>
    %c0_7 = arith.constant 0 : index
    %c0_8 = arith.constant 0 : index
    %32 = vector.load %arg2[%c0_7, %c0_8] : memref<256x128xbf16, #tpu.memory_space<vmem>>, vector<32x128xbf16>
    %c32 = arith.constant 32 : index
    %c0_9 = arith.constant 0 : index
    %33 = vector.load %arg2[%c32, %c0_9] : memref<256x128xbf16, #tpu.memory_space<vmem>>, vector<32x128xbf16>
    %c64 = arith.constant 64 : index
    %c0_10 = arith.constant 0 : index
    %34 = vector.load %arg2[%c64, %c0_10] : memref<256x128xbf16, #tpu.memory_space<vmem>>, vector<32x128xbf16>
    %c128 = arith.constant 128 : index
    %c0_11 = arith.constant 0 : index
    %35 = vector.load %arg2[%c128, %c0_11] : memref<256x128xbf16, #tpu.memory_space<vmem>>, vector<32x128xbf16>
    %c160 = arith.constant 160 : index
    %c0_12 = arith.constant 0 : index
    %36 = vector.load %arg2[%c160, %c0_12] : memref<256x128xbf16, #tpu.memory_space<vmem>>, vector<32x128xbf16>
    %c192 = arith.constant 192 : index
    %c0_13 = arith.constant 0 : index
    %37 = vector.load %arg2[%c192, %c0_13] : memref<256x128xbf16, #tpu.memory_space<vmem>>, vector<32x128xbf16>
    %c224 = arith.constant 224 : index
    %c0_14 = arith.constant 0 : index
    %38 = vector.load %arg2[%c224, %c0_14] : memref<256x128xbf16, #tpu.memory_space<vmem>>, vector<32x128xbf16>
    %c0_15 = arith.constant 0 : index
    %c0_16 = arith.constant 0 : index
    %39 = vector.load %arg3[%c0_15, %c0_16] : memref<7x128xf32, #tpu.memory_space<vmem>>, vector<7x128xf32>
    %40 = vector.extract_strided_slice %39 {offsets = [0, 0], sizes = [1, 128], strides = [1, 1]} : vector<7x128xf32> to vector<1x128xf32>
    %41 = vector.extract_strided_slice %39 {offsets = [1, 0], sizes = [1, 128], strides = [1, 1]} : vector<7x128xf32> to vector<1x128xf32>
    %42 = vector.extract_strided_slice %39 {offsets = [2, 0], sizes = [1, 128], strides = [1, 1]} : vector<7x128xf32> to vector<1x128xf32>
    %43 = vector.extract_strided_slice %39 {offsets = [3, 0], sizes = [1, 128], strides = [1, 1]} : vector<7x128xf32> to vector<1x128xf32>
    %44 = vector.extract_strided_slice %39 {offsets = [4, 0], sizes = [1, 128], strides = [1, 1]} : vector<7x128xf32> to vector<1x128xf32>
    %45 = vector.extract_strided_slice %39 {offsets = [5, 0], sizes = [1, 128], strides = [1, 1]} : vector<7x128xf32> to vector<1x128xf32>
    %46 = vector.extract_strided_slice %39 {offsets = [6, 0], sizes = [1, 128], strides = [1, 1]} : vector<7x128xf32> to vector<1x128xf32>
    %47 = vector.broadcast %31 : vector<32x1xf32> to vector<32x128xf32>
    %48 = vector.broadcast %44 : vector<1x128xf32> to vector<32x128xf32>
    %49 = arith.mulf %47, %48 : vector<32x128xf32>
    %50 = vector.broadcast %40 : vector<1x128xf32> to vector<32x128xf32>
    %51 = arith.addf %49, %50 : vector<32x128xf32>
    %52 = vector.broadcast %31 : vector<32x1xf32> to vector<32x128xf32>
    %53 = vector.broadcast %45 : vector<1x128xf32> to vector<32x128xf32>
    %54 = arith.mulf %52, %53 : vector<32x128xf32>
    %55 = vector.broadcast %41 : vector<1x128xf32> to vector<32x128xf32>
    %56 = arith.addf %54, %55 : vector<32x128xf32>
    %cst_17 = arith.constant 0.000000e+00 : f32
    %57 = vector.broadcast %cst_17 : f32 to vector<2x32xf32>
    %cst_18 = arith.constant 0.000000e+00 : bf16
    %58 = vector.broadcast %cst_18 : bf16 to vector<2x32xbf16>
    %59 = vector.extract_strided_slice %51 {offsets = [0, 0], sizes = [2, 128], strides = [1, 1]} : vector<32x128xf32> to vector<2x128xf32>
    %cst_19 = arith.constant dense<0.000000e+00> : vector<2x128xf32>
    %60 = tpu.matmul %58, %32, %cst_19 {dimension_numbers = #tpu.dot_dimension_numbers<[1], [0], [0], [1], [0, 0, 1, 1], [], []>} : vector<2x32xbf16>, vector<32x128xbf16>, vector<2x128xf32> -> vector<2x128xf32>
    %61 = arith.addf %59, %60 : vector<2x128xf32>
    %62 = vector.extract_strided_slice %61 {offsets = [0, 0], sizes = [2, 96], strides = [1, 1]} : vector<2x128xf32> to vector<2x96xf32>
    %63 = arith.negf %62 : vector<2x96xf32>
    %64 = math.exp %63 : vector<2x96xf32>
    %cst_20 = arith.constant 1.000000e+00 : f32
    %65 = vector.broadcast %cst_20 : f32 to vector<2x96xf32>
    %66 = arith.addf %65, %64 : vector<2x96xf32>
    %67 = arith.divf %65, %66 : vector<2x96xf32>
    %68 = vector.extract_strided_slice %67 {offsets = [0, 0], sizes = [2, 32], strides = [1, 1]} : vector<2x96xf32> to vector<2x32xf32>
    %69 = vector.extract_strided_slice %67 {offsets = [0, 32], sizes = [2, 32], strides = [1, 1]} : vector<2x96xf32> to vector<2x32xf32>
    %70 = vector.extract_strided_slice %67 {offsets = [0, 64], sizes = [2, 32], strides = [1, 1]} : vector<2x96xf32> to vector<2x32xf32>
    %71 = vector.extract_strided_slice %61 {offsets = [0, 96], sizes = [2, 32], strides = [1, 1]} : vector<2x128xf32> to vector<2x32xf32>
    %72 = math.tanh %71 : vector<2x32xf32>
    %73 = arith.mulf %69, %57 : vector<2x32xf32>
    %74 = arith.mulf %68, %72 : vector<2x32xf32>
    %75 = arith.addf %73, %74 : vector<2x32xf32>
    %76 = math.tanh %75 : vector<2x32xf32>
    %77 = arith.mulf %70, %76 : vector<2x32xf32>
    %78 = arith.truncf %77 : vector<2x32xf32> to vector<2x32xbf16>
    %cst_21 = arith.constant dense<0.000000e+00> : vector<2x128xf32>
    %79 = tpu.matmul %78, %35, %cst_21 {dimension_numbers = #tpu.dot_dimension_numbers<[1], [0], [0], [1], [0, 0, 1, 1], [], []>} : vector<2x32xbf16>, vector<32x128xbf16>, vector<2x128xf32> -> vector<2x128xf32>
    %c0_22 = arith.constant 0 : index
    %c0_23 = arith.constant 0 : index
    %80 = vector.load %arg5[%c0_22, %c0_23] : memref<32x128xf32, #tpu.memory_space<vmem>>, vector<2x128xf32>
    tpu.vector_store %arg5[%c0_22, %c0_23], %79 {strides = array<i32>} : memref<32x128xf32, #tpu.memory_space<vmem>>, vector<2x128xf32>,
    %81 = vector.extract_strided_slice %56 {offsets = [30, 0], sizes = [2, 128], strides = [1, 1]} : vector<32x128xf32> to vector<2x128xf32>
    %cst_24 = arith.constant dense<0.000000e+00> : vector<2x128xf32>
    %82 = tpu.matmul %58, %33, %cst_24 {dimension_numbers = #tpu.dot_dimension_numbers<[1], [0], [0], [1], [0, 0, 1, 1], [], []>} : vector<2x32xbf16>, vector<32x128xbf16>, vector<2x128xf32> -> vector<2x128xf32>
    %83 = arith.addf %81, %82 : vector<2x128xf32>
    %84 = vector.extract_strided_slice %83 {offsets = [0, 0], sizes = [2, 96], strides = [1, 1]} : vector<2x128xf32> to vector<2x96xf32>
    %85 = arith.negf %84 : vector<2x96xf32>
    %86 = math.exp %85 : vector<2x96xf32>
    %cst_25 = arith.constant 1.000000e+00 : f32
    %87 = vector.broadcast %cst_25 : f32 to vector<2x96xf32>
    %88 = arith.addf %87, %86 : vector<2x96xf32>
    %89 = arith.divf %87, %88 : vector<2x96xf32>
    %90 = vector.extract_strided_slice %89 {offsets = [0, 0], sizes = [2, 32], strides = [1, 1]} : vector<2x96xf32> to vector<2x32xf32>
    %91 = vector.extract_strided_slice %89 {offsets = [0, 32], sizes = [2, 32], strides = [1, 1]} : vector<2x96xf32> to vector<2x32xf32>
    %92 = vector.extract_strided_slice %89 {offsets = [0, 64], sizes = [2, 32], strides = [1, 1]} : vector<2x96xf32> to vector<2x32xf32>
    %93 = vector.extract_strided_slice %83 {offsets = [0, 96], sizes = [2, 32], strides = [1, 1]} : vector<2x128xf32> to vector<2x32xf32>
    %94 = math.tanh %93 : vector<2x32xf32>
    %95 = arith.mulf %91, %57 : vector<2x32xf32>
    %96 = arith.mulf %90, %94 : vector<2x32xf32>
    %97 = arith.addf %95, %96 : vector<2x32xf32>
    %98 = math.tanh %97 : vector<2x32xf32>
    %99 = arith.mulf %92, %98 : vector<2x32xf32>
    %100 = arith.truncf %99 : vector<2x32xf32> to vector<2x32xbf16>
    %cst_26 = arith.constant dense<0.000000e+00> : vector<2x128xf32>
    %101 = tpu.matmul %100, %36, %cst_26 {dimension_numbers = #tpu.dot_dimension_numbers<[1], [0], [0], [1], [0, 0, 1, 1], [], []>} : vector<2x32xbf16>, vector<32x128xbf16>, vector<2x128xf32> -> vector<2x128xf32>
    %c30 = arith.constant 30 : index
    %c0_27 = arith.constant 0 : index
    %102 = vector.load %arg6[%c30, %c0_27] : memref<32x128xf32, #tpu.memory_space<vmem>>, vector<2x128xf32>
    tpu.vector_store %arg6[%c30, %c0_27], %101 {strides = array<i32>} : memref<32x128xf32, #tpu.memory_space<vmem>>, vector<2x128xf32>,
    %103 = vector.extract_strided_slice %51 {offsets = [2, 0], sizes = [2, 128], strides = [1, 1]} : vector<32x128xf32> to vector<2x128xf32>
    %cst_28 = arith.constant dense<0.000000e+00> : vector<2x128xf32>
    %104 = tpu.matmul %78, %32, %cst_28 {dimension_numbers = #tpu.dot_dimension_numbers<[1], [0], [0], [1], [0, 0, 1, 1], [], []>} : vector<2x32xbf16>, vector<32x128xbf16>, vector<2x128xf32> -> vector<2x128xf32>
    %105 = arith.addf %103, %104 : vector<2x128xf32>
    %106 = vector.extract_strided_slice %105 {offsets = [0, 0], sizes = [2, 96], strides = [1, 1]} : vector<2x128xf32> to vector<2x96xf32>
    %107 = arith.negf %106 : vector<2x96xf32>
    %108 = math.exp %107 : vector<2x96xf32>
    %cst_29 = arith.constant 1.000000e+00 : f32
    %109 = vector.broadcast %cst_29 : f32 to vector<2x96xf32>
    %110 = arith.addf %109, %108 : vector<2x96xf32>
    %111 = arith.divf %109, %110 : vector<2x96xf32>
    %112 = vector.extract_strided_slice %111 {offsets = [0, 0], sizes = [2, 32], strides = [1, 1]} : vector<2x96xf32> to vector<2x32xf32>
    %113 = vector.extract_strided_slice %111 {offsets = [0, 32], sizes = [2, 32], strides = [1, 1]} : vector<2x96xf32> to vector<2x32xf32>
    %114 = vector.extract_strided_slice %111 {offsets = [0, 64], sizes = [2, 32], strides = [1, 1]} : vector<2x96xf32> to vector<2x32xf32>
    %115 = vector.extract_strided_slice %105 {offsets = [0, 96], sizes = [2, 32], strides = [1, 1]} : vector<2x128xf32> to vector<2x32xf32>
    %116 = math.tanh %115 : vector<2x32xf32>
    %117 = arith.mulf %113, %75 : vector<2x32xf32>
    %118 = arith.mulf %112, %116 : vector<2x32xf32>
    %119 = arith.addf %117, %118 : vector<2x32xf32>
    %120 = math.tanh %119 : vector<2x32xf32>
    %121 = arith.mulf %114, %120 : vector<2x32xf32>
    %122 = arith.truncf %121 : vector<2x32xf32> to vector<2x32xbf16>
    %cst_30 = arith.constant dense<0.000000e+00> : vector<2x128xf32>
    %123 = tpu.matmul %122, %35, %cst_30 {dimension_numbers = #tpu.dot_dimension_numbers<[1], [0], [0], [1], [0, 0, 1, 1], [], []>} : vector<2x32xbf16>, vector<32x128xbf16>, vector<2x128xf32> -> vector<2x128xf32>
    %c2_31 = arith.constant 2 : index
    %c0_32 = arith.constant 0 : index
    %124 = vector.load %arg5[%c2_31, %c0_32] : memref<32x128xf32, #tpu.memory_space<vmem>>, vector<2x128xf32>
    tpu.vector_store %arg5[%c2_31, %c0_32], %123 {strides = array<i32>} : memref<32x128xf32, #tpu.memory_space<vmem>>, vector<2x128xf32>,
    %125 = vector.extract_strided_slice %56 {offsets = [28, 0], sizes = [2, 128], strides = [1, 1]} : vector<32x128xf32> to vector<2x128xf32>
    %cst_33 = arith.constant dense<0.000000e+00> : vector<2x128xf32>
    %126 = tpu.matmul %100, %33, %cst_33 {dimension_numbers = #tpu.dot_dimension_numbers<[1], [0], [0], [1], [0, 0, 1, 1], [], []>} : vector<2x32xbf16>, vector<32x128xbf16>, vector<2x128xf32> -> vector<2x128xf32>
    %127 = arith.addf %125, %126 : vector<2x128xf32>
    %128 = vector.extract_strided_slice %127 {offsets = [0, 0], sizes = [2, 96], strides = [1, 1]} : vector<2x128xf32> to vector<2x96xf32>
    %129 = arith.negf %128 : vector<2x96xf32>
    %130 = math.exp %129 : vector<2x96xf32>
    %cst_34 = arith.constant 1.000000e+00 : f32
    %131 = vector.broadcast %cst_34 : f32 to vector<2x96xf32>
    %132 = arith.addf %131, %130 : vector<2x96xf32>
    %133 = arith.divf %131, %132 : vector<2x96xf32>
    %134 = vector.extract_strided_slice %133 {offsets = [0, 0], sizes = [2, 32], strides = [1, 1]} : vector<2x96xf32> to vector<2x32xf32>
    %135 = vector.extract_strided_slice %133 {offsets = [0, 32], sizes = [2, 32], strides = [1, 1]} : vector<2x96xf32> to vector<2x32xf32>
    %136 = vector.extract_strided_slice %133 {offsets = [0, 64], sizes = [2, 32], strides = [1, 1]} : vector<2x96xf32> to vector<2x32xf32>
    %137 = vector.extract_strided_slice %127 {offsets = [0, 96], sizes = [2, 32], strides = [1, 1]} : vector<2x128xf32> to vector<2x32xf32>
    %138 = math.tanh %137 : vector<2x32xf32>
    %139 = arith.mulf %135, %97 : vector<2x32xf32>
    %140 = arith.mulf %134, %138 : vector<2x32xf32>
    %141 = arith.addf %139, %140 : vector<2x32xf32>
    %142 = math.tanh %141 : vector<2x32xf32>
    %143 = arith.mulf %136, %142 : vector<2x32xf32>
    %144 = arith.truncf %143 : vector<2x32xf32> to vector<2x32xbf16>
    %cst_35 = arith.constant dense<0.000000e+00> : vector<2x128xf32>
    %145 = tpu.matmul %144, %36, %cst_35 {dimension_numbers = #tpu.dot_dimension_numbers<[1], [0], [0], [1], [0, 0, 1, 1], [], []>} : vector<2x32xbf16>, vector<32x128xbf16>, vector<2x128xf32> -> vector<2x128xf32>
    %c28 = arith.constant 28 : index
    %c0_36 = arith.constant 0 : index
    %146 = vector.load %arg6[%c28, %c0_36] : memref<32x128xf32, #tpu.memory_space<vmem>>, vector<2x128xf32>
    tpu.vector_store %arg6[%c28, %c0_36], %145 {strides = array<i32>} : memref<32x128xf32, #tpu.memory_space<vmem>>, vector<2x128xf32>,
    %147 = vector.extract_strided_slice %51 {offsets = [4, 0], sizes = [2, 128], strides = [1, 1]} : vector<32x128xf32> to vector<2x128xf32>
    %cst_37 = arith.constant dense<0.000000e+00> : vector<2x128xf32>
    %148 = tpu.matmul %122, %32, %cst_37 {dimension_numbers = #tpu.dot_dimension_numbers<[1], [0], [0], [1], [0, 0, 1, 1], [], []>} : vector<2x32xbf16>, vector<32x128xbf16>, vector<2x128xf32> -> vector<2x128xf32>
    %149 = arith.addf %147, %148 : vector<2x128xf32>
    %150 = vector.extract_strided_slice %149 {offsets = [0, 0], sizes = [2, 96], strides = [1, 1]} : vector<2x128xf32> to vector<2x96xf32>
    %151 = arith.negf %150 : vector<2x96xf32>
    %152 = math.exp %151 : vector<2x96xf32>
    %cst_38 = arith.constant 1.000000e+00 : f32
    %153 = vector.broadcast %cst_38 : f32 to vector<2x96xf32>
    %154 = arith.addf %153, %152 : vector<2x96xf32>
    %155 = arith.divf %153, %154 : vector<2x96xf32>
    %156 = vector.extract_strided_slice %155 {offsets = [0, 0], sizes = [2, 32], strides = [1, 1]} : vector<2x96xf32> to vector<2x32xf32>
    %157 = vector.extract_strided_slice %155 {offsets = [0, 32], sizes = [2, 32], strides = [1, 1]} : vector<2x96xf32> to vector<2x32xf32>
    %158 = vector.extract_strided_slice %155 {offsets = [0, 64], sizes = [2, 32], strides = [1, 1]} : vector<2x96xf32> to vector<2x32xf32>
    %159 = vector.extract_strided_slice %149 {offsets = [0, 96], sizes = [2, 32], strides = [1, 1]} : vector<2x128xf32> to vector<2x32xf32>
    %160 = math.tanh %159 : vector<2x32xf32>
    %161 = arith.mulf %157, %119 : vector<2x32xf32>
    %162 = arith.mulf %156, %160 : vector<2x32xf32>
    %163 = arith.addf %161, %162 : vector<2x32xf32>
    %164 = math.tanh %163 : vector<2x32xf32>
    %165 = arith.mulf %158, %164 : vector<2x32xf32>
    %166 = arith.truncf %165 : vector<2x32xf32> to vector<2x32xbf16>
    %cst_39 = arith.constant dense<0.000000e+00> : vector<2x128xf32>
    %167 = tpu.matmul %166, %35, %cst_39 {dimension_numbers = #tpu.dot_dimension_numbers<[1], [0], [0], [1], [0, 0, 1, 1], [], []>} : vector<2x32xbf16>, vector<32x128xbf16>, vector<2x128xf32> -> vector<2x128xf32>
    %c4_40 = arith.constant 4 : index
    %c0_41 = arith.constant 0 : index
    %168 = vector.load %arg5[%c4_40, %c0_41] : memref<32x128xf32, #tpu.memory_space<vmem>>, vector<2x128xf32>
    tpu.vector_store %arg5[%c4_40, %c0_41], %167 {strides = array<i32>} : memref<32x128xf32, #tpu.memory_space<vmem>>, vector<2x128xf32>,
    %169 = vector.extract_strided_slice %56 {offsets = [26, 0], sizes = [2, 128], strides = [1, 1]} : vector<32x128xf32> to vector<2x128xf32>
    %cst_42 = arith.constant dense<0.000000e+00> : vector<2x128xf32>
    %170 = tpu.matmul %144, %33, %cst_42 {dimension_numbers = #tpu.dot_dimension_numbers<[1], [0], [0], [1], [0, 0, 1, 1], [], []>} : vector<2x32xbf16>, vector<32x128xbf16>, vector<2x128xf32> -> vector<2x128xf32>
    %171 = arith.addf %169, %170 : vector<2x128xf32>
    %172 = vector.extract_strided_slice %171 {offsets = [0, 0], sizes = [2, 96], strides = [1, 1]} : vector<2x128xf32> to vector<2x96xf32>
    %173 = arith.negf %172 : vector<2x96xf32>
    %174 = math.exp %173 : vector<2x96xf32>
    %cst_43 = arith.constant 1.000000e+00 : f32
    %175 = vector.broadcast %cst_43 : f32 to vector<2x96xf32>
    %176 = arith.addf %175, %174 : vector<2x96xf32>
    %177 = arith.divf %175, %176 : vector<2x96xf32>
    %178 = vector.extract_strided_slice %177 {offsets = [0, 0], sizes = [2, 32], strides = [1, 1]} : vector<2x96xf32> to vector<2x32xf32>
    %179 = vector.extract_strided_slice %177 {offsets = [0, 32], sizes = [2, 32], strides = [1, 1]} : vector<2x96xf32> to vector<2x32xf32>
    %180 = vector.extract_strided_slice %177 {offsets = [0, 64], sizes = [2, 32], strides = [1, 1]} : vector<2x96xf32> to vector<2x32xf32>
    %181 = vector.extract_strided_slice %171 {offsets = [0, 96], sizes = [2, 32], strides = [1, 1]} : vector<2x128xf32> to vector<2x32xf32>
    %182 = math.tanh %181 : vector<2x32xf32>
    %183 = arith.mulf %179, %141 : vector<2x32xf32>
    %184 = arith.mulf %178, %182 : vector<2x32xf32>
    %185 = arith.addf %183, %184 : vector<2x32xf32>
    %186 = math.tanh %185 : vector<2x32xf32>
    %187 = arith.mulf %180, %186 : vector<2x32xf32>
    %188 = arith.truncf %187 : vector<2x32xf32> to vector<2x32xbf16>
    %cst_44 = arith.constant dense<0.000000e+00> : vector<2x128xf32>
    %189 = tpu.matmul %188, %36, %cst_44 {dimension_numbers = #tpu.dot_dimension_numbers<[1], [0], [0], [1], [0, 0, 1, 1], [], []>} : vector<2x32xbf16>, vector<32x128xbf16>, vector<2x128xf32> -> vector<2x128xf32>
    %c26 = arith.constant 26 : index
    %c0_45 = arith.constant 0 : index
    %190 = vector.load %arg6[%c26, %c0_45] : memref<32x128xf32, #tpu.memory_space<vmem>>, vector<2x128xf32>
    tpu.vector_store %arg6[%c26, %c0_45], %189 {strides = array<i32>} : memref<32x128xf32, #tpu.memory_space<vmem>>, vector<2x128xf32>,
    %191 = vector.extract_strided_slice %51 {offsets = [6, 0], sizes = [2, 128], strides = [1, 1]} : vector<32x128xf32> to vector<2x128xf32>
    %cst_46 = arith.constant dense<0.000000e+00> : vector<2x128xf32>
    %192 = tpu.matmul %166, %32, %cst_46 {dimension_numbers = #tpu.dot_dimension_numbers<[1], [0], [0], [1], [0, 0, 1, 1], [], []>} : vector<2x32xbf16>, vector<32x128xbf16>, vector<2x128xf32> -> vector<2x128xf32>
    %193 = arith.addf %191, %192 : vector<2x128xf32>
    %194 = vector.extract_strided_slice %193 {offsets = [0, 0], sizes = [2, 96], strides = [1, 1]} : vector<2x128xf32> to vector<2x96xf32>
    %195 = arith.negf %194 : vector<2x96xf32>
    %196 = math.exp %195 : vector<2x96xf32>
    %cst_47 = arith.constant 1.000000e+00 : f32
    %197 = vector.broadcast %cst_47 : f32 to vector<2x96xf32>
    %198 = arith.addf %197, %196 : vector<2x96xf32>
    %199 = arith.divf %197, %198 : vector<2x96xf32>
    %200 = vector.extract_strided_slice %199 {offsets = [0, 0], sizes = [2, 32], strides = [1, 1]} : vector<2x96xf32> to vector<2x32xf32>
    %201 = vector.extract_strided_slice %199 {offsets = [0, 32], sizes = [2, 32], strides = [1, 1]} : vector<2x96xf32> to vector<2x32xf32>
    %202 = vector.extract_strided_slice %199 {offsets = [0, 64], sizes = [2, 32], strides = [1, 1]} : vector<2x96xf32> to vector<2x32xf32>
    %203 = vector.extract_strided_slice %193 {offsets = [0, 96], sizes = [2, 32], strides = [1, 1]} : vector<2x128xf32> to vector<2x32xf32>
    %204 = math.tanh %203 : vector<2x32xf32>
    %205 = arith.mulf %201, %163 : vector<2x32xf32>
    %206 = arith.mulf %200, %204 : vector<2x32xf32>
    %207 = arith.addf %205, %206 : vector<2x32xf32>
    %208 = math.tanh %207 : vector<2x32xf32>
    %209 = arith.mulf %202, %208 : vector<2x32xf32>
    %210 = arith.truncf %209 : vector<2x32xf32> to vector<2x32xbf16>
    %cst_48 = arith.constant dense<0.000000e+00> : vector<2x128xf32>
    %211 = tpu.matmul %210, %35, %cst_48 {dimension_numbers = #tpu.dot_dimension_numbers<[1], [0], [0], [1], [0, 0, 1, 1], [], []>} : vector<2x32xbf16>, vector<32x128xbf16>, vector<2x128xf32> -> vector<2x128xf32>
    %c6 = arith.constant 6 : index
    %c0_49 = arith.constant 0 : index
    %212 = vector.load %arg5[%c6, %c0_49] : memref<32x128xf32, #tpu.memory_space<vmem>>, vector<2x128xf32>
    tpu.vector_store %arg5[%c6, %c0_49], %211 {strides = array<i32>} : memref<32x128xf32, #tpu.memory_space<vmem>>, vector<2x128xf32>,
    %213 = vector.extract_strided_slice %56 {offsets = [24, 0], sizes = [2, 128], strides = [1, 1]} : vector<32x128xf32> to vector<2x128xf32>
    %cst_50 = arith.constant dense<0.000000e+00> : vector<2x128xf32>
    %214 = tpu.matmul %188, %33, %cst_50 {dimension_numbers = #tpu.dot_dimension_numbers<[1], [0], [0], [1], [0, 0, 1, 1], [], []>} : vector<2x32xbf16>, vector<32x128xbf16>, vector<2x128xf32> -> vector<2x128xf32>
    %215 = arith.addf %213, %214 : vector<2x128xf32>
    %216 = vector.extract_strided_slice %215 {offsets = [0, 0], sizes = [2, 96], strides = [1, 1]} : vector<2x128xf32> to vector<2x96xf32>
    %217 = arith.negf %216 : vector<2x96xf32>
    %218 = math.exp %217 : vector<2x96xf32>
    %cst_51 = arith.constant 1.000000e+00 : f32
    %219 = vector.broadcast %cst_51 : f32 to vector<2x96xf32>
    %220 = arith.addf %219, %218 : vector<2x96xf32>
    %221 = arith.divf %219, %220 : vector<2x96xf32>
    %222 = vector.extract_strided_slice %221 {offsets = [0, 0], sizes = [2, 32], strides = [1, 1]} : vector<2x96xf32> to vector<2x32xf32>
    %223 = vector.extract_strided_slice %221 {offsets = [0, 32], sizes = [2, 32], strides = [1, 1]} : vector<2x96xf32> to vector<2x32xf32>
    %224 = vector.extract_strided_slice %221 {offsets = [0, 64], sizes = [2, 32], strides = [1, 1]} : vector<2x96xf32> to vector<2x32xf32>
    %225 = vector.extract_strided_slice %215 {offsets = [0, 96], sizes = [2, 32], strides = [1, 1]} : vector<2x128xf32> to vector<2x32xf32>
    %226 = math.tanh %225 : vector<2x32xf32>
    %227 = arith.mulf %223, %185 : vector<2x32xf32>
    %228 = arith.mulf %222, %226 : vector<2x32xf32>
    %229 = arith.addf %227, %228 : vector<2x32xf32>
    %230 = math.tanh %229 : vector<2x32xf32>
    %231 = arith.mulf %224, %230 : vector<2x32xf32>
    %232 = arith.truncf %231 : vector<2x32xf32> to vector<2x32xbf16>
    %cst_52 = arith.constant dense<0.000000e+00> : vector<2x128xf32>
    %233 = tpu.matmul %232, %36, %cst_52 {dimension_numbers = #tpu.dot_dimension_numbers<[1], [0], [0], [1], [0, 0, 1, 1], [], []>} : vector<2x32xbf16>, vector<32x128xbf16>, vector<2x128xf32> -> vector<2x128xf32>
    %c24 = arith.constant 24 : index
    %c0_53 = arith.constant 0 : index
    %234 = vector.load %arg6[%c24, %c0_53] : memref<32x128xf32, #tpu.memory_space<vmem>>, vector<2x128xf32>
    tpu.vector_store %arg6[%c24, %c0_53], %233 {strides = array<i32>} : memref<32x128xf32, #tpu.memory_space<vmem>>, vector<2x128xf32>,
    %235 = vector.extract_strided_slice %51 {offsets = [8, 0], sizes = [2, 128], strides = [1, 1]} : vector<32x128xf32> to vector<2x128xf32>
    %cst_54 = arith.constant dense<0.000000e+00> : vector<2x128xf32>
    %236 = tpu.matmul %210, %32, %cst_54 {dimension_numbers = #tpu.dot_dimension_numbers<[1], [0], [0], [1], [0, 0, 1, 1], [], []>} : vector<2x32xbf16>, vector<32x128xbf16>, vector<2x128xf32> -> vector<2x128xf32>
    %237 = arith.addf %235, %236 : vector<2x128xf32>
    %238 = vector.extract_strided_slice %237 {offsets = [0, 0], sizes = [2, 96], strides = [1, 1]} : vector<2x128xf32> to vector<2x96xf32>
    %239 = arith.negf %238 : vector<2x96xf32>
    %240 = math.exp %239 : vector<2x96xf32>
    %cst_55 = arith.constant 1.000000e+00 : f32
    %241 = vector.broadcast %cst_55 : f32 to vector<2x96xf32>
    %242 = arith.addf %241, %240 : vector<2x96xf32>
    %243 = arith.divf %241, %242 : vector<2x96xf32>
    %244 = vector.extract_strided_slice %243 {offsets = [0, 0], sizes = [2, 32], strides = [1, 1]} : vector<2x96xf32> to vector<2x32xf32>
    %245 = vector.extract_strided_slice %243 {offsets = [0, 32], sizes = [2, 32], strides = [1, 1]} : vector<2x96xf32> to vector<2x32xf32>
    %246 = vector.extract_strided_slice %243 {offsets = [0, 64], sizes = [2, 32], strides = [1, 1]} : vector<2x96xf32> to vector<2x32xf32>
    %247 = vector.extract_strided_slice %237 {offsets = [0, 96], sizes = [2, 32], strides = [1, 1]} : vector<2x128xf32> to vector<2x32xf32>
    %248 = math.tanh %247 : vector<2x32xf32>
    %249 = arith.mulf %245, %207 : vector<2x32xf32>
    %250 = arith.mulf %244, %248 : vector<2x32xf32>
    %251 = arith.addf %249, %250 : vector<2x32xf32>
    %252 = math.tanh %251 : vector<2x32xf32>
    %253 = arith.mulf %246, %252 : vector<2x32xf32>
    %254 = arith.truncf %253 : vector<2x32xf32> to vector<2x32xbf16>
    %cst_56 = arith.constant dense<0.000000e+00> : vector<2x128xf32>
    %255 = tpu.matmul %254, %35, %cst_56 {dimension_numbers = #tpu.dot_dimension_numbers<[1], [0], [0], [1], [0, 0, 1, 1], [], []>} : vector<2x32xbf16>, vector<32x128xbf16>, vector<2x128xf32> -> vector<2x128xf32>
    %c8 = arith.constant 8 : index
    %c0_57 = arith.constant 0 : index
    %256 = vector.load %arg5[%c8, %c0_57] : memref<32x128xf32, #tpu.memory_space<vmem>>, vector<2x128xf32>
    tpu.vector_store %arg5[%c8, %c0_57], %255 {strides = array<i32>} : memref<32x128xf32, #tpu.memory_space<vmem>>, vector<2x128xf32>,
    %257 = vector.extract_strided_slice %56 {offsets = [22, 0], sizes = [2, 128], strides = [1, 1]} : vector<32x128xf32> to vector<2x128xf32>
    %cst_58 = arith.constant dense<0.000000e+00> : vector<2x128xf32>
    %258 = tpu.matmul %232, %33, %cst_58 {dimension_numbers = #tpu.dot_dimension_numbers<[1], [0], [0], [1], [0, 0, 1, 1], [], []>} : vector<2x32xbf16>, vector<32x128xbf16>, vector<2x128xf32> -> vector<2x128xf32>
    %259 = arith.addf %257, %258 : vector<2x128xf32>
    %260 = vector.extract_strided_slice %259 {offsets = [0, 0], sizes = [2, 96], strides = [1, 1]} : vector<2x128xf32> to vector<2x96xf32>
    %261 = arith.negf %260 : vector<2x96xf32>
    %262 = math.exp %261 : vector<2x96xf32>
    %cst_59 = arith.constant 1.000000e+00 : f32
    %263 = vector.broadcast %cst_59 : f32 to vector<2x96xf32>
    %264 = arith.addf %263, %262 : vector<2x96xf32>
    %265 = arith.divf %263, %264 : vector<2x96xf32>
    %266 = vector.extract_strided_slice %265 {offsets = [0, 0], sizes = [2, 32], strides = [1, 1]} : vector<2x96xf32> to vector<2x32xf32>
    %267 = vector.extract_strided_slice %265 {offsets = [0, 32], sizes = [2, 32], strides = [1, 1]} : vector<2x96xf32> to vector<2x32xf32>
    %268 = vector.extract_strided_slice %265 {offsets = [0, 64], sizes = [2, 32], strides = [1, 1]} : vector<2x96xf32> to vector<2x32xf32>
    %269 = vector.extract_strided_slice %259 {offsets = [0, 96], sizes = [2, 32], strides = [1, 1]} : vector<2x128xf32> to vector<2x32xf32>
    %270 = math.tanh %269 : vector<2x32xf32>
    %271 = arith.mulf %267, %229 : vector<2x32xf32>
    %272 = arith.mulf %266, %270 : vector<2x32xf32>
    %273 = arith.addf %271, %272 : vector<2x32xf32>
    %274 = math.tanh %273 : vector<2x32xf32>
    %275 = arith.mulf %268, %274 : vector<2x32xf32>
    %276 = arith.truncf %275 : vector<2x32xf32> to vector<2x32xbf16>
    %cst_60 = arith.constant dense<0.000000e+00> : vector<2x128xf32>
    %277 = tpu.matmul %276, %36, %cst_60 {dimension_numbers = #tpu.dot_dimension_numbers<[1], [0], [0], [1], [0, 0, 1, 1], [], []>} : vector<2x32xbf16>, vector<32x128xbf16>, vector<2x128xf32> -> vector<2x128xf32>
    %c22 = arith.constant 22 : index
    %c0_61 = arith.constant 0 : index
    %278 = vector.load %arg6[%c22, %c0_61] : memref<32x128xf32, #tpu.memory_space<vmem>>, vector<2x128xf32>
    tpu.vector_store %arg6[%c22, %c0_61], %277 {strides = array<i32>} : memref<32x128xf32, #tpu.memory_space<vmem>>, vector<2x128xf32>,
    %279 = vector.extract_strided_slice %51 {offsets = [10, 0], sizes = [2, 128], strides = [1, 1]} : vector<32x128xf32> to vector<2x128xf32>
    %cst_62 = arith.constant dense<0.000000e+00> : vector<2x128xf32>
    %280 = tpu.matmul %254, %32, %cst_62 {dimension_numbers = #tpu.dot_dimension_numbers<[1], [0], [0], [1], [0, 0, 1, 1], [], []>} : vector<2x32xbf16>, vector<32x128xbf16>, vector<2x128xf32> -> vector<2x128xf32>
    %281 = arith.addf %279, %280 : vector<2x128xf32>
    %282 = vector.extract_strided_slice %281 {offsets = [0, 0], sizes = [2, 96], strides = [1, 1]} : vector<2x128xf32> to vector<2x96xf32>
    %283 = arith.negf %282 : vector<2x96xf32>
    %284 = math.exp %283 : vector<2x96xf32>
    %cst_63 = arith.constant 1.000000e+00 : f32
    %285 = vector.broadcast %cst_63 : f32 to vector<2x96xf32>
    %286 = arith.addf %285, %284 : vector<2x96xf32>
    %287 = arith.divf %285, %286 : vector<2x96xf32>
    %288 = vector.extract_strided_slice %287 {offsets = [0, 0], sizes = [2, 32], strides = [1, 1]} : vector<2x96xf32> to vector<2x32xf32>
    %289 = vector.extract_strided_slice %287 {offsets = [0, 32], sizes = [2, 32], strides = [1, 1]} : vector<2x96xf32> to vector<2x32xf32>
    %290 = vector.extract_strided_slice %287 {offsets = [0, 64], sizes = [2, 32], strides = [1, 1]} : vector<2x96xf32> to vector<2x32xf32>
    %291 = vector.extract_strided_slice %281 {offsets = [0, 96], sizes = [2, 32], strides = [1, 1]} : vector<2x128xf32> to vector<2x32xf32>
    %292 = math.tanh %291 : vector<2x32xf32>
    %293 = arith.mulf %289, %251 : vector<2x32xf32>
    %294 = arith.mulf %288, %292 : vector<2x32xf32>
    %295 = arith.addf %293, %294 : vector<2x32xf32>
    %296 = math.tanh %295 : vector<2x32xf32>
    %297 = arith.mulf %290, %296 : vector<2x32xf32>
    %298 = arith.truncf %297 : vector<2x32xf32> to vector<2x32xbf16>
    %cst_64 = arith.constant dense<0.000000e+00> : vector<2x128xf32>
    %299 = tpu.matmul %298, %35, %cst_64 {dimension_numbers = #tpu.dot_dimension_numbers<[1], [0], [0], [1], [0, 0, 1, 1], [], []>} : vector<2x32xbf16>, vector<32x128xbf16>, vector<2x128xf32> -> vector<2x128xf32>
    %c10 = arith.constant 10 : index
    %c0_65 = arith.constant 0 : index
    %300 = vector.load %arg5[%c10, %c0_65] : memref<32x128xf32, #tpu.memory_space<vmem>>, vector<2x128xf32>
    tpu.vector_store %arg5[%c10, %c0_65], %299 {strides = array<i32>} : memref<32x128xf32, #tpu.memory_space<vmem>>, vector<2x128xf32>,
    %301 = vector.extract_strided_slice %56 {offsets = [20, 0], sizes = [2, 128], strides = [1, 1]} : vector<32x128xf32> to vector<2x128xf32>
    %cst_66 = arith.constant dense<0.000000e+00> : vector<2x128xf32>
    %302 = tpu.matmul %276, %33, %cst_66 {dimension_numbers = #tpu.dot_dimension_numbers<[1], [0], [0], [1], [0, 0, 1, 1], [], []>} : vector<2x32xbf16>, vector<32x128xbf16>, vector<2x128xf32> -> vector<2x128xf32>
    %303 = arith.addf %301, %302 : vector<2x128xf32>
    %304 = vector.extract_strided_slice %303 {offsets = [0, 0], sizes = [2, 96], strides = [1, 1]} : vector<2x128xf32> to vector<2x96xf32>
    %305 = arith.negf %304 : vector<2x96xf32>
    %306 = math.exp %305 : vector<2x96xf32>
    %cst_67 = arith.constant 1.000000e+00 : f32
    %307 = vector.broadcast %cst_67 : f32 to vector<2x96xf32>
    %308 = arith.addf %307, %306 : vector<2x96xf32>
    %309 = arith.divf %307, %308 : vector<2x96xf32>
    %310 = vector.extract_strided_slice %309 {offsets = [0, 0], sizes = [2, 32], strides = [1, 1]} : vector<2x96xf32> to vector<2x32xf32>
    %311 = vector.extract_strided_slice %309 {offsets = [0, 32], sizes = [2, 32], strides = [1, 1]} : vector<2x96xf32> to vector<2x32xf32>
    %312 = vector.extract_strided_slice %309 {offsets = [0, 64], sizes = [2, 32], strides = [1, 1]} : vector<2x96xf32> to vector<2x32xf32>
    %313 = vector.extract_strided_slice %303 {offsets = [0, 96], sizes = [2, 32], strides = [1, 1]} : vector<2x128xf32> to vector<2x32xf32>
    %314 = math.tanh %313 : vector<2x32xf32>
    %315 = arith.mulf %311, %273 : vector<2x32xf32>
    %316 = arith.mulf %310, %314 : vector<2x32xf32>
    %317 = arith.addf %315, %316 : vector<2x32xf32>
    %318 = math.tanh %317 : vector<2x32xf32>
    %319 = arith.mulf %312, %318 : vector<2x32xf32>
    %320 = arith.truncf %319 : vector<2x32xf32> to vector<2x32xbf16>
    %cst_68 = arith.constant dense<0.000000e+00> : vector<2x128xf32>
    %321 = tpu.matmul %320, %36, %cst_68 {dimension_numbers = #tpu.dot_dimension_numbers<[1], [0], [0], [1], [0, 0, 1, 1], [], []>} : vector<2x32xbf16>, vector<32x128xbf16>, vector<2x128xf32> -> vector<2x128xf32>
    %c20 = arith.constant 20 : index
    %c0_69 = arith.constant 0 : index
    %322 = vector.load %arg6[%c20, %c0_69] : memref<32x128xf32, #tpu.memory_space<vmem>>, vector<2x128xf32>
    tpu.vector_store %arg6[%c20, %c0_69], %321 {strides = array<i32>} : memref<32x128xf32, #tpu.memory_space<vmem>>, vector<2x128xf32>,
    %323 = vector.extract_strided_slice %51 {offsets = [12, 0], sizes = [2, 128], strides = [1, 1]} : vector<32x128xf32> to vector<2x128xf32>
    %cst_70 = arith.constant dense<0.000000e+00> : vector<2x128xf32>
    %324 = tpu.matmul %298, %32, %cst_70 {dimension_numbers = #tpu.dot_dimension_numbers<[1], [0], [0], [1], [0, 0, 1, 1], [], []>} : vector<2x32xbf16>, vector<32x128xbf16>, vector<2x128xf32> -> vector<2x128xf32>
    %325 = arith.addf %323, %324 : vector<2x128xf32>
    %326 = vector.extract_strided_slice %325 {offsets = [0, 0], sizes = [2, 96], strides = [1, 1]} : vector<2x128xf32> to vector<2x96xf32>
    %327 = arith.negf %326 : vector<2x96xf32>
    %328 = math.exp %327 : vector<2x96xf32>
    %cst_71 = arith.constant 1.000000e+00 : f32
    %329 = vector.broadcast %cst_71 : f32 to vector<2x96xf32>
    %330 = arith.addf %329, %328 : vector<2x96xf32>
    %331 = arith.divf %329, %330 : vector<2x96xf32>
    %332 = vector.extract_strided_slice %331 {offsets = [0, 0], sizes = [2, 32], strides = [1, 1]} : vector<2x96xf32> to vector<2x32xf32>
    %333 = vector.extract_strided_slice %331 {offsets = [0, 32], sizes = [2, 32], strides = [1, 1]} : vector<2x96xf32> to vector<2x32xf32>
    %334 = vector.extract_strided_slice %331 {offsets = [0, 64], sizes = [2, 32], strides = [1, 1]} : vector<2x96xf32> to vector<2x32xf32>
    %335 = vector.extract_strided_slice %325 {offsets = [0, 96], sizes = [2, 32], strides = [1, 1]} : vector<2x128xf32> to vector<2x32xf32>
    %336 = math.tanh %335 : vector<2x32xf32>
    %337 = arith.mulf %333, %295 : vector<2x32xf32>
    %338 = arith.mulf %332, %336 : vector<2x32xf32>
    %339 = arith.addf %337, %338 : vector<2x32xf32>
    %340 = math.tanh %339 : vector<2x32xf32>
    %341 = arith.mulf %334, %340 : vector<2x32xf32>
    %342 = arith.truncf %341 : vector<2x32xf32> to vector<2x32xbf16>
    %cst_72 = arith.constant dense<0.000000e+00> : vector<2x128xf32>
    %343 = tpu.matmul %342, %35, %cst_72 {dimension_numbers = #tpu.dot_dimension_numbers<[1], [0], [0], [1], [0, 0, 1, 1], [], []>} : vector<2x32xbf16>, vector<32x128xbf16>, vector<2x128xf32> -> vector<2x128xf32>
    %c12 = arith.constant 12 : index
    %c0_73 = arith.constant 0 : index
    %344 = vector.load %arg5[%c12, %c0_73] : memref<32x128xf32, #tpu.memory_space<vmem>>, vector<2x128xf32>
    tpu.vector_store %arg5[%c12, %c0_73], %343 {strides = array<i32>} : memref<32x128xf32, #tpu.memory_space<vmem>>, vector<2x128xf32>,
    %345 = vector.extract_strided_slice %56 {offsets = [18, 0], sizes = [2, 128], strides = [1, 1]} : vector<32x128xf32> to vector<2x128xf32>
    %cst_74 = arith.constant dense<0.000000e+00> : vector<2x128xf32>
    %346 = tpu.matmul %320, %33, %cst_74 {dimension_numbers = #tpu.dot_dimension_numbers<[1], [0], [0], [1], [0, 0, 1, 1], [], []>} : vector<2x32xbf16>, vector<32x128xbf16>, vector<2x128xf32> -> vector<2x128xf32>
    %347 = arith.addf %345, %346 : vector<2x128xf32>
    %348 = vector.extract_strided_slice %347 {offsets = [0, 0], sizes = [2, 96], strides = [1, 1]} : vector<2x128xf32> to vector<2x96xf32>
    %349 = arith.negf %348 : vector<2x96xf32>
    %350 = math.exp %349 : vector<2x96xf32>
    %cst_75 = arith.constant 1.000000e+00 : f32
    %351 = vector.broadcast %cst_75 : f32 to vector<2x96xf32>
    %352 = arith.addf %351, %350 : vector<2x96xf32>
    %353 = arith.divf %351, %352 : vector<2x96xf32>
    %354 = vector.extract_strided_slice %353 {offsets = [0, 0], sizes = [2, 32], strides = [1, 1]} : vector<2x96xf32> to vector<2x32xf32>
    %355 = vector.extract_strided_slice %353 {offsets = [0, 32], sizes = [2, 32], strides = [1, 1]} : vector<2x96xf32> to vector<2x32xf32>
    %356 = vector.extract_strided_slice %353 {offsets = [0, 64], sizes = [2, 32], strides = [1, 1]} : vector<2x96xf32> to vector<2x32xf32>
    %357 = vector.extract_strided_slice %347 {offsets = [0, 96], sizes = [2, 32], strides = [1, 1]} : vector<2x128xf32> to vector<2x32xf32>
    %358 = math.tanh %357 : vector<2x32xf32>
    %359 = arith.mulf %355, %317 : vector<2x32xf32>
    %360 = arith.mulf %354, %358 : vector<2x32xf32>
    %361 = arith.addf %359, %360 : vector<2x32xf32>
    %362 = math.tanh %361 : vector<2x32xf32>
    %363 = arith.mulf %356, %362 : vector<2x32xf32>
    %364 = arith.truncf %363 : vector<2x32xf32> to vector<2x32xbf16>
    %cst_76 = arith.constant dense<0.000000e+00> : vector<2x128xf32>
    %365 = tpu.matmul %364, %36, %cst_76 {dimension_numbers = #tpu.dot_dimension_numbers<[1], [0], [0], [1], [0, 0, 1, 1], [], []>} : vector<2x32xbf16>, vector<32x128xbf16>, vector<2x128xf32> -> vector<2x128xf32>
    %c18 = arith.constant 18 : index
    %c0_77 = arith.constant 0 : index
    %366 = vector.load %arg6[%c18, %c0_77] : memref<32x128xf32, #tpu.memory_space<vmem>>, vector<2x128xf32>
    tpu.vector_store %arg6[%c18, %c0_77], %365 {strides = array<i32>} : memref<32x128xf32, #tpu.memory_space<vmem>>, vector<2x128xf32>,
    %367 = vector.extract_strided_slice %51 {offsets = [14, 0], sizes = [2, 128], strides = [1, 1]} : vector<32x128xf32> to vector<2x128xf32>
    %cst_78 = arith.constant dense<0.000000e+00> : vector<2x128xf32>
    %368 = tpu.matmul %342, %32, %cst_78 {dimension_numbers = #tpu.dot_dimension_numbers<[1], [0], [0], [1], [0, 0, 1, 1], [], []>} : vector<2x32xbf16>, vector<32x128xbf16>, vector<2x128xf32> -> vector<2x128xf32>
    %369 = arith.addf %367, %368 : vector<2x128xf32>
    %370 = vector.extract_strided_slice %369 {offsets = [0, 0], sizes = [2, 96], strides = [1, 1]} : vector<2x128xf32> to vector<2x96xf32>
    %371 = arith.negf %370 : vector<2x96xf32>
    %372 = math.exp %371 : vector<2x96xf32>
    %cst_79 = arith.constant 1.000000e+00 : f32
    %373 = vector.broadcast %cst_79 : f32 to vector<2x96xf32>
    %374 = arith.addf %373, %372 : vector<2x96xf32>
    %375 = arith.divf %373, %374 : vector<2x96xf32>
    %376 = vector.extract_strided_slice %375 {offsets = [0, 0], sizes = [2, 32], strides = [1, 1]} : vector<2x96xf32> to vector<2x32xf32>
    %377 = vector.extract_strided_slice %375 {offsets = [0, 32], sizes = [2, 32], strides = [1, 1]} : vector<2x96xf32> to vector<2x32xf32>
    %378 = vector.extract_strided_slice %375 {offsets = [0, 64], sizes = [2, 32], strides = [1, 1]} : vector<2x96xf32> to vector<2x32xf32>
    %379 = vector.extract_strided_slice %369 {offsets = [0, 96], sizes = [2, 32], strides = [1, 1]} : vector<2x128xf32> to vector<2x32xf32>
    %380 = math.tanh %379 : vector<2x32xf32>
    %381 = arith.mulf %377, %339 : vector<2x32xf32>
    %382 = arith.mulf %376, %380 : vector<2x32xf32>
    %383 = arith.addf %381, %382 : vector<2x32xf32>
    %384 = math.tanh %383 : vector<2x32xf32>
    %385 = arith.mulf %378, %384 : vector<2x32xf32>
    %386 = arith.truncf %385 : vector<2x32xf32> to vector<2x32xbf16>
    %cst_80 = arith.constant dense<0.000000e+00> : vector<2x128xf32>
    %387 = tpu.matmul %386, %35, %cst_80 {dimension_numbers = #tpu.dot_dimension_numbers<[1], [0], [0], [1], [0, 0, 1, 1], [], []>} : vector<2x32xbf16>, vector<32x128xbf16>, vector<2x128xf32> -> vector<2x128xf32>
    %c14 = arith.constant 14 : index
    %c0_81 = arith.constant 0 : index
    %388 = vector.load %arg5[%c14, %c0_81] : memref<32x128xf32, #tpu.memory_space<vmem>>, vector<2x128xf32>
    tpu.vector_store %arg5[%c14, %c0_81], %387 {strides = array<i32>} : memref<32x128xf32, #tpu.memory_space<vmem>>, vector<2x128xf32>,
    %389 = vector.extract_strided_slice %56 {offsets = [16, 0], sizes = [2, 128], strides = [1, 1]} : vector<32x128xf32> to vector<2x128xf32>
    %cst_82 = arith.constant dense<0.000000e+00> : vector<2x128xf32>
    %390 = tpu.matmul %364, %33, %cst_82 {dimension_numbers = #tpu.dot_dimension_numbers<[1], [0], [0], [1], [0, 0, 1, 1], [], []>} : vector<2x32xbf16>, vector<32x128xbf16>, vector<2x128xf32> -> vector<2x128xf32>
    %391 = arith.addf %389, %390 : vector<2x128xf32>
    %392 = vector.extract_strided_slice %391 {offsets = [0, 0], sizes = [2, 96], strides = [1, 1]} : vector<2x128xf32> to vector<2x96xf32>
    %393 = arith.negf %392 : vector<2x96xf32>
    %394 = math.exp %393 : vector<2x96xf32>
    %cst_83 = arith.constant 1.000000e+00 : f32
    %395 = vector.broadcast %cst_83 : f32 to vector<2x96xf32>
    %396 = arith.addf %395, %394 : vector<2x96xf32>
    %397 = arith.divf %395, %396 : vector<2x96xf32>
    %398 = vector.extract_strided_slice %397 {offsets = [0, 0], sizes = [2, 32], strides = [1, 1]} : vector<2x96xf32> to vector<2x32xf32>
    %399 = vector.extract_strided_slice %397 {offsets = [0, 32], sizes = [2, 32], strides = [1, 1]} : vector<2x96xf32> to vector<2x32xf32>
    %400 = vector.extract_strided_slice %397 {offsets = [0, 64], sizes = [2, 32], strides = [1, 1]} : vector<2x96xf32> to vector<2x32xf32>
    %401 = vector.extract_strided_slice %391 {offsets = [0, 96], sizes = [2, 32], strides = [1, 1]} : vector<2x128xf32> to vector<2x32xf32>
    %402 = math.tanh %401 : vector<2x32xf32>
    %403 = arith.mulf %399, %361 : vector<2x32xf32>
    %404 = arith.mulf %398, %402 : vector<2x32xf32>
    %405 = arith.addf %403, %404 : vector<2x32xf32>
    %406 = math.tanh %405 : vector<2x32xf32>
    %407 = arith.mulf %400, %406 : vector<2x32xf32>
    %408 = arith.truncf %407 : vector<2x32xf32> to vector<2x32xbf16>
    %cst_84 = arith.constant dense<0.000000e+00> : vector<2x128xf32>
    %409 = tpu.matmul %408, %36, %cst_84 {dimension_numbers = #tpu.dot_dimension_numbers<[1], [0], [0], [1], [0, 0, 1, 1], [], []>} : vector<2x32xbf16>, vector<32x128xbf16>, vector<2x128xf32> -> vector<2x128xf32>
    %c16 = arith.constant 16 : index
    %c0_85 = arith.constant 0 : index
    %410 = vector.load %arg6[%c16, %c0_85] : memref<32x128xf32, #tpu.memory_space<vmem>>, vector<2x128xf32>
    tpu.vector_store %arg6[%c16, %c0_85], %409 {strides = array<i32>} : memref<32x128xf32, #tpu.memory_space<vmem>>, vector<2x128xf32>,
    %411 = vector.extract_strided_slice %51 {offsets = [16, 0], sizes = [2, 128], strides = [1, 1]} : vector<32x128xf32> to vector<2x128xf32>
    %cst_86 = arith.constant dense<0.000000e+00> : vector<2x128xf32>
    %412 = tpu.matmul %386, %32, %cst_86 {dimension_numbers = #tpu.dot_dimension_numbers<[1], [0], [0], [1], [0, 0, 1, 1], [], []>} : vector<2x32xbf16>, vector<32x128xbf16>, vector<2x128xf32> -> vector<2x128xf32>
    %413 = arith.addf %411, %412 : vector<2x128xf32>
    %414 = vector.extract_strided_slice %413 {offsets = [0, 0], sizes = [2, 96], strides = [1, 1]} : vector<2x128xf32> to vector<2x96xf32>
    %415 = arith.negf %414 : vector<2x96xf32>
    %416 = math.exp %415 : vector<2x96xf32>
    %cst_87 = arith.constant 1.000000e+00 : f32
    %417 = vector.broadcast %cst_87 : f32 to vector<2x96xf32>
    %418 = arith.addf %417, %416 : vector<2x96xf32>
    %419 = arith.divf %417, %418 : vector<2x96xf32>
    %420 = vector.extract_strided_slice %419 {offsets = [0, 0], sizes = [2, 32], strides = [1, 1]} : vector<2x96xf32> to vector<2x32xf32>
    %421 = vector.extract_strided_slice %419 {offsets = [0, 32], sizes = [2, 32], strides = [1, 1]} : vector<2x96xf32> to vector<2x32xf32>
    %422 = vector.extract_strided_slice %419 {offsets = [0, 64], sizes = [2, 32], strides = [1, 1]} : vector<2x96xf32> to vector<2x32xf32>
    %423 = vector.extract_strided_slice %413 {offsets = [0, 96], sizes = [2, 32], strides = [1, 1]} : vector<2x128xf32> to vector<2x32xf32>
    %424 = math.tanh %423 : vector<2x32xf32>
    %425 = arith.mulf %421, %383 : vector<2x32xf32>
    %426 = arith.mulf %420, %424 : vector<2x32xf32>
    %427 = arith.addf %425, %426 : vector<2x32xf32>
    %428 = math.tanh %427 : vector<2x32xf32>
    %429 = arith.mulf %422, %428 : vector<2x32xf32>
    %430 = arith.truncf %429 : vector<2x32xf32> to vector<2x32xbf16>
    %cst_88 = arith.constant dense<0.000000e+00> : vector<2x128xf32>
    %431 = tpu.matmul %430, %35, %cst_88 {dimension_numbers = #tpu.dot_dimension_numbers<[1], [0], [0], [1], [0, 0, 1, 1], [], []>} : vector<2x32xbf16>, vector<32x128xbf16>, vector<2x128xf32> -> vector<2x128xf32>
    %c16_89 = arith.constant 16 : index
    %c0_90 = arith.constant 0 : index
    %432 = vector.load %arg5[%c16_89, %c0_90] : memref<32x128xf32, #tpu.memory_space<vmem>>, vector<2x128xf32>
    tpu.vector_store %arg5[%c16_89, %c0_90], %431 {strides = array<i32>} : memref<32x128xf32, #tpu.memory_space<vmem>>, vector<2x128xf32>,
    %433 = vector.extract_strided_slice %56 {offsets = [14, 0], sizes = [2, 128], strides = [1, 1]} : vector<32x128xf32> to vector<2x128xf32>
    %cst_91 = arith.constant dense<0.000000e+00> : vector<2x128xf32>
    %434 = tpu.matmul %408, %33, %cst_91 {dimension_numbers = #tpu.dot_dimension_numbers<[1], [0], [0], [1], [0, 0, 1, 1], [], []>} : vector<2x32xbf16>, vector<32x128xbf16>, vector<2x128xf32> -> vector<2x128xf32>
    %435 = arith.addf %433, %434 : vector<2x128xf32>
    %436 = vector.extract_strided_slice %435 {offsets = [0, 0], sizes = [2, 96], strides = [1, 1]} : vector<2x128xf32> to vector<2x96xf32>
    %437 = arith.negf %436 : vector<2x96xf32>
    %438 = math.exp %437 : vector<2x96xf32>
    %cst_92 = arith.constant 1.000000e+00 : f32
    %439 = vector.broadcast %cst_92 : f32 to vector<2x96xf32>
    %440 = arith.addf %439, %438 : vector<2x96xf32>
    %441 = arith.divf %439, %440 : vector<2x96xf32>
    %442 = vector.extract_strided_slice %441 {offsets = [0, 0], sizes = [2, 32], strides = [1, 1]} : vector<2x96xf32> to vector<2x32xf32>
    %443 = vector.extract_strided_slice %441 {offsets = [0, 32], sizes = [2, 32], strides = [1, 1]} : vector<2x96xf32> to vector<2x32xf32>
    %444 = vector.extract_strided_slice %441 {offsets = [0, 64], sizes = [2, 32], strides = [1, 1]} : vector<2x96xf32> to vector<2x32xf32>
    %445 = vector.extract_strided_slice %435 {offsets = [0, 96], sizes = [2, 32], strides = [1, 1]} : vector<2x128xf32> to vector<2x32xf32>
    %446 = math.tanh %445 : vector<2x32xf32>
    %447 = arith.mulf %443, %405 : vector<2x32xf32>
    %448 = arith.mulf %442, %446 : vector<2x32xf32>
    %449 = arith.addf %447, %448 : vector<2x32xf32>
    %450 = math.tanh %449 : vector<2x32xf32>
    %451 = arith.mulf %444, %450 : vector<2x32xf32>
    %452 = arith.truncf %451 : vector<2x32xf32> to vector<2x32xbf16>
    %cst_93 = arith.constant dense<0.000000e+00> : vector<2x128xf32>
    %453 = tpu.matmul %452, %36, %cst_93 {dimension_numbers = #tpu.dot_dimension_numbers<[1], [0], [0], [1], [0, 0, 1, 1], [], []>} : vector<2x32xbf16>, vector<32x128xbf16>, vector<2x128xf32> -> vector<2x128xf32>
    %c14_94 = arith.constant 14 : index
    %c0_95 = arith.constant 0 : index
    %454 = vector.load %arg6[%c14_94, %c0_95] : memref<32x128xf32, #tpu.memory_space<vmem>>, vector<2x128xf32>
    tpu.vector_store %arg6[%c14_94, %c0_95], %453 {strides = array<i32>} : memref<32x128xf32, #tpu.memory_space<vmem>>, vector<2x128xf32>,
    %455 = vector.extract_strided_slice %51 {offsets = [18, 0], sizes = [2, 128], strides = [1, 1]} : vector<32x128xf32> to vector<2x128xf32>
    %cst_96 = arith.constant dense<0.000000e+00> : vector<2x128xf32>
    %456 = tpu.matmul %430, %32, %cst_96 {dimension_numbers = #tpu.dot_dimension_numbers<[1], [0], [0], [1], [0, 0, 1, 1], [], []>} : vector<2x32xbf16>, vector<32x128xbf16>, vector<2x128xf32> -> vector<2x128xf32>
    %457 = arith.addf %455, %456 : vector<2x128xf32>
    %458 = vector.extract_strided_slice %457 {offsets = [0, 0], sizes = [2, 96], strides = [1, 1]} : vector<2x128xf32> to vector<2x96xf32>
    %459 = arith.negf %458 : vector<2x96xf32>
    %460 = math.exp %459 : vector<2x96xf32>
    %cst_97 = arith.constant 1.000000e+00 : f32
    %461 = vector.broadcast %cst_97 : f32 to vector<2x96xf32>
    %462 = arith.addf %461, %460 : vector<2x96xf32>
    %463 = arith.divf %461, %462 : vector<2x96xf32>
    %464 = vector.extract_strided_slice %463 {offsets = [0, 0], sizes = [2, 32], strides = [1, 1]} : vector<2x96xf32> to vector<2x32xf32>
    %465 = vector.extract_strided_slice %463 {offsets = [0, 32], sizes = [2, 32], strides = [1, 1]} : vector<2x96xf32> to vector<2x32xf32>
    %466 = vector.extract_strided_slice %463 {offsets = [0, 64], sizes = [2, 32], strides = [1, 1]} : vector<2x96xf32> to vector<2x32xf32>
    %467 = vector.extract_strided_slice %457 {offsets = [0, 96], sizes = [2, 32], strides = [1, 1]} : vector<2x128xf32> to vector<2x32xf32>
    %468 = math.tanh %467 : vector<2x32xf32>
    %469 = arith.mulf %465, %427 : vector<2x32xf32>
    %470 = arith.mulf %464, %468 : vector<2x32xf32>
    %471 = arith.addf %469, %470 : vector<2x32xf32>
    %472 = math.tanh %471 : vector<2x32xf32>
    %473 = arith.mulf %466, %472 : vector<2x32xf32>
    %474 = arith.truncf %473 : vector<2x32xf32> to vector<2x32xbf16>
    %cst_98 = arith.constant dense<0.000000e+00> : vector<2x128xf32>
    %475 = tpu.matmul %474, %35, %cst_98 {dimension_numbers = #tpu.dot_dimension_numbers<[1], [0], [0], [1], [0, 0, 1, 1], [], []>} : vector<2x32xbf16>, vector<32x128xbf16>, vector<2x128xf32> -> vector<2x128xf32>
    %c18_99 = arith.constant 18 : index
    %c0_100 = arith.constant 0 : index
    %476 = vector.load %arg5[%c18_99, %c0_100] : memref<32x128xf32, #tpu.memory_space<vmem>>, vector<2x128xf32>
    tpu.vector_store %arg5[%c18_99, %c0_100], %475 {strides = array<i32>} : memref<32x128xf32, #tpu.memory_space<vmem>>, vector<2x128xf32>,
    %477 = vector.extract_strided_slice %56 {offsets = [12, 0], sizes = [2, 128], strides = [1, 1]} : vector<32x128xf32> to vector<2x128xf32>
    %cst_101 = arith.constant dense<0.000000e+00> : vector<2x128xf32>
    %478 = tpu.matmul %452, %33, %cst_101 {dimension_numbers = #tpu.dot_dimension_numbers<[1], [0], [0], [1], [0, 0, 1, 1], [], []>} : vector<2x32xbf16>, vector<32x128xbf16>, vector<2x128xf32> -> vector<2x128xf32>
    %479 = arith.addf %477, %478 : vector<2x128xf32>
    %480 = vector.extract_strided_slice %479 {offsets = [0, 0], sizes = [2, 96], strides = [1, 1]} : vector<2x128xf32> to vector<2x96xf32>
    %481 = arith.negf %480 : vector<2x96xf32>
    %482 = math.exp %481 : vector<2x96xf32>
    %cst_102 = arith.constant 1.000000e+00 : f32
    %483 = vector.broadcast %cst_102 : f32 to vector<2x96xf32>
    %484 = arith.addf %483, %482 : vector<2x96xf32>
    %485 = arith.divf %483, %484 : vector<2x96xf32>
    %486 = vector.extract_strided_slice %485 {offsets = [0, 0], sizes = [2, 32], strides = [1, 1]} : vector<2x96xf32> to vector<2x32xf32>
    %487 = vector.extract_strided_slice %485 {offsets = [0, 32], sizes = [2, 32], strides = [1, 1]} : vector<2x96xf32> to vector<2x32xf32>
    %488 = vector.extract_strided_slice %485 {offsets = [0, 64], sizes = [2, 32], strides = [1, 1]} : vector<2x96xf32> to vector<2x32xf32>
    %489 = vector.extract_strided_slice %479 {offsets = [0, 96], sizes = [2, 32], strides = [1, 1]} : vector<2x128xf32> to vector<2x32xf32>
    %490 = math.tanh %489 : vector<2x32xf32>
    %491 = arith.mulf %487, %449 : vector<2x32xf32>
    %492 = arith.mulf %486, %490 : vector<2x32xf32>
    %493 = arith.addf %491, %492 : vector<2x32xf32>
    %494 = math.tanh %493 : vector<2x32xf32>
    %495 = arith.mulf %488, %494 : vector<2x32xf32>
    %496 = arith.truncf %495 : vector<2x32xf32> to vector<2x32xbf16>
    %cst_103 = arith.constant dense<0.000000e+00> : vector<2x128xf32>
    %497 = tpu.matmul %496, %36, %cst_103 {dimension_numbers = #tpu.dot_dimension_numbers<[1], [0], [0], [1], [0, 0, 1, 1], [], []>} : vector<2x32xbf16>, vector<32x128xbf16>, vector<2x128xf32> -> vector<2x128xf32>
    %c12_104 = arith.constant 12 : index
    %c0_105 = arith.constant 0 : index
    %498 = vector.load %arg6[%c12_104, %c0_105] : memref<32x128xf32, #tpu.memory_space<vmem>>, vector<2x128xf32>
    tpu.vector_store %arg6[%c12_104, %c0_105], %497 {strides = array<i32>} : memref<32x128xf32, #tpu.memory_space<vmem>>, vector<2x128xf32>,
    %499 = vector.extract_strided_slice %51 {offsets = [20, 0], sizes = [2, 128], strides = [1, 1]} : vector<32x128xf32> to vector<2x128xf32>
    %cst_106 = arith.constant dense<0.000000e+00> : vector<2x128xf32>
    %500 = tpu.matmul %474, %32, %cst_106 {dimension_numbers = #tpu.dot_dimension_numbers<[1], [0], [0], [1], [0, 0, 1, 1], [], []>} : vector<2x32xbf16>, vector<32x128xbf16>, vector<2x128xf32> -> vector<2x128xf32>
    %501 = arith.addf %499, %500 : vector<2x128xf32>
    %502 = vector.extract_strided_slice %501 {offsets = [0, 0], sizes = [2, 96], strides = [1, 1]} : vector<2x128xf32> to vector<2x96xf32>
    %503 = arith.negf %502 : vector<2x96xf32>
    %504 = math.exp %503 : vector<2x96xf32>
    %cst_107 = arith.constant 1.000000e+00 : f32
    %505 = vector.broadcast %cst_107 : f32 to vector<2x96xf32>
    %506 = arith.addf %505, %504 : vector<2x96xf32>
    %507 = arith.divf %505, %506 : vector<2x96xf32>
    %508 = vector.extract_strided_slice %507 {offsets = [0, 0], sizes = [2, 32], strides = [1, 1]} : vector<2x96xf32> to vector<2x32xf32>
    %509 = vector.extract_strided_slice %507 {offsets = [0, 32], sizes = [2, 32], strides = [1, 1]} : vector<2x96xf32> to vector<2x32xf32>
    %510 = vector.extract_strided_slice %507 {offsets = [0, 64], sizes = [2, 32], strides = [1, 1]} : vector<2x96xf32> to vector<2x32xf32>
    %511 = vector.extract_strided_slice %501 {offsets = [0, 96], sizes = [2, 32], strides = [1, 1]} : vector<2x128xf32> to vector<2x32xf32>
    %512 = math.tanh %511 : vector<2x32xf32>
    %513 = arith.mulf %509, %471 : vector<2x32xf32>
    %514 = arith.mulf %508, %512 : vector<2x32xf32>
    %515 = arith.addf %513, %514 : vector<2x32xf32>
    %516 = math.tanh %515 : vector<2x32xf32>
    %517 = arith.mulf %510, %516 : vector<2x32xf32>
    %518 = arith.truncf %517 : vector<2x32xf32> to vector<2x32xbf16>
    %cst_108 = arith.constant dense<0.000000e+00> : vector<2x128xf32>
    %519 = tpu.matmul %518, %35, %cst_108 {dimension_numbers = #tpu.dot_dimension_numbers<[1], [0], [0], [1], [0, 0, 1, 1], [], []>} : vector<2x32xbf16>, vector<32x128xbf16>, vector<2x128xf32> -> vector<2x128xf32>
    %c20_109 = arith.constant 20 : index
    %c0_110 = arith.constant 0 : index
    %520 = vector.load %arg5[%c20_109, %c0_110] : memref<32x128xf32, #tpu.memory_space<vmem>>, vector<2x128xf32>
    tpu.vector_store %arg5[%c20_109, %c0_110], %519 {strides = array<i32>} : memref<32x128xf32, #tpu.memory_space<vmem>>, vector<2x128xf32>,
    %521 = vector.extract_strided_slice %56 {offsets = [10, 0], sizes = [2, 128], strides = [1, 1]} : vector<32x128xf32> to vector<2x128xf32>
    %cst_111 = arith.constant dense<0.000000e+00> : vector<2x128xf32>
    %522 = tpu.matmul %496, %33, %cst_111 {dimension_numbers = #tpu.dot_dimension_numbers<[1], [0], [0], [1], [0, 0, 1, 1], [], []>} : vector<2x32xbf16>, vector<32x128xbf16>, vector<2x128xf32> -> vector<2x128xf32>
    %523 = arith.addf %521, %522 : vector<2x128xf32>
    %524 = vector.extract_strided_slice %523 {offsets = [0, 0], sizes = [2, 96], strides = [1, 1]} : vector<2x128xf32> to vector<2x96xf32>
    %525 = arith.negf %524 : vector<2x96xf32>
    %526 = math.exp %525 : vector<2x96xf32>
    %cst_112 = arith.constant 1.000000e+00 : f32
    %527 = vector.broadcast %cst_112 : f32 to vector<2x96xf32>
    %528 = arith.addf %527, %526 : vector<2x96xf32>
    %529 = arith.divf %527, %528 : vector<2x96xf32>
    %530 = vector.extract_strided_slice %529 {offsets = [0, 0], sizes = [2, 32], strides = [1, 1]} : vector<2x96xf32> to vector<2x32xf32>
    %531 = vector.extract_strided_slice %529 {offsets = [0, 32], sizes = [2, 32], strides = [1, 1]} : vector<2x96xf32> to vector<2x32xf32>
    %532 = vector.extract_strided_slice %529 {offsets = [0, 64], sizes = [2, 32], strides = [1, 1]} : vector<2x96xf32> to vector<2x32xf32>
    %533 = vector.extract_strided_slice %523 {offsets = [0, 96], sizes = [2, 32], strides = [1, 1]} : vector<2x128xf32> to vector<2x32xf32>
    %534 = math.tanh %533 : vector<2x32xf32>
    %535 = arith.mulf %531, %493 : vector<2x32xf32>
    %536 = arith.mulf %530, %534 : vector<2x32xf32>
    %537 = arith.addf %535, %536 : vector<2x32xf32>
    %538 = math.tanh %537 : vector<2x32xf32>
    %539 = arith.mulf %532, %538 : vector<2x32xf32>
    %540 = arith.truncf %539 : vector<2x32xf32> to vector<2x32xbf16>
    %cst_113 = arith.constant dense<0.000000e+00> : vector<2x128xf32>
    %541 = tpu.matmul %540, %36, %cst_113 {dimension_numbers = #tpu.dot_dimension_numbers<[1], [0], [0], [1], [0, 0, 1, 1], [], []>} : vector<2x32xbf16>, vector<32x128xbf16>, vector<2x128xf32> -> vector<2x128xf32>
    %c10_114 = arith.constant 10 : index
    %c0_115 = arith.constant 0 : index
    %542 = vector.load %arg6[%c10_114, %c0_115] : memref<32x128xf32, #tpu.memory_space<vmem>>, vector<2x128xf32>
    tpu.vector_store %arg6[%c10_114, %c0_115], %541 {strides = array<i32>} : memref<32x128xf32, #tpu.memory_space<vmem>>, vector<2x128xf32>,
    %543 = vector.extract_strided_slice %51 {offsets = [22, 0], sizes = [2, 128], strides = [1, 1]} : vector<32x128xf32> to vector<2x128xf32>
    %cst_116 = arith.constant dense<0.000000e+00> : vector<2x128xf32>
    %544 = tpu.matmul %518, %32, %cst_116 {dimension_numbers = #tpu.dot_dimension_numbers<[1], [0], [0], [1], [0, 0, 1, 1], [], []>} : vector<2x32xbf16>, vector<32x128xbf16>, vector<2x128xf32> -> vector<2x128xf32>
    %545 = arith.addf %543, %544 : vector<2x128xf32>
    %546 = vector.extract_strided_slice %545 {offsets = [0, 0], sizes = [2, 96], strides = [1, 1]} : vector<2x128xf32> to vector<2x96xf32>
    %547 = arith.negf %546 : vector<2x96xf32>
    %548 = math.exp %547 : vector<2x96xf32>
    %cst_117 = arith.constant 1.000000e+00 : f32
    %549 = vector.broadcast %cst_117 : f32 to vector<2x96xf32>
    %550 = arith.addf %549, %548 : vector<2x96xf32>
    %551 = arith.divf %549, %550 : vector<2x96xf32>
    %552 = vector.extract_strided_slice %551 {offsets = [0, 0], sizes = [2, 32], strides = [1, 1]} : vector<2x96xf32> to vector<2x32xf32>
    %553 = vector.extract_strided_slice %551 {offsets = [0, 32], sizes = [2, 32], strides = [1, 1]} : vector<2x96xf32> to vector<2x32xf32>
    %554 = vector.extract_strided_slice %551 {offsets = [0, 64], sizes = [2, 32], strides = [1, 1]} : vector<2x96xf32> to vector<2x32xf32>
    %555 = vector.extract_strided_slice %545 {offsets = [0, 96], sizes = [2, 32], strides = [1, 1]} : vector<2x128xf32> to vector<2x32xf32>
    %556 = math.tanh %555 : vector<2x32xf32>
    %557 = arith.mulf %553, %515 : vector<2x32xf32>
    %558 = arith.mulf %552, %556 : vector<2x32xf32>
    %559 = arith.addf %557, %558 : vector<2x32xf32>
    %560 = math.tanh %559 : vector<2x32xf32>
    %561 = arith.mulf %554, %560 : vector<2x32xf32>
    %562 = arith.truncf %561 : vector<2x32xf32> to vector<2x32xbf16>
    %cst_118 = arith.constant dense<0.000000e+00> : vector<2x128xf32>
    %563 = tpu.matmul %562, %35, %cst_118 {dimension_numbers = #tpu.dot_dimension_numbers<[1], [0], [0], [1], [0, 0, 1, 1], [], []>} : vector<2x32xbf16>, vector<32x128xbf16>, vector<2x128xf32> -> vector<2x128xf32>
    %c22_119 = arith.constant 22 : index
    %c0_120 = arith.constant 0 : index
    %564 = vector.load %arg5[%c22_119, %c0_120] : memref<32x128xf32, #tpu.memory_space<vmem>>, vector<2x128xf32>
    tpu.vector_store %arg5[%c22_119, %c0_120], %563 {strides = array<i32>} : memref<32x128xf32, #tpu.memory_space<vmem>>, vector<2x128xf32>,
    %565 = vector.extract_strided_slice %56 {offsets = [8, 0], sizes = [2, 128], strides = [1, 1]} : vector<32x128xf32> to vector<2x128xf32>
    %cst_121 = arith.constant dense<0.000000e+00> : vector<2x128xf32>
    %566 = tpu.matmul %540, %33, %cst_121 {dimension_numbers = #tpu.dot_dimension_numbers<[1], [0], [0], [1], [0, 0, 1, 1], [], []>} : vector<2x32xbf16>, vector<32x128xbf16>, vector<2x128xf32> -> vector<2x128xf32>
    %567 = arith.addf %565, %566 : vector<2x128xf32>
    %568 = vector.extract_strided_slice %567 {offsets = [0, 0], sizes = [2, 96], strides = [1, 1]} : vector<2x128xf32> to vector<2x96xf32>
    %569 = arith.negf %568 : vector<2x96xf32>
    %570 = math.exp %569 : vector<2x96xf32>
    %cst_122 = arith.constant 1.000000e+00 : f32
    %571 = vector.broadcast %cst_122 : f32 to vector<2x96xf32>
    %572 = arith.addf %571, %570 : vector<2x96xf32>
    %573 = arith.divf %571, %572 : vector<2x96xf32>
    %574 = vector.extract_strided_slice %573 {offsets = [0, 0], sizes = [2, 32], strides = [1, 1]} : vector<2x96xf32> to vector<2x32xf32>
    %575 = vector.extract_strided_slice %573 {offsets = [0, 32], sizes = [2, 32], strides = [1, 1]} : vector<2x96xf32> to vector<2x32xf32>
    %576 = vector.extract_strided_slice %573 {offsets = [0, 64], sizes = [2, 32], strides = [1, 1]} : vector<2x96xf32> to vector<2x32xf32>
    %577 = vector.extract_strided_slice %567 {offsets = [0, 96], sizes = [2, 32], strides = [1, 1]} : vector<2x128xf32> to vector<2x32xf32>
    %578 = math.tanh %577 : vector<2x32xf32>
    %579 = arith.mulf %575, %537 : vector<2x32xf32>
    %580 = arith.mulf %574, %578 : vector<2x32xf32>
    %581 = arith.addf %579, %580 : vector<2x32xf32>
    %582 = math.tanh %581 : vector<2x32xf32>
    %583 = arith.mulf %576, %582 : vector<2x32xf32>
    %584 = arith.truncf %583 : vector<2x32xf32> to vector<2x32xbf16>
    %cst_123 = arith.constant dense<0.000000e+00> : vector<2x128xf32>
    %585 = tpu.matmul %584, %36, %cst_123 {dimension_numbers = #tpu.dot_dimension_numbers<[1], [0], [0], [1], [0, 0, 1, 1], [], []>} : vector<2x32xbf16>, vector<32x128xbf16>, vector<2x128xf32> -> vector<2x128xf32>
    %c8_124 = arith.constant 8 : index
    %c0_125 = arith.constant 0 : index
    %586 = vector.load %arg6[%c8_124, %c0_125] : memref<32x128xf32, #tpu.memory_space<vmem>>, vector<2x128xf32>
    tpu.vector_store %arg6[%c8_124, %c0_125], %585 {strides = array<i32>} : memref<32x128xf32, #tpu.memory_space<vmem>>, vector<2x128xf32>,
    %587 = vector.extract_strided_slice %51 {offsets = [24, 0], sizes = [2, 128], strides = [1, 1]} : vector<32x128xf32> to vector<2x128xf32>
    %cst_126 = arith.constant dense<0.000000e+00> : vector<2x128xf32>
    %588 = tpu.matmul %562, %32, %cst_126 {dimension_numbers = #tpu.dot_dimension_numbers<[1], [0], [0], [1], [0, 0, 1, 1], [], []>} : vector<2x32xbf16>, vector<32x128xbf16>, vector<2x128xf32> -> vector<2x128xf32>
    %589 = arith.addf %587, %588 : vector<2x128xf32>
    %590 = vector.extract_strided_slice %589 {offsets = [0, 0], sizes = [2, 96], strides = [1, 1]} : vector<2x128xf32> to vector<2x96xf32>
    %591 = arith.negf %590 : vector<2x96xf32>
    %592 = math.exp %591 : vector<2x96xf32>
    %cst_127 = arith.constant 1.000000e+00 : f32
    %593 = vector.broadcast %cst_127 : f32 to vector<2x96xf32>
    %594 = arith.addf %593, %592 : vector<2x96xf32>
    %595 = arith.divf %593, %594 : vector<2x96xf32>
    %596 = vector.extract_strided_slice %595 {offsets = [0, 0], sizes = [2, 32], strides = [1, 1]} : vector<2x96xf32> to vector<2x32xf32>
    %597 = vector.extract_strided_slice %595 {offsets = [0, 32], sizes = [2, 32], strides = [1, 1]} : vector<2x96xf32> to vector<2x32xf32>
    %598 = vector.extract_strided_slice %595 {offsets = [0, 64], sizes = [2, 32], strides = [1, 1]} : vector<2x96xf32> to vector<2x32xf32>
    %599 = vector.extract_strided_slice %589 {offsets = [0, 96], sizes = [2, 32], strides = [1, 1]} : vector<2x128xf32> to vector<2x32xf32>
    %600 = math.tanh %599 : vector<2x32xf32>
    %601 = arith.mulf %597, %559 : vector<2x32xf32>
    %602 = arith.mulf %596, %600 : vector<2x32xf32>
    %603 = arith.addf %601, %602 : vector<2x32xf32>
    %604 = math.tanh %603 : vector<2x32xf32>
    %605 = arith.mulf %598, %604 : vector<2x32xf32>
    %606 = arith.truncf %605 : vector<2x32xf32> to vector<2x32xbf16>
    %cst_128 = arith.constant dense<0.000000e+00> : vector<2x128xf32>
    %607 = tpu.matmul %606, %35, %cst_128 {dimension_numbers = #tpu.dot_dimension_numbers<[1], [0], [0], [1], [0, 0, 1, 1], [], []>} : vector<2x32xbf16>, vector<32x128xbf16>, vector<2x128xf32> -> vector<2x128xf32>
    %c24_129 = arith.constant 24 : index
    %c0_130 = arith.constant 0 : index
    %608 = vector.load %arg5[%c24_129, %c0_130] : memref<32x128xf32, #tpu.memory_space<vmem>>, vector<2x128xf32>
    tpu.vector_store %arg5[%c24_129, %c0_130], %607 {strides = array<i32>} : memref<32x128xf32, #tpu.memory_space<vmem>>, vector<2x128xf32>,
    %609 = vector.extract_strided_slice %56 {offsets = [6, 0], sizes = [2, 128], strides = [1, 1]} : vector<32x128xf32> to vector<2x128xf32>
    %cst_131 = arith.constant dense<0.000000e+00> : vector<2x128xf32>
    %610 = tpu.matmul %584, %33, %cst_131 {dimension_numbers = #tpu.dot_dimension_numbers<[1], [0], [0], [1], [0, 0, 1, 1], [], []>} : vector<2x32xbf16>, vector<32x128xbf16>, vector<2x128xf32> -> vector<2x128xf32>
    %611 = arith.addf %609, %610 : vector<2x128xf32>
    %612 = vector.extract_strided_slice %611 {offsets = [0, 0], sizes = [2, 96], strides = [1, 1]} : vector<2x128xf32> to vector<2x96xf32>
    %613 = arith.negf %612 : vector<2x96xf32>
    %614 = math.exp %613 : vector<2x96xf32>
    %cst_132 = arith.constant 1.000000e+00 : f32
    %615 = vector.broadcast %cst_132 : f32 to vector<2x96xf32>
    %616 = arith.addf %615, %614 : vector<2x96xf32>
    %617 = arith.divf %615, %616 : vector<2x96xf32>
    %618 = vector.extract_strided_slice %617 {offsets = [0, 0], sizes = [2, 32], strides = [1, 1]} : vector<2x96xf32> to vector<2x32xf32>
    %619 = vector.extract_strided_slice %617 {offsets = [0, 32], sizes = [2, 32], strides = [1, 1]} : vector<2x96xf32> to vector<2x32xf32>
    %620 = vector.extract_strided_slice %617 {offsets = [0, 64], sizes = [2, 32], strides = [1, 1]} : vector<2x96xf32> to vector<2x32xf32>
    %621 = vector.extract_strided_slice %611 {offsets = [0, 96], sizes = [2, 32], strides = [1, 1]} : vector<2x128xf32> to vector<2x32xf32>
    %622 = math.tanh %621 : vector<2x32xf32>
    %623 = arith.mulf %619, %581 : vector<2x32xf32>
    %624 = arith.mulf %618, %622 : vector<2x32xf32>
    %625 = arith.addf %623, %624 : vector<2x32xf32>
    %626 = math.tanh %625 : vector<2x32xf32>
    %627 = arith.mulf %620, %626 : vector<2x32xf32>
    %628 = arith.truncf %627 : vector<2x32xf32> to vector<2x32xbf16>
    %cst_133 = arith.constant dense<0.000000e+00> : vector<2x128xf32>
    %629 = tpu.matmul %628, %36, %cst_133 {dimension_numbers = #tpu.dot_dimension_numbers<[1], [0], [0], [1], [0, 0, 1, 1], [], []>} : vector<2x32xbf16>, vector<32x128xbf16>, vector<2x128xf32> -> vector<2x128xf32>
    %c6_134 = arith.constant 6 : index
    %c0_135 = arith.constant 0 : index
    %630 = vector.load %arg6[%c6_134, %c0_135] : memref<32x128xf32, #tpu.memory_space<vmem>>, vector<2x128xf32>
    tpu.vector_store %arg6[%c6_134, %c0_135], %629 {strides = array<i32>} : memref<32x128xf32, #tpu.memory_space<vmem>>, vector<2x128xf32>,
    %631 = vector.extract_strided_slice %51 {offsets = [26, 0], sizes = [2, 128], strides = [1, 1]} : vector<32x128xf32> to vector<2x128xf32>
    %cst_136 = arith.constant dense<0.000000e+00> : vector<2x128xf32>
    %632 = tpu.matmul %606, %32, %cst_136 {dimension_numbers = #tpu.dot_dimension_numbers<[1], [0], [0], [1], [0, 0, 1, 1], [], []>} : vector<2x32xbf16>, vector<32x128xbf16>, vector<2x128xf32> -> vector<2x128xf32>
    %633 = arith.addf %631, %632 : vector<2x128xf32>
    %634 = vector.extract_strided_slice %633 {offsets = [0, 0], sizes = [2, 96], strides = [1, 1]} : vector<2x128xf32> to vector<2x96xf32>
    %635 = arith.negf %634 : vector<2x96xf32>
    %636 = math.exp %635 : vector<2x96xf32>
    %cst_137 = arith.constant 1.000000e+00 : f32
    %637 = vector.broadcast %cst_137 : f32 to vector<2x96xf32>
    %638 = arith.addf %637, %636 : vector<2x96xf32>
    %639 = arith.divf %637, %638 : vector<2x96xf32>
    %640 = vector.extract_strided_slice %639 {offsets = [0, 0], sizes = [2, 32], strides = [1, 1]} : vector<2x96xf32> to vector<2x32xf32>
    %641 = vector.extract_strided_slice %639 {offsets = [0, 32], sizes = [2, 32], strides = [1, 1]} : vector<2x96xf32> to vector<2x32xf32>
    %642 = vector.extract_strided_slice %639 {offsets = [0, 64], sizes = [2, 32], strides = [1, 1]} : vector<2x96xf32> to vector<2x32xf32>
    %643 = vector.extract_strided_slice %633 {offsets = [0, 96], sizes = [2, 32], strides = [1, 1]} : vector<2x128xf32> to vector<2x32xf32>
    %644 = math.tanh %643 : vector<2x32xf32>
    %645 = arith.mulf %641, %603 : vector<2x32xf32>
    %646 = arith.mulf %640, %644 : vector<2x32xf32>
    %647 = arith.addf %645, %646 : vector<2x32xf32>
    %648 = math.tanh %647 : vector<2x32xf32>
    %649 = arith.mulf %642, %648 : vector<2x32xf32>
    %650 = arith.truncf %649 : vector<2x32xf32> to vector<2x32xbf16>
    %cst_138 = arith.constant dense<0.000000e+00> : vector<2x128xf32>
    %651 = tpu.matmul %650, %35, %cst_138 {dimension_numbers = #tpu.dot_dimension_numbers<[1], [0], [0], [1], [0, 0, 1, 1], [], []>} : vector<2x32xbf16>, vector<32x128xbf16>, vector<2x128xf32> -> vector<2x128xf32>
    %c26_139 = arith.constant 26 : index
    %c0_140 = arith.constant 0 : index
    %652 = vector.load %arg5[%c26_139, %c0_140] : memref<32x128xf32, #tpu.memory_space<vmem>>, vector<2x128xf32>
    tpu.vector_store %arg5[%c26_139, %c0_140], %651 {strides = array<i32>} : memref<32x128xf32, #tpu.memory_space<vmem>>, vector<2x128xf32>,
    %653 = vector.extract_strided_slice %56 {offsets = [4, 0], sizes = [2, 128], strides = [1, 1]} : vector<32x128xf32> to vector<2x128xf32>
    %cst_141 = arith.constant dense<0.000000e+00> : vector<2x128xf32>
    %654 = tpu.matmul %628, %33, %cst_141 {dimension_numbers = #tpu.dot_dimension_numbers<[1], [0], [0], [1], [0, 0, 1, 1], [], []>} : vector<2x32xbf16>, vector<32x128xbf16>, vector<2x128xf32> -> vector<2x128xf32>
    %655 = arith.addf %653, %654 : vector<2x128xf32>
    %656 = vector.extract_strided_slice %655 {offsets = [0, 0], sizes = [2, 96], strides = [1, 1]} : vector<2x128xf32> to vector<2x96xf32>
    %657 = arith.negf %656 : vector<2x96xf32>
    %658 = math.exp %657 : vector<2x96xf32>
    %cst_142 = arith.constant 1.000000e+00 : f32
    %659 = vector.broadcast %cst_142 : f32 to vector<2x96xf32>
    %660 = arith.addf %659, %658 : vector<2x96xf32>
    %661 = arith.divf %659, %660 : vector<2x96xf32>
    %662 = vector.extract_strided_slice %661 {offsets = [0, 0], sizes = [2, 32], strides = [1, 1]} : vector<2x96xf32> to vector<2x32xf32>
    %663 = vector.extract_strided_slice %661 {offsets = [0, 32], sizes = [2, 32], strides = [1, 1]} : vector<2x96xf32> to vector<2x32xf32>
    %664 = vector.extract_strided_slice %661 {offsets = [0, 64], sizes = [2, 32], strides = [1, 1]} : vector<2x96xf32> to vector<2x32xf32>
    %665 = vector.extract_strided_slice %655 {offsets = [0, 96], sizes = [2, 32], strides = [1, 1]} : vector<2x128xf32> to vector<2x32xf32>
    %666 = math.tanh %665 : vector<2x32xf32>
    %667 = arith.mulf %663, %625 : vector<2x32xf32>
    %668 = arith.mulf %662, %666 : vector<2x32xf32>
    %669 = arith.addf %667, %668 : vector<2x32xf32>
    %670 = math.tanh %669 : vector<2x32xf32>
    %671 = arith.mulf %664, %670 : vector<2x32xf32>
    %672 = arith.truncf %671 : vector<2x32xf32> to vector<2x32xbf16>
    %cst_143 = arith.constant dense<0.000000e+00> : vector<2x128xf32>
    %673 = tpu.matmul %672, %36, %cst_143 {dimension_numbers = #tpu.dot_dimension_numbers<[1], [0], [0], [1], [0, 0, 1, 1], [], []>} : vector<2x32xbf16>, vector<32x128xbf16>, vector<2x128xf32> -> vector<2x128xf32>
    %c4_144 = arith.constant 4 : index
    %c0_145 = arith.constant 0 : index
    %674 = vector.load %arg6[%c4_144, %c0_145] : memref<32x128xf32, #tpu.memory_space<vmem>>, vector<2x128xf32>
    tpu.vector_store %arg6[%c4_144, %c0_145], %673 {strides = array<i32>} : memref<32x128xf32, #tpu.memory_space<vmem>>, vector<2x128xf32>,
    %675 = vector.extract_strided_slice %51 {offsets = [28, 0], sizes = [2, 128], strides = [1, 1]} : vector<32x128xf32> to vector<2x128xf32>
    %cst_146 = arith.constant dense<0.000000e+00> : vector<2x128xf32>
    %676 = tpu.matmul %650, %32, %cst_146 {dimension_numbers = #tpu.dot_dimension_numbers<[1], [0], [0], [1], [0, 0, 1, 1], [], []>} : vector<2x32xbf16>, vector<32x128xbf16>, vector<2x128xf32> -> vector<2x128xf32>
    %677 = arith.addf %675, %676 : vector<2x128xf32>
    %678 = vector.extract_strided_slice %677 {offsets = [0, 0], sizes = [2, 96], strides = [1, 1]} : vector<2x128xf32> to vector<2x96xf32>
    %679 = arith.negf %678 : vector<2x96xf32>
    %680 = math.exp %679 : vector<2x96xf32>
    %cst_147 = arith.constant 1.000000e+00 : f32
    %681 = vector.broadcast %cst_147 : f32 to vector<2x96xf32>
    %682 = arith.addf %681, %680 : vector<2x96xf32>
    %683 = arith.divf %681, %682 : vector<2x96xf32>
    %684 = vector.extract_strided_slice %683 {offsets = [0, 0], sizes = [2, 32], strides = [1, 1]} : vector<2x96xf32> to vector<2x32xf32>
    %685 = vector.extract_strided_slice %683 {offsets = [0, 32], sizes = [2, 32], strides = [1, 1]} : vector<2x96xf32> to vector<2x32xf32>
    %686 = vector.extract_strided_slice %683 {offsets = [0, 64], sizes = [2, 32], strides = [1, 1]} : vector<2x96xf32> to vector<2x32xf32>
    %687 = vector.extract_strided_slice %677 {offsets = [0, 96], sizes = [2, 32], strides = [1, 1]} : vector<2x128xf32> to vector<2x32xf32>
    %688 = math.tanh %687 : vector<2x32xf32>
    %689 = arith.mulf %685, %647 : vector<2x32xf32>
    %690 = arith.mulf %684, %688 : vector<2x32xf32>
    %691 = arith.addf %689, %690 : vector<2x32xf32>
    %692 = math.tanh %691 : vector<2x32xf32>
    %693 = arith.mulf %686, %692 : vector<2x32xf32>
    %694 = arith.truncf %693 : vector<2x32xf32> to vector<2x32xbf16>
    %cst_148 = arith.constant dense<0.000000e+00> : vector<2x128xf32>
    %695 = tpu.matmul %694, %35, %cst_148 {dimension_numbers = #tpu.dot_dimension_numbers<[1], [0], [0], [1], [0, 0, 1, 1], [], []>} : vector<2x32xbf16>, vector<32x128xbf16>, vector<2x128xf32> -> vector<2x128xf32>
    %c28_149 = arith.constant 28 : index
    %c0_150 = arith.constant 0 : index
    %696 = vector.load %arg5[%c28_149, %c0_150] : memref<32x128xf32, #tpu.memory_space<vmem>>, vector<2x128xf32>
    tpu.vector_store %arg5[%c28_149, %c0_150], %695 {strides = array<i32>} : memref<32x128xf32, #tpu.memory_space<vmem>>, vector<2x128xf32>,
    %697 = vector.extract_strided_slice %56 {offsets = [2, 0], sizes = [2, 128], strides = [1, 1]} : vector<32x128xf32> to vector<2x128xf32>
    %cst_151 = arith.constant dense<0.000000e+00> : vector<2x128xf32>
    %698 = tpu.matmul %672, %33, %cst_151 {dimension_numbers = #tpu.dot_dimension_numbers<[1], [0], [0], [1], [0, 0, 1, 1], [], []>} : vector<2x32xbf16>, vector<32x128xbf16>, vector<2x128xf32> -> vector<2x128xf32>
    %699 = arith.addf %697, %698 : vector<2x128xf32>
    %700 = vector.extract_strided_slice %699 {offsets = [0, 0], sizes = [2, 96], strides = [1, 1]} : vector<2x128xf32> to vector<2x96xf32>
    %701 = arith.negf %700 : vector<2x96xf32>
    %702 = math.exp %701 : vector<2x96xf32>
    %cst_152 = arith.constant 1.000000e+00 : f32
    %703 = vector.broadcast %cst_152 : f32 to vector<2x96xf32>
    %704 = arith.addf %703, %702 : vector<2x96xf32>
    %705 = arith.divf %703, %704 : vector<2x96xf32>
    %706 = vector.extract_strided_slice %705 {offsets = [0, 0], sizes = [2, 32], strides = [1, 1]} : vector<2x96xf32> to vector<2x32xf32>
    %707 = vector.extract_strided_slice %705 {offsets = [0, 32], sizes = [2, 32], strides = [1, 1]} : vector<2x96xf32> to vector<2x32xf32>
    %708 = vector.extract_strided_slice %705 {offsets = [0, 64], sizes = [2, 32], strides = [1, 1]} : vector<2x96xf32> to vector<2x32xf32>
    %709 = vector.extract_strided_slice %699 {offsets = [0, 96], sizes = [2, 32], strides = [1, 1]} : vector<2x128xf32> to vector<2x32xf32>
    %710 = math.tanh %709 : vector<2x32xf32>
    %711 = arith.mulf %707, %669 : vector<2x32xf32>
    %712 = arith.mulf %706, %710 : vector<2x32xf32>
    %713 = arith.addf %711, %712 : vector<2x32xf32>
    %714 = math.tanh %713 : vector<2x32xf32>
    %715 = arith.mulf %708, %714 : vector<2x32xf32>
    %716 = arith.truncf %715 : vector<2x32xf32> to vector<2x32xbf16>
    %cst_153 = arith.constant dense<0.000000e+00> : vector<2x128xf32>
    %717 = tpu.matmul %716, %36, %cst_153 {dimension_numbers = #tpu.dot_dimension_numbers<[1], [0], [0], [1], [0, 0, 1, 1], [], []>} : vector<2x32xbf16>, vector<32x128xbf16>, vector<2x128xf32> -> vector<2x128xf32>
    %c2_154 = arith.constant 2 : index
    %c0_155 = arith.constant 0 : index
    %718 = vector.load %arg6[%c2_154, %c0_155] : memref<32x128xf32, #tpu.memory_space<vmem>>, vector<2x128xf32>
    tpu.vector_store %arg6[%c2_154, %c0_155], %717 {strides = array<i32>} : memref<32x128xf32, #tpu.memory_space<vmem>>, vector<2x128xf32>,
    %719 = vector.extract_strided_slice %51 {offsets = [30, 0], sizes = [2, 128], strides = [1, 1]} : vector<32x128xf32> to vector<2x128xf32>
    %cst_156 = arith.constant dense<0.000000e+00> : vector<2x128xf32>
    %720 = tpu.matmul %694, %32, %cst_156 {dimension_numbers = #tpu.dot_dimension_numbers<[1], [0], [0], [1], [0, 0, 1, 1], [], []>} : vector<2x32xbf16>, vector<32x128xbf16>, vector<2x128xf32> -> vector<2x128xf32>
    %721 = arith.addf %719, %720 : vector<2x128xf32>
    %722 = vector.extract_strided_slice %721 {offsets = [0, 0], sizes = [2, 96], strides = [1, 1]} : vector<2x128xf32> to vector<2x96xf32>
    %723 = arith.negf %722 : vector<2x96xf32>
    %724 = math.exp %723 : vector<2x96xf32>
    %cst_157 = arith.constant 1.000000e+00 : f32
    %725 = vector.broadcast %cst_157 : f32 to vector<2x96xf32>
    %726 = arith.addf %725, %724 : vector<2x96xf32>
    %727 = arith.divf %725, %726 : vector<2x96xf32>
    %728 = vector.extract_strided_slice %727 {offsets = [0, 0], sizes = [2, 32], strides = [1, 1]} : vector<2x96xf32> to vector<2x32xf32>
    %729 = vector.extract_strided_slice %727 {offsets = [0, 32], sizes = [2, 32], strides = [1, 1]} : vector<2x96xf32> to vector<2x32xf32>
    %730 = vector.extract_strided_slice %727 {offsets = [0, 64], sizes = [2, 32], strides = [1, 1]} : vector<2x96xf32> to vector<2x32xf32>
    %731 = vector.extract_strided_slice %721 {offsets = [0, 96], sizes = [2, 32], strides = [1, 1]} : vector<2x128xf32> to vector<2x32xf32>
    %732 = math.tanh %731 : vector<2x32xf32>
    %733 = arith.mulf %729, %691 : vector<2x32xf32>
    %734 = arith.mulf %728, %732 : vector<2x32xf32>
    %735 = arith.addf %733, %734 : vector<2x32xf32>
    %736 = math.tanh %735 : vector<2x32xf32>
    %737 = arith.mulf %730, %736 : vector<2x32xf32>
    %738 = arith.truncf %737 : vector<2x32xf32> to vector<2x32xbf16>
    %cst_158 = arith.constant dense<0.000000e+00> : vector<2x128xf32>
    %739 = tpu.matmul %738, %35, %cst_158 {dimension_numbers = #tpu.dot_dimension_numbers<[1], [0], [0], [1], [0, 0, 1, 1], [], []>} : vector<2x32xbf16>, vector<32x128xbf16>, vector<2x128xf32> -> vector<2x128xf32>
    %c30_159 = arith.constant 30 : index
    %c0_160 = arith.constant 0 : index
    %740 = vector.load %arg5[%c30_159, %c0_160] : memref<32x128xf32, #tpu.memory_space<vmem>>, vector<2x128xf32>
    tpu.vector_store %arg5[%c30_159, %c0_160], %739 {strides = array<i32>} : memref<32x128xf32, #tpu.memory_space<vmem>>, vector<2x128xf32>,
    %741 = vector.extract_strided_slice %56 {offsets = [0, 0], sizes = [2, 128], strides = [1, 1]} : vector<32x128xf32> to vector<2x128xf32>
    %cst_161 = arith.constant dense<0.000000e+00> : vector<2x128xf32>
    %742 = tpu.matmul %716, %33, %cst_161 {dimension_numbers = #tpu.dot_dimension_numbers<[1], [0], [0], [1], [0, 0, 1, 1], [], []>} : vector<2x32xbf16>, vector<32x128xbf16>, vector<2x128xf32> -> vector<2x128xf32>
    %743 = arith.addf %741, %742 : vector<2x128xf32>
    %744 = vector.extract_strided_slice %743 {offsets = [0, 0], sizes = [2, 96], strides = [1, 1]} : vector<2x128xf32> to vector<2x96xf32>
    %745 = arith.negf %744 : vector<2x96xf32>
    %746 = math.exp %745 : vector<2x96xf32>
    %cst_162 = arith.constant 1.000000e+00 : f32
    %747 = vector.broadcast %cst_162 : f32 to vector<2x96xf32>
    %748 = arith.addf %747, %746 : vector<2x96xf32>
    %749 = arith.divf %747, %748 : vector<2x96xf32>
    %750 = vector.extract_strided_slice %749 {offsets = [0, 0], sizes = [2, 32], strides = [1, 1]} : vector<2x96xf32> to vector<2x32xf32>
    %751 = vector.extract_strided_slice %749 {offsets = [0, 32], sizes = [2, 32], strides = [1, 1]} : vector<2x96xf32> to vector<2x32xf32>
    %752 = vector.extract_strided_slice %749 {offsets = [0, 64], sizes = [2, 32], strides = [1, 1]} : vector<2x96xf32> to vector<2x32xf32>
    %753 = vector.extract_strided_slice %743 {offsets = [0, 96], sizes = [2, 32], strides = [1, 1]} : vector<2x128xf32> to vector<2x32xf32>
    %754 = math.tanh %753 : vector<2x32xf32>
    %755 = arith.mulf %751, %713 : vector<2x32xf32>
    %756 = arith.mulf %750, %754 : vector<2x32xf32>
    %757 = arith.addf %755, %756 : vector<2x32xf32>
    %758 = math.tanh %757 : vector<2x32xf32>
    %759 = arith.mulf %752, %758 : vector<2x32xf32>
    %760 = arith.truncf %759 : vector<2x32xf32> to vector<2x32xbf16>
    %cst_163 = arith.constant dense<0.000000e+00> : vector<2x128xf32>
    %761 = tpu.matmul %760, %36, %cst_163 {dimension_numbers = #tpu.dot_dimension_numbers<[1], [0], [0], [1], [0, 0, 1, 1], [], []>} : vector<2x32xbf16>, vector<32x128xbf16>, vector<2x128xf32> -> vector<2x128xf32>
    %c0_164 = arith.constant 0 : index
    %c0_165 = arith.constant 0 : index
    %762 = vector.load %arg6[%c0_164, %c0_165] : memref<32x128xf32, #tpu.memory_space<vmem>>, vector<2x128xf32>
    tpu.vector_store %arg6[%c0_164, %c0_165], %761 {strides = array<i32>} : memref<32x128xf32, #tpu.memory_space<vmem>>, vector<2x128xf32>,
    %c0_166 = arith.constant 0 : index
    %c0_167 = arith.constant 0 : index
    %763 = vector.load %arg5[%c0_166, %c0_167] : memref<32x128xf32, #tpu.memory_space<vmem>>, vector<2x128xf32>
    %c0_168 = arith.constant 0 : index
    %c0_169 = arith.constant 0 : index
    %764 = vector.load %arg6[%c0_168, %c0_169] : memref<32x128xf32, #tpu.memory_space<vmem>>, vector<2x128xf32>
    %765 = arith.addf %763, %764 : vector<2x128xf32>
    %766 = vector.broadcast %42 : vector<1x128xf32> to vector<2x128xf32>
    %767 = arith.addf %765, %766 : vector<2x128xf32>
    %cst_170 = arith.constant dense<0.000000e+00> : vector<2x128xf32>
    %768 = tpu.matmul %58, %34, %cst_170 {dimension_numbers = #tpu.dot_dimension_numbers<[1], [0], [0], [1], [0, 0, 1, 1], [], []>} : vector<2x32xbf16>, vector<32x128xbf16>, vector<2x128xf32> -> vector<2x128xf32>
    %769 = arith.addf %767, %768 : vector<2x128xf32>
    %770 = vector.extract_strided_slice %769 {offsets = [0, 0], sizes = [2, 96], strides = [1, 1]} : vector<2x128xf32> to vector<2x96xf32>
    %771 = arith.negf %770 : vector<2x96xf32>
    %772 = math.exp %771 : vector<2x96xf32>
    %cst_171 = arith.constant 1.000000e+00 : f32
    %773 = vector.broadcast %cst_171 : f32 to vector<2x96xf32>
    %774 = arith.addf %773, %772 : vector<2x96xf32>
    %775 = arith.divf %773, %774 : vector<2x96xf32>
    %776 = vector.extract_strided_slice %775 {offsets = [0, 0], sizes = [2, 32], strides = [1, 1]} : vector<2x96xf32> to vector<2x32xf32>
    %777 = vector.extract_strided_slice %775 {offsets = [0, 32], sizes = [2, 32], strides = [1, 1]} : vector<2x96xf32> to vector<2x32xf32>
    %778 = vector.extract_strided_slice %775 {offsets = [0, 64], sizes = [2, 32], strides = [1, 1]} : vector<2x96xf32> to vector<2x32xf32>
    %779 = vector.extract_strided_slice %769 {offsets = [0, 96], sizes = [2, 32], strides = [1, 1]} : vector<2x128xf32> to vector<2x32xf32>
    %780 = math.tanh %779 : vector<2x32xf32>
    %781 = arith.mulf %777, %57 : vector<2x32xf32>
    %782 = arith.mulf %776, %780 : vector<2x32xf32>
    %783 = arith.addf %781, %782 : vector<2x32xf32>
    %784 = math.tanh %783 : vector<2x32xf32>
    %785 = arith.mulf %778, %784 : vector<2x32xf32>
    %786 = arith.truncf %785 : vector<2x32xf32> to vector<2x32xbf16>
    %c2_172 = arith.constant 2 : index
    %c0_173 = arith.constant 0 : index
    %787 = vector.load %arg5[%c2_172, %c0_173] : memref<32x128xf32, #tpu.memory_space<vmem>>, vector<2x128xf32>
    %c2_174 = arith.constant 2 : index
    %c0_175 = arith.constant 0 : index
    %788 = vector.load %arg6[%c2_174, %c0_175] : memref<32x128xf32, #tpu.memory_space<vmem>>, vector<2x128xf32>
    %789 = arith.addf %787, %788 : vector<2x128xf32>
    %790 = vector.broadcast %42 : vector<1x128xf32> to vector<2x128xf32>
    %791 = arith.addf %789, %790 : vector<2x128xf32>
    %cst_176 = arith.constant dense<0.000000e+00> : vector<2x128xf32>
    %792 = tpu.matmul %786, %34, %cst_176 {dimension_numbers = #tpu.dot_dimension_numbers<[1], [0], [0], [1], [0, 0, 1, 1], [], []>} : vector<2x32xbf16>, vector<32x128xbf16>, vector<2x128xf32> -> vector<2x128xf32>
    %793 = arith.addf %791, %792 : vector<2x128xf32>
    %794 = vector.extract_strided_slice %793 {offsets = [0, 0], sizes = [2, 96], strides = [1, 1]} : vector<2x128xf32> to vector<2x96xf32>
    %795 = arith.negf %794 : vector<2x96xf32>
    %796 = math.exp %795 : vector<2x96xf32>
    %cst_177 = arith.constant 1.000000e+00 : f32
    %797 = vector.broadcast %cst_177 : f32 to vector<2x96xf32>
    %798 = arith.addf %797, %796 : vector<2x96xf32>
    %799 = arith.divf %797, %798 : vector<2x96xf32>
    %800 = vector.extract_strided_slice %799 {offsets = [0, 0], sizes = [2, 32], strides = [1, 1]} : vector<2x96xf32> to vector<2x32xf32>
    %801 = vector.extract_strided_slice %799 {offsets = [0, 32], sizes = [2, 32], strides = [1, 1]} : vector<2x96xf32> to vector<2x32xf32>
    %802 = vector.extract_strided_slice %799 {offsets = [0, 64], sizes = [2, 32], strides = [1, 1]} : vector<2x96xf32> to vector<2x32xf32>
    %803 = vector.extract_strided_slice %793 {offsets = [0, 96], sizes = [2, 32], strides = [1, 1]} : vector<2x128xf32> to vector<2x32xf32>
    %804 = math.tanh %803 : vector<2x32xf32>
    %805 = arith.mulf %801, %783 : vector<2x32xf32>
    %806 = arith.mulf %800, %804 : vector<2x32xf32>
    %807 = arith.addf %805, %806 : vector<2x32xf32>
    %808 = math.tanh %807 : vector<2x32xf32>
    %809 = arith.mulf %802, %808 : vector<2x32xf32>
    %810 = arith.truncf %809 : vector<2x32xf32> to vector<2x32xbf16>
    %c4_178 = arith.constant 4 : index
    %c0_179 = arith.constant 0 : index
    %811 = vector.load %arg5[%c4_178, %c0_179] : memref<32x128xf32, #tpu.memory_space<vmem>>, vector<2x128xf32>
    %c4_180 = arith.constant 4 : index
    %c0_181 = arith.constant 0 : index
    %812 = vector.load %arg6[%c4_180, %c0_181] : memref<32x128xf32, #tpu.memory_space<vmem>>, vector<2x128xf32>
    %813 = arith.addf %811, %812 : vector<2x128xf32>
    %814 = vector.broadcast %42 : vector<1x128xf32> to vector<2x128xf32>
    %815 = arith.addf %813, %814 : vector<2x128xf32>
    %cst_182 = arith.constant dense<0.000000e+00> : vector<2x128xf32>
    %816 = tpu.matmul %810, %34, %cst_182 {dimension_numbers = #tpu.dot_dimension_numbers<[1], [0], [0], [1], [0, 0, 1, 1], [], []>} : vector<2x32xbf16>, vector<32x128xbf16>, vector<2x128xf32> -> vector<2x128xf32>
    %817 = arith.addf %815, %816 : vector<2x128xf32>
    %818 = vector.extract_strided_slice %817 {offsets = [0, 0], sizes = [2, 96], strides = [1, 1]} : vector<2x128xf32> to vector<2x96xf32>
    %819 = arith.negf %818 : vector<2x96xf32>
    %820 = math.exp %819 : vector<2x96xf32>
    %cst_183 = arith.constant 1.000000e+00 : f32
    %821 = vector.broadcast %cst_183 : f32 to vector<2x96xf32>
    %822 = arith.addf %821, %820 : vector<2x96xf32>
    %823 = arith.divf %821, %822 : vector<2x96xf32>
    %824 = vector.extract_strided_slice %823 {offsets = [0, 0], sizes = [2, 32], strides = [1, 1]} : vector<2x96xf32> to vector<2x32xf32>
    %825 = vector.extract_strided_slice %823 {offsets = [0, 32], sizes = [2, 32], strides = [1, 1]} : vector<2x96xf32> to vector<2x32xf32>
    %826 = vector.extract_strided_slice %823 {offsets = [0, 64], sizes = [2, 32], strides = [1, 1]} : vector<2x96xf32> to vector<2x32xf32>
    %827 = vector.extract_strided_slice %817 {offsets = [0, 96], sizes = [2, 32], strides = [1, 1]} : vector<2x128xf32> to vector<2x32xf32>
    %828 = math.tanh %827 : vector<2x32xf32>
    %829 = arith.mulf %825, %807 : vector<2x32xf32>
    %830 = arith.mulf %824, %828 : vector<2x32xf32>
    %831 = arith.addf %829, %830 : vector<2x32xf32>
    %832 = math.tanh %831 : vector<2x32xf32>
    %833 = arith.mulf %826, %832 : vector<2x32xf32>
    %834 = arith.truncf %833 : vector<2x32xf32> to vector<2x32xbf16>
    %c6_184 = arith.constant 6 : index
    %c0_185 = arith.constant 0 : index
    %835 = vector.load %arg5[%c6_184, %c0_185] : memref<32x128xf32, #tpu.memory_space<vmem>>, vector<2x128xf32>
    %c6_186 = arith.constant 6 : index
    %c0_187 = arith.constant 0 : index
    %836 = vector.load %arg6[%c6_186, %c0_187] : memref<32x128xf32, #tpu.memory_space<vmem>>, vector<2x128xf32>
    %837 = arith.addf %835, %836 : vector<2x128xf32>
    %838 = vector.broadcast %42 : vector<1x128xf32> to vector<2x128xf32>
    %839 = arith.addf %837, %838 : vector<2x128xf32>
    %cst_188 = arith.constant dense<0.000000e+00> : vector<2x128xf32>
    %840 = tpu.matmul %834, %34, %cst_188 {dimension_numbers = #tpu.dot_dimension_numbers<[1], [0], [0], [1], [0, 0, 1, 1], [], []>} : vector<2x32xbf16>, vector<32x128xbf16>, vector<2x128xf32> -> vector<2x128xf32>
    %841 = arith.addf %839, %840 : vector<2x128xf32>
    %842 = vector.extract_strided_slice %841 {offsets = [0, 0], sizes = [2, 96], strides = [1, 1]} : vector<2x128xf32> to vector<2x96xf32>
    %843 = arith.negf %842 : vector<2x96xf32>
    %844 = math.exp %843 : vector<2x96xf32>
    %cst_189 = arith.constant 1.000000e+00 : f32
    %845 = vector.broadcast %cst_189 : f32 to vector<2x96xf32>
    %846 = arith.addf %845, %844 : vector<2x96xf32>
    %847 = arith.divf %845, %846 : vector<2x96xf32>
    %848 = vector.extract_strided_slice %847 {offsets = [0, 0], sizes = [2, 32], strides = [1, 1]} : vector<2x96xf32> to vector<2x32xf32>
    %849 = vector.extract_strided_slice %847 {offsets = [0, 32], sizes = [2, 32], strides = [1, 1]} : vector<2x96xf32> to vector<2x32xf32>
    %850 = vector.extract_strided_slice %847 {offsets = [0, 64], sizes = [2, 32], strides = [1, 1]} : vector<2x96xf32> to vector<2x32xf32>
    %851 = vector.extract_strided_slice %841 {offsets = [0, 96], sizes = [2, 32], strides = [1, 1]} : vector<2x128xf32> to vector<2x32xf32>
    %852 = math.tanh %851 : vector<2x32xf32>
    %853 = arith.mulf %849, %831 : vector<2x32xf32>
    %854 = arith.mulf %848, %852 : vector<2x32xf32>
    %855 = arith.addf %853, %854 : vector<2x32xf32>
    %856 = math.tanh %855 : vector<2x32xf32>
    %857 = arith.mulf %850, %856 : vector<2x32xf32>
    %858 = arith.truncf %857 : vector<2x32xf32> to vector<2x32xbf16>
    %c8_190 = arith.constant 8 : index
    %c0_191 = arith.constant 0 : index
    %859 = vector.load %arg5[%c8_190, %c0_191] : memref<32x128xf32, #tpu.memory_space<vmem>>, vector<2x128xf32>
    %c8_192 = arith.constant 8 : index
    %c0_193 = arith.constant 0 : index
    %860 = vector.load %arg6[%c8_192, %c0_193] : memref<32x128xf32, #tpu.memory_space<vmem>>, vector<2x128xf32>
    %861 = arith.addf %859, %860 : vector<2x128xf32>
    %862 = vector.broadcast %42 : vector<1x128xf32> to vector<2x128xf32>
    %863 = arith.addf %861, %862 : vector<2x128xf32>
    %cst_194 = arith.constant dense<0.000000e+00> : vector<2x128xf32>
    %864 = tpu.matmul %858, %34, %cst_194 {dimension_numbers = #tpu.dot_dimension_numbers<[1], [0], [0], [1], [0, 0, 1, 1], [], []>} : vector<2x32xbf16>, vector<32x128xbf16>, vector<2x128xf32> -> vector<2x128xf32>
    %865 = arith.addf %863, %864 : vector<2x128xf32>
    %866 = vector.extract_strided_slice %865 {offsets = [0, 0], sizes = [2, 96], strides = [1, 1]} : vector<2x128xf32> to vector<2x96xf32>
    %867 = arith.negf %866 : vector<2x96xf32>
    %868 = math.exp %867 : vector<2x96xf32>
    %cst_195 = arith.constant 1.000000e+00 : f32
    %869 = vector.broadcast %cst_195 : f32 to vector<2x96xf32>
    %870 = arith.addf %869, %868 : vector<2x96xf32>
    %871 = arith.divf %869, %870 : vector<2x96xf32>
    %872 = vector.extract_strided_slice %871 {offsets = [0, 0], sizes = [2, 32], strides = [1, 1]} : vector<2x96xf32> to vector<2x32xf32>
    %873 = vector.extract_strided_slice %871 {offsets = [0, 32], sizes = [2, 32], strides = [1, 1]} : vector<2x96xf32> to vector<2x32xf32>
    %874 = vector.extract_strided_slice %871 {offsets = [0, 64], sizes = [2, 32], strides = [1, 1]} : vector<2x96xf32> to vector<2x32xf32>
    %875 = vector.extract_strided_slice %865 {offsets = [0, 96], sizes = [2, 32], strides = [1, 1]} : vector<2x128xf32> to vector<2x32xf32>
    %876 = math.tanh %875 : vector<2x32xf32>
    %877 = arith.mulf %873, %855 : vector<2x32xf32>
    %878 = arith.mulf %872, %876 : vector<2x32xf32>
    %879 = arith.addf %877, %878 : vector<2x32xf32>
    %880 = math.tanh %879 : vector<2x32xf32>
    %881 = arith.mulf %874, %880 : vector<2x32xf32>
    %882 = arith.truncf %881 : vector<2x32xf32> to vector<2x32xbf16>
    %c10_196 = arith.constant 10 : index
    %c0_197 = arith.constant 0 : index
    %883 = vector.load %arg5[%c10_196, %c0_197] : memref<32x128xf32, #tpu.memory_space<vmem>>, vector<2x128xf32>
    %c10_198 = arith.constant 10 : index
    %c0_199 = arith.constant 0 : index
    %884 = vector.load %arg6[%c10_198, %c0_199] : memref<32x128xf32, #tpu.memory_space<vmem>>, vector<2x128xf32>
    %885 = arith.addf %883, %884 : vector<2x128xf32>
    %886 = vector.broadcast %42 : vector<1x128xf32> to vector<2x128xf32>
    %887 = arith.addf %885, %886 : vector<2x128xf32>
    %cst_200 = arith.constant dense<0.000000e+00> : vector<2x128xf32>
    %888 = tpu.matmul %882, %34, %cst_200 {dimension_numbers = #tpu.dot_dimension_numbers<[1], [0], [0], [1], [0, 0, 1, 1], [], []>} : vector<2x32xbf16>, vector<32x128xbf16>, vector<2x128xf32> -> vector<2x128xf32>
    %889 = arith.addf %887, %888 : vector<2x128xf32>
    %890 = vector.extract_strided_slice %889 {offsets = [0, 0], sizes = [2, 96], strides = [1, 1]} : vector<2x128xf32> to vector<2x96xf32>
    %891 = arith.negf %890 : vector<2x96xf32>
    %892 = math.exp %891 : vector<2x96xf32>
    %cst_201 = arith.constant 1.000000e+00 : f32
    %893 = vector.broadcast %cst_201 : f32 to vector<2x96xf32>
    %894 = arith.addf %893, %892 : vector<2x96xf32>
    %895 = arith.divf %893, %894 : vector<2x96xf32>
    %896 = vector.extract_strided_slice %895 {offsets = [0, 0], sizes = [2, 32], strides = [1, 1]} : vector<2x96xf32> to vector<2x32xf32>
    %897 = vector.extract_strided_slice %895 {offsets = [0, 32], sizes = [2, 32], strides = [1, 1]} : vector<2x96xf32> to vector<2x32xf32>
    %898 = vector.extract_strided_slice %895 {offsets = [0, 64], sizes = [2, 32], strides = [1, 1]} : vector<2x96xf32> to vector<2x32xf32>
    %899 = vector.extract_strided_slice %889 {offsets = [0, 96], sizes = [2, 32], strides = [1, 1]} : vector<2x128xf32> to vector<2x32xf32>
    %900 = math.tanh %899 : vector<2x32xf32>
    %901 = arith.mulf %897, %879 : vector<2x32xf32>
    %902 = arith.mulf %896, %900 : vector<2x32xf32>
    %903 = arith.addf %901, %902 : vector<2x32xf32>
    %904 = math.tanh %903 : vector<2x32xf32>
    %905 = arith.mulf %898, %904 : vector<2x32xf32>
    %906 = arith.truncf %905 : vector<2x32xf32> to vector<2x32xbf16>
    %c12_202 = arith.constant 12 : index
    %c0_203 = arith.constant 0 : index
    %907 = vector.load %arg5[%c12_202, %c0_203] : memref<32x128xf32, #tpu.memory_space<vmem>>, vector<2x128xf32>
    %c12_204 = arith.constant 12 : index
    %c0_205 = arith.constant 0 : index
    %908 = vector.load %arg6[%c12_204, %c0_205] : memref<32x128xf32, #tpu.memory_space<vmem>>, vector<2x128xf32>
    %909 = arith.addf %907, %908 : vector<2x128xf32>
    %910 = vector.broadcast %42 : vector<1x128xf32> to vector<2x128xf32>
    %911 = arith.addf %909, %910 : vector<2x128xf32>
    %cst_206 = arith.constant dense<0.000000e+00> : vector<2x128xf32>
    %912 = tpu.matmul %906, %34, %cst_206 {dimension_numbers = #tpu.dot_dimension_numbers<[1], [0], [0], [1], [0, 0, 1, 1], [], []>} : vector<2x32xbf16>, vector<32x128xbf16>, vector<2x128xf32> -> vector<2x128xf32>
    %913 = arith.addf %911, %912 : vector<2x128xf32>
    %914 = vector.extract_strided_slice %913 {offsets = [0, 0], sizes = [2, 96], strides = [1, 1]} : vector<2x128xf32> to vector<2x96xf32>
    %915 = arith.negf %914 : vector<2x96xf32>
    %916 = math.exp %915 : vector<2x96xf32>
    %cst_207 = arith.constant 1.000000e+00 : f32
    %917 = vector.broadcast %cst_207 : f32 to vector<2x96xf32>
    %918 = arith.addf %917, %916 : vector<2x96xf32>
    %919 = arith.divf %917, %918 : vector<2x96xf32>
    %920 = vector.extract_strided_slice %919 {offsets = [0, 0], sizes = [2, 32], strides = [1, 1]} : vector<2x96xf32> to vector<2x32xf32>
    %921 = vector.extract_strided_slice %919 {offsets = [0, 32], sizes = [2, 32], strides = [1, 1]} : vector<2x96xf32> to vector<2x32xf32>
    %922 = vector.extract_strided_slice %919 {offsets = [0, 64], sizes = [2, 32], strides = [1, 1]} : vector<2x96xf32> to vector<2x32xf32>
    %923 = vector.extract_strided_slice %913 {offsets = [0, 96], sizes = [2, 32], strides = [1, 1]} : vector<2x128xf32> to vector<2x32xf32>
    %924 = math.tanh %923 : vector<2x32xf32>
    %925 = arith.mulf %921, %903 : vector<2x32xf32>
    %926 = arith.mulf %920, %924 : vector<2x32xf32>
    %927 = arith.addf %925, %926 : vector<2x32xf32>
    %928 = math.tanh %927 : vector<2x32xf32>
    %929 = arith.mulf %922, %928 : vector<2x32xf32>
    %930 = arith.truncf %929 : vector<2x32xf32> to vector<2x32xbf16>
    %c14_208 = arith.constant 14 : index
    %c0_209 = arith.constant 0 : index
    %931 = vector.load %arg5[%c14_208, %c0_209] : memref<32x128xf32, #tpu.memory_space<vmem>>, vector<2x128xf32>
    %c14_210 = arith.constant 14 : index
    %c0_211 = arith.constant 0 : index
    %932 = vector.load %arg6[%c14_210, %c0_211] : memref<32x128xf32, #tpu.memory_space<vmem>>, vector<2x128xf32>
    %933 = arith.addf %931, %932 : vector<2x128xf32>
    %934 = vector.broadcast %42 : vector<1x128xf32> to vector<2x128xf32>
    %935 = arith.addf %933, %934 : vector<2x128xf32>
    %cst_212 = arith.constant dense<0.000000e+00> : vector<2x128xf32>
    %936 = tpu.matmul %930, %34, %cst_212 {dimension_numbers = #tpu.dot_dimension_numbers<[1], [0], [0], [1], [0, 0, 1, 1], [], []>} : vector<2x32xbf16>, vector<32x128xbf16>, vector<2x128xf32> -> vector<2x128xf32>
    %937 = arith.addf %935, %936 : vector<2x128xf32>
    %938 = vector.extract_strided_slice %937 {offsets = [0, 0], sizes = [2, 96], strides = [1, 1]} : vector<2x128xf32> to vector<2x96xf32>
    %939 = arith.negf %938 : vector<2x96xf32>
    %940 = math.exp %939 : vector<2x96xf32>
    %cst_213 = arith.constant 1.000000e+00 : f32
    %941 = vector.broadcast %cst_213 : f32 to vector<2x96xf32>
    %942 = arith.addf %941, %940 : vector<2x96xf32>
    %943 = arith.divf %941, %942 : vector<2x96xf32>
    %944 = vector.extract_strided_slice %943 {offsets = [0, 0], sizes = [2, 32], strides = [1, 1]} : vector<2x96xf32> to vector<2x32xf32>
    %945 = vector.extract_strided_slice %943 {offsets = [0, 32], sizes = [2, 32], strides = [1, 1]} : vector<2x96xf32> to vector<2x32xf32>
    %946 = vector.extract_strided_slice %943 {offsets = [0, 64], sizes = [2, 32], strides = [1, 1]} : vector<2x96xf32> to vector<2x32xf32>
    %947 = vector.extract_strided_slice %937 {offsets = [0, 96], sizes = [2, 32], strides = [1, 1]} : vector<2x128xf32> to vector<2x32xf32>
    %948 = math.tanh %947 : vector<2x32xf32>
    %949 = arith.mulf %945, %927 : vector<2x32xf32>
    %950 = arith.mulf %944, %948 : vector<2x32xf32>
    %951 = arith.addf %949, %950 : vector<2x32xf32>
    %952 = math.tanh %951 : vector<2x32xf32>
    %953 = arith.mulf %946, %952 : vector<2x32xf32>
    %954 = arith.truncf %953 : vector<2x32xf32> to vector<2x32xbf16>
    %c16_214 = arith.constant 16 : index
    %c0_215 = arith.constant 0 : index
    %955 = vector.load %arg5[%c16_214, %c0_215] : memref<32x128xf32, #tpu.memory_space<vmem>>, vector<2x128xf32>
    %c16_216 = arith.constant 16 : index
    %c0_217 = arith.constant 0 : index
    %956 = vector.load %arg6[%c16_216, %c0_217] : memref<32x128xf32, #tpu.memory_space<vmem>>, vector<2x128xf32>
    %957 = arith.addf %955, %956 : vector<2x128xf32>
    %958 = vector.broadcast %42 : vector<1x128xf32> to vector<2x128xf32>
    %959 = arith.addf %957, %958 : vector<2x128xf32>
    %cst_218 = arith.constant dense<0.000000e+00> : vector<2x128xf32>
    %960 = tpu.matmul %954, %34, %cst_218 {dimension_numbers = #tpu.dot_dimension_numbers<[1], [0], [0], [1], [0, 0, 1, 1], [], []>} : vector<2x32xbf16>, vector<32x128xbf16>, vector<2x128xf32> -> vector<2x128xf32>
    %961 = arith.addf %959, %960 : vector<2x128xf32>
    %962 = vector.extract_strided_slice %961 {offsets = [0, 0], sizes = [2, 96], strides = [1, 1]} : vector<2x128xf32> to vector<2x96xf32>
    %963 = arith.negf %962 : vector<2x96xf32>
    %964 = math.exp %963 : vector<2x96xf32>
    %cst_219 = arith.constant 1.000000e+00 : f32
    %965 = vector.broadcast %cst_219 : f32 to vector<2x96xf32>
    %966 = arith.addf %965, %964 : vector<2x96xf32>
    %967 = arith.divf %965, %966 : vector<2x96xf32>
    %968 = vector.extract_strided_slice %967 {offsets = [0, 0], sizes = [2, 32], strides = [1, 1]} : vector<2x96xf32> to vector<2x32xf32>
    %969 = vector.extract_strided_slice %967 {offsets = [0, 32], sizes = [2, 32], strides = [1, 1]} : vector<2x96xf32> to vector<2x32xf32>
    %970 = vector.extract_strided_slice %967 {offsets = [0, 64], sizes = [2, 32], strides = [1, 1]} : vector<2x96xf32> to vector<2x32xf32>
    %971 = vector.extract_strided_slice %961 {offsets = [0, 96], sizes = [2, 32], strides = [1, 1]} : vector<2x128xf32> to vector<2x32xf32>
    %972 = math.tanh %971 : vector<2x32xf32>
    %973 = arith.mulf %969, %951 : vector<2x32xf32>
    %974 = arith.mulf %968, %972 : vector<2x32xf32>
    %975 = arith.addf %973, %974 : vector<2x32xf32>
    %976 = math.tanh %975 : vector<2x32xf32>
    %977 = arith.mulf %970, %976 : vector<2x32xf32>
    %978 = arith.truncf %977 : vector<2x32xf32> to vector<2x32xbf16>
    %c18_220 = arith.constant 18 : index
    %c0_221 = arith.constant 0 : index
    %979 = vector.load %arg5[%c18_220, %c0_221] : memref<32x128xf32, #tpu.memory_space<vmem>>, vector<2x128xf32>
    %c18_222 = arith.constant 18 : index
    %c0_223 = arith.constant 0 : index
    %980 = vector.load %arg6[%c18_222, %c0_223] : memref<32x128xf32, #tpu.memory_space<vmem>>, vector<2x128xf32>
    %981 = arith.addf %979, %980 : vector<2x128xf32>
    %982 = vector.broadcast %42 : vector<1x128xf32> to vector<2x128xf32>
    %983 = arith.addf %981, %982 : vector<2x128xf32>
    %cst_224 = arith.constant dense<0.000000e+00> : vector<2x128xf32>
    %984 = tpu.matmul %978, %34, %cst_224 {dimension_numbers = #tpu.dot_dimension_numbers<[1], [0], [0], [1], [0, 0, 1, 1], [], []>} : vector<2x32xbf16>, vector<32x128xbf16>, vector<2x128xf32> -> vector<2x128xf32>
    %985 = arith.addf %983, %984 : vector<2x128xf32>
    %986 = vector.extract_strided_slice %985 {offsets = [0, 0], sizes = [2, 96], strides = [1, 1]} : vector<2x128xf32> to vector<2x96xf32>
    %987 = arith.negf %986 : vector<2x96xf32>
    %988 = math.exp %987 : vector<2x96xf32>
    %cst_225 = arith.constant 1.000000e+00 : f32
    %989 = vector.broadcast %cst_225 : f32 to vector<2x96xf32>
    %990 = arith.addf %989, %988 : vector<2x96xf32>
    %991 = arith.divf %989, %990 : vector<2x96xf32>
    %992 = vector.extract_strided_slice %991 {offsets = [0, 0], sizes = [2, 32], strides = [1, 1]} : vector<2x96xf32> to vector<2x32xf32>
    %993 = vector.extract_strided_slice %991 {offsets = [0, 32], sizes = [2, 32], strides = [1, 1]} : vector<2x96xf32> to vector<2x32xf32>
    %994 = vector.extract_strided_slice %991 {offsets = [0, 64], sizes = [2, 32], strides = [1, 1]} : vector<2x96xf32> to vector<2x32xf32>
    %995 = vector.extract_strided_slice %985 {offsets = [0, 96], sizes = [2, 32], strides = [1, 1]} : vector<2x128xf32> to vector<2x32xf32>
    %996 = math.tanh %995 : vector<2x32xf32>
    %997 = arith.mulf %993, %975 : vector<2x32xf32>
    %998 = arith.mulf %992, %996 : vector<2x32xf32>
    %999 = arith.addf %997, %998 : vector<2x32xf32>
    %1000 = math.tanh %999 : vector<2x32xf32>
    %1001 = arith.mulf %994, %1000 : vector<2x32xf32>
    %1002 = arith.truncf %1001 : vector<2x32xf32> to vector<2x32xbf16>
    %c20_226 = arith.constant 20 : index
    %c0_227 = arith.constant 0 : index
    %1003 = vector.load %arg5[%c20_226, %c0_227] : memref<32x128xf32, #tpu.memory_space<vmem>>, vector<2x128xf32>
    %c20_228 = arith.constant 20 : index
    %c0_229 = arith.constant 0 : index
    %1004 = vector.load %arg6[%c20_228, %c0_229] : memref<32x128xf32, #tpu.memory_space<vmem>>, vector<2x128xf32>
    %1005 = arith.addf %1003, %1004 : vector<2x128xf32>
    %1006 = vector.broadcast %42 : vector<1x128xf32> to vector<2x128xf32>
    %1007 = arith.addf %1005, %1006 : vector<2x128xf32>
    %cst_230 = arith.constant dense<0.000000e+00> : vector<2x128xf32>
    %1008 = tpu.matmul %1002, %34, %cst_230 {dimension_numbers = #tpu.dot_dimension_numbers<[1], [0], [0], [1], [0, 0, 1, 1], [], []>} : vector<2x32xbf16>, vector<32x128xbf16>, vector<2x128xf32> -> vector<2x128xf32>
    %1009 = arith.addf %1007, %1008 : vector<2x128xf32>
    %1010 = vector.extract_strided_slice %1009 {offsets = [0, 0], sizes = [2, 96], strides = [1, 1]} : vector<2x128xf32> to vector<2x96xf32>
    %1011 = arith.negf %1010 : vector<2x96xf32>
    %1012 = math.exp %1011 : vector<2x96xf32>
    %cst_231 = arith.constant 1.000000e+00 : f32
    %1013 = vector.broadcast %cst_231 : f32 to vector<2x96xf32>
    %1014 = arith.addf %1013, %1012 : vector<2x96xf32>
    %1015 = arith.divf %1013, %1014 : vector<2x96xf32>
    %1016 = vector.extract_strided_slice %1015 {offsets = [0, 0], sizes = [2, 32], strides = [1, 1]} : vector<2x96xf32> to vector<2x32xf32>
    %1017 = vector.extract_strided_slice %1015 {offsets = [0, 32], sizes = [2, 32], strides = [1, 1]} : vector<2x96xf32> to vector<2x32xf32>
    %1018 = vector.extract_strided_slice %1015 {offsets = [0, 64], sizes = [2, 32], strides = [1, 1]} : vector<2x96xf32> to vector<2x32xf32>
    %1019 = vector.extract_strided_slice %1009 {offsets = [0, 96], sizes = [2, 32], strides = [1, 1]} : vector<2x128xf32> to vector<2x32xf32>
    %1020 = math.tanh %1019 : vector<2x32xf32>
    %1021 = arith.mulf %1017, %999 : vector<2x32xf32>
    %1022 = arith.mulf %1016, %1020 : vector<2x32xf32>
    %1023 = arith.addf %1021, %1022 : vector<2x32xf32>
    %1024 = math.tanh %1023 : vector<2x32xf32>
    %1025 = arith.mulf %1018, %1024 : vector<2x32xf32>
    %1026 = arith.truncf %1025 : vector<2x32xf32> to vector<2x32xbf16>
    %c22_232 = arith.constant 22 : index
    %c0_233 = arith.constant 0 : index
    %1027 = vector.load %arg5[%c22_232, %c0_233] : memref<32x128xf32, #tpu.memory_space<vmem>>, vector<2x128xf32>
    %c22_234 = arith.constant 22 : index
    %c0_235 = arith.constant 0 : index
    %1028 = vector.load %arg6[%c22_234, %c0_235] : memref<32x128xf32, #tpu.memory_space<vmem>>, vector<2x128xf32>
    %1029 = arith.addf %1027, %1028 : vector<2x128xf32>
    %1030 = vector.broadcast %42 : vector<1x128xf32> to vector<2x128xf32>
    %1031 = arith.addf %1029, %1030 : vector<2x128xf32>
    %cst_236 = arith.constant dense<0.000000e+00> : vector<2x128xf32>
    %1032 = tpu.matmul %1026, %34, %cst_236 {dimension_numbers = #tpu.dot_dimension_numbers<[1], [0], [0], [1], [0, 0, 1, 1], [], []>} : vector<2x32xbf16>, vector<32x128xbf16>, vector<2x128xf32> -> vector<2x128xf32>
    %1033 = arith.addf %1031, %1032 : vector<2x128xf32>
    %1034 = vector.extract_strided_slice %1033 {offsets = [0, 0], sizes = [2, 96], strides = [1, 1]} : vector<2x128xf32> to vector<2x96xf32>
    %1035 = arith.negf %1034 : vector<2x96xf32>
    %1036 = math.exp %1035 : vector<2x96xf32>
    %cst_237 = arith.constant 1.000000e+00 : f32
    %1037 = vector.broadcast %cst_237 : f32 to vector<2x96xf32>
    %1038 = arith.addf %1037, %1036 : vector<2x96xf32>
    %1039 = arith.divf %1037, %1038 : vector<2x96xf32>
    %1040 = vector.extract_strided_slice %1039 {offsets = [0, 0], sizes = [2, 32], strides = [1, 1]} : vector<2x96xf32> to vector<2x32xf32>
    %1041 = vector.extract_strided_slice %1039 {offsets = [0, 32], sizes = [2, 32], strides = [1, 1]} : vector<2x96xf32> to vector<2x32xf32>
    %1042 = vector.extract_strided_slice %1039 {offsets = [0, 64], sizes = [2, 32], strides = [1, 1]} : vector<2x96xf32> to vector<2x32xf32>
    %1043 = vector.extract_strided_slice %1033 {offsets = [0, 96], sizes = [2, 32], strides = [1, 1]} : vector<2x128xf32> to vector<2x32xf32>
    %1044 = math.tanh %1043 : vector<2x32xf32>
    %1045 = arith.mulf %1041, %1023 : vector<2x32xf32>
    %1046 = arith.mulf %1040, %1044 : vector<2x32xf32>
    %1047 = arith.addf %1045, %1046 : vector<2x32xf32>
    %1048 = math.tanh %1047 : vector<2x32xf32>
    %1049 = arith.mulf %1042, %1048 : vector<2x32xf32>
    %1050 = arith.truncf %1049 : vector<2x32xf32> to vector<2x32xbf16>
    %c24_238 = arith.constant 24 : index
    %c0_239 = arith.constant 0 : index
    %1051 = vector.load %arg5[%c24_238, %c0_239] : memref<32x128xf32, #tpu.memory_space<vmem>>, vector<2x128xf32>
    %c24_240 = arith.constant 24 : index
    %c0_241 = arith.constant 0 : index
    %1052 = vector.load %arg6[%c24_240, %c0_241] : memref<32x128xf32, #tpu.memory_space<vmem>>, vector<2x128xf32>
    %1053 = arith.addf %1051, %1052 : vector<2x128xf32>
    %1054 = vector.broadcast %42 : vector<1x128xf32> to vector<2x128xf32>
    %1055 = arith.addf %1053, %1054 : vector<2x128xf32>
    %cst_242 = arith.constant dense<0.000000e+00> : vector<2x128xf32>
    %1056 = tpu.matmul %1050, %34, %cst_242 {dimension_numbers = #tpu.dot_dimension_numbers<[1], [0], [0], [1], [0, 0, 1, 1], [], []>} : vector<2x32xbf16>, vector<32x128xbf16>, vector<2x128xf32> -> vector<2x128xf32>
    %1057 = arith.addf %1055, %1056 : vector<2x128xf32>
    %1058 = vector.extract_strided_slice %1057 {offsets = [0, 0], sizes = [2, 96], strides = [1, 1]} : vector<2x128xf32> to vector<2x96xf32>
    %1059 = arith.negf %1058 : vector<2x96xf32>
    %1060 = math.exp %1059 : vector<2x96xf32>
    %cst_243 = arith.constant 1.000000e+00 : f32
    %1061 = vector.broadcast %cst_243 : f32 to vector<2x96xf32>
    %1062 = arith.addf %1061, %1060 : vector<2x96xf32>
    %1063 = arith.divf %1061, %1062 : vector<2x96xf32>
    %1064 = vector.extract_strided_slice %1063 {offsets = [0, 0], sizes = [2, 32], strides = [1, 1]} : vector<2x96xf32> to vector<2x32xf32>
    %1065 = vector.extract_strided_slice %1063 {offsets = [0, 32], sizes = [2, 32], strides = [1, 1]} : vector<2x96xf32> to vector<2x32xf32>
    %1066 = vector.extract_strided_slice %1063 {offsets = [0, 64], sizes = [2, 32], strides = [1, 1]} : vector<2x96xf32> to vector<2x32xf32>
    %1067 = vector.extract_strided_slice %1057 {offsets = [0, 96], sizes = [2, 32], strides = [1, 1]} : vector<2x128xf32> to vector<2x32xf32>
    %1068 = math.tanh %1067 : vector<2x32xf32>
    %1069 = arith.mulf %1065, %1047 : vector<2x32xf32>
    %1070 = arith.mulf %1064, %1068 : vector<2x32xf32>
    %1071 = arith.addf %1069, %1070 : vector<2x32xf32>
    %1072 = math.tanh %1071 : vector<2x32xf32>
    %1073 = arith.mulf %1066, %1072 : vector<2x32xf32>
    %1074 = arith.truncf %1073 : vector<2x32xf32> to vector<2x32xbf16>
    %c26_244 = arith.constant 26 : index
    %c0_245 = arith.constant 0 : index
    %1075 = vector.load %arg5[%c26_244, %c0_245] : memref<32x128xf32, #tpu.memory_space<vmem>>, vector<2x128xf32>
    %c26_246 = arith.constant 26 : index
    %c0_247 = arith.constant 0 : index
    %1076 = vector.load %arg6[%c26_246, %c0_247] : memref<32x128xf32, #tpu.memory_space<vmem>>, vector<2x128xf32>
    %1077 = arith.addf %1075, %1076 : vector<2x128xf32>
    %1078 = vector.broadcast %42 : vector<1x128xf32> to vector<2x128xf32>
    %1079 = arith.addf %1077, %1078 : vector<2x128xf32>
    %cst_248 = arith.constant dense<0.000000e+00> : vector<2x128xf32>
    %1080 = tpu.matmul %1074, %34, %cst_248 {dimension_numbers = #tpu.dot_dimension_numbers<[1], [0], [0], [1], [0, 0, 1, 1], [], []>} : vector<2x32xbf16>, vector<32x128xbf16>, vector<2x128xf32> -> vector<2x128xf32>
    %1081 = arith.addf %1079, %1080 : vector<2x128xf32>
    %1082 = vector.extract_strided_slice %1081 {offsets = [0, 0], sizes = [2, 96], strides = [1, 1]} : vector<2x128xf32> to vector<2x96xf32>
    %1083 = arith.negf %1082 : vector<2x96xf32>
    %1084 = math.exp %1083 : vector<2x96xf32>
    %cst_249 = arith.constant 1.000000e+00 : f32
    %1085 = vector.broadcast %cst_249 : f32 to vector<2x96xf32>
    %1086 = arith.addf %1085, %1084 : vector<2x96xf32>
    %1087 = arith.divf %1085, %1086 : vector<2x96xf32>
    %1088 = vector.extract_strided_slice %1087 {offsets = [0, 0], sizes = [2, 32], strides = [1, 1]} : vector<2x96xf32> to vector<2x32xf32>
    %1089 = vector.extract_strided_slice %1087 {offsets = [0, 32], sizes = [2, 32], strides = [1, 1]} : vector<2x96xf32> to vector<2x32xf32>
    %1090 = vector.extract_strided_slice %1087 {offsets = [0, 64], sizes = [2, 32], strides = [1, 1]} : vector<2x96xf32> to vector<2x32xf32>
    %1091 = vector.extract_strided_slice %1081 {offsets = [0, 96], sizes = [2, 32], strides = [1, 1]} : vector<2x128xf32> to vector<2x32xf32>
    %1092 = math.tanh %1091 : vector<2x32xf32>
    %1093 = arith.mulf %1089, %1071 : vector<2x32xf32>
    %1094 = arith.mulf %1088, %1092 : vector<2x32xf32>
    %1095 = arith.addf %1093, %1094 : vector<2x32xf32>
    %1096 = math.tanh %1095 : vector<2x32xf32>
    %1097 = arith.mulf %1090, %1096 : vector<2x32xf32>
    %1098 = arith.truncf %1097 : vector<2x32xf32> to vector<2x32xbf16>
    %c28_250 = arith.constant 28 : index
    %c0_251 = arith.constant 0 : index
    %1099 = vector.load %arg5[%c28_250, %c0_251] : memref<32x128xf32, #tpu.memory_space<vmem>>, vector<2x128xf32>
    %c28_252 = arith.constant 28 : index
    %c0_253 = arith.constant 0 : index
    %1100 = vector.load %arg6[%c28_252, %c0_253] : memref<32x128xf32, #tpu.memory_space<vmem>>, vector<2x128xf32>
    %1101 = arith.addf %1099, %1100 : vector<2x128xf32>
    %1102 = vector.broadcast %42 : vector<1x128xf32> to vector<2x128xf32>
    %1103 = arith.addf %1101, %1102 : vector<2x128xf32>
    %cst_254 = arith.constant dense<0.000000e+00> : vector<2x128xf32>
    %1104 = tpu.matmul %1098, %34, %cst_254 {dimension_numbers = #tpu.dot_dimension_numbers<[1], [0], [0], [1], [0, 0, 1, 1], [], []>} : vector<2x32xbf16>, vector<32x128xbf16>, vector<2x128xf32> -> vector<2x128xf32>
    %1105 = arith.addf %1103, %1104 : vector<2x128xf32>
    %1106 = vector.extract_strided_slice %1105 {offsets = [0, 0], sizes = [2, 96], strides = [1, 1]} : vector<2x128xf32> to vector<2x96xf32>
    %1107 = arith.negf %1106 : vector<2x96xf32>
    %1108 = math.exp %1107 : vector<2x96xf32>
    %cst_255 = arith.constant 1.000000e+00 : f32
    %1109 = vector.broadcast %cst_255 : f32 to vector<2x96xf32>
    %1110 = arith.addf %1109, %1108 : vector<2x96xf32>
    %1111 = arith.divf %1109, %1110 : vector<2x96xf32>
    %1112 = vector.extract_strided_slice %1111 {offsets = [0, 0], sizes = [2, 32], strides = [1, 1]} : vector<2x96xf32> to vector<2x32xf32>
    %1113 = vector.extract_strided_slice %1111 {offsets = [0, 32], sizes = [2, 32], strides = [1, 1]} : vector<2x96xf32> to vector<2x32xf32>
    %1114 = vector.extract_strided_slice %1111 {offsets = [0, 64], sizes = [2, 32], strides = [1, 1]} : vector<2x96xf32> to vector<2x32xf32>
    %1115 = vector.extract_strided_slice %1105 {offsets = [0, 96], sizes = [2, 32], strides = [1, 1]} : vector<2x128xf32> to vector<2x32xf32>
    %1116 = math.tanh %1115 : vector<2x32xf32>
    %1117 = arith.mulf %1113, %1095 : vector<2x32xf32>
    %1118 = arith.mulf %1112, %1116 : vector<2x32xf32>
    %1119 = arith.addf %1117, %1118 : vector<2x32xf32>
    %1120 = math.tanh %1119 : vector<2x32xf32>
    %1121 = arith.mulf %1114, %1120 : vector<2x32xf32>
    %1122 = arith.truncf %1121 : vector<2x32xf32> to vector<2x32xbf16>
    %c30_256 = arith.constant 30 : index
    %c0_257 = arith.constant 0 : index
    %1123 = vector.load %arg5[%c30_256, %c0_257] : memref<32x128xf32, #tpu.memory_space<vmem>>, vector<2x128xf32>
    %c30_258 = arith.constant 30 : index
    %c0_259 = arith.constant 0 : index
    %1124 = vector.load %arg6[%c30_258, %c0_259] : memref<32x128xf32, #tpu.memory_space<vmem>>, vector<2x128xf32>
    %1125 = arith.addf %1123, %1124 : vector<2x128xf32>
    %1126 = vector.broadcast %42 : vector<1x128xf32> to vector<2x128xf32>
    %1127 = arith.addf %1125, %1126 : vector<2x128xf32>
    %cst_260 = arith.constant dense<0.000000e+00> : vector<2x128xf32>
    %1128 = tpu.matmul %1122, %34, %cst_260 {dimension_numbers = #tpu.dot_dimension_numbers<[1], [0], [0], [1], [0, 0, 1, 1], [], []>} : vector<2x32xbf16>, vector<32x128xbf16>, vector<2x128xf32> -> vector<2x128xf32>
    %1129 = arith.addf %1127, %1128 : vector<2x128xf32>
    %1130 = vector.extract_strided_slice %1129 {offsets = [0, 0], sizes = [2, 96], strides = [1, 1]} : vector<2x128xf32> to vector<2x96xf32>
    %1131 = arith.negf %1130 : vector<2x96xf32>
    %1132 = math.exp %1131 : vector<2x96xf32>
    %cst_261 = arith.constant 1.000000e+00 : f32
    %1133 = vector.broadcast %cst_261 : f32 to vector<2x96xf32>
    %1134 = arith.addf %1133, %1132 : vector<2x96xf32>
    %1135 = arith.divf %1133, %1134 : vector<2x96xf32>
    %1136 = vector.extract_strided_slice %1135 {offsets = [0, 0], sizes = [2, 32], strides = [1, 1]} : vector<2x96xf32> to vector<2x32xf32>
    %1137 = vector.extract_strided_slice %1135 {offsets = [0, 32], sizes = [2, 32], strides = [1, 1]} : vector<2x96xf32> to vector<2x32xf32>
    %1138 = vector.extract_strided_slice %1135 {offsets = [0, 64], sizes = [2, 32], strides = [1, 1]} : vector<2x96xf32> to vector<2x32xf32>
    %1139 = vector.extract_strided_slice %1129 {offsets = [0, 96], sizes = [2, 32], strides = [1, 1]} : vector<2x128xf32> to vector<2x32xf32>
    %1140 = math.tanh %1139 : vector<2x32xf32>
    %1141 = arith.mulf %1137, %1119 : vector<2x32xf32>
    %1142 = arith.mulf %1136, %1140 : vector<2x32xf32>
    %1143 = arith.addf %1141, %1142 : vector<2x32xf32>
    %1144 = math.tanh %1143 : vector<2x32xf32>
    %1145 = arith.mulf %1138, %1144 : vector<2x32xf32>
    %cst_262 = arith.constant dense<0.000000e+00> : vector<2x128xf32>
    %1146 = tpu.matmul %738, %37, %cst_262 {dimension_numbers = #tpu.dot_dimension_numbers<[1], [0], [0], [1], [0, 0, 1, 1], [], []>} : vector<2x32xbf16>, vector<32x128xbf16>, vector<2x128xf32> -> vector<2x128xf32>
    %cst_263 = arith.constant dense<0.000000e+00> : vector<2x128xf32>
    %1147 = tpu.matmul %100, %38, %cst_263 {dimension_numbers = #tpu.dot_dimension_numbers<[1], [0], [0], [1], [0, 0, 1, 1], [], []>} : vector<2x32xbf16>, vector<32x128xbf16>, vector<2x128xf32> -> vector<2x128xf32>
    %1148 = arith.addf %1146, %1147 : vector<2x128xf32>
    %1149 = vector.broadcast %43 : vector<1x128xf32> to vector<2x128xf32>
    %1150 = arith.addf %1148, %1149 : vector<2x128xf32>
    %1151 = vector.extract_strided_slice %1150 {offsets = [0, 0], sizes = [2, 96], strides = [1, 1]} : vector<2x128xf32> to vector<2x96xf32>
    %1152 = arith.negf %1151 : vector<2x96xf32>
    %1153 = math.exp %1152 : vector<2x96xf32>
    %cst_264 = arith.constant 1.000000e+00 : f32
    %1154 = vector.broadcast %cst_264 : f32 to vector<2x96xf32>
    %1155 = arith.addf %1154, %1153 : vector<2x96xf32>
    %1156 = arith.divf %1154, %1155 : vector<2x96xf32>
    %1157 = vector.extract_strided_slice %1156 {offsets = [0, 0], sizes = [2, 32], strides = [1, 1]} : vector<2x96xf32> to vector<2x32xf32>
    %1158 = vector.extract_strided_slice %1156 {offsets = [0, 32], sizes = [2, 32], strides = [1, 1]} : vector<2x96xf32> to vector<2x32xf32>
    %1159 = vector.extract_strided_slice %1156 {offsets = [0, 64], sizes = [2, 32], strides = [1, 1]} : vector<2x96xf32> to vector<2x32xf32>
    %1160 = vector.extract_strided_slice %1150 {offsets = [0, 96], sizes = [2, 32], strides = [1, 1]} : vector<2x128xf32> to vector<2x32xf32>
    %1161 = math.tanh %1160 : vector<2x32xf32>
    %1162 = arith.mulf %1158, %57 : vector<2x32xf32>
    %1163 = arith.mulf %1157, %1161 : vector<2x32xf32>
    %1164 = arith.addf %1162, %1163 : vector<2x32xf32>
    %1165 = math.tanh %1164 : vector<2x32xf32>
    %1166 = arith.mulf %1159, %1165 : vector<2x32xf32>
    %1167 = vector.extract_strided_slice %46 {offsets = [0, 0], sizes = [1, 32], strides = [1, 1]} : vector<1x128xf32> to vector<1x32xf32>
    %1168 = vector.broadcast %1167 : vector<1x32xf32> to vector<2x32xf32>
    %1169 = arith.mulf %1145, %1168 : vector<2x32xf32>
    %1170 = vector.extract_strided_slice %46 {offsets = [0, 32], sizes = [1, 32], strides = [1, 1]} : vector<1x128xf32> to vector<1x32xf32>
    %1171 = vector.broadcast %1170 : vector<1x32xf32> to vector<2x32xf32>
    %1172 = arith.mulf %1166, %1171 : vector<2x32xf32>
    %1173 = arith.addf %1169, %1172 : vector<2x32xf32>
    %cst_265 = arith.constant dense<0.000000e+00> : vector<2xf32>
    %1174 = vector.multi_reduction <add>, %1173, %cst_265 [1] : vector<2x32xf32> to vector<2xf32>
    %1175 = vector.shape_cast %1174 : vector<2xf32> to vector<2x1xf32>
    %1176 = vector.broadcast %5 : f32 to vector<2x1xf32>
    %1177 = arith.addf %1175, %1176 : vector<2x1xf32>
    %c0_266 = arith.constant 0 : index
    %c0_267 = arith.constant 0 : index
    %1178 = vector.load %arg4[%c0_266, %c0_267] : memref<2x1xf32, #tpu.memory_space<vmem>>, vector<2x1xf32>
    tpu.vector_store %arg4[%c0_266, %c0_267], %1177 {strides = array<i32>} : memref<2x1xf32, #tpu.memory_space<vmem>>, vector<2x1xf32>,
    return
  }
}

</mosaic_0001>

<llo_original>
// kernel: cnn_bilstm_forward.1
$region0: #{cnn_bilstm_forward.1}
  #allocation0 [shape = 'u32[]', space=smem, size = 0x4, offset = 0x4, fixed_abs, tag = 'smem constant byte address 0x4 - core index']
  #allocation1 [shape = 'u32[144,128]{1,0:T(1,128)}', space=vmem, size = 0x12000, scoped, tag = 'internal scratch']
  #allocation2 [shape = 'f32[32,128]{1,0:T(8,128)}', space=vmem, size = 0x4000, scoped, tag = 'scratch operand']
  #allocation3 [shape = 'f32[32,128]{1,0:T(8,128)}', space=vmem, size = 0x4000, scoped, tag = 'scratch operand']
  %s0 = inlined_call_operand.vmem [shape: f32[40,1], index: 0, kind: input, shape index: {}]
  %s1 = inlined_call_operand.vmem [shape: f32[1,5], index: 1, kind: input, shape index: {}]
  %s2 = inlined_call_operand.hbm [shape: bf16[256,128], index: 2, kind: input, shape index: {}]
  %s3 = inlined_call_operand.vmem [shape: f32[7,128], index: 3, kind: input, shape index: {}]
  %s4 = inlined_call_operand.vmem [shape: f32[2,1], index: 4, kind: output, shape index: {}]
  %s5 = sld [smem:[#allocation0]]
  $region34: #{cnn_bilstm_forward.1} parent=0
    _
  %s7 = ssub.s32 1, %s5
  %s8 = scalar_select 0, %s7, %s5
  $region1: #{cnn_bilstm_forward.1} parent=0
    #allocation4 [shape = 'u8[512]{0}', space=smem, size = 0x200, scoped, tag = 'input window, operand 1, single buffered']
    #allocation5 [shape = 's32[1]{0}', space=sflag, size = 0x4, scoped, tag = 'scoped memory for cnn_bilstm_forward.1']
    #allocation6 [shape = 's32[1]{0}', space=sflag, size = 0x4, scoped, tag = 'scoped memory for cnn_bilstm_forward.1']
    #allocation7 [shape = 'u8[65536]{0}', space=vmem, size = 0x10000, scoped, tag = 'input window, operand 2, single buffered']
    %9 = vsyncpa [#allocation6], 0
    %10 = vsyncpa [#allocation5], 0
    // Predicated region
    $region2: #{cnn_bilstm_forward.1} parent=1 // pred_check
      _
    $region3: #{cnn_bilstm_forward.1} parent=1 // pred_check_branch
      %12 = sbr.rel (0) target = $region5
    $region4: #{cnn_bilstm_forward.1} parent=1 // pred_region
      _
    $region5: #{cnn_bilstm_forward.1} parent=1 // pred_fallthru
      _
    // Predicated region
    $region6: #{cnn_bilstm_forward.1} parent=1 // pred_check
      _
    $region7: #{cnn_bilstm_forward.1} parent=1 // pred_check_branch
      %14 = sbr.rel (0) target = $region9
    $region8: #{cnn_bilstm_forward.1} parent=1 // pred_region
      %s16 = ssub.s32 16, 16
      %17 = vsyncadd [#allocation6], %s16
      %s19 = sshll.u32 %s1, 4
      %s20 = int_to_ptr.vmem [resolvable:$true] %s19
      %22 = dma.vmem_to_smem %s20, 16, [#allocation4], [#allocation6]
    $region9: #{cnn_bilstm_forward.1} parent=1 // pred_fallthru
      _
    // Predicated region
    $region10: #{cnn_bilstm_forward.1} parent=1 // pred_check
      _
    $region11: #{cnn_bilstm_forward.1} parent=1 // pred_check_branch
      %24 = sbr.rel (0) target = $region13
    $region12: #{cnn_bilstm_forward.1} parent=1 // pred_region
      %s26 = ssub.s32 2048, 2048
      %27 = vsyncadd [#allocation5], %s26
      %s28 = sshll.u32 [#allocation7], 4
      %s29 = int_to_ptr.vmem [resolvable:$true] %s28
      %34 = dma.hbm_to_vmem [thread:$0]  %s2, 2048, %s29, [#allocation5], 64, 64, 4
    $region13: #{cnn_bilstm_forward.1} parent=1 // pred_fallthru
      _
    // Predicated region
    $region14: #{cnn_bilstm_forward.1} parent=1 // pred_check
      _
    $region15: #{cnn_bilstm_forward.1} parent=1 // pred_check_branch
      %36 = sbr.rel (0) target = $region17
    $region16: #{cnn_bilstm_forward.1} parent=1 // pred_region
      _
    $region17: #{cnn_bilstm_forward.1} parent=1 // pred_fallthru
      _
    // Predicated region
    $region18: #{cnn_bilstm_forward.1} parent=1 // pred_check
      _
    $region19: #{cnn_bilstm_forward.1} parent=1 // pred_check_branch
      %38 = sbr.rel (0) target = $region21
    $region20: #{cnn_bilstm_forward.1} parent=1 // pred_region
      %39 = dma.done [#allocation6], 16
    $region21: #{cnn_bilstm_forward.1} parent=1 // pred_fallthru
      _
    // Predicated region
    $region22: #{cnn_bilstm_forward.1} parent=1 // pred_check
      _
    $region23: #{cnn_bilstm_forward.1} parent=1 // pred_check_branch
      %41 = sbr.rel (0) target = $region25
    $region24: #{cnn_bilstm_forward.1} parent=1 // pred_region
      %42 = dma.done [#allocation5], 2048
    $region25: #{cnn_bilstm_forward.1} parent=1 // pred_fallthru
      _
    %43 = sfence
    %v45 = vld [vmem:[%s0] sm:$0xff]
    %v46 = vld [vmem:[%s0 + $0x8] sm:$0xff]
    %v47 = vld [vmem:[%s0 + $0x10] sm:$0xff]
    %v48 = vld [vmem:[%s0 + $0x18] sm:$0xff]
    %v49 = vld [vmem:[%s0 + $0x20] sm:$0xff]
    %s50 = sld [smem:[#allocation4]]
    %s51 = sld [smem:[#allocation4 + $0x1]]
    %s52 = sld [smem:[#allocation4 + $0x2]]
    %s53 = sld [smem:[#allocation4 + $0x3]]
    %s54 = sld [smem:[#allocation4 + $0x4]]
    %v55 = vstv %s50
    %v56 = vmul.f32 %v55, %v45
    %v57 = vmul.f32 %v55, %v46
    %v58 = vmul.f32 %v55, %v47
    %v59 = vmul.f32 %v55, %v48
    %v60 = vmul.f32 %v55, %v49
    %v61 = vstv %s51
    %v62 = vmul.f32 %v61, %v45
    %v63 = vmul.f32 %v61, %v46
    %v64 = vmul.f32 %v61, %v47
    %v65 = vmul.f32 %v61, %v48
    %v66 = vmul.f32 %v61, %v49
    %vm72 = vcmask 1045504
    %v73 = vrot.slane %v62, 2
    %v74 = vrot.slane %v63, 2
    %v75 = vsel %vm72, %v73, %v74
    %v76 = vrot.slane %v64, 2
    %v77 = vsel %vm72, %v74, %v76
    %v78 = vrot.slane %v65, 2
    %v79 = vsel %vm72, %v76, %v78
    %v80 = vrot.slane %v66, 2
    %v81 = vsel %vm72, %v78, %v80
    %v87 = vadd.f32 %v56, %v75
    %v88 = vadd.f32 %v57, %v77
    %v89 = vadd.f32 %v58, %v79
    %v90 = vadd.f32 %v59, %v81
    %v91 = vadd.f32 %v60, %v80
    %v92 = vstv %s52
    %v93 = vmul.f32 %v92, %v45
    %v94 = vmul.f32 %v92, %v46
    %v95 = vmul.f32 %v92, %v47
    %v96 = vmul.f32 %v92, %v48
    %v97 = vmul.f32 %v92, %v49
    %vm103 = vcmask 1043456
    %v104 = vrot.slane %v93, 4
    %v105 = vrot.slane %v94, 4
    %v106 = vsel %vm103, %v104, %v105
    %v107 = vrot.slane %v95, 4
    %v108 = vsel %vm103, %v105, %v107
    %v109 = vrot.slane %v96, 4
    %v110 = vsel %vm103, %v107, %v109
    %v111 = vrot.slane %v97, 4
    %v112 = vsel %vm103, %v109, %v111
    %v118 = vadd.f32 %v87, %v106
    %v119 = vadd.f32 %v88, %v108
    %v120 = vadd.f32 %v89, %v110
    %v121 = vadd.f32 %v90, %v112
    %v122 = vadd.f32 %v91, %v111
    %v123 = vstv %s53
    %v124 = vadd.f32 %v118, %v123
    %v125 = vadd.f32 %v119, %v123
    %v126 = vadd.f32 %v120, %v123
    %v127 = vadd.f32 %v121, %v123
    %v128 = vadd.f32 %v122, %v123
    %v129 = vlaneseq
    %v130 = vshrl.u32 %v129, 7
    %v131 = vadd.s32 %v130, 8
    %v132 = vadd.s32 %v130, 16
    %v133 = vadd.s32 %v130, 24
    %v134 = vadd.s32 %v130, 32
    %vm135 = vcmp.lt.s32.totalorder %v130, 2
    %vm136 = vcmp.lt.s32.totalorder %v131, 2
    %vm137 = vcmp.lt.s32.totalorder %v132, 2
    %vm138 = vcmp.lt.s32.totalorder %v133, 2
    %vm139 = vcmp.lt.s32.totalorder %v134, 2
    %vm140 = vcmp.ge.s32.totalorder %v130, 34
    %vm141 = vcmp.ge.s32.totalorder %v131, 34
    %vm142 = vcmp.ge.s32.totalorder %v132, 34
    %vm143 = vcmp.ge.s32.totalorder %v133, 34
    %vm144 = vcmp.ge.s32.totalorder %v134, 34
    %vm145 = vmor %vm135, %vm140
    %vm146 = vmor %vm136, %vm141
    %vm147 = vmor %vm137, %vm142
    %vm148 = vmor %vm138, %vm143
    %vm149 = vmor %vm139, %vm144
    %v150 = vsel %vm145, -inf, %v124
    %v151 = vsel %vm146, -inf, %v125
    %v152 = vsel %vm147, -inf, %v126
    %v153 = vsel %vm148, -inf, %v127
    %v154 = vsel %vm149, -inf, %v128
    %v160 = vrot.slane %v150, 2
    %v161 = vrot.slane %v151, 2
    %v162 = vsel %vm72, %v160, %v161
    %v163 = vrot.slane %v152, 2
    %v164 = vsel %vm72, %v161, %v163
    %v165 = vrot.slane %v153, 2
    %v166 = vsel %vm72, %v163, %v165
    %v167 = vrot.slane %v154, 2
    %v168 = vsel %vm72, %v165, %v167
    %v173 = vmax.f32 %v150, %v162
    %v174 = vmax.f32 %v151, %v164
    %v175 = vmax.f32 %v152, %v166
    %v176 = vmax.f32 %v153, %v168
    %v177 = vrot.slane %v150, 4
    %v178 = vrot.slane %v151, 4
    %v179 = vsel %vm103, %v177, %v178
    %v180 = vrot.slane %v152, 4
    %v181 = vsel %vm103, %v178, %v180
    %v182 = vrot.slane %v153, 4
    %v183 = vsel %vm103, %v180, %v182
    %v184 = vrot.slane %v154, 4
    %v185 = vsel %vm103, %v182, %v184
    %v190 = vmax.f32 %v173, %v179
    %v191 = vmax.f32 %v174, %v181
    %v192 = vmax.f32 %v175, %v183
    %v193 = vmax.f32 %v176, %v185
    %v194 = vld [vmem:[#allocation7] sm:$0xf]
    %v195 = vld [vmem:[#allocation7 + $0x4] sm:$0xf]
    %v196 = vld [vmem:[#allocation7 + $0x8] sm:$0xf]
    %v197 = vld [vmem:[#allocation7 + $0xc] sm:$0xf]
    %v198 = vld [vmem:[#allocation7 + $0x10] sm:$0xf]
    %v199 = vld [vmem:[#allocation7 + $0x14] sm:$0xf]
    %v200 = vld [vmem:[#allocation7 + $0x18] sm:$0xf]
    %v201 = vld [vmem:[#allocation7 + $0x1c] sm:$0xf]
    %v202 = vld [vmem:[#allocation7 + $0x20] sm:$0xf]
    %v203 = vld [vmem:[#allocation7 + $0x24] sm:$0xf]
    %v204 = vld [vmem:[#allocation7 + $0x28] sm:$0xf]
    %v205 = vld [vmem:[#allocation7 + $0x2c] sm:$0xf]
    %v206 = vld [vmem:[#allocation7 + $0x40] sm:$0xf]
    %v207 = vld [vmem:[#allocation7 + $0x44] sm:$0xf]
    %v208 = vld [vmem:[#allocation7 + $0x48] sm:$0xf]
    %v209 = vld [vmem:[#allocation7 + $0x4c] sm:$0xf]
    %v210 = vld [vmem:[#allocation7 + $0x50] sm:$0xf]
    %v211 = vld [vmem:[#allocation7 + $0x54] sm:$0xf]
    %v212 = vld [vmem:[#allocation7 + $0x58] sm:$0xf]
    %v213 = vld [vmem:[#allocation7 + $0x5c] sm:$0xf]
    %v214 = vld [vmem:[#allocation7 + $0x60] sm:$0xf]
    %v215 = vld [vmem:[#allocation7 + $0x64] sm:$0xf]
    %v216 = vld [vmem:[#allocation7 + $0x68] sm:$0xf]
    %v217 = vld [vmem:[#allocation7 + $0x6c] sm:$0xf]
    %v218 = vld [vmem:[#allocation7 + $0x70] sm:$0xf]
    %v219 = vld [vmem:[#allocation7 + $0x74] sm:$0xf]
    %v220 = vld [vmem:[#allocation7 + $0x78] sm:$0xf]
    %v221 = vld [vmem:[#allocation7 + $0x7c] sm:$0xf]
    %v222 = vld [vmem:[%s3] sm:$0x7f]
    %224 = vset.pattern.permute.xlu0 0
    %225 = vperm.xlu0 %224, %v190
    %v226 = vpop.permute.xlu0 %225
    %229 = vset.pattern.permute.xlu0 0
    %230 = vperm.xlu0 %229, %v191
    %v231 = vpop.permute.xlu0 %230
    %234 = vset.pattern.permute.xlu0 0
    %235 = vperm.xlu0 %234, %v192
    %v236 = vpop.permute.xlu0 %235
    %239 = vset.pattern.permute.xlu0 0
    %240 = vperm.xlu0 %239, %v193
    %v241 = vpop.permute.xlu0 %240
    %v243 = vlaneseq
    %v244 = vshrl.u32 %v243, 7
    %v245 = vsub.s32 4, %v244
    %v246 = vrot.slane %v222, %v245
    %v247 = vmul.f32 %v226, %v246
    %v248 = vmul.f32 %v231, %v246
    %v249 = vmul.f32 %v236, %v246
    %v250 = vmul.f32 %v241, %v246
    %v251 = vlaneseq
    %v252 = vshrl.u32 %v251, 7
    %v253 = vsub.s32 0, %v252
    %v254 = vrot.slane %v222, %v253
    %v255 = vadd.f32 %v247, %v254
    %v256 = vadd.f32 %v248, %v254
    %v257 = vadd.f32 %v249, %v254
    %v258 = vadd.f32 %v250, %v254
    %v259 = vlaneseq
    %v260 = vshrl.u32 %v259, 7
    %v261 = vsub.s32 5, %v260
    %v262 = vrot.slane %v222, %v261
    %v263 = vmul.f32 %v226, %v262
    %v264 = vmul.f32 %v231, %v262
    %v265 = vmul.f32 %v236, %v262
    %v266 = vmul.f32 %v241, %v262
    %v267 = vlaneseq
    %v268 = vshrl.u32 %v267, 7
    %v269 = vsub.s32 1, %v268
    %v270 = vrot.slane %v222, %v269
    %v271 = vadd.f32 %v263, %v270
    %v272 = vadd.f32 %v264, %v270
    %v273 = vadd.f32 %v265, %v270
    %v274 = vadd.f32 %v266, %v270
    %v279 = vunpack.c.l.b16 %v194
    %v280 = vunpack.c.l.b16 %v195
    %v281 = vunpack.c.l.b16 %v196
    %v282 = vunpack.c.l.b16 %v197
    %v283 = vpack.c.b16 %v280, %v279
    %v284 = vpack.c.b16 %v282, %v281
    %vm287 = vcmask 261120
    %v289 = vsel %vm287, 0, 0
    %291 = vmatprep.subr.bf16.mxu0 0
    %292 = vmatpush1.bf16.msra.mxu0 %v283
    %293 = vmatprep.subr.bf16.mxu0 0
    %294 = vmatpush1.bf16.msra.mxu0 %v284
    %295 = vmatprep.subr.bf16.mxu0 0
    %296 = vmatpush1.bf16.msra.mxu0 0
    %297 = vmatprep.subr.bf16.mxu0 0
    %298 = vmatpush1.bf16.msra.mxu0 0
    %299 = vmatprep.subr.bf16.mxu0 0
    %300 = vmatpush1.bf16.msra.mxu0 0
    %301 = vmatprep.subr.bf16.mxu0 0
    %302 = vmatpush1.bf16.msra.mxu0 0
    %303 = vmatprep.subr.bf16.mxu0 0
    %304 = vmatpush1.bf16.msra.mxu0 0
    %305 = vmatprep.subr.bf16.mxu0 0
    %306 = vmatpush1.bf16.msra.mxu0 0
    %307 = vmatprep.subr.bf16.mxu0 0
    %308 = vmatpush1.bf16.msra.mxu0 0
    %309 = vmatprep.subr.bf16.mxu0 0
    %310 = vmatpush1.bf16.msra.mxu0 0
    %311 = vmatprep.subr.bf16.mxu0 0
    %312 = vmatpush1.bf16.msra.mxu0 0
    %313 = vmatprep.subr.bf16.mxu0 0
    %314 = vmatpush1.bf16.msra.mxu0 0
    %315 = vmatprep.subr.bf16.mxu0 0
    %316 = vmatpush1.bf16.msra.mxu0 0
    %317 = vmatprep.subr.bf16.mxu0 0
    %318 = vmatpush1.bf16.msra.mxu0 0
    %319 = vmatprep.subr.bf16.mxu0 0
    %320 = vmatpush1.bf16.msra.mxu0 0
    %321 = vmatprep.subr.bf16.mxu0 0
    %322 = vmatpush1.bf16.msra.mxu0 0
    %323 = vmatprep.mubr.bf16.mxu0 0
    %324 = vmatmul.mubr.bf16.gmra.mrb[0].mxu0 %v289
    %v325 = vpop.f32.mrb[0].mxu0
    %v326 = vadd.f32 0.0, %v325
    %v327 = vpop.f32.mrb[0].mxu0
    %v328 = vpop.f32.mrb[0].mxu0
    %v329 = vpop.f32.mrb[0].mxu0
    %330 = vdwg.mxu0
    %v331 = vadd.f32 %v255, %v326
    %v332 = vxor.u32 %v331, 2147483648
    %v333 = vmul.f32 %v332, 1.442695
    %v334 = vpow.pop %v333
    %v335 = vadd.f32 %v334, 1.0
    %v336 = vrcp.pop %v335
    %v337 = vmul.f32 1.0, %v336
    %v338 = vtanh.pop %v331
    %v339 = vmul.f32 %v337, 0.0
    %341 = vrot.lane.b32.xlu0 %v338, 32
    %v342 = vpop.permute.xlu0 %341
    %v344 = vmul.f32 %v337, %v342
    %346 = vrot.lane.b32.xlu0 %v344, 32
    %v347 = vpop.permute.xlu0 %346
    %v349 = vadd.f32 %v339, %v347
    %v350 = vtanh.pop %v349
    %352 = vrot.lane.b32.xlu0 %v350, 32
    %v353 = vpop.permute.xlu0 %352
    %v355 = vmul.f32 %v337, %v353
    %v356 = vpack.c.bf16 %v355, %v355
    %358 = vrot.lane.b32.xlu0 %v356, 64
    %v359 = vpop.permute.xlu0 %358
    %v364 = vunpack.c.l.b16 %v206
    %v365 = vunpack.c.l.b16 %v207
    %v366 = vunpack.c.l.b16 %v208
    %v367 = vunpack.c.l.b16 %v209
    %v368 = vpack.c.b16 %v365, %v364
    %v369 = vpack.c.b16 %v367, %v366
    %v373 = vsel %vm287, %v359, 0
    %375 = vmatprep.subr.bf16.mxu0 0
    %376 = vmatpush1.bf16.msra.mxu0 %v368
    %377 = vmatprep.subr.bf16.mxu0 0
    %378 = vmatpush1.bf16.msra.mxu0 %v369
    %379 = vmatprep.subr.bf16.mxu0 0
    %380 = vmatpush1.bf16.msra.mxu0 0
    %381 = vmatprep.subr.bf16.mxu0 0
    %382 = vmatpush1.bf16.msra.mxu0 0
    %383 = vmatprep.subr.bf16.mxu0 0
    %384 = vmatpush1.bf16.msra.mxu0 0
    %385 = vmatprep.subr.bf16.mxu0 0
    %386 = vmatpush1.bf16.msra.mxu0 0
    %387 = vmatprep.subr.bf16.mxu0 0
    %388 = vmatpush1.bf16.msra.mxu0 0
    %389 = vmatprep.subr.bf16.mxu0 0
    %390 = vmatpush1.bf16.msra.mxu0 0
    %391 = vmatprep.subr.bf16.mxu0 0
    %392 = vmatpush1.bf16.msra.mxu0 0
    %393 = vmatprep.subr.bf16.mxu0 0
    %394 = vmatpush1.bf16.msra.mxu0 0
    %395 = vmatprep.subr.bf16.mxu0 0
    %396 = vmatpush1.bf16.msra.mxu0 0
    %397 = vmatprep.subr.bf16.mxu0 0
    %398 = vmatpush1.bf16.msra.mxu0 0
    %399 = vmatprep.subr.bf16.mxu0 0
    %400 = vmatpush1.bf16.msra.mxu0 0
    %401 = vmatprep.subr.bf16.mxu0 0
    %402 = vmatpush1.bf16.msra.mxu0 0
    %403 = vmatprep.subr.bf16.mxu0 0
    %404 = vmatpush1.bf16.msra.mxu0 0
    %405 = vmatprep.subr.bf16.mxu0 0
    %406 = vmatpush1.bf16.msra.mxu0 0
    %407 = vmatprep.mubr.bf16.mxu0 0
    %408 = vmatmul.mubr.bf16.gmra.mrb[0].mxu0 %v373
    %v409 = vpop.f32.mrb[0].mxu0
    %v410 = vadd.f32 0.0, %v409
    %v411 = vpop.f32.mrb[0].mxu0
    %v412 = vpop.f32.mrb[0].mxu0
    %v413 = vpop.f32.mrb[0].mxu0
    %414 = vdwg.mxu0
    %415 = vst [vmem:[#allocation2] sm:$0x3] %v410
    %v420 = vunpack.c.l.b16 %v198
    %v421 = vunpack.c.l.b16 %v199
    %v422 = vunpack.c.l.b16 %v200
    %v423 = vunpack.c.l.b16 %v201
    %v424 = vpack.c.b16 %v421, %v420
    %v425 = vpack.c.b16 %v423, %v422
    %428 = vmatprep.subr.bf16.mxu0 0
    %429 = vmatpush1.bf16.msra.mxu0 %v424
    %430 = vmatprep.subr.bf16.mxu0 0
    %431 = vmatpush1.bf16.msra.mxu0 %v425
    %432 = vmatprep.subr.bf16.mxu0 0
    %433 = vmatpush1.bf16.msra.mxu0 0
    %434 = vmatprep.subr.bf16.mxu0 0
    %435 = vmatpush1.bf16.msra.mxu0 0
    %436 = vmatprep.subr.bf16.mxu0 0
    %437 = vmatpush1.bf16.msra.mxu0 0
    %438 = vmatprep.subr.bf16.mxu0 0
    %439 = vmatpush1.bf16.msra.mxu0 0
    %440 = vmatprep.subr.bf16.mxu0 0
    %441 = vmatpush1.bf16.msra.mxu0 0
    %442 = vmatprep.subr.bf16.mxu0 0
    %443 = vmatpush1.bf16.msra.mxu0 0
    %444 = vmatprep.subr.bf16.mxu0 0
    %445 = vmatpush1.bf16.msra.mxu0 0
    %446 = vmatprep.subr.bf16.mxu0 0
    %447 = vmatpush1.bf16.msra.mxu0 0
    %448 = vmatprep.subr.bf16.mxu0 0
    %449 = vmatpush1.bf16.msra.mxu0 0
    %450 = vmatprep.subr.bf16.mxu0 0
    %451 = vmatpush1.bf16.msra.mxu0 0
    %452 = vmatprep.subr.bf16.mxu0 0
    %453 = vmatpush1.bf16.msra.mxu0 0
    %454 = vmatprep.subr.bf16.mxu0 0
    %455 = vmatpush1.bf16.msra.mxu0 0
    %456 = vmatprep.subr.bf16.mxu0 0
    %457 = vmatpush1.bf16.msra.mxu0 0
    %458 = vmatprep.subr.bf16.mxu0 0
    %459 = vmatpush1.bf16.msra.mxu0 0
    %460 = vmatprep.mubr.bf16.mxu0 0
    %461 = vmatmul.mubr.bf16.gmra.mrb[0].mxu0 %v289
    %v462 = vpop.f32.mrb[0].mxu0
    %v463 = vadd.f32 0.0, %v462
    %v464 = vpop.f32.mrb[0].mxu0
    %v465 = vpop.f32.mrb[0].mxu0
    %v466 = vpop.f32.mrb[0].mxu0
    %467 = vdwg.mxu0
    %v469 = vrot.slane %v463, 2
    %v471 = vadd.f32 %v274, %v469
    %v472 = vxor.u32 %v471, 2147483648
    %v473 = vmul.f32 %v472, 1.442695
    %v474 = vpow.pop %v473
    %v475 = vadd.f32 %v474, 1.0
    %v476 = vrcp.pop %v475
    %v477 = vmul.f32 1.0, %v476
    %v478 = vtanh.pop %v471
    %v479 = vmul.f32 %v477, 0.0
    %481 = vrot.lane.b32.xlu0 %v478, 32
    %v482 = vpop.permute.xlu0 %481
    %v484 = vmul.f32 %v477, %v482
    %486 = vrot.lane.b32.xlu0 %v484, 32
    %v487 = vpop.permute.xlu0 %486
    %v489 = vadd.f32 %v479, %v487
    %v490 = vtanh.pop %v489
    %492 = vrot.lane.b32.xlu0 %v490, 32
    %v493 = vpop.permute.xlu0 %492
    %v495 = vmul.f32 %v477, %v493
    %v496 = vpack.c.bf16 %v495, %v495
    %v498 = vrot.slane %v496, 3
    %499 = vrot.lane.b32.xlu0 %v498, 64
    %v500 = vpop.permute.xlu0 %499
    %v505 = vunpack.c.l.b16 %v210
    %v506 = vunpack.c.l.b16 %v211
    %v507 = vunpack.c.l.b16 %v212
    %v508 = vunpack.c.l.b16 %v213
    %v509 = vpack.c.b16 %v506, %v505
    %v510 = vpack.c.b16 %v508, %v507
    %v514 = vsel %vm287, %v500, 0
    %516 = vmatprep.subr.bf16.mxu0 0
    %517 = vmatpush1.bf16.msra.mxu0 %v509
    %518 = vmatprep.subr.bf16.mxu0 0
    %519 = vmatpush1.bf16.msra.mxu0 %v510
    %520 = vmatprep.subr.bf16.mxu0 0
    %521 = vmatpush1.bf16.msra.mxu0 0
    %522 = vmatprep.subr.bf16.mxu0 0
    %523 = vmatpush1.bf16.msra.mxu0 0
    %524 = vmatprep.subr.bf16.mxu0 0
    %525 = vmatpush1.bf16.msra.mxu0 0
    %526 = vmatprep.subr.bf16.mxu0 0
    %527 = vmatpush1.bf16.msra.mxu0 0
    %528 = vmatprep.subr.bf16.mxu0 0
    %529 = vmatpush1.bf16.msra.mxu0 0
    %530 = vmatprep.subr.bf16.mxu0 0
    %531 = vmatpush1.bf16.msra.mxu0 0
    %532 = vmatprep.subr.bf16.mxu0 0
    %533 = vmatpush1.bf16.msra.mxu0 0
    %534 = vmatprep.subr.bf16.mxu0 0
    %535 = vmatpush1.bf16.msra.mxu0 0
    %536 = vmatprep.subr.bf16.mxu0 0
    %537 = vmatpush1.bf16.msra.mxu0 0
    %538 = vmatprep.subr.bf16.mxu0 0
    %539 = vmatpush1.bf16.msra.mxu0 0
    %540 = vmatprep.subr.bf16.mxu0 0
    %541 = vmatpush1.bf16.msra.mxu0 0
    %542 = vmatprep.subr.bf16.mxu0 0
    %543 = vmatpush1.bf16.msra.mxu0 0
    %544 = vmatprep.subr.bf16.mxu0 0
    %545 = vmatpush1.bf16.msra.mxu0 0
    %546 = vmatprep.subr.bf16.mxu0 0
    %547 = vmatpush1.bf16.msra.mxu0 0
    %548 = vmatprep.mubr.bf16.mxu0 0
    %549 = vmatmul.mubr.bf16.gmra.mrb[0].mxu0 %v514
    %v550 = vpop.f32.mrb[0].mxu0
    %v551 = vadd.f32 0.0, %v550
    %v552 = vpop.f32.mrb[0].mxu0
    %v553 = vpop.f32.mrb[0].mxu0
    %v554 = vpop.f32.mrb[0].mxu0
    %555 = vdwg.mxu0
    %556 = vst [vmem:[#allocation3 + $0x1e] sm:$0x3] %v551
    %557 = vmatprep.subr.bf16.mxu0 0
    %558 = vmatpush1.bf16.msra.mxu0 %v283
    %559 = vmatprep.subr.bf16.mxu0 0
    %560 = vmatpush1.bf16.msra.mxu0 %v284
    %561 = vmatprep.subr.bf16.mxu0 0
    %562 = vmatpush1.bf16.msra.mxu0 0
    %563 = vmatprep.subr.bf16.mxu0 0
    %564 = vmatpush1.bf16.msra.mxu0 0
    %565 = vmatprep.subr.bf16.mxu0 0
    %566 = vmatpush1.bf16.msra.mxu0 0
    %567 = vmatprep.subr.bf16.mxu0 0
    %568 = vmatpush1.bf16.msra.mxu0 0
    %569 = vmatprep.subr.bf16.mxu0 0
    %570 = vmatpush1.bf16.msra.mxu0 0
    %571 = vmatprep.subr.bf16.mxu0 0
    %572 = vmatpush1.bf16.msra.mxu0 0
    %573 = vmatprep.subr.bf16.mxu0 0
    %574 = vmatpush1.bf16.msra.mxu0 0
    %575 = vmatprep.subr.bf16.mxu0 0
    %576 = vmatpush1.bf16.msra.mxu0 0
    %577 = vmatprep.subr.bf16.mxu0 0
    %578 = vmatpush1.bf16.msra.mxu0 0
    %579 = vmatprep.subr.bf16.mxu0 0
    %580 = vmatpush1.bf16.msra.mxu0 0
    %581 = vmatprep.subr.bf16.mxu0 0
    %582 = vmatpush1.bf16.msra.mxu0 0
    %583 = vmatprep.subr.bf16.mxu0 0
    %584 = vmatpush1.bf16.msra.mxu0 0
    %585 = vmatprep.subr.bf16.mxu0 0
    %586 = vmatpush1.bf16.msra.mxu0 0
    %587 = vmatprep.subr.bf16.mxu0 0
    %588 = vmatpush1.bf16.msra.mxu0 0
    %589 = vmatprep.mubr.bf16.mxu0 0
    %590 = vmatmul.mubr.bf16.gmra.mrb[0].mxu0 %v373
    %v591 = vpop.f32.mrb[0].mxu0
    %v592 = vadd.f32 0.0, %v591
    %v593 = vpop.f32.mrb[0].mxu0
    %v594 = vpop.f32.mrb[0].mxu0
    %v595 = vpop.f32.mrb[0].mxu0
    %596 = vdwg.mxu0
    %v598 = vrot.slane %v592, 6
    %v600 = vadd.f32 %v255, %v598
    %v601 = vxor.u32 %v600, 2147483648
    %v602 = vmul.f32 %v601, 1.442695
    %v603 = vpow.pop %v602
    %v604 = vadd.f32 %v603, 1.0
    %v605 = vrcp.pop %v604
    %v606 = vmul.f32 1.0, %v605
    %v607 = vtanh.pop %v600
    %v609 = vrot.slane %v349, 6
    %v611 = vmul.f32 %v606, %v609
    %613 = vrot.lane.b32.xlu0 %v607, 32
    %v614 = vpop.permute.xlu0 %613
    %v616 = vmul.f32 %v606, %v614
    %618 = vrot.lane.b32.xlu0 %v616, 32
    %v619 = vpop.permute.xlu0 %618
    %v621 = vadd.f32 %v611, %v619
    %v622 = vtanh.pop %v621
    %624 = vrot.lane.b32.xlu0 %v622, 32
    %v625 = vpop.permute.xlu0 %624
    %v627 = vmul.f32 %v606, %v625
    %v628 = vpack.c.bf16 %v627, %v627
    %v630 = vrot.slane %v628, 1
    %631 = vrot.lane.b32.xlu0 %v630, 64
    %v632 = vpop.permute.xlu0 %631
    %v634 = vsel %vm287, %v632, 0
    %636 = vmatprep.subr.bf16.mxu0 0
    %637 = vmatpush1.bf16.msra.mxu0 %v368
    %638 = vmatprep.subr.bf16.mxu0 0
    %639 = vmatpush1.bf16.msra.mxu0 %v369
    %640 = vmatprep.subr.bf16.mxu0 0
    %641 = vmatpush1.bf16.msra.mxu0 0
    %642 = vmatprep.subr.bf16.mxu0 0
    %643 = vmatpush1.bf16.msra.mxu0 0
    %644 = vmatprep.subr.bf16.mxu0 0
    %645 = vmatpush1.bf16.msra.mxu0 0
    %646 = vmatprep.subr.bf16.mxu0 0
    %647 = vmatpush1.bf16.msra.mxu0 0
    %648 = vmatprep.subr.bf16.mxu0 0
    %649 = vmatpush1.bf16.msra.mxu0 0
    %650 = vmatprep.subr.bf16.mxu0 0
    %651 = vmatpush1.bf16.msra.mxu0 0
    %652 = vmatprep.subr.bf16.mxu0 0
    %653 = vmatpush1.bf16.msra.mxu0 0
    %654 = vmatprep.subr.bf16.mxu0 0
    %655 = vmatpush1.bf16.msra.mxu0 0
    %656 = vmatprep.subr.bf16.mxu0 0
    %657 = vmatpush1.bf16.msra.mxu0 0
    %658 = vmatprep.subr.bf16.mxu0 0
    %659 = vmatpush1.bf16.msra.mxu0 0
    %660 = vmatprep.subr.bf16.mxu0 0
    %661 = vmatpush1.bf16.msra.mxu0 0
    %662 = vmatprep.subr.bf16.mxu0 0
    %663 = vmatpush1.bf16.msra.mxu0 0
    %664 = vmatprep.subr.bf16.mxu0 0
    %665 = vmatpush1.bf16.msra.mxu0 0
    %666 = vmatprep.subr.bf16.mxu0 0
    %667 = vmatpush1.bf16.msra.mxu0 0
    %668 = vmatprep.mubr.bf16.mxu0 0
    %669 = vmatmul.mubr.bf16.gmra.mrb[0].mxu0 %v634
    %v670 = vpop.f32.mrb[0].mxu0
    %v671 = vadd.f32 0.0, %v670
    %v672 = vpop.f32.mrb[0].mxu0
    %v673 = vpop.f32.mrb[0].mxu0
    %v674 = vpop.f32.mrb[0].mxu0
    %675 = vdwg.mxu0
    %676 = vst [vmem:[#allocation2 + $0x2] sm:$0x3] %v671
    %677 = vmatprep.subr.bf16.mxu0 0
    %678 = vmatpush1.bf16.msra.mxu0 %v424
    %679 = vmatprep.subr.bf16.mxu0 0
    %680 = vmatpush1.bf16.msra.mxu0 %v425
    %681 = vmatprep.subr.bf16.mxu0 0
    %682 = vmatpush1.bf16.msra.mxu0 0
    %683 = vmatprep.subr.bf16.mxu0 0
    %684 = vmatpush1.bf16.msra.mxu0 0
    %685 = vmatprep.subr.bf16.mxu0 0
    %686 = vmatpush1.bf16.msra.mxu0 0
    %687 = vmatprep.subr.bf16.mxu0 0
    %688 = vmatpush1.bf16.msra.mxu0 0
    %689 = vmatprep.subr.bf16.mxu0 0
    %690 = vmatpush1.bf16.msra.mxu0 0
    %691 = vmatprep.subr.bf16.mxu0 0
    %692 = vmatpush1.bf16.msra.mxu0 0
    %693 = vmatprep.subr.bf16.mxu0 0
    %694 = vmatpush1.bf16.msra.mxu0 0
    %695 = vmatprep.subr.bf16.mxu0 0
    %696 = vmatpush1.bf16.msra.mxu0 0
    %697 = vmatprep.subr.bf16.mxu0 0
    %698 = vmatpush1.bf16.msra.mxu0 0
    %699 = vmatprep.subr.bf16.mxu0 0
    %700 = vmatpush1.bf16.msra.mxu0 0
    %701 = vmatprep.subr.bf16.mxu0 0
    %702 = vmatpush1.bf16.msra.mxu0 0
    %703 = vmatprep.subr.bf16.mxu0 0
    %704 = vmatpush1.bf16.msra.mxu0 0
    %705 = vmatprep.subr.bf16.mxu0 0
    %706 = vmatpush1.bf16.msra.mxu0 0
    %707 = vmatprep.subr.bf16.mxu0 0
    %708 = vmatpush1.bf16.msra.mxu0 0
    %709 = vmatprep.mubr.bf16.mxu0 0
    %710 = vmatmul.mubr.bf16.gmra.mrb[0].mxu0 %v514
    %v711 = vpop.f32.mrb[0].mxu0
    %v712 = vadd.f32 0.0, %v711
    %v713 = vpop.f32.mrb[0].mxu0
    %v714 = vpop.f32.mrb[0].mxu0
    %v715 = vpop.f32.mrb[0].mxu0
    %716 = vdwg.mxu0
    %v718 = vrot.slane %v712, 4
    %v720 = vadd.f32 %v274, %v718
    %v721 = vxor.u32 %v720, 2147483648
    %v722 = vmul.f32 %v721, 1.442695
    %v723 = vpow.pop %v722
    %v724 = vadd.f32 %v723, 1.0
    %v725 = vrcp.pop %v724
    %v726 = vmul.f32 1.0, %v725
    %v727 = vtanh.pop %v720
    %v729 = vrot.slane %v489, 2
    %v731 = vmul.f32 %v726, %v729
    %733 = vrot.lane.b32.xlu0 %v727, 32
    %v734 = vpop.permute.xlu0 %733
    %v736 = vmul.f32 %v726, %v734
    %738 = vrot.lane.b32.xlu0 %v736, 32
    %v739 = vpop.permute.xlu0 %738
    %v741 = vadd.f32 %v731, %v739
    %v742 = vtanh.pop %v741
    %744 = vrot.lane.b32.xlu0 %v742, 32
    %v745 = vpop.permute.xlu0 %744
    %v747 = vmul.f32 %v726, %v745
    %v748 = vpack.c.bf16 %v747, %v747
    %v750 = vrot.slane %v748, 2
    %751 = vrot.lane.b32.xlu0 %v750, 64
    %v752 = vpop.permute.xlu0 %751
    %v754 = vsel %vm287, %v752, 0
    %756 = vmatprep.subr.bf16.mxu0 0
    %757 = vmatpush1.bf16.msra.mxu0 %v509
    %758 = vmatprep.subr.bf16.mxu0 0
    %759 = vmatpush1.bf16.msra.mxu0 %v510
    %760 = vmatprep.subr.bf16.mxu0 0
    %761 = vmatpush1.bf16.msra.mxu0 0
    %762 = vmatprep.subr.bf16.mxu0 0
    %763 = vmatpush1.bf16.msra.mxu0 0
    %764 = vmatprep.subr.bf16.mxu0 0
    %765 = vmatpush1.bf16.msra.mxu0 0
    %766 = vmatprep.subr.bf16.mxu0 0
    %767 = vmatpush1.bf16.msra.mxu0 0
    %768 = vmatprep.subr.bf16.mxu0 0
    %769 = vmatpush1.bf16.msra.mxu0 0
    %770 = vmatprep.subr.bf16.mxu0 0
    %771 = vmatpush1.bf16.msra.mxu0 0
    %772 = vmatprep.subr.bf16.mxu0 0
    %773 = vmatpush1.bf16.msra.mxu0 0
    %774 = vmatprep.subr.bf16.mxu0 0
    %775 = vmatpush1.bf16.msra.mxu0 0
    %776 = vmatprep.subr.bf16.mxu0 0
    %777 = vmatpush1.bf16.msra.mxu0 0
    %778 = vmatprep.subr.bf16.mxu0 0
    %779 = vmatpush1.bf16.msra.mxu0 0
    %780 = vmatprep.subr.bf16.mxu0 0
    %781 = vmatpush1.bf16.msra.mxu0 0
    %782 = vmatprep.subr.bf16.mxu0 0
    %783 = vmatpush1.bf16.msra.mxu0 0
    %784 = vmatprep.subr.bf16.mxu0 0
    %785 = vmatpush1.bf16.msra.mxu0 0
    %786 = vmatprep.subr.bf16.mxu0 0
    %787 = vmatpush1.bf16.msra.mxu0 0
    %788 = vmatprep.mubr.bf16.mxu0 0
    %789 = vmatmul.mubr.bf16.gmra.mrb[0].mxu0 %v754
    %v790 = vpop.f32.mrb[0].mxu0
    %v791 = vadd.f32 0.0, %v790
    %v792 = vpop.f32.mrb[0].mxu0
    %v793 = vpop.f32.mrb[0].mxu0
    %v794 = vpop.f32.mrb[0].mxu0
    %795 = vdwg.mxu0
    %796 = vst [vmem:[#allocation3 + $0x1c] sm:$0x3] %v791
    %797 = vmatprep.subr.bf16.mxu0 0
    %798 = vmatpush1.bf16.msra.mxu0 %v283
    %799 = vmatprep.subr.bf16.mxu0 0
    %800 = vmatpush1.bf16.msra.mxu0 %v284
    %801 = vmatprep.subr.bf16.mxu0 0
    %802 = vmatpush1.bf16.msra.mxu0 0
    %803 = vmatprep.subr.bf16.mxu0 0
    %804 = vmatpush1.bf16.msra.mxu0 0
    %805 = vmatprep.subr.bf16.mxu0 0
    %806 = vmatpush1.bf16.msra.mxu0 0
    %807 = vmatprep.subr.bf16.mxu0 0
    %808 = vmatpush1.bf16.msra.mxu0 0
    %809 = vmatprep.subr.bf16.mxu0 0
    %810 = vmatpush1.bf16.msra.mxu0 0
    %811 = vmatprep.subr.bf16.mxu0 0
    %812 = vmatpush1.bf16.msra.mxu0 0
    %813 = vmatprep.subr.bf16.mxu0 0
    %814 = vmatpush1.bf16.msra.mxu0 0
    %815 = vmatprep.subr.bf16.mxu0 0
    %816 = vmatpush1.bf16.msra.mxu0 0
    %817 = vmatprep.subr.bf16.mxu0 0
    %818 = vmatpush1.bf16.msra.mxu0 0
    %819 = vmatprep.subr.bf16.mxu0 0
    %820 = vmatpush1.bf16.msra.mxu0 0
    %821 = vmatprep.subr.bf16.mxu0 0
    %822 = vmatpush1.bf16.msra.mxu0 0
    %823 = vmatprep.subr.bf16.mxu0 0
    %824 = vmatpush1.bf16.msra.mxu0 0
    %825 = vmatprep.subr.bf16.mxu0 0
    %826 = vmatpush1.bf16.msra.mxu0 0
    %827 = vmatprep.subr.bf16.mxu0 0
    %828 = vmatpush1.bf16.msra.mxu0 0
    %829 = vmatprep.mubr.bf16.mxu0 0
    %830 = vmatmul.mubr.bf16.gmra.mrb[0].mxu0 %v634
    %v831 = vpop.f32.mrb[0].mxu0
    %v832 = vadd.f32 0.0, %v831
    %v833 = vpop.f32.mrb[0].mxu0
    %v834 = vpop.f32.mrb[0].mxu0
    %v835 = vpop.f32.mrb[0].mxu0
    %836 = vdwg.mxu0
    %v838 = vrot.slane %v832, 4
    %v840 = vadd.f32 %v255, %v838
    %v841 = vxor.u32 %v840, 2147483648
    %v842 = vmul.f32 %v841, 1.442695
    %v843 = vpow.pop %v842
    %v844 = vadd.f32 %v843, 1.0
    %v845 = vrcp.pop %v844
    %v846 = vmul.f32 1.0, %v845
    %v847 = vtanh.pop %v840
    %v849 = vrot.slane %v621, 6
    %v851 = vmul.f32 %v846, %v849
    %853 = vrot.lane.b32.xlu0 %v847, 32
    %v854 = vpop.permute.xlu0 %853
    %v856 = vmul.f32 %v846, %v854
    %858 = vrot.lane.b32.xlu0 %v856, 32
    %v859 = vpop.permute.xlu0 %858
    %v861 = vadd.f32 %v851, %v859
    %v862 = vtanh.pop %v861
    %864 = vrot.lane.b32.xlu0 %v862, 32
    %v865 = vpop.permute.xlu0 %864
    %v867 = vmul.f32 %v846, %v865
    %v868 = vpack.c.bf16 %v867, %v867
    %v870 = vrot.slane %v868, 2
    %871 = vrot.lane.b32.xlu0 %v870, 64
    %v872 = vpop.permute.xlu0 %871
    %v874 = vsel %vm287, %v872, 0
    %876 = vmatprep.subr.bf16.mxu0 0
    %877 = vmatpush1.bf16.msra.mxu0 %v368
    %878 = vmatprep.subr.bf16.mxu0 0
    %879 = vmatpush1.bf16.msra.mxu0 %v369
    %880 = vmatprep.subr.bf16.mxu0 0
    %881 = vmatpush1.bf16.msra.mxu0 0
    %882 = vmatprep.subr.bf16.mxu0 0
    %883 = vmatpush1.bf16.msra.mxu0 0
    %884 = vmatprep.subr.bf16.mxu0 0
    %885 = vmatpush1.bf16.msra.mxu0 0
    %886 = vmatprep.subr.bf16.mxu0 0
    %887 = vmatpush1.bf16.msra.mxu0 0
    %888 = vmatprep.subr.bf16.mxu0 0
    %889 = vmatpush1.bf16.msra.mxu0 0
    %890 = vmatprep.subr.bf16.mxu0 0
    %891 = vmatpush1.bf16.msra.mxu0 0
    %892 = vmatprep.subr.bf16.mxu0 0
    %893 = vmatpush1.bf16.msra.mxu0 0
    %894 = vmatprep.subr.bf16.mxu0 0
    %895 = vmatpush1.bf16.msra.mxu0 0
    %896 = vmatprep.subr.bf16.mxu0 0
    %897 = vmatpush1.bf16.msra.mxu0 0
    %898 = vmatprep.subr.bf16.mxu0 0
    %899 = vmatpush1.bf16.msra.mxu0 0
    %900 = vmatprep.subr.bf16.mxu0 0
    %901 = vmatpush1.bf16.msra.mxu0 0
    %902 = vmatprep.subr.bf16.mxu0 0
    %903 = vmatpush1.bf16.msra.mxu0 0
    %904 = vmatprep.subr.bf16.mxu0 0
    %905 = vmatpush1.bf16.msra.mxu0 0
    %906 = vmatprep.subr.bf16.mxu0 0
    %907 = vmatpush1.bf16.msra.mxu0 0
    %908 = vmatprep.mubr.bf16.mxu0 0
    %909 = vmatmul.mubr.bf16.gmra.mrb[0].mxu0 %v874
    %v910 = vpop.f32.mrb[0].mxu0
    %v911 = vadd.f32 0.0, %v910
    %v912 = vpop.f32.mrb[0].mxu0
    %v913 = vpop.f32.mrb[0].mxu0
    %v914 = vpop.f32.mrb[0].mxu0
    %915 = vdwg.mxu0
    %916 = vst [vmem:[#allocation2 + $0x4] sm:$0x3] %v911
    %917 = vmatprep.subr.bf16.mxu0 0
    %918 = vmatpush1.bf16.msra.mxu0 %v424
    %919 = vmatprep.subr.bf16.mxu0 0
    %920 = vmatpush1.bf16.msra.mxu0 %v425
    %921 = vmatprep.subr.bf16.mxu0 0
    %922 = vmatpush1.bf16.msra.mxu0 0
    %923 = vmatprep.subr.bf16.mxu0 0
    %924 = vmatpush1.bf16.msra.mxu0 0
    %925 = vmatprep.subr.bf16.mxu0 0
    %926 = vmatpush1.bf16.msra.mxu0 0
    %927 = vmatprep.subr.bf16.mxu0 0
    %928 = vmatpush1.bf16.msra.mxu0 0
    %929 = vmatprep.subr.bf16.mxu0 0
    %930 = vmatpush1.bf16.msra.mxu0 0
    %931 = vmatprep.subr.bf16.mxu0 0
    %932 = vmatpush1.bf16.msra.mxu0 0
    %933 = vmatprep.subr.bf16.mxu0 0
    %934 = vmatpush1.bf16.msra.mxu0 0
    %935 = vmatprep.subr.bf16.mxu0 0
    %936 = vmatpush1.bf16.msra.mxu0 0
    %937 = vmatprep.subr.bf16.mxu0 0
    %938 = vmatpush1.bf16.msra.mxu0 0
    %939 = vmatprep.subr.bf16.mxu0 0
    %940 = vmatpush1.bf16.msra.mxu0 0
    %941 = vmatprep.subr.bf16.mxu0 0
    %942 = vmatpush1.bf16.msra.mxu0 0
    %943 = vmatprep.subr.bf16.mxu0 0
    %944 = vmatpush1.bf16.msra.mxu0 0
    %945 = vmatprep.subr.bf16.mxu0 0
    %946 = vmatpush1.bf16.msra.mxu0 0
    %947 = vmatprep.subr.bf16.mxu0 0
    %948 = vmatpush1.bf16.msra.mxu0 0
    %949 = vmatprep.mubr.bf16.mxu0 0
    %950 = vmatmul.mubr.bf16.gmra.mrb[0].mxu0 %v754
    %v951 = vpop.f32.mrb[0].mxu0
    %v952 = vadd.f32 0.0, %v951
    %v953 = vpop.f32.mrb[0].mxu0
    %v954 = vpop.f32.mrb[0].mxu0
    %v955 = vpop.f32.mrb[0].mxu0
    %956 = vdwg.mxu0
    %v958 = vrot.slane %v952, 6
    %v960 = vadd.f32 %v274, %v958
    %v961 = vxor.u32 %v960, 2147483648
    %v962 = vmul.f32 %v961, 1.442695
    %v963 = vpow.pop %v962
    %v964 = vadd.f32 %v963, 1.0
    %v965 = vrcp.pop %v964
    %v966 = vmul.f32 1.0, %v965
    %v967 = vtanh.pop %v960
    %v969 = vrot.slane %v741, 2
    %v971 = vmul.f32 %v966, %v969
    %973 = vrot.lane.b32.xlu0 %v967, 32
    %v974 = vpop.permute.xlu0 %973
    %v976 = vmul.f32 %v966, %v974
    %978 = vrot.lane.b32.xlu0 %v976, 32
    %v979 = vpop.permute.xlu0 %978
    %v981 = vadd.f32 %v971, %v979
    %v982 = vtanh.pop %v981
    %984 = vrot.lane.b32.xlu0 %v982, 32
    %v985 = vpop.permute.xlu0 %984
    %v987 = vmul.f32 %v966, %v985
    %v988 = vpack.c.bf16 %v987, %v987
    %v990 = vrot.slane %v988, 1
    %991 = vrot.lane.b32.xlu0 %v990, 64
    %v992 = vpop.permute.xlu0 %991
    %v994 = vsel %vm287, %v992, 0
    %996 = vmatprep.subr.bf16.mxu0 0
    %997 = vmatpush1.bf16.msra.mxu0 %v509
    %998 = vmatprep.subr.bf16.mxu0 0
    %999 = vmatpush1.bf16.msra.mxu0 %v510
    %1000 = vmatprep.subr.bf16.mxu0 0
    %1001 = vmatpush1.bf16.msra.mxu0 0
    %1002 = vmatprep.subr.bf16.mxu0 0
    %1003 = vmatpush1.bf16.msra.mxu0 0
    %1004 = vmatprep.subr.bf16.mxu0 0
    %1005 = vmatpush1.bf16.msra.mxu0 0
    %1006 = vmatprep.subr.bf16.mxu0 0
    %1007 = vmatpush1.bf16.msra.mxu0 0
    %1008 = vmatprep.subr.bf16.mxu0 0
    %1009 = vmatpush1.bf16.msra.mxu0 0
    %1010 = vmatprep.subr.bf16.mxu0 0
    %1011 = vmatpush1.bf16.msra.mxu0 0
    %1012 = vmatprep.subr.bf16.mxu0 0
    %1013 = vmatpush1.bf16.msra.mxu0 0
    %1014 = vmatprep.subr.bf16.mxu0 0
    %1015 = vmatpush1.bf16.msra.mxu0 0
    %1016 = vmatprep.subr.bf16.mxu0 0
    %1017 = vmatpush1.bf16.msra.mxu0 0
    %1018 = vmatprep.subr.bf16.mxu0 0
    %1019 = vmatpush1.bf16.msra.mxu0 0
    %1020 = vmatprep.subr.bf16.mxu0 0
    %1021 = vmatpush1.bf16.msra.mxu0 0
    %1022 = vmatprep.subr.bf16.mxu0 0
    %1023 = vmatpush1.bf16.msra.mxu0 0
    %1024 = vmatprep.subr.bf16.mxu0 0
    %1025 = vmatpush1.bf16.msra.mxu0 0
    %1026 = vmatprep.subr.bf16.mxu0 0
    %1027 = vmatpush1.bf16.msra.mxu0 0
    %1028 = vmatprep.mubr.bf16.mxu0 0
    %1029 = vmatmul.mubr.bf16.gmra.mrb[0].mxu0 %v994
    %v1030 = vpop.f32.mrb[0].mxu0
    %v1031 = vadd.f32 0.0, %v1030
    %v1032 = vpop.f32.mrb[0].mxu0
    %v1033 = vpop.f32.mrb[0].mxu0
    %v1034 = vpop.f32.mrb[0].mxu0
    %1035 = vdwg.mxu0
    %1036 = vst [vmem:[#allocation3 + $0x1a] sm:$0x3] %v1031
    %1037 = vmatprep.subr.bf16.mxu0 0
    %1038 = vmatpush1.bf16.msra.mxu0 %v283
    %1039 = vmatprep.subr.bf16.mxu0 0
    %1040 = vmatpush1.bf16.msra.mxu0 %v284
    %1041 = vmatprep.subr.bf16.mxu0 0
    %1042 = vmatpush1.bf16.msra.mxu0 0
    %1043 = vmatprep.subr.bf16.mxu0 0
    %1044 = vmatpush1.bf16.msra.mxu0 0
    %1045 = vmatprep.subr.bf16.mxu0 0
    %1046 = vmatpush1.bf16.msra.mxu0 0
    %1047 = vmatprep.subr.bf16.mxu0 0
    %1048 = vmatpush1.bf16.msra.mxu0 0
    %1049 = vmatprep.subr.bf16.mxu0 0
    %1050 = vmatpush1.bf16.msra.mxu0 0
    %1051 = vmatprep.subr.bf16.mxu0 0
    %1052 = vmatpush1.bf16.msra.mxu0 0
    %1053 = vmatprep.subr.bf16.mxu0 0
    %1054 = vmatpush1.bf16.msra.mxu0 0
    %1055 = vmatprep.subr.bf16.mxu0 0
    %1056 = vmatpush1.bf16.msra.mxu0 0
    %1057 = vmatprep.subr.bf16.mxu0 0
    %1058 = vmatpush1.bf16.msra.mxu0 0
    %1059 = vmatprep.subr.bf16.mxu0 0
    %1060 = vmatpush1.bf16.msra.mxu0 0
    %1061 = vmatprep.subr.bf16.mxu0 0
    %1062 = vmatpush1.bf16.msra.mxu0 0
    %1063 = vmatprep.subr.bf16.mxu0 0
    %1064 = vmatpush1.bf16.msra.mxu0 0
    %1065 = vmatprep.subr.bf16.mxu0 0
    %1066 = vmatpush1.bf16.msra.mxu0 0
    %1067 = vmatprep.subr.bf16.mxu0 0
    %1068 = vmatpush1.bf16.msra.mxu0 0
    %1069 = vmatprep.mubr.bf16.mxu0 0
    %1070 = vmatmul.mubr.bf16.gmra.mrb[0].mxu0 %v874
    %v1071 = vpop.f32.mrb[0].mxu0
    %v1072 = vadd.f32 0.0, %v1071
    %v1073 = vpop.f32.mrb[0].mxu0
    %v1074 = vpop.f32.mrb[0].mxu0
    %v1075 = vpop.f32.mrb[0].mxu0
    %1076 = vdwg.mxu0
    %v1078 = vrot.slane %v1072, 2
    %v1080 = vadd.f32 %v255, %v1078
    %v1081 = vxor.u32 %v1080, 2147483648
    %v1082 = vmul.f32 %v1081, 1.442695
    %v1083 = vpow.pop %v1082
    %v1084 = vadd.f32 %v1083, 1.0
    %v1085 = vrcp.pop %v1084
    %v1086 = vmul.f32 1.0, %v1085
    %v1087 = vtanh.pop %v1080
    %v1089 = vrot.slane %v861, 6
    %v1091 = vmul.f32 %v1086, %v1089
    %1093 = vrot.lane.b32.xlu0 %v1087, 32
    %v1094 = vpop.permute.xlu0 %1093
    %v1096 = vmul.f32 %v1086, %v1094
    %1098 = vrot.lane.b32.xlu0 %v1096, 32
    %v1099 = vpop.permute.xlu0 %1098
    %v1101 = vadd.f32 %v1091, %v1099
    %v1102 = vtanh.pop %v1101
    %1104 = vrot.lane.b32.xlu0 %v1102, 32
    %v1105 = vpop.permute.xlu0 %1104
    %v1107 = vmul.f32 %v1086, %v1105
    %v1108 = vpack.c.bf16 %v1107, %v1107
    %v1110 = vrot.slane %v1108, 3
    %1111 = vrot.lane.b32.xlu0 %v1110, 64
    %v1112 = vpop.permute.xlu0 %1111
    %v1114 = vsel %vm287, %v1112, 0
    %1116 = vmatprep.subr.bf16.mxu0 0
    %1117 = vmatpush1.bf16.msra.mxu0 %v368
    %1118 = vmatprep.subr.bf16.mxu0 0
    %1119 = vmatpush1.bf16.msra.mxu0 %v369
    %1120 = vmatprep.subr.bf16.mxu0 0
    %1121 = vmatpush1.bf16.msra.mxu0 0
    %1122 = vmatprep.subr.bf16.mxu0 0
    %1123 = vmatpush1.bf16.msra.mxu0 0
    %1124 = vmatprep.subr.bf16.mxu0 0
    %1125 = vmatpush1.bf16.msra.mxu0 0
    %1126 = vmatprep.subr.bf16.mxu0 0
    %1127 = vmatpush1.bf16.msra.mxu0 0
    %1128 = vmatprep.subr.bf16.mxu0 0
    %1129 = vmatpush1.bf16.msra.mxu0 0
    %1130 = vmatprep.subr.bf16.mxu0 0
    %1131 = vmatpush1.bf16.msra.mxu0 0
    %1132 = vmatprep.subr.bf16.mxu0 0
    %1133 = vmatpush1.bf16.msra.mxu0 0
    %1134 = vmatprep.subr.bf16.mxu0 0
    %1135 = vmatpush1.bf16.msra.mxu0 0
    %1136 = vmatprep.subr.bf16.mxu0 0
    %1137 = vmatpush1.bf16.msra.mxu0 0
    %1138 = vmatprep.subr.bf16.mxu0 0
    %1139 = vmatpush1.bf16.msra.mxu0 0
    %1140 = vmatprep.subr.bf16.mxu0 0
    %1141 = vmatpush1.bf16.msra.mxu0 0
    %1142 = vmatprep.subr.bf16.mxu0 0
    %1143 = vmatpush1.bf16.msra.mxu0 0
    %1144 = vmatprep.subr.bf16.mxu0 0
    %1145 = vmatpush1.bf16.msra.mxu0 0
    %1146 = vmatprep.subr.bf16.mxu0 0
    %1147 = vmatpush1.bf16.msra.mxu0 0
    %1148 = vmatprep.mubr.bf16.mxu0 0
    %1149 = vmatmul.mubr.bf16.gmra.mrb[0].mxu0 %v1114
    %v1150 = vpop.f32.mrb[0].mxu0
    %v1151 = vadd.f32 0.0, %v1150
    %v1152 = vpop.f32.mrb[0].mxu0
    %v1153 = vpop.f32.mrb[0].mxu0
    %v1154 = vpop.f32.mrb[0].mxu0
    %1155 = vdwg.mxu0
    %1156 = vst [vmem:[#allocation2 + $0x6] sm:$0x3] %v1151
    %1157 = vmatprep.subr.bf16.mxu0 0
    %1158 = vmatpush1.bf16.msra.mxu0 %v424
    %1159 = vmatprep.subr.bf16.mxu0 0
    %1160 = vmatpush1.bf16.msra.mxu0 %v425
    %1161 = vmatprep.subr.bf16.mxu0 0
    %1162 = vmatpush1.bf16.msra.mxu0 0
    %1163 = vmatprep.subr.bf16.mxu0 0
    %1164 = vmatpush1.bf16.msra.mxu0 0
    %1165 = vmatprep.subr.bf16.mxu0 0
    %1166 = vmatpush1.bf16.msra.mxu0 0
    %1167 = vmatprep.subr.bf16.mxu0 0
    %1168 = vmatpush1.bf16.msra.mxu0 0
    %1169 = vmatprep.subr.bf16.mxu0 0
    %1170 = vmatpush1.bf16.msra.mxu0 0
    %1171 = vmatprep.subr.bf16.mxu0 0
    %1172 = vmatpush1.bf16.msra.mxu0 0
    %1173 = vmatprep.subr.bf16.mxu0 0
    %1174 = vmatpush1.bf16.msra.mxu0 0
    %1175 = vmatprep.subr.bf16.mxu0 0
    %1176 = vmatpush1.bf16.msra.mxu0 0
    %1177 = vmatprep.subr.bf16.mxu0 0
    %1178 = vmatpush1.bf16.msra.mxu0 0
    %1179 = vmatprep.subr.bf16.mxu0 0
    %1180 = vmatpush1.bf16.msra.mxu0 0
    %1181 = vmatprep.subr.bf16.mxu0 0
    %1182 = vmatpush1.bf16.msra.mxu0 0
    %1183 = vmatprep.subr.bf16.mxu0 0
    %1184 = vmatpush1.bf16.msra.mxu0 0
    %1185 = vmatprep.subr.bf16.mxu0 0
    %1186 = vmatpush1.bf16.msra.mxu0 0
    %1187 = vmatprep.subr.bf16.mxu0 0
    %1188 = vmatpush1.bf16.msra.mxu0 0
    %1189 = vmatprep.mubr.bf16.mxu0 0
    %1190 = vmatmul.mubr.bf16.gmra.mrb[0].mxu0 %v994
    %v1191 = vpop.f32.mrb[0].mxu0
    %v1192 = vadd.f32 0.0, %v1191
    %v1193 = vpop.f32.mrb[0].mxu0
    %v1194 = vpop.f32.mrb[0].mxu0
    %v1195 = vpop.f32.mrb[0].mxu0
    %1196 = vdwg.mxu0
    %v1197 = vadd.f32 %v274, %v1192
    %v1198 = vxor.u32 %v1197, 2147483648
    %v1199 = vmul.f32 %v1198, 1.442695
    %v1200 = vpow.pop %v1199
    %v1201 = vadd.f32 %v1200, 1.0
    %v1202 = vrcp.pop %v1201
    %v1203 = vmul.f32 1.0, %v1202
    %v1204 = vtanh.pop %v1197
    %v1206 = vrot.slane %v981, 2
    %v1208 = vmul.f32 %v1203, %v1206
    %1210 = vrot.lane.b32.xlu0 %v1204, 32
    %v1211 = vpop.permute.xlu0 %1210
    %v1213 = vmul.f32 %v1203, %v1211
    %1215 = vrot.lane.b32.xlu0 %v1213, 32
    %v1216 = vpop.permute.xlu0 %1215
    %v1218 = vadd.f32 %v1208, %v1216
    %v1219 = vtanh.pop %v1218
    %1221 = vrot.lane.b32.xlu0 %v1219, 32
    %v1222 = vpop.permute.xlu0 %1221
    %v1224 = vmul.f32 %v1203, %v1222
    %v1225 = vpack.c.bf16 %v1224, %v1224
    %1227 = vrot.lane.b32.xlu0 %v1225, 64
    %v1228 = vpop.permute.xlu0 %1227
    %v1230 = vsel %vm287, %v1228, 0
    %1232 = vmatprep.subr.bf16.mxu0 0
    %1233 = vmatpush1.bf16.msra.mxu0 %v509
    %1234 = vmatprep.subr.bf16.mxu0 0
    %1235 = vmatpush1.bf16.msra.mxu0 %v510
    %1236 = vmatprep.subr.bf16.mxu0 0
    %1237 = vmatpush1.bf16.msra.mxu0 0
    %1238 = vmatprep.subr.bf16.mxu0 0
    %1239 = vmatpush1.bf16.msra.mxu0 0
    %1240 = vmatprep.subr.bf16.mxu0 0
    %1241 = vmatpush1.bf16.msra.mxu0 0
    %1242 = vmatprep.subr.bf16.mxu0 0
    %1243 = vmatpush1.bf16.msra.mxu0 0
    %1244 = vmatprep.subr.bf16.mxu0 0
    %1245 = vmatpush1.bf16.msra.mxu0 0
    %1246 = vmatprep.subr.bf16.mxu0 0
    %1247 = vmatpush1.bf16.msra.mxu0 0
    %1248 = vmatprep.subr.bf16.mxu0 0
    %1249 = vmatpush1.bf16.msra.mxu0 0
    %1250 = vmatprep.subr.bf16.mxu0 0
    %1251 = vmatpush1.bf16.msra.mxu0 0
    %1252 = vmatprep.subr.bf16.mxu0 0
    %1253 = vmatpush1.bf16.msra.mxu0 0
    %1254 = vmatprep.subr.bf16.mxu0 0
    %1255 = vmatpush1.bf16.msra.mxu0 0
    %1256 = vmatprep.subr.bf16.mxu0 0
    %1257 = vmatpush1.bf16.msra.mxu0 0
    %1258 = vmatprep.subr.bf16.mxu0 0
    %1259 = vmatpush1.bf16.msra.mxu0 0
    %1260 = vmatprep.subr.bf16.mxu0 0
    %1261 = vmatpush1.bf16.msra.mxu0 0
    %1262 = vmatprep.subr.bf16.mxu0 0
    %1263 = vmatpush1.bf16.msra.mxu0 0
    %1264 = vmatprep.mubr.bf16.mxu0 0
    %1265 = vmatmul.mubr.bf16.gmra.mrb[0].mxu0 %v1230
    %v1266 = vpop.f32.mrb[0].mxu0
    %v1267 = vadd.f32 0.0, %v1266
    %v1268 = vpop.f32.mrb[0].mxu0
    %v1269 = vpop.f32.mrb[0].mxu0
    %v1270 = vpop.f32.mrb[0].mxu0
    %1271 = vdwg.mxu0
    %1272 = vst [vmem:[#allocation3 + $0x18] sm:$0x3] %v1267
    %1273 = vmatprep.subr.bf16.mxu0 0
    %1274 = vmatpush1.bf16.msra.mxu0 %v283
    %1275 = vmatprep.subr.bf16.mxu0 0
    %1276 = vmatpush1.bf16.msra.mxu0 %v284
    %1277 = vmatprep.subr.bf16.mxu0 0
    %1278 = vmatpush1.bf16.msra.mxu0 0
    %1279 = vmatprep.subr.bf16.mxu0 0
    %1280 = vmatpush1.bf16.msra.mxu0 0
    %1281 = vmatprep.subr.bf16.mxu0 0
    %1282 = vmatpush1.bf16.msra.mxu0 0
    %1283 = vmatprep.subr.bf16.mxu0 0
    %1284 = vmatpush1.bf16.msra.mxu0 0
    %1285 = vmatprep.subr.bf16.mxu0 0
    %1286 = vmatpush1.bf16.msra.mxu0 0
    %1287 = vmatprep.subr.bf16.mxu0 0
    %1288 = vmatpush1.bf16.msra.mxu0 0
    %1289 = vmatprep.subr.bf16.mxu0 0
    %1290 = vmatpush1.bf16.msra.mxu0 0
    %1291 = vmatprep.subr.bf16.mxu0 0
    %1292 = vmatpush1.bf16.msra.mxu0 0
    %1293 = vmatprep.subr.bf16.mxu0 0
    %1294 = vmatpush1.bf16.msra.mxu0 0
    %1295 = vmatprep.subr.bf16.mxu0 0
    %1296 = vmatpush1.bf16.msra.mxu0 0
    %1297 = vmatprep.subr.bf16.mxu0 0
    %1298 = vmatpush1.bf16.msra.mxu0 0
    %1299 = vmatprep.subr.bf16.mxu0 0
    %1300 = vmatpush1.bf16.msra.mxu0 0
    %1301 = vmatprep.subr.bf16.mxu0 0
    %1302 = vmatpush1.bf16.msra.mxu0 0
    %1303 = vmatprep.subr.bf16.mxu0 0
    %1304 = vmatpush1.bf16.msra.mxu0 0
    %1305 = vmatprep.mubr.bf16.mxu0 0
    %1306 = vmatmul.mubr.bf16.gmra.mrb[0].mxu0 %v1114
    %v1307 = vpop.f32.mrb[0].mxu0
    %v1308 = vadd.f32 0.0, %v1307
    %v1309 = vpop.f32.mrb[0].mxu0
    %v1310 = vpop.f32.mrb[0].mxu0
    %v1311 = vpop.f32.mrb[0].mxu0
    %1312 = vdwg.mxu0
    %v1313 = vadd.f32 %v256, %v1308
    %v1314 = vxor.u32 %v1313, 2147483648
    %v1315 = vmul.f32 %v1314, 1.442695
    %v1316 = vpow.pop %v1315
    %v1317 = vadd.f32 %v1316, 1.0
    %v1318 = vrcp.pop %v1317
    %v1319 = vmul.f32 1.0, %v1318
    %v1320 = vtanh.pop %v1313
    %v1322 = vrot.slane %v1101, 6
    %v1324 = vmul.f32 %v1319, %v1322
    %1326 = vrot.lane.b32.xlu0 %v1320, 32
    %v1327 = vpop.permute.xlu0 %1326
    %v1329 = vmul.f32 %v1319, %v1327
    %1331 = vrot.lane.b32.xlu0 %v1329, 32
    %v1332 = vpop.permute.xlu0 %1331
    %v1334 = vadd.f32 %v1324, %v1332
    %v1335 = vtanh.pop %v1334
    %1337 = vrot.lane.b32.xlu0 %v1335, 32
    %v1338 = vpop.permute.xlu0 %1337
    %v1340 = vmul.f32 %v1319, %v1338
    %v1341 = vpack.c.bf16 %v1340, %v1340
    %1343 = vrot.lane.b32.xlu0 %v1341, 64
    %v1344 = vpop.permute.xlu0 %1343
    %v1346 = vsel %vm287, %v1344, 0
    %1348 = vmatprep.subr.bf16.mxu0 0
    %1349 = vmatpush1.bf16.msra.mxu0 %v368
    %1350 = vmatprep.subr.bf16.mxu0 0
    %1351 = vmatpush1.bf16.msra.mxu0 %v369
    %1352 = vmatprep.subr.bf16.mxu0 0
    %1353 = vmatpush1.bf16.msra.mxu0 0
    %1354 = vmatprep.subr.bf16.mxu0 0
    %1355 = vmatpush1.bf16.msra.mxu0 0
    %1356 = vmatprep.subr.bf16.mxu0 0
    %1357 = vmatpush1.bf16.msra.mxu0 0
    %1358 = vmatprep.subr.bf16.mxu0 0
    %1359 = vmatpush1.bf16.msra.mxu0 0
    %1360 = vmatprep.subr.bf16.mxu0 0
    %1361 = vmatpush1.bf16.msra.mxu0 0
    %1362 = vmatprep.subr.bf16.mxu0 0
    %1363 = vmatpush1.bf16.msra.mxu0 0
    %1364 = vmatprep.subr.bf16.mxu0 0
    %1365 = vmatpush1.bf16.msra.mxu0 0
    %1366 = vmatprep.subr.bf16.mxu0 0
    %1367 = vmatpush1.bf16.msra.mxu0 0
    %1368 = vmatprep.subr.bf16.mxu0 0
    %1369 = vmatpush1.bf16.msra.mxu0 0
    %1370 = vmatprep.subr.bf16.mxu0 0
    %1371 = vmatpush1.bf16.msra.mxu0 0
    %1372 = vmatprep.subr.bf16.mxu0 0
    %1373 = vmatpush1.bf16.msra.mxu0 0
    %1374 = vmatprep.subr.bf16.mxu0 0
    %1375 = vmatpush1.bf16.msra.mxu0 0
    %1376 = vmatprep.subr.bf16.mxu0 0
    %1377 = vmatpush1.bf16.msra.mxu0 0
    %1378 = vmatprep.subr.bf16.mxu0 0
    %1379 = vmatpush1.bf16.msra.mxu0 0
    %1380 = vmatprep.mubr.bf16.mxu0 0
    %1381 = vmatmul.mubr.bf16.gmra.mrb[0].mxu0 %v1346
    %v1382 = vpop.f32.mrb[0].mxu0
    %v1383 = vadd.f32 0.0, %v1382
    %v1384 = vpop.f32.mrb[0].mxu0
    %v1385 = vpop.f32.mrb[0].mxu0
    %v1386 = vpop.f32.mrb[0].mxu0
    %1387 = vdwg.mxu0
    %1388 = vst [vmem:[#allocation2 + $0x8] sm:$0x3] %v1383
    %1389 = vmatprep.subr.bf16.mxu0 0
    %1390 = vmatpush1.bf16.msra.mxu0 %v424
    %1391 = vmatprep.subr.bf16.mxu0 0
    %1392 = vmatpush1.bf16.msra.mxu0 %v425
    %1393 = vmatprep.subr.bf16.mxu0 0
    %1394 = vmatpush1.bf16.msra.mxu0 0
    %1395 = vmatprep.subr.bf16.mxu0 0
    %1396 = vmatpush1.bf16.msra.mxu0 0
    %1397 = vmatprep.subr.bf16.mxu0 0
    %1398 = vmatpush1.bf16.msra.mxu0 0
    %1399 = vmatprep.subr.bf16.mxu0 0
    %1400 = vmatpush1.bf16.msra.mxu0 0
    %1401 = vmatprep.subr.bf16.mxu0 0
    %1402 = vmatpush1.bf16.msra.mxu0 0
    %1403 = vmatprep.subr.bf16.mxu0 0
    %1404 = vmatpush1.bf16.msra.mxu0 0
    %1405 = vmatprep.subr.bf16.mxu0 0
    %1406 = vmatpush1.bf16.msra.mxu0 0
    %1407 = vmatprep.subr.bf16.mxu0 0
    %1408 = vmatpush1.bf16.msra.mxu0 0
    %1409 = vmatprep.subr.bf16.mxu0 0
    %1410 = vmatpush1.bf16.msra.mxu0 0
    %1411 = vmatprep.subr.bf16.mxu0 0
    %1412 = vmatpush1.bf16.msra.mxu0 0
    %1413 = vmatprep.subr.bf16.mxu0 0
    %1414 = vmatpush1.bf16.msra.mxu0 0
    %1415 = vmatprep.subr.bf16.mxu0 0
    %1416 = vmatpush1.bf16.msra.mxu0 0
    %1417 = vmatprep.subr.bf16.mxu0 0
    %1418 = vmatpush1.bf16.msra.mxu0 0
    %1419 = vmatprep.subr.bf16.mxu0 0
    %1420 = vmatpush1.bf16.msra.mxu0 0
    %1421 = vmatprep.mubr.bf16.mxu0 0
    %1422 = vmatmul.mubr.bf16.gmra.mrb[0].mxu0 %v1230
    %v1423 = vpop.f32.mrb[0].mxu0
    %v1424 = vadd.f32 0.0, %v1423
    %v1425 = vpop.f32.mrb[0].mxu0
    %v1426 = vpop.f32.mrb[0].mxu0
    %v1427 = vpop.f32.mrb[0].mxu0
    %1428 = vdwg.mxu0
    %v1430 = vrot.slane %v1424, 2
    %v1432 = vadd.f32 %v273, %v1430
    %v1433 = vxor.u32 %v1432, 2147483648
    %v1434 = vmul.f32 %v1433, 1.442695
    %v1435 = vpow.pop %v1434
    %v1436 = vadd.f32 %v1435, 1.0
    %v1437 = vrcp.pop %v1436
    %v1438 = vmul.f32 1.0, %v1437
    %v1439 = vtanh.pop %v1432
    %v1441 = vrot.slane %v1218, 2
    %v1443 = vmul.f32 %v1438, %v1441
    %1445 = vrot.lane.b32.xlu0 %v1439, 32
    %v1446 = vpop.permute.xlu0 %1445
    %v1448 = vmul.f32 %v1438, %v1446
    %1450 = vrot.lane.b32.xlu0 %v1448, 32
    %v1451 = vpop.permute.xlu0 %1450
    %v1453 = vadd.f32 %v1443, %v1451
    %v1454 = vtanh.pop %v1453
    %1456 = vrot.lane.b32.xlu0 %v1454, 32
    %v1457 = vpop.permute.xlu0 %1456
    %v1459 = vmul.f32 %v1438, %v1457
    %v1460 = vpack.c.bf16 %v1459, %v1459
    %v1462 = vrot.slane %v1460, 3
    %1463 = vrot.lane.b32.xlu0 %v1462, 64
    %v1464 = vpop.permute.xlu0 %1463
    %v1466 = vsel %vm287, %v1464, 0
    %1468 = vmatprep.subr.bf16.mxu0 0
    %1469 = vmatpush1.bf16.msra.mxu0 %v509
    %1470 = vmatprep.subr.bf16.mxu0 0
    %1471 = vmatpush1.bf16.msra.mxu0 %v510
    %1472 = vmatprep.subr.bf16.mxu0 0
    %1473 = vmatpush1.bf16.msra.mxu0 0
    %1474 = vmatprep.subr.bf16.mxu0 0
    %1475 = vmatpush1.bf16.msra.mxu0 0
    %1476 = vmatprep.subr.bf16.mxu0 0
    %1477 = vmatpush1.bf16.msra.mxu0 0
    %1478 = vmatprep.subr.bf16.mxu0 0
    %1479 = vmatpush1.bf16.msra.mxu0 0
    %1480 = vmatprep.subr.bf16.mxu0 0
    %1481 = vmatpush1.bf16.msra.mxu0 0
    %1482 = vmatprep.subr.bf16.mxu0 0
    %1483 = vmatpush1.bf16.msra.mxu0 0
    %1484 = vmatprep.subr.bf16.mxu0 0
    %1485 = vmatpush1.bf16.msra.mxu0 0
    %1486 = vmatprep.subr.bf16.mxu0 0
    %1487 = vmatpush1.bf16.msra.mxu0 0
    %1488 = vmatprep.subr.bf16.mxu0 0
    %1489 = vmatpush1.bf16.msra.mxu0 0
    %1490 = vmatprep.subr.bf16.mxu0 0
    %1491 = vmatpush1.bf16.msra.mxu0 0
    %1492 = vmatprep.subr.bf16.mxu0 0
    %1493 = vmatpush1.bf16.msra.mxu0 0
    %1494 = vmatprep.subr.bf16.mxu0 0
    %1495 = vmatpush1.bf16.msra.mxu0 0
    %1496 = vmatprep.subr.bf16.mxu0 0
    %1497 = vmatpush1.bf16.msra.mxu0 0
    %1498 = vmatprep.subr.bf16.mxu0 0
    %1499 = vmatpush1.bf16.msra.mxu0 0
    %1500 = vmatprep.mubr.bf16.mxu0 0
    %1501 = vmatmul.mubr.bf16.gmra.mrb[0].mxu0 %v1466
    %v1502 = vpop.f32.mrb[0].mxu0
    %v1503 = vadd.f32 0.0, %v1502
    %v1504 = vpop.f32.mrb[0].mxu0
    %v1505 = vpop.f32.mrb[0].mxu0
    %v1506 = vpop.f32.mrb[0].mxu0
    %1507 = vdwg.mxu0
    %1508 = vst [vmem:[#allocation3 + $0x16] sm:$0x3] %v1503
    %1509 = vmatprep.subr.bf16.mxu0 0
    %1510 = vmatpush1.bf16.msra.mxu0 %v283
    %1511 = vmatprep.subr.bf16.mxu0 0
    %1512 = vmatpush1.bf16.msra.mxu0 %v284
    %1513 = vmatprep.subr.bf16.mxu0 0
    %1514 = vmatpush1.bf16.msra.mxu0 0
    %1515 = vmatprep.subr.bf16.mxu0 0
    %1516 = vmatpush1.bf16.msra.mxu0 0
    %1517 = vmatprep.subr.bf16.mxu0 0
    %1518 = vmatpush1.bf16.msra.mxu0 0
    %1519 = vmatprep.subr.bf16.mxu0 0
    %1520 = vmatpush1.bf16.msra.mxu0 0
    %1521 = vmatprep.subr.bf16.mxu0 0
    %1522 = vmatpush1.bf16.msra.mxu0 0
    %1523 = vmatprep.subr.bf16.mxu0 0
    %1524 = vmatpush1.bf16.msra.mxu0 0
    %1525 = vmatprep.subr.bf16.mxu0 0
    %1526 = vmatpush1.bf16.msra.mxu0 0
    %1527 = vmatprep.subr.bf16.mxu0 0
    %1528 = vmatpush1.bf16.msra.mxu0 0
    %1529 = vmatprep.subr.bf16.mxu0 0
    %1530 = vmatpush1.bf16.msra.mxu0 0
    %1531 = vmatprep.subr.bf16.mxu0 0
    %1532 = vmatpush1.bf16.msra.mxu0 0
    %1533 = vmatprep.subr.bf16.mxu0 0
    %1534 = vmatpush1.bf16.msra.mxu0 0
    %1535 = vmatprep.subr.bf16.mxu0 0
    %1536 = vmatpush1.bf16.msra.mxu0 0
    %1537 = vmatprep.subr.bf16.mxu0 0
    %1538 = vmatpush1.bf16.msra.mxu0 0
    %1539 = vmatprep.subr.bf16.mxu0 0
    %1540 = vmatpush1.bf16.msra.mxu0 0
    %1541 = vmatprep.mubr.bf16.mxu0 0
    %1542 = vmatmul.mubr.bf16.gmra.mrb[0].mxu0 %v1346
    %v1543 = vpop.f32.mrb[0].mxu0
    %v1544 = vadd.f32 0.0, %v1543
    %v1545 = vpop.f32.mrb[0].mxu0
    %v1546 = vpop.f32.mrb[0].mxu0
    %v1547 = vpop.f32.mrb[0].mxu0
    %1548 = vdwg.mxu0
    %v1550 = vrot.slane %v1544, 6
    %v1552 = vadd.f32 %v256, %v1550
    %v1553 = vxor.u32 %v1552, 2147483648
    %v1554 = vmul.f32 %v1553, 1.442695
    %v1555 = vpow.pop %v1554
    %v1556 = vadd.f32 %v1555, 1.0
    %v1557 = vrcp.pop %v1556
    %v1558 = vmul.f32 1.0, %v1557
    %v1559 = vtanh.pop %v1552
    %v1561 = vrot.slane %v1334, 6
    %v1563 = vmul.f32 %v1558, %v1561
    %1565 = vrot.lane.b32.xlu0 %v1559, 32
    %v1566 = vpop.permute.xlu0 %1565
    %v1568 = vmul.f32 %v1558, %v1566
    %1570 = vrot.lane.b32.xlu0 %v1568, 32
    %v1571 = vpop.permute.xlu0 %1570
    %v1573 = vadd.f32 %v1563, %v1571
    %v1574 = vtanh.pop %v1573
    %1576 = vrot.lane.b32.xlu0 %v1574, 32
    %v1577 = vpop.permute.xlu0 %1576
    %v1579 = vmul.f32 %v1558, %v1577
    %v1580 = vpack.c.bf16 %v1579, %v1579
    %v1582 = vrot.slane %v1580, 1
    %1583 = vrot.lane.b32.xlu0 %v1582, 64
    %v1584 = vpop.permute.xlu0 %1583
    %v1586 = vsel %vm287, %v1584, 0
    %1588 = vmatprep.subr.bf16.mxu0 0
    %1589 = vmatpush1.bf16.msra.mxu0 %v368
    %1590 = vmatprep.subr.bf16.mxu0 0
    %1591 = vmatpush1.bf16.msra.mxu0 %v369
    %1592 = vmatprep.subr.bf16.mxu0 0
    %1593 = vmatpush1.bf16.msra.mxu0 0
    %1594 = vmatprep.subr.bf16.mxu0 0
    %1595 = vmatpush1.bf16.msra.mxu0 0
    %1596 = vmatprep.subr.bf16.mxu0 0
    %1597 = vmatpush1.bf16.msra.mxu0 0
    %1598 = vmatprep.subr.bf16.mxu0 0
    %1599 = vmatpush1.bf16.msra.mxu0 0
    %1600 = vmatprep.subr.bf16.mxu0 0
    %1601 = vmatpush1.bf16.msra.mxu0 0
    %1602 = vmatprep.subr.bf16.mxu0 0
    %1603 = vmatpush1.bf16.msra.mxu0 0
    %1604 = vmatprep.subr.bf16.mxu0 0
    %1605 = vmatpush1.bf16.msra.mxu0 0
    %1606 = vmatprep.subr.bf16.mxu0 0
    %1607 = vmatpush1.bf16.msra.mxu0 0
    %1608 = vmatprep.subr.bf16.mxu0 0
    %1609 = vmatpush1.bf16.msra.mxu0 0
    %1610 = vmatprep.subr.bf16.mxu0 0
    %1611 = vmatpush1.bf16.msra.mxu0 0
    %1612 = vmatprep.subr.bf16.mxu0 0
    %1613 = vmatpush1.bf16.msra.mxu0 0
    %1614 = vmatprep.subr.bf16.mxu0 0
    %1615 = vmatpush1.bf16.msra.mxu0 0
    %1616 = vmatprep.subr.bf16.mxu0 0
    %1617 = vmatpush1.bf16.msra.mxu0 0
    %1618 = vmatprep.subr.bf16.mxu0 0
    %1619 = vmatpush1.bf16.msra.mxu0 0
    %1620 = vmatprep.mubr.bf16.mxu0 0
    %1621 = vmatmul.mubr.bf16.gmra.mrb[0].mxu0 %v1586
    %v1622 = vpop.f32.mrb[0].mxu0
    %v1623 = vadd.f32 0.0, %v1622
    %v1624 = vpop.f32.mrb[0].mxu0
    %v1625 = vpop.f32.mrb[0].mxu0
    %v1626 = vpop.f32.mrb[0].mxu0
    %1627 = vdwg.mxu0
    %1628 = vst [vmem:[#allocation2 + $0xa] sm:$0x3] %v1623
    %1629 = vmatprep.subr.bf16.mxu0 0
    %1630 = vmatpush1.bf16.msra.mxu0 %v424
    %1631 = vmatprep.subr.bf16.mxu0 0
    %1632 = vmatpush1.bf16.msra.mxu0 %v425
    %1633 = vmatprep.subr.bf16.mxu0 0
    %1634 = vmatpush1.bf16.msra.mxu0 0
    %1635 = vmatprep.subr.bf16.mxu0 0
    %1636 = vmatpush1.bf16.msra.mxu0 0
    %1637 = vmatprep.subr.bf16.mxu0 0
    %1638 = vmatpush1.bf16.msra.mxu0 0
    %1639 = vmatprep.subr.bf16.mxu0 0
    %1640 = vmatpush1.bf16.msra.mxu0 0
    %1641 = vmatprep.subr.bf16.mxu0 0
    %1642 = vmatpush1.bf16.msra.mxu0 0
    %1643 = vmatprep.subr.bf16.mxu0 0
    %1644 = vmatpush1.bf16.msra.mxu0 0
    %1645 = vmatprep.subr.bf16.mxu0 0
    %1646 = vmatpush1.bf16.msra.mxu0 0
    %1647 = vmatprep.subr.bf16.mxu0 0
    %1648 = vmatpush1.bf16.msra.mxu0 0
    %1649 = vmatprep.subr.bf16.mxu0 0
    %1650 = vmatpush1.bf16.msra.mxu0 0
    %1651 = vmatprep.subr.bf16.mxu0 0
    %1652 = vmatpush1.bf16.msra.mxu0 0
    %1653 = vmatprep.subr.bf16.mxu0 0
    %1654 = vmatpush1.bf16.msra.mxu0 0
    %1655 = vmatprep.subr.bf16.mxu0 0
    %1656 = vmatpush1.bf16.msra.mxu0 0
    %1657 = vmatprep.subr.bf16.mxu0 0
    %1658 = vmatpush1.bf16.msra.mxu0 0
    %1659 = vmatprep.subr.bf16.mxu0 0
    %1660 = vmatpush1.bf16.msra.mxu0 0
    %1661 = vmatprep.mubr.bf16.mxu0 0
    %1662 = vmatmul.mubr.bf16.gmra.mrb[0].mxu0 %v1466
    %v1663 = vpop.f32.mrb[0].mxu0
    %v1664 = vadd.f32 0.0, %v1663
    %v1665 = vpop.f32.mrb[0].mxu0
    %v1666 = vpop.f32.mrb[0].mxu0
    %v1667 = vpop.f32.mrb[0].mxu0
    %1668 = vdwg.mxu0
    %v1670 = vrot.slane %v1664, 4
    %v1672 = vadd.f32 %v273, %v1670
    %v1673 = vxor.u32 %v1672, 2147483648
    %v1674 = vmul.f32 %v1673, 1.442695
    %v1675 = vpow.pop %v1674
    %v1676 = vadd.f32 %v1675, 1.0
    %v1677 = vrcp.pop %v1676
    %v1678 = vmul.f32 1.0, %v1677
    %v1679 = vtanh.pop %v1672
    %v1681 = vrot.slane %v1453, 2
    %v1683 = vmul.f32 %v1678, %v1681
    %1685 = vrot.lane.b32.xlu0 %v1679, 32
    %v1686 = vpop.permute.xlu0 %1685
    %v1688 = vmul.f32 %v1678, %v1686
    %1690 = vrot.lane.b32.xlu0 %v1688, 32
    %v1691 = vpop.permute.xlu0 %1690
    %v1693 = vadd.f32 %v1683, %v1691
    %v1694 = vtanh.pop %v1693
    %1696 = vrot.lane.b32.xlu0 %v1694, 32
    %v1697 = vpop.permute.xlu0 %1696
    %v1699 = vmul.f32 %v1678, %v1697
    %v1700 = vpack.c.bf16 %v1699, %v1699
    %v1702 = vrot.slane %v1700, 2
    %1703 = vrot.lane.b32.xlu0 %v1702, 64
    %v1704 = vpop.permute.xlu0 %1703
    %v1706 = vsel %vm287, %v1704, 0
    %1708 = vmatprep.subr.bf16.mxu0 0
    %1709 = vmatpush1.bf16.msra.mxu0 %v509
    %1710 = vmatprep.subr.bf16.mxu0 0
    %1711 = vmatpush1.bf16.msra.mxu0 %v510
    %1712 = vmatprep.subr.bf16.mxu0 0
    %1713 = vmatpush1.bf16.msra.mxu0 0
    %1714 = vmatprep.subr.bf16.mxu0 0
    %1715 = vmatpush1.bf16.msra.mxu0 0
    %1716 = vmatprep.subr.bf16.mxu0 0
    %1717 = vmatpush1.bf16.msra.mxu0 0
    %1718 = vmatprep.subr.bf16.mxu0 0
    %1719 = vmatpush1.bf16.msra.mxu0 0
    %1720 = vmatprep.subr.bf16.mxu0 0
    %1721 = vmatpush1.bf16.msra.mxu0 0
    %1722 = vmatprep.subr.bf16.mxu0 0
    %1723 = vmatpush1.bf16.msra.mxu0 0
    %1724 = vmatprep.subr.bf16.mxu0 0
    %1725 = vmatpush1.bf16.msra.mxu0 0
    %1726 = vmatprep.subr.bf16.mxu0 0
    %1727 = vmatpush1.bf16.msra.mxu0 0
    %1728 = vmatprep.subr.bf16.mxu0 0
    %1729 = vmatpush1.bf16.msra.mxu0 0
    %1730 = vmatprep.subr.bf16.mxu0 0
    %1731 = vmatpush1.bf16.msra.mxu0 0
    %1732 = vmatprep.subr.bf16.mxu0 0
    %1733 = vmatpush1.bf16.msra.mxu0 0
    %1734 = vmatprep.subr.bf16.mxu0 0
    %1735 = vmatpush1.bf16.msra.mxu0 0
    %1736 = vmatprep.subr.bf16.mxu0 0
    %1737 = vmatpush1.bf16.msra.mxu0 0
    %1738 = vmatprep.subr.bf16.mxu0 0
    %1739 = vmatpush1.bf16.msra.mxu0 0
    %1740 = vmatprep.mubr.bf16.mxu0 0
    %1741 = vmatmul.mubr.bf16.gmra.mrb[0].mxu0 %v1706
    %v1742 = vpop.f32.mrb[0].mxu0
    %v1743 = vadd.f32 0.0, %v1742
    %v1744 = vpop.f32.mrb[0].mxu0
    %v1745 = vpop.f32.mrb[0].mxu0
    %v1746 = vpop.f32.mrb[0].mxu0
    %1747 = vdwg.mxu0
    %1748 = vst [vmem:[#allocation3 + $0x14] sm:$0x3] %v1743
    %1749 = vmatprep.subr.bf16.mxu0 0
    %1750 = vmatpush1.bf16.msra.mxu0 %v283
    %1751 = vmatprep.subr.bf16.mxu0 0
    %1752 = vmatpush1.bf16.msra.mxu0 %v284
    %1753 = vmatprep.subr.bf16.mxu0 0
    %1754 = vmatpush1.bf16.msra.mxu0 0
    %1755 = vmatprep.subr.bf16.mxu0 0
    %1756 = vmatpush1.bf16.msra.mxu0 0
    %1757 = vmatprep.subr.bf16.mxu0 0
    %1758 = vmatpush1.bf16.msra.mxu0 0
    %1759 = vmatprep.subr.bf16.mxu0 0
    %1760 = vmatpush1.bf16.msra.mxu0 0
    %1761 = vmatprep.subr.bf16.mxu0 0
    %1762 = vmatpush1.bf16.msra.mxu0 0
    %1763 = vmatprep.subr.bf16.mxu0 0
    %1764 = vmatpush1.bf16.msra.mxu0 0
    %1765 = vmatprep.subr.bf16.mxu0 0
    %1766 = vmatpush1.bf16.msra.mxu0 0
    %1767 = vmatprep.subr.bf16.mxu0 0
    %1768 = vmatpush1.bf16.msra.mxu0 0
    %1769 = vmatprep.subr.bf16.mxu0 0
    %1770 = vmatpush1.bf16.msra.mxu0 0
    %1771 = vmatprep.subr.bf16.mxu0 0
    %1772 = vmatpush1.bf16.msra.mxu0 0
    %1773 = vmatprep.subr.bf16.mxu0 0
    %1774 = vmatpush1.bf16.msra.mxu0 0
    %1775 = vmatprep.subr.bf16.mxu0 0
    %1776 = vmatpush1.bf16.msra.mxu0 0
    %1777 = vmatprep.subr.bf16.mxu0 0
    %1778 = vmatpush1.bf16.msra.mxu0 0
    %1779 = vmatprep.subr.bf16.mxu0 0
    %1780 = vmatpush1.bf16.msra.mxu0 0
    %1781 = vmatprep.mubr.bf16.mxu0 0
    %1782 = vmatmul.mubr.bf16.gmra.mrb[0].mxu0 %v1586
    %v1783 = vpop.f32.mrb[0].mxu0
    %v1784 = vadd.f32 0.0, %v1783
    %v1785 = vpop.f32.mrb[0].mxu0
    %v1786 = vpop.f32.mrb[0].mxu0
    %v1787 = vpop.f32.mrb[0].mxu0
    %1788 = vdwg.mxu0
    %v1790 = vrot.slane %v1784, 4
    %v1792 = vadd.f32 %v256, %v1790
    %v1793 = vxor.u32 %v1792, 2147483648
    %v1794 = vmul.f32 %v1793, 1.442695
    %v1795 = vpow.pop %v1794
    %v1796 = vadd.f32 %v1795, 1.0
    %v1797 = vrcp.pop %v1796
    %v1798 = vmul.f32 1.0, %v1797
    %v1799 = vtanh.pop %v1792
    %v1801 = vrot.slane %v1573, 6
    %v1803 = vmul.f32 %v1798, %v1801
    %1805 = vrot.lane.b32.xlu0 %v1799, 32
    %v1806 = vpop.permute.xlu0 %1805
    %v1808 = vmul.f32 %v1798, %v1806
    %1810 = vrot.lane.b32.xlu0 %v1808, 32
    %v1811 = vpop.permute.xlu0 %1810
    %v1813 = vadd.f32 %v1803, %v1811
    %v1814 = vtanh.pop %v1813
    %1816 = vrot.lane.b32.xlu0 %v1814, 32
    %v1817 = vpop.permute.xlu0 %1816
    %v1819 = vmul.f32 %v1798, %v1817
    %v1820 = vpack.c.bf16 %v1819, %v1819
    %v1822 = vrot.slane %v1820, 2
    %1823 = vrot.lane.b32.xlu0 %v1822, 64
    %v1824 = vpop.permute.xlu0 %1823
    %v1826 = vsel %vm287, %v1824, 0
    %1828 = vmatprep.subr.bf16.mxu0 0
    %1829 = vmatpush1.bf16.msra.mxu0 %v368
    %1830 = vmatprep.subr.bf16.mxu0 0
    %1831 = vmatpush1.bf16.msra.mxu0 %v369
    %1832 = vmatprep.subr.bf16.mxu0 0
    %1833 = vmatpush1.bf16.msra.mxu0 0
    %1834 = vmatprep.subr.bf16.mxu0 0
    %1835 = vmatpush1.bf16.msra.mxu0 0
    %1836 = vmatprep.subr.bf16.mxu0 0
    %1837 = vmatpush1.bf16.msra.mxu0 0
    %1838 = vmatprep.subr.bf16.mxu0 0
    %1839 = vmatpush1.bf16.msra.mxu0 0
    %1840 = vmatprep.subr.bf16.mxu0 0
    %1841 = vmatpush1.bf16.msra.mxu0 0
    %1842 = vmatprep.subr.bf16.mxu0 0
    %1843 = vmatpush1.bf16.msra.mxu0 0
    %1844 = vmatprep.subr.bf16.mxu0 0
    %1845 = vmatpush1.bf16.msra.mxu0 0
    %1846 = vmatprep.subr.bf16.mxu0 0
    %1847 = vmatpush1.bf16.msra.mxu0 0
    %1848 = vmatprep.subr.bf16.mxu0 0
    %1849 = vmatpush1.bf16.msra.mxu0 0
    %1850 = vmatprep.subr.bf16.mxu0 0
    %1851 = vmatpush1.bf16.msra.mxu0 0
    %1852 = vmatprep.subr.bf16.mxu0 0
    %1853 = vmatpush1.bf16.msra.mxu0 0
    %1854 = vmatprep.subr.bf16.mxu0 0
    %1855 = vmatpush1.bf16.msra.mxu0 0
    %1856 = vmatprep.subr.bf16.mxu0 0
    %1857 = vmatpush1.bf16.msra.mxu0 0
    %1858 = vmatprep.subr.bf16.mxu0 0
    %1859 = vmatpush1.bf16.msra.mxu0 0
    %1860 = vmatprep.mubr.bf16.mxu0 0
    %1861 = vmatmul.mubr.bf16.gmra.mrb[0].mxu0 %v1826
    %v1862 = vpop.f32.mrb[0].mxu0
    %v1863 = vadd.f32 0.0, %v1862
    %v1864 = vpop.f32.mrb[0].mxu0
    %v1865 = vpop.f32.mrb[0].mxu0
    %v1866 = vpop.f32.mrb[0].mxu0
    %1867 = vdwg.mxu0
    %1868 = vst [vmem:[#allocation2 + $0xc] sm:$0x3] %v1863
    %1869 = vmatprep.subr.bf16.mxu0 0
    %1870 = vmatpush1.bf16.msra.mxu0 %v424
    %1871 = vmatprep.subr.bf16.mxu0 0
    %1872 = vmatpush1.bf16.msra.mxu0 %v425
    %1873 = vmatprep.subr.bf16.mxu0 0
    %1874 = vmatpush1.bf16.msra.mxu0 0
    %1875 = vmatprep.subr.bf16.mxu0 0
    %1876 = vmatpush1.bf16.msra.mxu0 0
    %1877 = vmatprep.subr.bf16.mxu0 0
    %1878 = vmatpush1.bf16.msra.mxu0 0
    %1879 = vmatprep.subr.bf16.mxu0 0
    %1880 = vmatpush1.bf16.msra.mxu0 0
    %1881 = vmatprep.subr.bf16.mxu0 0
    %1882 = vmatpush1.bf16.msra.mxu0 0
    %1883 = vmatprep.subr.bf16.mxu0 0
    %1884 = vmatpush1.bf16.msra.mxu0 0
    %1885 = vmatprep.subr.bf16.mxu0 0
    %1886 = vmatpush1.bf16.msra.mxu0 0
    %1887 = vmatprep.subr.bf16.mxu0 0
    %1888 = vmatpush1.bf16.msra.mxu0 0
    %1889 = vmatprep.subr.bf16.mxu0 0
    %1890 = vmatpush1.bf16.msra.mxu0 0
    %1891 = vmatprep.subr.bf16.mxu0 0
    %1892 = vmatpush1.bf16.msra.mxu0 0
    %1893 = vmatprep.subr.bf16.mxu0 0
    %1894 = vmatpush1.bf16.msra.mxu0 0
    %1895 = vmatprep.subr.bf16.mxu0 0
    %1896 = vmatpush1.bf16.msra.mxu0 0
    %1897 = vmatprep.subr.bf16.mxu0 0
    %1898 = vmatpush1.bf16.msra.mxu0 0
    %1899 = vmatprep.subr.bf16.mxu0 0
    %1900 = vmatpush1.bf16.msra.mxu0 0
    %1901 = vmatprep.mubr.bf16.mxu0 0
    %1902 = vmatmul.mubr.bf16.gmra.mrb[0].mxu0 %v1706
    %v1903 = vpop.f32.mrb[0].mxu0
    %v1904 = vadd.f32 0.0, %v1903
    %v1905 = vpop.f32.mrb[0].mxu0
    %v1906 = vpop.f32.mrb[0].mxu0
    %v1907 = vpop.f32.mrb[0].mxu0
    %1908 = vdwg.mxu0
    %v1910 = vrot.slane %v1904, 6
    %v1912 = vadd.f32 %v273, %v1910
    %v1913 = vxor.u32 %v1912, 2147483648
    %v1914 = vmul.f32 %v1913, 1.442695
    %v1915 = vpow.pop %v1914
    %v1916 = vadd.f32 %v1915, 1.0
    %v1917 = vrcp.pop %v1916
    %v1918 = vmul.f32 1.0, %v1917
    %v1919 = vtanh.pop %v1912
    %v1921 = vrot.slane %v1693, 2
    %v1923 = vmul.f32 %v1918, %v1921
    %1925 = vrot.lane.b32.xlu0 %v1919, 32
    %v1926 = vpop.permute.xlu0 %1925
    %v1928 = vmul.f32 %v1918, %v1926
    %1930 = vrot.lane.b32.xlu0 %v1928, 32
    %v1931 = vpop.permute.xlu0 %1930
    %v1933 = vadd.f32 %v1923, %v1931
    %v1934 = vtanh.pop %v1933
    %1936 = vrot.lane.b32.xlu0 %v1934, 32
    %v1937 = vpop.permute.xlu0 %1936
    %v1939 = vmul.f32 %v1918, %v1937
    %v1940 = vpack.c.bf16 %v1939, %v1939
    %v1942 = vrot.slane %v1940, 1
    %1943 = vrot.lane.b32.xlu0 %v1942, 64
    %v1944 = vpop.permute.xlu0 %1943
    %v1946 = vsel %vm287, %v1944, 0
    %1948 = vmatprep.subr.bf16.mxu0 0
    %1949 = vmatpush1.bf16.msra.mxu0 %v509
    %1950 = vmatprep.subr.bf16.mxu0 0
    %1951 = vmatpush1.bf16.msra.mxu0 %v510
    %1952 = vmatprep.subr.bf16.mxu0 0
    %1953 = vmatpush1.bf16.msra.mxu0 0
    %1954 = vmatprep.subr.bf16.mxu0 0
    %1955 = vmatpush1.bf16.msra.mxu0 0
    %1956 = vmatprep.subr.bf16.mxu0 0
    %1957 = vmatpush1.bf16.msra.mxu0 0
    %1958 = vmatprep.subr.bf16.mxu0 0
    %1959 = vmatpush1.bf16.msra.mxu0 0
    %1960 = vmatprep.subr.bf16.mxu0 0
    %1961 = vmatpush1.bf16.msra.mxu0 0
    %1962 = vmatprep.subr.bf16.mxu0 0
    %1963 = vmatpush1.bf16.msra.mxu0 0
    %1964 = vmatprep.subr.bf16.mxu0 0
    %1965 = vmatpush1.bf16.msra.mxu0 0
    %1966 = vmatprep.subr.bf16.mxu0 0
    %1967 = vmatpush1.bf16.msra.mxu0 0
    %1968 = vmatprep.subr.bf16.mxu0 0
    %1969 = vmatpush1.bf16.msra.mxu0 0
    %1970 = vmatprep.subr.bf16.mxu0 0
    %1971 = vmatpush1.bf16.msra.mxu0 0
    %1972 = vmatprep.subr.bf16.mxu0 0
    %1973 = vmatpush1.bf16.msra.mxu0 0
    %1974 = vmatprep.subr.bf16.mxu0 0
    %1975 = vmatpush1.bf16.msra.mxu0 0
    %1976 = vmatprep.subr.bf16.mxu0 0
    %1977 = vmatpush1.bf16.msra.mxu0 0
    %1978 = vmatprep.subr.bf16.mxu0 0
    %1979 = vmatpush1.bf16.msra.mxu0 0
    %1980 = vmatprep.mubr.bf16.mxu0 0
    %1981 = vmatmul.mubr.bf16.gmra.mrb[0].mxu0 %v1946
    %v1982 = vpop.f32.mrb[0].mxu0
    %v1983 = vadd.f32 0.0, %v1982
    %v1984 = vpop.f32.mrb[0].mxu0
    %v1985 = vpop.f32.mrb[0].mxu0
    %v1986 = vpop.f32.mrb[0].mxu0
    %1987 = vdwg.mxu0
    %1988 = vst [vmem:[#allocation3 + $0x12] sm:$0x3] %v1983
    %1989 = vmatprep.subr.bf16.mxu0 0
    %1990 = vmatpush1.bf16.msra.mxu0 %v283
    %1991 = vmatprep.subr.bf16.mxu0 0
    %1992 = vmatpush1.bf16.msra.mxu0 %v284
    %1993 = vmatprep.subr.bf16.mxu0 0
    %1994 = vmatpush1.bf16.msra.mxu0 0
    %1995 = vmatprep.subr.bf16.mxu0 0
    %1996 = vmatpush1.bf16.msra.mxu0 0
    %1997 = vmatprep.subr.bf16.mxu0 0
    %1998 = vmatpush1.bf16.msra.mxu0 0
    %1999 = vmatprep.subr.bf16.mxu0 0
    %2000 = vmatpush1.bf16.msra.mxu0 0
    %2001 = vmatprep.subr.bf16.mxu0 0
    %2002 = vmatpush1.bf16.msra.mxu0 0
    %2003 = vmatprep.subr.bf16.mxu0 0
    %2004 = vmatpush1.bf16.msra.mxu0 0
    %2005 = vmatprep.subr.bf16.mxu0 0
    %2006 = vmatpush1.bf16.msra.mxu0 0
    %2007 = vmatprep.subr.bf16.mxu0 0
    %2008 = vmatpush1.bf16.msra.mxu0 0
    %2009 = vmatprep.subr.bf16.mxu0 0
    %2010 = vmatpush1.bf16.msra.mxu0 0
    %2011 = vmatprep.subr.bf16.mxu0 0
    %2012 = vmatpush1.bf16.msra.mxu0 0
    %2013 = vmatprep.subr.bf16.mxu0 0
    %2014 = vmatpush1.bf16.msra.mxu0 0
    %2015 = vmatprep.subr.bf16.mxu0 0
    %2016 = vmatpush1.bf16.msra.mxu0 0
    %2017 = vmatprep.subr.bf16.mxu0 0
    %2018 = vmatpush1.bf16.msra.mxu0 0
    %2019 = vmatprep.subr.bf16.mxu0 0
    %2020 = vmatpush1.bf16.msra.mxu0 0
    %2021 = vmatprep.mubr.bf16.mxu0 0
    %2022 = vmatmul.mubr.bf16.gmra.mrb[0].mxu0 %v1826
    %v2023 = vpop.f32.mrb[0].mxu0
    %v2024 = vadd.f32 0.0, %v2023
    %v2025 = vpop.f32.mrb[0].mxu0
    %v2026 = vpop.f32.mrb[0].mxu0
    %v2027 = vpop.f32.mrb[0].mxu0
    %2028 = vdwg.mxu0
    %v2030 = vrot.slane %v2024, 2
    %v2032 = vadd.f32 %v256, %v2030
    %v2033 = vxor.u32 %v2032, 2147483648
    %v2034 = vmul.f32 %v2033, 1.442695
    %v2035 = vpow.pop %v2034
    %v2036 = vadd.f32 %v2035, 1.0
    %v2037 = vrcp.pop %v2036
    %v2038 = vmul.f32 1.0, %v2037
    %v2039 = vtanh.pop %v2032
    %v2041 = vrot.slane %v1813, 6
    %v2043 = vmul.f32 %v2038, %v2041
    %2045 = vrot.lane.b32.xlu0 %v2039, 32
    %v2046 = vpop.permute.xlu0 %2045
    %v2048 = vmul.f32 %v2038, %v2046
    %2050 = vrot.lane.b32.xlu0 %v2048, 32
    %v2051 = vpop.permute.xlu0 %2050
    %v2053 = vadd.f32 %v2043, %v2051
    %v2054 = vtanh.pop %v2053
    %2056 = vrot.lane.b32.xlu0 %v2054, 32
    %v2057 = vpop.permute.xlu0 %2056
    %v2059 = vmul.f32 %v2038, %v2057
    %v2060 = vpack.c.bf16 %v2059, %v2059
    %v2062 = vrot.slane %v2060, 3
    %2063 = vrot.lane.b32.xlu0 %v2062, 64
    %v2064 = vpop.permute.xlu0 %2063
    %v2066 = vsel %vm287, %v2064, 0
    %2068 = vmatprep.subr.bf16.mxu0 0
    %2069 = vmatpush1.bf16.msra.mxu0 %v368
    %2070 = vmatprep.subr.bf16.mxu0 0
    %2071 = vmatpush1.bf16.msra.mxu0 %v369
    %2072 = vmatprep.subr.bf16.mxu0 0
    %2073 = vmatpush1.bf16.msra.mxu0 0
    %2074 = vmatprep.subr.bf16.mxu0 0
    %2075 = vmatpush1.bf16.msra.mxu0 0
    %2076 = vmatprep.subr.bf16.mxu0 0
    %2077 = vmatpush1.bf16.msra.mxu0 0
    %2078 = vmatprep.subr.bf16.mxu0 0
    %2079 = vmatpush1.bf16.msra.mxu0 0
    %2080 = vmatprep.subr.bf16.mxu0 0
    %2081 = vmatpush1.bf16.msra.mxu0 0
    %2082 = vmatprep.subr.bf16.mxu0 0
    %2083 = vmatpush1.bf16.msra.mxu0 0
    %2084 = vmatprep.subr.bf16.mxu0 0
    %2085 = vmatpush1.bf16.msra.mxu0 0
    %2086 = vmatprep.subr.bf16.mxu0 0
    %2087 = vmatpush1.bf16.msra.mxu0 0
    %2088 = vmatprep.subr.bf16.mxu0 0
    %2089 = vmatpush1.bf16.msra.mxu0 0
    %2090 = vmatprep.subr.bf16.mxu0 0
    %2091 = vmatpush1.bf16.msra.mxu0 0
    %2092 = vmatprep.subr.bf16.mxu0 0
    %2093 = vmatpush1.bf16.msra.mxu0 0
    %2094 = vmatprep.subr.bf16.mxu0 0
    %2095 = vmatpush1.bf16.msra.mxu0 0
    %2096 = vmatprep.subr.bf16.mxu0 0
    %2097 = vmatpush1.bf16.msra.mxu0 0
    %2098 = vmatprep.subr.bf16.mxu0 0
    %2099 = vmatpush1.bf16.msra.mxu0 0
    %2100 = vmatprep.mubr.bf16.mxu0 0
    %2101 = vmatmul.mubr.bf16.gmra.mrb[0].mxu0 %v2066
    %v2102 = vpop.f32.mrb[0].mxu0
    %v2103 = vadd.f32 0.0, %v2102
    %v2104 = vpop.f32.mrb[0].mxu0
    %v2105 = vpop.f32.mrb[0].mxu0
    %v2106 = vpop.f32.mrb[0].mxu0
    %2107 = vdwg.mxu0
    %2108 = vst [vmem:[#allocation2 + $0xe] sm:$0x3] %v2103
    %2109 = vmatprep.subr.bf16.mxu0 0
    %2110 = vmatpush1.bf16.msra.mxu0 %v424
    %2111 = vmatprep.subr.bf16.mxu0 0
    %2112 = vmatpush1.bf16.msra.mxu0 %v425
    %2113 = vmatprep.subr.bf16.mxu0 0
    %2114 = vmatpush1.bf16.msra.mxu0 0
    %2115 = vmatprep.subr.bf16.mxu0 0
    %2116 = vmatpush1.bf16.msra.mxu0 0
    %2117 = vmatprep.subr.bf16.mxu0 0
    %2118 = vmatpush1.bf16.msra.mxu0 0
    %2119 = vmatprep.subr.bf16.mxu0 0
    %2120 = vmatpush1.bf16.msra.mxu0 0
    %2121 = vmatprep.subr.bf16.mxu0 0
    %2122 = vmatpush1.bf16.msra.mxu0 0
    %2123 = vmatprep.subr.bf16.mxu0 0
    %2124 = vmatpush1.bf16.msra.mxu0 0
    %2125 = vmatprep.subr.bf16.mxu0 0
    %2126 = vmatpush1.bf16.msra.mxu0 0
    %2127 = vmatprep.subr.bf16.mxu0 0
    %2128 = vmatpush1.bf16.msra.mxu0 0
    %2129 = vmatprep.subr.bf16.mxu0 0
    %2130 = vmatpush1.bf16.msra.mxu0 0
    %2131 = vmatprep.subr.bf16.mxu0 0
    %2132 = vmatpush1.bf16.msra.mxu0 0
    %2133 = vmatprep.subr.bf16.mxu0 0
    %2134 = vmatpush1.bf16.msra.mxu0 0
    %2135 = vmatprep.subr.bf16.mxu0 0
    %2136 = vmatpush1.bf16.msra.mxu0 0
    %2137 = vmatprep.subr.bf16.mxu0 0
    %2138 = vmatpush1.bf16.msra.mxu0 0
    %2139 = vmatprep.subr.bf16.mxu0 0
    %2140 = vmatpush1.bf16.msra.mxu0 0
    %2141 = vmatprep.mubr.bf16.mxu0 0
    %2142 = vmatmul.mubr.bf16.gmra.mrb[0].mxu0 %v1946
    %v2143 = vpop.f32.mrb[0].mxu0
    %v2144 = vadd.f32 0.0, %v2143
    %v2145 = vpop.f32.mrb[0].mxu0
    %v2146 = vpop.f32.mrb[0].mxu0
    %v2147 = vpop.f32.mrb[0].mxu0
    %2148 = vdwg.mxu0
    %v2149 = vadd.f32 %v273, %v2144
    %v2150 = vxor.u32 %v2149, 2147483648
    %v2151 = vmul.f32 %v2150, 1.442695
    %v2152 = vpow.pop %v2151
    %v2153 = vadd.f32 %v2152, 1.0
    %v2154 = vrcp.pop %v2153
    %v2155 = vmul.f32 1.0, %v2154
    %v2156 = vtanh.pop %v2149
    %v2158 = vrot.slane %v1933, 2
    %v2160 = vmul.f32 %v2155, %v2158
    %2162 = vrot.lane.b32.xlu0 %v2156, 32
    %v2163 = vpop.permute.xlu0 %2162
    %v2165 = vmul.f32 %v2155, %v2163
    %2167 = vrot.lane.b32.xlu0 %v2165, 32
    %v2168 = vpop.permute.xlu0 %2167
    %v2170 = vadd.f32 %v2160, %v2168
    %v2171 = vtanh.pop %v2170
    %2173 = vrot.lane.b32.xlu0 %v2171, 32
    %v2174 = vpop.permute.xlu0 %2173
    %v2176 = vmul.f32 %v2155, %v2174
    %v2177 = vpack.c.bf16 %v2176, %v2176
    %2179 = vrot.lane.b32.xlu0 %v2177, 64
    %v2180 = vpop.permute.xlu0 %2179
    %v2182 = vsel %vm287, %v2180, 0
    %2184 = vmatprep.subr.bf16.mxu0 0
    %2185 = vmatpush1.bf16.msra.mxu0 %v509
    %2186 = vmatprep.subr.bf16.mxu0 0
    %2187 = vmatpush1.bf16.msra.mxu0 %v510
    %2188 = vmatprep.subr.bf16.mxu0 0
    %2189 = vmatpush1.bf16.msra.mxu0 0
    %2190 = vmatprep.subr.bf16.mxu0 0
    %2191 = vmatpush1.bf16.msra.mxu0 0
    %2192 = vmatprep.subr.bf16.mxu0 0
    %2193 = vmatpush1.bf16.msra.mxu0 0
    %2194 = vmatprep.subr.bf16.mxu0 0
    %2195 = vmatpush1.bf16.msra.mxu0 0
    %2196 = vmatprep.subr.bf16.mxu0 0
    %2197 = vmatpush1.bf16.msra.mxu0 0
    %2198 = vmatprep.subr.bf16.mxu0 0
    %2199 = vmatpush1.bf16.msra.mxu0 0
    %2200 = vmatprep.subr.bf16.mxu0 0
    %2201 = vmatpush1.bf16.msra.mxu0 0
    %2202 = vmatprep.subr.bf16.mxu0 0
    %2203 = vmatpush1.bf16.msra.mxu0 0
    %2204 = vmatprep.subr.bf16.mxu0 0
    %2205 = vmatpush1.bf16.msra.mxu0 0
    %2206 = vmatprep.subr.bf16.mxu0 0
    %2207 = vmatpush1.bf16.msra.mxu0 0
    %2208 = vmatprep.subr.bf16.mxu0 0
    %2209 = vmatpush1.bf16.msra.mxu0 0
    %2210 = vmatprep.subr.bf16.mxu0 0
    %2211 = vmatpush1.bf16.msra.mxu0 0
    %2212 = vmatprep.subr.bf16.mxu0 0
    %2213 = vmatpush1.bf16.msra.mxu0 0
    %2214 = vmatprep.subr.bf16.mxu0 0
    %2215 = vmatpush1.bf16.msra.mxu0 0
    %2216 = vmatprep.mubr.bf16.mxu0 0
    %2217 = vmatmul.mubr.bf16.gmra.mrb[0].mxu0 %v2182
    %v2218 = vpop.f32.mrb[0].mxu0
    %v2219 = vadd.f32 0.0, %v2218
    %v2220 = vpop.f32.mrb[0].mxu0
    %v2221 = vpop.f32.mrb[0].mxu0
    %v2222 = vpop.f32.mrb[0].mxu0
    %2223 = vdwg.mxu0
    %2224 = vst [vmem:[#allocation3 + $0x10] sm:$0x3] %v2219
    %2225 = vmatprep.subr.bf16.mxu0 0
    %2226 = vmatpush1.bf16.msra.mxu0 %v283
    %2227 = vmatprep.subr.bf16.mxu0 0
    %2228 = vmatpush1.bf16.msra.mxu0 %v284
    %2229 = vmatprep.subr.bf16.mxu0 0
    %2230 = vmatpush1.bf16.msra.mxu0 0
    %2231 = vmatprep.subr.bf16.mxu0 0
    %2232 = vmatpush1.bf16.msra.mxu0 0
    %2233 = vmatprep.subr.bf16.mxu0 0
    %2234 = vmatpush1.bf16.msra.mxu0 0
    %2235 = vmatprep.subr.bf16.mxu0 0
    %2236 = vmatpush1.bf16.msra.mxu0 0
    %2237 = vmatprep.subr.bf16.mxu0 0
    %2238 = vmatpush1.bf16.msra.mxu0 0
    %2239 = vmatprep.subr.bf16.mxu0 0
    %2240 = vmatpush1.bf16.msra.mxu0 0
    %2241 = vmatprep.subr.bf16.mxu0 0
    %2242 = vmatpush1.bf16.msra.mxu0 0
    %2243 = vmatprep.subr.bf16.mxu0 0
    %2244 = vmatpush1.bf16.msra.mxu0 0
    %2245 = vmatprep.subr.bf16.mxu0 0
    %2246 = vmatpush1.bf16.msra.mxu0 0
    %2247 = vmatprep.subr.bf16.mxu0 0
    %2248 = vmatpush1.bf16.msra.mxu0 0
    %2249 = vmatprep.subr.bf16.mxu0 0
    %2250 = vmatpush1.bf16.msra.mxu0 0
    %2251 = vmatprep.subr.bf16.mxu0 0
    %2252 = vmatpush1.bf16.msra.mxu0 0
    %2253 = vmatprep.subr.bf16.mxu0 0
    %2254 = vmatpush1.bf16.msra.mxu0 0
    %2255 = vmatprep.subr.bf16.mxu0 0
    %2256 = vmatpush1.bf16.msra.mxu0 0
    %2257 = vmatprep.mubr.bf16.mxu0 0
    %2258 = vmatmul.mubr.bf16.gmra.mrb[0].mxu0 %v2066
    %v2259 = vpop.f32.mrb[0].mxu0
    %v2260 = vadd.f32 0.0, %v2259
    %v2261 = vpop.f32.mrb[0].mxu0
    %v2262 = vpop.f32.mrb[0].mxu0
    %v2263 = vpop.f32.mrb[0].mxu0
    %2264 = vdwg.mxu0
    %v2265 = vadd.f32 %v257, %v2260
    %v2266 = vxor.u32 %v2265, 2147483648
    %v2267 = vmul.f32 %v2266, 1.442695
    %v2268 = vpow.pop %v2267
    %v2269 = vadd.f32 %v2268, 1.0
    %v2270 = vrcp.pop %v2269
    %v2271 = vmul.f32 1.0, %v2270
    %v2272 = vtanh.pop %v2265
    %v2274 = vrot.slane %v2053, 6
    %v2276 = vmul.f32 %v2271, %v2274
    %2278 = vrot.lane.b32.xlu0 %v2272, 32
    %v2279 = vpop.permute.xlu0 %2278
    %v2281 = vmul.f32 %v2271, %v2279
    %2283 = vrot.lane.b32.xlu0 %v2281, 32
    %v2284 = vpop.permute.xlu0 %2283
    %v2286 = vadd.f32 %v2276, %v2284
    %v2287 = vtanh.pop %v2286
    %2289 = vrot.lane.b32.xlu0 %v2287, 32
    %v2290 = vpop.permute.xlu0 %2289
    %v2292 = vmul.f32 %v2271, %v2290
    %v2293 = vpack.c.bf16 %v2292, %v2292
    %2295 = vrot.lane.b32.xlu0 %v2293, 64
    %v2296 = vpop.permute.xlu0 %2295
    %v2298 = vsel %vm287, %v2296, 0
    %2300 = vmatprep.subr.bf16.mxu0 0
    %2301 = vmatpush1.bf16.msra.mxu0 %v368
    %2302 = vmatprep.subr.bf16.mxu0 0
    %2303 = vmatpush1.bf16.msra.mxu0 %v369
    %2304 = vmatprep.subr.bf16.mxu0 0
    %2305 = vmatpush1.bf16.msra.mxu0 0
    %2306 = vmatprep.subr.bf16.mxu0 0
    %2307 = vmatpush1.bf16.msra.mxu0 0
    %2308 = vmatprep.subr.bf16.mxu0 0
    %2309 = vmatpush1.bf16.msra.mxu0 0
    %2310 = vmatprep.subr.bf16.mxu0 0
    %2311 = vmatpush1.bf16.msra.mxu0 0
    %2312 = vmatprep.subr.bf16.mxu0 0
    %2313 = vmatpush1.bf16.msra.mxu0 0
    %2314 = vmatprep.subr.bf16.mxu0 0
    %2315 = vmatpush1.bf16.msra.mxu0 0
    %2316 = vmatprep.subr.bf16.mxu0 0
    %2317 = vmatpush1.bf16.msra.mxu0 0
    %2318 = vmatprep.subr.bf16.mxu0 0
    %2319 = vmatpush1.bf16.msra.mxu0 0
    %2320 = vmatprep.subr.bf16.mxu0 0
    %2321 = vmatpush1.bf16.msra.mxu0 0
    %2322 = vmatprep.subr.bf16.mxu0 0
    %2323 = vmatpush1.bf16.msra.mxu0 0
    %2324 = vmatprep.subr.bf16.mxu0 0
    %2325 = vmatpush1.bf16.msra.mxu0 0
    %2326 = vmatprep.subr.bf16.mxu0 0
    %2327 = vmatpush1.bf16.msra.mxu0 0
    %2328 = vmatprep.subr.bf16.mxu0 0
    %2329 = vmatpush1.bf16.msra.mxu0 0
    %2330 = vmatprep.subr.bf16.mxu0 0
    %2331 = vmatpush1.bf16.msra.mxu0 0
    %2332 = vmatprep.mubr.bf16.mxu0 0
    %2333 = vmatmul.mubr.bf16.gmra.mrb[0].mxu0 %v2298
    %v2334 = vpop.f32.mrb[0].mxu0
    %v2335 = vadd.f32 0.0, %v2334
    %v2336 = vpop.f32.mrb[0].mxu0
    %v2337 = vpop.f32.mrb[0].mxu0
    %v2338 = vpop.f32.mrb[0].mxu0
    %2339 = vdwg.mxu0
    %2340 = vst [vmem:[#allocation2 + $0x10] sm:$0x3] %v2335
    %2341 = vmatprep.subr.bf16.mxu0 0
    %2342 = vmatpush1.bf16.msra.mxu0 %v424
    %2343 = vmatprep.subr.bf16.mxu0 0
    %2344 = vmatpush1.bf16.msra.mxu0 %v425
    %2345 = vmatprep.subr.bf16.mxu0 0
    %2346 = vmatpush1.bf16.msra.mxu0 0
    %2347 = vmatprep.subr.bf16.mxu0 0
    %2348 = vmatpush1.bf16.msra.mxu0 0
    %2349 = vmatprep.subr.bf16.mxu0 0
    %2350 = vmatpush1.bf16.msra.mxu0 0
    %2351 = vmatprep.subr.bf16.mxu0 0
    %2352 = vmatpush1.bf16.msra.mxu0 0
    %2353 = vmatprep.subr.bf16.mxu0 0
    %2354 = vmatpush1.bf16.msra.mxu0 0
    %2355 = vmatprep.subr.bf16.mxu0 0
    %2356 = vmatpush1.bf16.msra.mxu0 0
    %2357 = vmatprep.subr.bf16.mxu0 0
    %2358 = vmatpush1.bf16.msra.mxu0 0
    %2359 = vmatprep.subr.bf16.mxu0 0
    %2360 = vmatpush1.bf16.msra.mxu0 0
    %2361 = vmatprep.subr.bf16.mxu0 0
    %2362 = vmatpush1.bf16.msra.mxu0 0
    %2363 = vmatprep.subr.bf16.mxu0 0
    %2364 = vmatpush1.bf16.msra.mxu0 0
    %2365 = vmatprep.subr.bf16.mxu0 0
    %2366 = vmatpush1.bf16.msra.mxu0 0
    %2367 = vmatprep.subr.bf16.mxu0 0
    %2368 = vmatpush1.bf16.msra.mxu0 0
    %2369 = vmatprep.subr.bf16.mxu0 0
    %2370 = vmatpush1.bf16.msra.mxu0 0
    %2371 = vmatprep.subr.bf16.mxu0 0
    %2372 = vmatpush1.bf16.msra.mxu0 0
    %2373 = vmatprep.mubr.bf16.mxu0 0
    %2374 = vmatmul.mubr.bf16.gmra.mrb[0].mxu0 %v2182
    %v2375 = vpop.f32.mrb[0].mxu0
    %v2376 = vadd.f32 0.0, %v2375
    %v2377 = vpop.f32.mrb[0].mxu0
    %v2378 = vpop.f32.mrb[0].mxu0
    %v2379 = vpop.f32.mrb[0].mxu0
    %2380 = vdwg.mxu0
    %v2382 = vrot.slane %v2376, 2
    %v2384 = vadd.f32 %v272, %v2382
    %v2385 = vxor.u32 %v2384, 2147483648
    %v2386 = vmul.f32 %v2385, 1.442695
    %v2387 = vpow.pop %v2386
    %v2388 = vadd.f32 %v2387, 1.0
    %v2389 = vrcp.pop %v2388
    %v2390 = vmul.f32 1.0, %v2389
    %v2391 = vtanh.pop %v2384
    %v2393 = vrot.slane %v2170, 2
    %v2395 = vmul.f32 %v2390, %v2393
    %2397 = vrot.lane.b32.xlu0 %v2391, 32
    %v2398 = vpop.permute.xlu0 %2397
    %v2400 = vmul.f32 %v2390, %v2398
    %2402 = vrot.lane.b32.xlu0 %v2400, 32
    %v2403 = vpop.permute.xlu0 %2402
    %v2405 = vadd.f32 %v2395, %v2403
    %v2406 = vtanh.pop %v2405
    %2408 = vrot.lane.b32.xlu0 %v2406, 32
    %v2409 = vpop.permute.xlu0 %2408
    %v2411 = vmul.f32 %v2390, %v2409
    %v2412 = vpack.c.bf16 %v2411, %v2411
    %v2414 = vrot.slane %v2412, 3
    %2415 = vrot.lane.b32.xlu0 %v2414, 64
    %v2416 = vpop.permute.xlu0 %2415
    %v2418 = vsel %vm287, %v2416, 0
    %2420 = vmatprep.subr.bf16.mxu0 0
    %2421 = vmatpush1.bf16.msra.mxu0 %v509
    %2422 = vmatprep.subr.bf16.mxu0 0
    %2423 = vmatpush1.bf16.msra.mxu0 %v510
    %2424 = vmatprep.subr.bf16.mxu0 0
    %2425 = vmatpush1.bf16.msra.mxu0 0
    %2426 = vmatprep.subr.bf16.mxu0 0
    %2427 = vmatpush1.bf16.msra.mxu0 0
    %2428 = vmatprep.subr.bf16.mxu0 0
    %2429 = vmatpush1.bf16.msra.mxu0 0
    %2430 = vmatprep.subr.bf16.mxu0 0
    %2431 = vmatpush1.bf16.msra.mxu0 0
    %2432 = vmatprep.subr.bf16.mxu0 0
    %2433 = vmatpush1.bf16.msra.mxu0 0
    %2434 = vmatprep.subr.bf16.mxu0 0
    %2435 = vmatpush1.bf16.msra.mxu0 0
    %2436 = vmatprep.subr.bf16.mxu0 0
    %2437 = vmatpush1.bf16.msra.mxu0 0
    %2438 = vmatprep.subr.bf16.mxu0 0
    %2439 = vmatpush1.bf16.msra.mxu0 0
    %2440 = vmatprep.subr.bf16.mxu0 0
    %2441 = vmatpush1.bf16.msra.mxu0 0
    %2442 = vmatprep.subr.bf16.mxu0 0
    %2443 = vmatpush1.bf16.msra.mxu0 0
    %2444 = vmatprep.subr.bf16.mxu0 0
    %2445 = vmatpush1.bf16.msra.mxu0 0
    %2446 = vmatprep.subr.bf16.mxu0 0
    %2447 = vmatpush1.bf16.msra.mxu0 0
    %2448 = vmatprep.subr.bf16.mxu0 0
    %2449 = vmatpush1.bf16.msra.mxu0 0
    %2450 = vmatprep.subr.bf16.mxu0 0
    %2451 = vmatpush1.bf16.msra.mxu0 0
    %2452 = vmatprep.mubr.bf16.mxu0 0
    %2453 = vmatmul.mubr.bf16.gmra.mrb[0].mxu0 %v2418
    %v2454 = vpop.f32.mrb[0].mxu0
    %v2455 = vadd.f32 0.0, %v2454
    %v2456 = vpop.f32.mrb[0].mxu0
    %v2457 = vpop.f32.mrb[0].mxu0
    %v2458 = vpop.f32.mrb[0].mxu0
    %2459 = vdwg.mxu0
    %2460 = vst [vmem:[#allocation3 + $0xe] sm:$0x3] %v2455
    %2461 = vmatprep.subr.bf16.mxu0 0
    %2462 = vmatpush1.bf16.msra.mxu0 %v283
    %2463 = vmatprep.subr.bf16.mxu0 0
    %2464 = vmatpush1.bf16.msra.mxu0 %v284
    %2465 = vmatprep.subr.bf16.mxu0 0
    %2466 = vmatpush1.bf16.msra.mxu0 0
    %2467 = vmatprep.subr.bf16.mxu0 0
    %2468 = vmatpush1.bf16.msra.mxu0 0
    %2469 = vmatprep.subr.bf16.mxu0 0
    %2470 = vmatpush1.bf16.msra.mxu0 0
    %2471 = vmatprep.subr.bf16.mxu0 0
    %2472 = vmatpush1.bf16.msra.mxu0 0
    %2473 = vmatprep.subr.bf16.mxu0 0
    %2474 = vmatpush1.bf16.msra.mxu0 0
    %2475 = vmatprep.subr.bf16.mxu0 0
    %2476 = vmatpush1.bf16.msra.mxu0 0
    %2477 = vmatprep.subr.bf16.mxu0 0
    %2478 = vmatpush1.bf16.msra.mxu0 0
    %2479 = vmatprep.subr.bf16.mxu0 0
    %2480 = vmatpush1.bf16.msra.mxu0 0
    %2481 = vmatprep.subr.bf16.mxu0 0
    %2482 = vmatpush1.bf16.msra.mxu0 0
    %2483 = vmatprep.subr.bf16.mxu0 0
    %2484 = vmatpush1.bf16.msra.mxu0 0
    %2485 = vmatprep.subr.bf16.mxu0 0
    %2486 = vmatpush1.bf16.msra.mxu0 0
    %2487 = vmatprep.subr.bf16.mxu0 0
    %2488 = vmatpush1.bf16.msra.mxu0 0
    %2489 = vmatprep.subr.bf16.mxu0 0
    %2490 = vmatpush1.bf16.msra.mxu0 0
    %2491 = vmatprep.subr.bf16.mxu0 0
    %2492 = vmatpush1.bf16.msra.mxu0 0
    %2493 = vmatprep.mubr.bf16.mxu0 0
    %2494 = vmatmul.mubr.bf16.gmra.mrb[0].mxu0 %v2298
    %v2495 = vpop.f32.mrb[0].mxu0
    %v2496 = vadd.f32 0.0, %v2495
    %v2497 = vpop.f32.mrb[0].mxu0
    %v2498 = vpop.f32.mrb[0].mxu0
    %v2499 = vpop.f32.mrb[0].mxu0
    %2500 = vdwg.mxu0
    %v2502 = vrot.slane %v2496, 6
    %v2504 = vadd.f32 %v257, %v2502
    %v2505 = vxor.u32 %v2504, 2147483648
    %v2506 = vmul.f32 %v2505, 1.442695
    %v2507 = vpow.pop %v2506
    %v2508 = vadd.f32 %v2507, 1.0
    %v2509 = vrcp.pop %v2508
    %v2510 = vmul.f32 1.0, %v2509
    %v2511 = vtanh.pop %v2504
    %v2513 = vrot.slane %v2286, 6
    %v2515 = vmul.f32 %v2510, %v2513
    %2517 = vrot.lane.b32.xlu0 %v2511, 32
    %v2518 = vpop.permute.xlu0 %2517
    %v2520 = vmul.f32 %v2510, %v2518
    %2522 = vrot.lane.b32.xlu0 %v2520, 32
    %v2523 = vpop.permute.xlu0 %2522
    %v2525 = vadd.f32 %v2515, %v2523
    %v2526 = vtanh.pop %v2525
    %2528 = vrot.lane.b32.xlu0 %v2526, 32
    %v2529 = vpop.permute.xlu0 %2528
    %v2531 = vmul.f32 %v2510, %v2529
    %v2532 = vpack.c.bf16 %v2531, %v2531
    %v2534 = vrot.slane %v2532, 1
    %2535 = vrot.lane.b32.xlu0 %v2534, 64
    %v2536 = vpop.permute.xlu0 %2535
    %v2538 = vsel %vm287, %v2536, 0
    %2540 = vmatprep.subr.bf16.mxu0 0
    %2541 = vmatpush1.bf16.msra.mxu0 %v368
    %2542 = vmatprep.subr.bf16.mxu0 0
    %2543 = vmatpush1.bf16.msra.mxu0 %v369
    %2544 = vmatprep.subr.bf16.mxu0 0
    %2545 = vmatpush1.bf16.msra.mxu0 0
    %2546 = vmatprep.subr.bf16.mxu0 0
    %2547 = vmatpush1.bf16.msra.mxu0 0
    %2548 = vmatprep.subr.bf16.mxu0 0
    %2549 = vmatpush1.bf16.msra.mxu0 0
    %2550 = vmatprep.subr.bf16.mxu0 0
    %2551 = vmatpush1.bf16.msra.mxu0 0
    %2552 = vmatprep.subr.bf16.mxu0 0
    %2553 = vmatpush1.bf16.msra.mxu0 0
    %2554 = vmatprep.subr.bf16.mxu0 0
    %2555 = vmatpush1.bf16.msra.mxu0 0
    %2556 = vmatprep.subr.bf16.mxu0 0
    %2557 = vmatpush1.bf16.msra.mxu0 0
    %2558 = vmatprep.subr.bf16.mxu0 0
    %2559 = vmatpush1.bf16.msra.mxu0 0
    %2560 = vmatprep.subr.bf16.mxu0 0
    %2561 = vmatpush1.bf16.msra.mxu0 0
    %2562 = vmatprep.subr.bf16.mxu0 0
    %2563 = vmatpush1.bf16.msra.mxu0 0
    %2564 = vmatprep.subr.bf16.mxu0 0
    %2565 = vmatpush1.bf16.msra.mxu0 0
    %2566 = vmatprep.subr.bf16.mxu0 0
    %2567 = vmatpush1.bf16.msra.mxu0 0
    %2568 = vmatprep.subr.bf16.mxu0 0
    %2569 = vmatpush1.bf16.msra.mxu0 0
    %2570 = vmatprep.subr.bf16.mxu0 0
    %2571 = vmatpush1.bf16.msra.mxu0 0
    %2572 = vmatprep.mubr.bf16.mxu0 0
    %2573 = vmatmul.mubr.bf16.gmra.mrb[0].mxu0 %v2538
    %v2574 = vpop.f32.mrb[0].mxu0
    %v2575 = vadd.f32 0.0, %v2574
    %v2576 = vpop.f32.mrb[0].mxu0
    %v2577 = vpop.f32.mrb[0].mxu0
    %v2578 = vpop.f32.mrb[0].mxu0
    %2579 = vdwg.mxu0
    %2580 = vst [vmem:[#allocation2 + $0x12] sm:$0x3] %v2575
    %2581 = vmatprep.subr.bf16.mxu0 0
    %2582 = vmatpush1.bf16.msra.mxu0 %v424
    %2583 = vmatprep.subr.bf16.mxu0 0
    %2584 = vmatpush1.bf16.msra.mxu0 %v425
    %2585 = vmatprep.subr.bf16.mxu0 0
    %2586 = vmatpush1.bf16.msra.mxu0 0
    %2587 = vmatprep.subr.bf16.mxu0 0
    %2588 = vmatpush1.bf16.msra.mxu0 0
    %2589 = vmatprep.subr.bf16.mxu0 0
    %2590 = vmatpush1.bf16.msra.mxu0 0
    %2591 = vmatprep.subr.bf16.mxu0 0
    %2592 = vmatpush1.bf16.msra.mxu0 0
    %2593 = vmatprep.subr.bf16.mxu0 0
    %2594 = vmatpush1.bf16.msra.mxu0 0
    %2595 = vmatprep.subr.bf16.mxu0 0
    %2596 = vmatpush1.bf16.msra.mxu0 0
    %2597 = vmatprep.subr.bf16.mxu0 0
    %2598 = vmatpush1.bf16.msra.mxu0 0
    %2599 = vmatprep.subr.bf16.mxu0 0
    %2600 = vmatpush1.bf16.msra.mxu0 0
    %2601 = vmatprep.subr.bf16.mxu0 0
    %2602 = vmatpush1.bf16.msra.mxu0 0
    %2603 = vmatprep.subr.bf16.mxu0 0
    %2604 = vmatpush1.bf16.msra.mxu0 0
    %2605 = vmatprep.subr.bf16.mxu0 0
    %2606 = vmatpush1.bf16.msra.mxu0 0
    %2607 = vmatprep.subr.bf16.mxu0 0
    %2608 = vmatpush1.bf16.msra.mxu0 0
    %2609 = vmatprep.subr.bf16.mxu0 0
    %2610 = vmatpush1.bf16.msra.mxu0 0
    %2611 = vmatprep.subr.bf16.mxu0 0
    %2612 = vmatpush1.bf16.msra.mxu0 0
    %2613 = vmatprep.mubr.bf16.mxu0 0
    %2614 = vmatmul.mubr.bf16.gmra.mrb[0].mxu0 %v2418
    %v2615 = vpop.f32.mrb[0].mxu0
    %v2616 = vadd.f32 0.0, %v2615
    %v2617 = vpop.f32.mrb[0].mxu0
    %v2618 = vpop.f32.mrb[0].mxu0
    %v2619 = vpop.f32.mrb[0].mxu0
    %2620 = vdwg.mxu0
    %v2622 = vrot.slane %v2616, 4
    %v2624 = vadd.f32 %v272, %v2622
    %v2625 = vxor.u32 %v2624, 2147483648
    %v2626 = vmul.f32 %v2625, 1.442695
    %v2627 = vpow.pop %v2626
    %v2628 = vadd.f32 %v2627, 1.0
    %v2629 = vrcp.pop %v2628
    %v2630 = vmul.f32 1.0, %v2629
    %v2631 = vtanh.pop %v2624
    %v2633 = vrot.slane %v2405, 2
    %v2635 = vmul.f32 %v2630, %v2633
    %2637 = vrot.lane.b32.xlu0 %v2631, 32
    %v2638 = vpop.permute.xlu0 %2637
    %v2640 = vmul.f32 %v2630, %v2638
    %2642 = vrot.lane.b32.xlu0 %v2640, 32
    %v2643 = vpop.permute.xlu0 %2642
    %v2645 = vadd.f32 %v2635, %v2643
    %v2646 = vtanh.pop %v2645
    %2648 = vrot.lane.b32.xlu0 %v2646, 32
    %v2649 = vpop.permute.xlu0 %2648
    %v2651 = vmul.f32 %v2630, %v2649
    %v2652 = vpack.c.bf16 %v2651, %v2651
    %v2654 = vrot.slane %v2652, 2
    %2655 = vrot.lane.b32.xlu0 %v2654, 64
    %v2656 = vpop.permute.xlu0 %2655
    %v2658 = vsel %vm287, %v2656, 0
    %2660 = vmatprep.subr.bf16.mxu0 0
    %2661 = vmatpush1.bf16.msra.mxu0 %v509
    %2662 = vmatprep.subr.bf16.mxu0 0
    %2663 = vmatpush1.bf16.msra.mxu0 %v510
    %2664 = vmatprep.subr.bf16.mxu0 0
    %2665 = vmatpush1.bf16.msra.mxu0 0
    %2666 = vmatprep.subr.bf16.mxu0 0
    %2667 = vmatpush1.bf16.msra.mxu0 0
    %2668 = vmatprep.subr.bf16.mxu0 0
    %2669 = vmatpush1.bf16.msra.mxu0 0
    %2670 = vmatprep.subr.bf16.mxu0 0
    %2671 = vmatpush1.bf16.msra.mxu0 0
    %2672 = vmatprep.subr.bf16.mxu0 0
    %2673 = vmatpush1.bf16.msra.mxu0 0
    %2674 = vmatprep.subr.bf16.mxu0 0
    %2675 = vmatpush1.bf16.msra.mxu0 0
    %2676 = vmatprep.subr.bf16.mxu0 0
    %2677 = vmatpush1.bf16.msra.mxu0 0
    %2678 = vmatprep.subr.bf16.mxu0 0
    %2679 = vmatpush1.bf16.msra.mxu0 0
    %2680 = vmatprep.subr.bf16.mxu0 0
    %2681 = vmatpush1.bf16.msra.mxu0 0
    %2682 = vmatprep.subr.bf16.mxu0 0
    %2683 = vmatpush1.bf16.msra.mxu0 0
    %2684 = vmatprep.subr.bf16.mxu0 0
    %2685 = vmatpush1.bf16.msra.mxu0 0
    %2686 = vmatprep.subr.bf16.mxu0 0
    %2687 = vmatpush1.bf16.msra.mxu0 0
    %2688 = vmatprep.subr.bf16.mxu0 0
    %2689 = vmatpush1.bf16.msra.mxu0 0
    %2690 = vmatprep.subr.bf16.mxu0 0
    %2691 = vmatpush1.bf16.msra.mxu0 0
    %2692 = vmatprep.mubr.bf16.mxu0 0
    %2693 = vmatmul.mubr.bf16.gmra.mrb[0].mxu0 %v2658
    %v2694 = vpop.f32.mrb[0].mxu0
    %v2695 = vadd.f32 0.0, %v2694
    %v2696 = vpop.f32.mrb[0].mxu0
    %v2697 = vpop.f32.mrb[0].mxu0
    %v2698 = vpop.f32.mrb[0].mxu0
    %2699 = vdwg.mxu0
    %2700 = vst [vmem:[#allocation3 + $0xc] sm:$0x3] %v2695
    %2701 = vmatprep.subr.bf16.mxu0 0
    %2702 = vmatpush1.bf16.msra.mxu0 %v283
    %2703 = vmatprep.subr.bf16.mxu0 0
    %2704 = vmatpush1.bf16.msra.mxu0 %v284
    %2705 = vmatprep.subr.bf16.mxu0 0
    %2706 = vmatpush1.bf16.msra.mxu0 0
    %2707 = vmatprep.subr.bf16.mxu0 0
    %2708 = vmatpush1.bf16.msra.mxu0 0
    %2709 = vmatprep.subr.bf16.mxu0 0
    %2710 = vmatpush1.bf16.msra.mxu0 0
    %2711 = vmatprep.subr.bf16.mxu0 0
    %2712 = vmatpush1.bf16.msra.mxu0 0
    %2713 = vmatprep.subr.bf16.mxu0 0
    %2714 = vmatpush1.bf16.msra.mxu0 0
    %2715 = vmatprep.subr.bf16.mxu0 0
    %2716 = vmatpush1.bf16.msra.mxu0 0
    %2717 = vmatprep.subr.bf16.mxu0 0
    %2718 = vmatpush1.bf16.msra.mxu0 0
    %2719 = vmatprep.subr.bf16.mxu0 0
    %2720 = vmatpush1.bf16.msra.mxu0 0
    %2721 = vmatprep.subr.bf16.mxu0 0
    %2722 = vmatpush1.bf16.msra.mxu0 0
    %2723 = vmatprep.subr.bf16.mxu0 0
    %2724 = vmatpush1.bf16.msra.mxu0 0
    %2725 = vmatprep.subr.bf16.mxu0 0
    %2726 = vmatpush1.bf16.msra.mxu0 0
    %2727 = vmatprep.subr.bf16.mxu0 0
    %2728 = vmatpush1.bf16.msra.mxu0 0
    %2729 = vmatprep.subr.bf16.mxu0 0
    %2730 = vmatpush1.bf16.msra.mxu0 0
    %2731 = vmatprep.subr.bf16.mxu0 0
    %2732 = vmatpush1.bf16.msra.mxu0 0
    %2733 = vmatprep.mubr.bf16.mxu0 0
    %2734 = vmatmul.mubr.bf16.gmra.mrb[0].mxu0 %v2538
    %v2735 = vpop.f32.mrb[0].mxu0
    %v2736 = vadd.f32 0.0, %v2735
    %v2737 = vpop.f32.mrb[0].mxu0
    %v2738 = vpop.f32.mrb[0].mxu0
    %v2739 = vpop.f32.mrb[0].mxu0
    %2740 = vdwg.mxu0
    %v2742 = vrot.slane %v2736, 4
    %v2744 = vadd.f32 %v257, %v2742
    %v2745 = vxor.u32 %v2744, 2147483648
    %v2746 = vmul.f32 %v2745, 1.442695
    %v2747 = vpow.pop %v2746
    %v2748 = vadd.f32 %v2747, 1.0
    %v2749 = vrcp.pop %v2748
    %v2750 = vmul.f32 1.0, %v2749
    %v2751 = vtanh.pop %v2744
    %v2753 = vrot.slane %v2525, 6
    %v2755 = vmul.f32 %v2750, %v2753
    %2757 = vrot.lane.b32.xlu0 %v2751, 32
    %v2758 = vpop.permute.xlu0 %2757
    %v2760 = vmul.f32 %v2750, %v2758
    %2762 = vrot.lane.b32.xlu0 %v2760, 32
    %v2763 = vpop.permute.xlu0 %2762
    %v2765 = vadd.f32 %v2755, %v2763
    %v2766 = vtanh.pop %v2765
    %2768 = vrot.lane.b32.xlu0 %v2766, 32
    %v2769 = vpop.permute.xlu0 %2768
    %v2771 = vmul.f32 %v2750, %v2769
    %v2772 = vpack.c.bf16 %v2771, %v2771
    %v2774 = vrot.slane %v2772, 2
    %2775 = vrot.lane.b32.xlu0 %v2774, 64
    %v2776 = vpop.permute.xlu0 %2775
    %v2778 = vsel %vm287, %v2776, 0
    %2780 = vmatprep.subr.bf16.mxu0 0
    %2781 = vmatpush1.bf16.msra.mxu0 %v368
    %2782 = vmatprep.subr.bf16.mxu0 0
    %2783 = vmatpush1.bf16.msra.mxu0 %v369
    %2784 = vmatprep.subr.bf16.mxu0 0
    %2785 = vmatpush1.bf16.msra.mxu0 0
    %2786 = vmatprep.subr.bf16.mxu0 0
    %2787 = vmatpush1.bf16.msra.mxu0 0
    %2788 = vmatprep.subr.bf16.mxu0 0
    %2789 = vmatpush1.bf16.msra.mxu0 0
    %2790 = vmatprep.subr.bf16.mxu0 0
    %2791 = vmatpush1.bf16.msra.mxu0 0
    %2792 = vmatprep.subr.bf16.mxu0 0
    %2793 = vmatpush1.bf16.msra.mxu0 0
    %2794 = vmatprep.subr.bf16.mxu0 0
    %2795 = vmatpush1.bf16.msra.mxu0 0
    %2796 = vmatprep.subr.bf16.mxu0 0
    %2797 = vmatpush1.bf16.msra.mxu0 0
    %2798 = vmatprep.subr.bf16.mxu0 0
    %2799 = vmatpush1.bf16.msra.mxu0 0
    %2800 = vmatprep.subr.bf16.mxu0 0
    %2801 = vmatpush1.bf16.msra.mxu0 0
    %2802 = vmatprep.subr.bf16.mxu0 0
    %2803 = vmatpush1.bf16.msra.mxu0 0
    %2804 = vmatprep.subr.bf16.mxu0 0
    %2805 = vmatpush1.bf16.msra.mxu0 0
    %2806 = vmatprep.subr.bf16.mxu0 0
    %2807 = vmatpush1.bf16.msra.mxu0 0
    %2808 = vmatprep.subr.bf16.mxu0 0
    %2809 = vmatpush1.bf16.msra.mxu0 0
    %2810 = vmatprep.subr.bf16.mxu0 0
    %2811 = vmatpush1.bf16.msra.mxu0 0
    %2812 = vmatprep.mubr.bf16.mxu0 0
    %2813 = vmatmul.mubr.bf16.gmra.mrb[0].mxu0 %v2778
    %v2814 = vpop.f32.mrb[0].mxu0
    %v2815 = vadd.f32 0.0, %v2814
    %v2816 = vpop.f32.mrb[0].mxu0
    %v2817 = vpop.f32.mrb[0].mxu0
    %v2818 = vpop.f32.mrb[0].mxu0
    %2819 = vdwg.mxu0
    %2820 = vst [vmem:[#allocation2 + $0x14] sm:$0x3] %v2815
    %2821 = vmatprep.subr.bf16.mxu0 0
    %2822 = vmatpush1.bf16.msra.mxu0 %v424
    %2823 = vmatprep.subr.bf16.mxu0 0
    %2824 = vmatpush1.bf16.msra.mxu0 %v425
    %2825 = vmatprep.subr.bf16.mxu0 0
    %2826 = vmatpush1.bf16.msra.mxu0 0
    %2827 = vmatprep.subr.bf16.mxu0 0
    %2828 = vmatpush1.bf16.msra.mxu0 0
    %2829 = vmatprep.subr.bf16.mxu0 0
    %2830 = vmatpush1.bf16.msra.mxu0 0
    %2831 = vmatprep.subr.bf16.mxu0 0
    %2832 = vmatpush1.bf16.msra.mxu0 0
    %2833 = vmatprep.subr.bf16.mxu0 0
    %2834 = vmatpush1.bf16.msra.mxu0 0
    %2835 = vmatprep.subr.bf16.mxu0 0
    %2836 = vmatpush1.bf16.msra.mxu0 0
    %2837 = vmatprep.subr.bf16.mxu0 0
    %2838 = vmatpush1.bf16.msra.mxu0 0
    %2839 = vmatprep.subr.bf16.mxu0 0
    %2840 = vmatpush1.bf16.msra.mxu0 0
    %2841 = vmatprep.subr.bf16.mxu0 0
    %2842 = vmatpush1.bf16.msra.mxu0 0
    %2843 = vmatprep.subr.bf16.mxu0 0
    %2844 = vmatpush1.bf16.msra.mxu0 0
    %2845 = vmatprep.subr.bf16.mxu0 0
    %2846 = vmatpush1.bf16.msra.mxu0 0
    %2847 = vmatprep.subr.bf16.mxu0 0
    %2848 = vmatpush1.bf16.msra.mxu0 0
    %2849 = vmatprep.subr.bf16.mxu0 0
    %2850 = vmatpush1.bf16.msra.mxu0 0
    %2851 = vmatprep.subr.bf16.mxu0 0
    %2852 = vmatpush1.bf16.msra.mxu0 0
    %2853 = vmatprep.mubr.bf16.mxu0 0
    %2854 = vmatmul.mubr.bf16.gmra.mrb[0].mxu0 %v2658
    %v2855 = vpop.f32.mrb[0].mxu0
    %v2856 = vadd.f32 0.0, %v2855
    %v2857 = vpop.f32.mrb[0].mxu0
    %v2858 = vpop.f32.mrb[0].mxu0
    %v2859 = vpop.f32.mrb[0].mxu0
    %2860 = vdwg.mxu0
    %v2862 = vrot.slane %v2856, 6
    %v2864 = vadd.f32 %v272, %v2862
    %v2865 = vxor.u32 %v2864, 2147483648
    %v2866 = vmul.f32 %v2865, 1.442695
    %v2867 = vpow.pop %v2866
    %v2868 = vadd.f32 %v2867, 1.0
    %v2869 = vrcp.pop %v2868
    %v2870 = vmul.f32 1.0, %v2869
    %v2871 = vtanh.pop %v2864
    %v2873 = vrot.slane %v2645, 2
    %v2875 = vmul.f32 %v2870, %v2873
    %2877 = vrot.lane.b32.xlu0 %v2871, 32
    %v2878 = vpop.permute.xlu0 %2877
    %v2880 = vmul.f32 %v2870, %v2878
    %2882 = vrot.lane.b32.xlu0 %v2880, 32
    %v2883 = vpop.permute.xlu0 %2882
    %v2885 = vadd.f32 %v2875, %v2883
    %v2886 = vtanh.pop %v2885
    %2888 = vrot.lane.b32.xlu0 %v2886, 32
    %v2889 = vpop.permute.xlu0 %2888
    %v2891 = vmul.f32 %v2870, %v2889
    %v2892 = vpack.c.bf16 %v2891, %v2891
    %v2894 = vrot.slane %v2892, 1
    %2895 = vrot.lane.b32.xlu0 %v2894, 64
    %v2896 = vpop.permute.xlu0 %2895
    %v2898 = vsel %vm287, %v2896, 0
    %2900 = vmatprep.subr.bf16.mxu0 0
    %2901 = vmatpush1.bf16.msra.mxu0 %v509
    %2902 = vmatprep.subr.bf16.mxu0 0
    %2903 = vmatpush1.bf16.msra.mxu0 %v510
    %2904 = vmatprep.subr.bf16.mxu0 0
    %2905 = vmatpush1.bf16.msra.mxu0 0
    %2906 = vmatprep.subr.bf16.mxu0 0
    %2907 = vmatpush1.bf16.msra.mxu0 0
    %2908 = vmatprep.subr.bf16.mxu0 0
    %2909 = vmatpush1.bf16.msra.mxu0 0
    %2910 = vmatprep.subr.bf16.mxu0 0
    %2911 = vmatpush1.bf16.msra.mxu0 0
    %2912 = vmatprep.subr.bf16.mxu0 0
    %2913 = vmatpush1.bf16.msra.mxu0 0
    %2914 = vmatprep.subr.bf16.mxu0 0
    %2915 = vmatpush1.bf16.msra.mxu0 0
    %2916 = vmatprep.subr.bf16.mxu0 0
    %2917 = vmatpush1.bf16.msra.mxu0 0
    %2918 = vmatprep.subr.bf16.mxu0 0
    %2919 = vmatpush1.bf16.msra.mxu0 0
    %2920 = vmatprep.subr.bf16.mxu0 0
    %2921 = vmatpush1.bf16.msra.mxu0 0
    %2922 = vmatprep.subr.bf16.mxu0 0
    %2923 = vmatpush1.bf16.msra.mxu0 0
    %2924 = vmatprep.subr.bf16.mxu0 0
    %2925 = vmatpush1.bf16.msra.mxu0 0
    %2926 = vmatprep.subr.bf16.mxu0 0
    %2927 = vmatpush1.bf16.msra.mxu0 0
    %2928 = vmatprep.subr.bf16.mxu0 0
    %2929 = vmatpush1.bf16.msra.mxu0 0
    %2930 = vmatprep.subr.bf16.mxu0 0
    %2931 = vmatpush1.bf16.msra.mxu0 0
    %2932 = vmatprep.mubr.bf16.mxu0 0
    %2933 = vmatmul.mubr.bf16.gmra.mrb[0].mxu0 %v2898
    %v2934 = vpop.f32.mrb[0].mxu0
    %v2935 = vadd.f32 0.0, %v2934
    %v2936 = vpop.f32.mrb[0].mxu0
    %v2937 = vpop.f32.mrb[0].mxu0
    %v2938 = vpop.f32.mrb[0].mxu0
    %2939 = vdwg.mxu0
    %2940 = vst [vmem:[#allocation3 + $0xa] sm:$0x3] %v2935
    %2941 = vmatprep.subr.bf16.mxu0 0
    %2942 = vmatpush1.bf16.msra.mxu0 %v283
    %2943 = vmatprep.subr.bf16.mxu0 0
    %2944 = vmatpush1.bf16.msra.mxu0 %v284
    %2945 = vmatprep.subr.bf16.mxu0 0
    %2946 = vmatpush1.bf16.msra.mxu0 0
    %2947 = vmatprep.subr.bf16.mxu0 0
    %2948 = vmatpush1.bf16.msra.mxu0 0
    %2949 = vmatprep.subr.bf16.mxu0 0
    %2950 = vmatpush1.bf16.msra.mxu0 0
    %2951 = vmatprep.subr.bf16.mxu0 0
    %2952 = vmatpush1.bf16.msra.mxu0 0
    %2953 = vmatprep.subr.bf16.mxu0 0
    %2954 = vmatpush1.bf16.msra.mxu0 0
    %2955 = vmatprep.subr.bf16.mxu0 0
    %2956 = vmatpush1.bf16.msra.mxu0 0
    %2957 = vmatprep.subr.bf16.mxu0 0
    %2958 = vmatpush1.bf16.msra.mxu0 0
    %2959 = vmatprep.subr.bf16.mxu0 0
    %2960 = vmatpush1.bf16.msra.mxu0 0
    %2961 = vmatprep.subr.bf16.mxu0 0
    %2962 = vmatpush1.bf16.msra.mxu0 0
    %2963 = vmatprep.subr.bf16.mxu0 0
    %2964 = vmatpush1.bf16.msra.mxu0 0
    %2965 = vmatprep.subr.bf16.mxu0 0
    %2966 = vmatpush1.bf16.msra.mxu0 0
    %2967 = vmatprep.subr.bf16.mxu0 0
    %2968 = vmatpush1.bf16.msra.mxu0 0
    %2969 = vmatprep.subr.bf16.mxu0 0
    %2970 = vmatpush1.bf16.msra.mxu0 0
    %2971 = vmatprep.subr.bf16.mxu0 0
    %2972 = vmatpush1.bf16.msra.mxu0 0
    %2973 = vmatprep.mubr.bf16.mxu0 0
    %2974 = vmatmul.mubr.bf16.gmra.mrb[0].mxu0 %v2778
    %v2975 = vpop.f32.mrb[0].mxu0
    %v2976 = vadd.f32 0.0, %v2975
    %v2977 = vpop.f32.mrb[0].mxu0
    %v2978 = vpop.f32.mrb[0].mxu0
    %v2979 = vpop.f32.mrb[0].mxu0
    %2980 = vdwg.mxu0
    %v2982 = vrot.slane %v2976, 2
    %v2984 = vadd.f32 %v257, %v2982
    %v2985 = vxor.u32 %v2984, 2147483648
    %v2986 = vmul.f32 %v2985, 1.442695
    %v2987 = vpow.pop %v2986
    %v2988 = vadd.f32 %v2987, 1.0
    %v2989 = vrcp.pop %v2988
    %v2990 = vmul.f32 1.0, %v2989
    %v2991 = vtanh.pop %v2984
    %v2993 = vrot.slane %v2765, 6
    %v2995 = vmul.f32 %v2990, %v2993
    %2997 = vrot.lane.b32.xlu0 %v2991, 32
    %v2998 = vpop.permute.xlu0 %2997
    %v3000 = vmul.f32 %v2990, %v2998
    %3002 = vrot.lane.b32.xlu0 %v3000, 32
    %v3003 = vpop.permute.xlu0 %3002
    %v3005 = vadd.f32 %v2995, %v3003
    %v3006 = vtanh.pop %v3005
    %3008 = vrot.lane.b32.xlu0 %v3006, 32
    %v3009 = vpop.permute.xlu0 %3008
    %v3011 = vmul.f32 %v2990, %v3009
    %v3012 = vpack.c.bf16 %v3011, %v3011
    %v3014 = vrot.slane %v3012, 3
    %3015 = vrot.lane.b32.xlu0 %v3014, 64
    %v3016 = vpop.permute.xlu0 %3015
    %v3018 = vsel %vm287, %v3016, 0
    %3020 = vmatprep.subr.bf16.mxu0 0
    %3021 = vmatpush1.bf16.msra.mxu0 %v368
    %3022 = vmatprep.subr.bf16.mxu0 0
    %3023 = vmatpush1.bf16.msra.mxu0 %v369
    %3024 = vmatprep.subr.bf16.mxu0 0
    %3025 = vmatpush1.bf16.msra.mxu0 0
    %3026 = vmatprep.subr.bf16.mxu0 0
    %3027 = vmatpush1.bf16.msra.mxu0 0
    %3028 = vmatprep.subr.bf16.mxu0 0
    %3029 = vmatpush1.bf16.msra.mxu0 0
    %3030 = vmatprep.subr.bf16.mxu0 0
    %3031 = vmatpush1.bf16.msra.mxu0 0
    %3032 = vmatprep.subr.bf16.mxu0 0
    %3033 = vmatpush1.bf16.msra.mxu0 0
    %3034 = vmatprep.subr.bf16.mxu0 0
    %3035 = vmatpush1.bf16.msra.mxu0 0
    %3036 = vmatprep.subr.bf16.mxu0 0
    %3037 = vmatpush1.bf16.msra.mxu0 0
    %3038 = vmatprep.subr.bf16.mxu0 0
    %3039 = vmatpush1.bf16.msra.mxu0 0
    %3040 = vmatprep.subr.bf16.mxu0 0
    %3041 = vmatpush1.bf16.msra.mxu0 0
    %3042 = vmatprep.subr.bf16.mxu0 0
    %3043 = vmatpush1.bf16.msra.mxu0 0
    %3044 = vmatprep.subr.bf16.mxu0 0
    %3045 = vmatpush1.bf16.msra.mxu0 0
    %3046 = vmatprep.subr.bf16.mxu0 0
    %3047 = vmatpush1.bf16.msra.mxu0 0
    %3048 = vmatprep.subr.bf16.mxu0 0
    %3049 = vmatpush1.bf16.msra.mxu0 0
    %3050 = vmatprep.subr.bf16.mxu0 0
    %3051 = vmatpush1.bf16.msra.mxu0 0
    %3052 = vmatprep.mubr.bf16.mxu0 0
    %3053 = vmatmul.mubr.bf16.gmra.mrb[0].mxu0 %v3018
    %v3054 = vpop.f32.mrb[0].mxu0
    %v3055 = vadd.f32 0.0, %v3054
    %v3056 = vpop.f32.mrb[0].mxu0
    %v3057 = vpop.f32.mrb[0].mxu0
    %v3058 = vpop.f32.mrb[0].mxu0
    %3059 = vdwg.mxu0
    %3060 = vst [vmem:[#allocation2 + $0x16] sm:$0x3] %v3055
    %3061 = vmatprep.subr.bf16.mxu0 0
    %3062 = vmatpush1.bf16.msra.mxu0 %v424
    %3063 = vmatprep.subr.bf16.mxu0 0
    %3064 = vmatpush1.bf16.msra.mxu0 %v425
    %3065 = vmatprep.subr.bf16.mxu0 0
    %3066 = vmatpush1.bf16.msra.mxu0 0
    %3067 = vmatprep.subr.bf16.mxu0 0
    %3068 = vmatpush1.bf16.msra.mxu0 0
    %3069 = vmatprep.subr.bf16.mxu0 0
    %3070 = vmatpush1.bf16.msra.mxu0 0
    %3071 = vmatprep.subr.bf16.mxu0 0
    %3072 = vmatpush1.bf16.msra.mxu0 0
    %3073 = vmatprep.subr.bf16.mxu0 0
    %3074 = vmatpush1.bf16.msra.mxu0 0
    %3075 = vmatprep.subr.bf16.mxu0 0
    %3076 = vmatpush1.bf16.msra.mxu0 0
    %3077 = vmatprep.subr.bf16.mxu0 0
    %3078 = vmatpush1.bf16.msra.mxu0 0
    %3079 = vmatprep.subr.bf16.mxu0 0
    %3080 = vmatpush1.bf16.msra.mxu0 0
    %3081 = vmatprep.subr.bf16.mxu0 0
    %3082 = vmatpush1.bf16.msra.mxu0 0
    %3083 = vmatprep.subr.bf16.mxu0 0
    %3084 = vmatpush1.bf16.msra.mxu0 0
    %3085 = vmatprep.subr.bf16.mxu0 0
    %3086 = vmatpush1.bf16.msra.mxu0 0
    %3087 = vmatprep.subr.bf16.mxu0 0
    %3088 = vmatpush1.bf16.msra.mxu0 0
    %3089 = vmatprep.subr.bf16.mxu0 0
    %3090 = vmatpush1.bf16.msra.mxu0 0
    %3091 = vmatprep.subr.bf16.mxu0 0
    %3092 = vmatpush1.bf16.msra.mxu0 0
    %3093 = vmatprep.mubr.bf16.mxu0 0
    %3094 = vmatmul.mubr.bf16.gmra.mrb[0].mxu0 %v2898
    %v3095 = vpop.f32.mrb[0].mxu0
    %v3096 = vadd.f32 0.0, %v3095
    %v3097 = vpop.f32.mrb[0].mxu0
    %v3098 = vpop.f32.mrb[0].mxu0
    %v3099 = vpop.f32.mrb[0].mxu0
    %3100 = vdwg.mxu0
    %v3101 = vadd.f32 %v272, %v3096
    %v3102 = vxor.u32 %v3101, 2147483648
    %v3103 = vmul.f32 %v3102, 1.442695
    %v3104 = vpow.pop %v3103
    %v3105 = vadd.f32 %v3104, 1.0
    %v3106 = vrcp.pop %v3105
    %v3107 = vmul.f32 1.0, %v3106
    %v3108 = vtanh.pop %v3101
    %v3110 = vrot.slane %v2885, 2
    %v3112 = vmul.f32 %v3107, %v3110
    %3114 = vrot.lane.b32.xlu0 %v3108, 32
    %v3115 = vpop.permute.xlu0 %3114
    %v3117 = vmul.f32 %v3107, %v3115
    %3119 = vrot.lane.b32.xlu0 %v3117, 32
    %v3120 = vpop.permute.xlu0 %3119
    %v3122 = vadd.f32 %v3112, %v3120
    %v3123 = vtanh.pop %v3122
    %3125 = vrot.lane.b32.xlu0 %v3123, 32
    %v3126 = vpop.permute.xlu0 %3125
    %v3128 = vmul.f32 %v3107, %v3126
    %v3129 = vpack.c.bf16 %v3128, %v3128
    %3131 = vrot.lane.b32.xlu0 %v3129, 64
    %v3132 = vpop.permute.xlu0 %3131
    %v3134 = vsel %vm287, %v3132, 0
    %3136 = vmatprep.subr.bf16.mxu0 0
    %3137 = vmatpush1.bf16.msra.mxu0 %v509
    %3138 = vmatprep.subr.bf16.mxu0 0
    %3139 = vmatpush1.bf16.msra.mxu0 %v510
    %3140 = vmatprep.subr.bf16.mxu0 0
    %3141 = vmatpush1.bf16.msra.mxu0 0
    %3142 = vmatprep.subr.bf16.mxu0 0
    %3143 = vmatpush1.bf16.msra.mxu0 0
    %3144 = vmatprep.subr.bf16.mxu0 0
    %3145 = vmatpush1.bf16.msra.mxu0 0
    %3146 = vmatprep.subr.bf16.mxu0 0
    %3147 = vmatpush1.bf16.msra.mxu0 0
    %3148 = vmatprep.subr.bf16.mxu0 0
    %3149 = vmatpush1.bf16.msra.mxu0 0
    %3150 = vmatprep.subr.bf16.mxu0 0
    %3151 = vmatpush1.bf16.msra.mxu0 0
    %3152 = vmatprep.subr.bf16.mxu0 0
    %3153 = vmatpush1.bf16.msra.mxu0 0
    %3154 = vmatprep.subr.bf16.mxu0 0
    %3155 = vmatpush1.bf16.msra.mxu0 0
    %3156 = vmatprep.subr.bf16.mxu0 0
    %3157 = vmatpush1.bf16.msra.mxu0 0
    %3158 = vmatprep.subr.bf16.mxu0 0
    %3159 = vmatpush1.bf16.msra.mxu0 0
    %3160 = vmatprep.subr.bf16.mxu0 0
    %3161 = vmatpush1.bf16.msra.mxu0 0
    %3162 = vmatprep.subr.bf16.mxu0 0
    %3163 = vmatpush1.bf16.msra.mxu0 0
    %3164 = vmatprep.subr.bf16.mxu0 0
    %3165 = vmatpush1.bf16.msra.mxu0 0
    %3166 = vmatprep.subr.bf16.mxu0 0
    %3167 = vmatpush1.bf16.msra.mxu0 0
    %3168 = vmatprep.mubr.bf16.mxu0 0
    %3169 = vmatmul.mubr.bf16.gmra.mrb[0].mxu0 %v3134
    %v3170 = vpop.f32.mrb[0].mxu0
    %v3171 = vadd.f32 0.0, %v3170
    %v3172 = vpop.f32.mrb[0].mxu0
    %v3173 = vpop.f32.mrb[0].mxu0
    %v3174 = vpop.f32.mrb[0].mxu0
    %3175 = vdwg.mxu0
    %3176 = vst [vmem:[#allocation3 + $0x8] sm:$0x3] %v3171
    %3177 = vmatprep.subr.bf16.mxu0 0
    %3178 = vmatpush1.bf16.msra.mxu0 %v283
    %3179 = vmatprep.subr.bf16.mxu0 0
    %3180 = vmatpush1.bf16.msra.mxu0 %v284
    %3181 = vmatprep.subr.bf16.mxu0 0
    %3182 = vmatpush1.bf16.msra.mxu0 0
    %3183 = vmatprep.subr.bf16.mxu0 0
    %3184 = vmatpush1.bf16.msra.mxu0 0
    %3185 = vmatprep.subr.bf16.mxu0 0
    %3186 = vmatpush1.bf16.msra.mxu0 0
    %3187 = vmatprep.subr.bf16.mxu0 0
    %3188 = vmatpush1.bf16.msra.mxu0 0
    %3189 = vmatprep.subr.bf16.mxu0 0
    %3190 = vmatpush1.bf16.msra.mxu0 0
    %3191 = vmatprep.subr.bf16.mxu0 0
    %3192 = vmatpush1.bf16.msra.mxu0 0
    %3193 = vmatprep.subr.bf16.mxu0 0
    %3194 = vmatpush1.bf16.msra.mxu0 0
    %3195 = vmatprep.subr.bf16.mxu0 0
    %3196 = vmatpush1.bf16.msra.mxu0 0
    %3197 = vmatprep.subr.bf16.mxu0 0
    %3198 = vmatpush1.bf16.msra.mxu0 0
    %3199 = vmatprep.subr.bf16.mxu0 0
    %3200 = vmatpush1.bf16.msra.mxu0 0
    %3201 = vmatprep.subr.bf16.mxu0 0
    %3202 = vmatpush1.bf16.msra.mxu0 0
    %3203 = vmatprep.subr.bf16.mxu0 0
    %3204 = vmatpush1.bf16.msra.mxu0 0
    %3205 = vmatprep.subr.bf16.mxu0 0
    %3206 = vmatpush1.bf16.msra.mxu0 0
    %3207 = vmatprep.subr.bf16.mxu0 0
    %3208 = vmatpush1.bf16.msra.mxu0 0
    %3209 = vmatprep.mubr.bf16.mxu0 0
    %3210 = vmatmul.mubr.bf16.gmra.mrb[0].mxu0 %v3018
    %v3211 = vpop.f32.mrb[0].mxu0
    %v3212 = vadd.f32 0.0, %v3211
    %v3213 = vpop.f32.mrb[0].mxu0
    %v3214 = vpop.f32.mrb[0].mxu0
    %v3215 = vpop.f32.mrb[0].mxu0
    %3216 = vdwg.mxu0
    %v3217 = vadd.f32 %v258, %v3212
    %v3218 = vxor.u32 %v3217, 2147483648
    %v3219 = vmul.f32 %v3218, 1.442695
    %v3220 = vpow.pop %v3219
    %v3221 = vadd.f32 %v3220, 1.0
    %v3222 = vrcp.pop %v3221
    %v3223 = vmul.f32 1.0, %v3222
    %v3224 = vtanh.pop %v3217
    %v3226 = vrot.slane %v3005, 6
    %v3228 = vmul.f32 %v3223, %v3226
    %3230 = vrot.lane.b32.xlu0 %v3224, 32
    %v3231 = vpop.permute.xlu0 %3230
    %v3233 = vmul.f32 %v3223, %v3231
    %3235 = vrot.lane.b32.xlu0 %v3233, 32
    %v3236 = vpop.permute.xlu0 %3235
    %v3238 = vadd.f32 %v3228, %v3236
    %v3239 = vtanh.pop %v3238
    %3241 = vrot.lane.b32.xlu0 %v3239, 32
    %v3242 = vpop.permute.xlu0 %3241
    %v3244 = vmul.f32 %v3223, %v3242
    %v3245 = vpack.c.bf16 %v3244, %v3244
    %3247 = vrot.lane.b32.xlu0 %v3245, 64
    %v3248 = vpop.permute.xlu0 %3247
    %v3250 = vsel %vm287, %v3248, 0
    %3252 = vmatprep.subr.bf16.mxu0 0
    %3253 = vmatpush1.bf16.msra.mxu0 %v368
    %3254 = vmatprep.subr.bf16.mxu0 0
    %3255 = vmatpush1.bf16.msra.mxu0 %v369
    %3256 = vmatprep.subr.bf16.mxu0 0
    %3257 = vmatpush1.bf16.msra.mxu0 0
    %3258 = vmatprep.subr.bf16.mxu0 0
    %3259 = vmatpush1.bf16.msra.mxu0 0
    %3260 = vmatprep.subr.bf16.mxu0 0
    %3261 = vmatpush1.bf16.msra.mxu0 0
    %3262 = vmatprep.subr.bf16.mxu0 0
    %3263 = vmatpush1.bf16.msra.mxu0 0
    %3264 = vmatprep.subr.bf16.mxu0 0
    %3265 = vmatpush1.bf16.msra.mxu0 0
    %3266 = vmatprep.subr.bf16.mxu0 0
    %3267 = vmatpush1.bf16.msra.mxu0 0
    %3268 = vmatprep.subr.bf16.mxu0 0
    %3269 = vmatpush1.bf16.msra.mxu0 0
    %3270 = vmatprep.subr.bf16.mxu0 0
    %3271 = vmatpush1.bf16.msra.mxu0 0
    %3272 = vmatprep.subr.bf16.mxu0 0
    %3273 = vmatpush1.bf16.msra.mxu0 0
    %3274 = vmatprep.subr.bf16.mxu0 0
    %3275 = vmatpush1.bf16.msra.mxu0 0
    %3276 = vmatprep.subr.bf16.mxu0 0
    %3277 = vmatpush1.bf16.msra.mxu0 0
    %3278 = vmatprep.subr.bf16.mxu0 0
    %3279 = vmatpush1.bf16.msra.mxu0 0
    %3280 = vmatprep.subr.bf16.mxu0 0
    %3281 = vmatpush1.bf16.msra.mxu0 0
    %3282 = vmatprep.subr.bf16.mxu0 0
    %3283 = vmatpush1.bf16.msra.mxu0 0
    %3284 = vmatprep.mubr.bf16.mxu0 0
    %3285 = vmatmul.mubr.bf16.gmra.mrb[0].mxu0 %v3250
    %v3286 = vpop.f32.mrb[0].mxu0
    %v3287 = vadd.f32 0.0, %v3286
    %v3288 = vpop.f32.mrb[0].mxu0
    %v3289 = vpop.f32.mrb[0].mxu0
    %v3290 = vpop.f32.mrb[0].mxu0
    %3291 = vdwg.mxu0
    %3292 = vst [vmem:[#allocation2 + $0x18] sm:$0x3] %v3287
    %3293 = vmatprep.subr.bf16.mxu0 0
    %3294 = vmatpush1.bf16.msra.mxu0 %v424
    %3295 = vmatprep.subr.bf16.mxu0 0
    %3296 = vmatpush1.bf16.msra.mxu0 %v425
    %3297 = vmatprep.subr.bf16.mxu0 0
    %3298 = vmatpush1.bf16.msra.mxu0 0
    %3299 = vmatprep.subr.bf16.mxu0 0
    %3300 = vmatpush1.bf16.msra.mxu0 0
    %3301 = vmatprep.subr.bf16.mxu0 0
    %3302 = vmatpush1.bf16.msra.mxu0 0
    %3303 = vmatprep.subr.bf16.mxu0 0
    %3304 = vmatpush1.bf16.msra.mxu0 0
    %3305 = vmatprep.subr.bf16.mxu0 0
    %3306 = vmatpush1.bf16.msra.mxu0 0
    %3307 = vmatprep.subr.bf16.mxu0 0
    %3308 = vmatpush1.bf16.msra.mxu0 0
    %3309 = vmatprep.subr.bf16.mxu0 0
    %3310 = vmatpush1.bf16.msra.mxu0 0
    %3311 = vmatprep.subr.bf16.mxu0 0
    %3312 = vmatpush1.bf16.msra.mxu0 0
    %3313 = vmatprep.subr.bf16.mxu0 0
    %3314 = vmatpush1.bf16.msra.mxu0 0
    %3315 = vmatprep.subr.bf16.mxu0 0
    %3316 = vmatpush1.bf16.msra.mxu0 0
    %3317 = vmatprep.subr.bf16.mxu0 0
    %3318 = vmatpush1.bf16.msra.mxu0 0
    %3319 = vmatprep.subr.bf16.mxu0 0
    %3320 = vmatpush1.bf16.msra.mxu0 0
    %3321 = vmatprep.subr.bf16.mxu0 0
    %3322 = vmatpush1.bf16.msra.mxu0 0
    %3323 = vmatprep.subr.bf16.mxu0 0
    %3324 = vmatpush1.bf16.msra.mxu0 0
    %3325 = vmatprep.mubr.bf16.mxu0 0
    %3326 = vmatmul.mubr.bf16.gmra.mrb[0].mxu0 %v3134
    %v3327 = vpop.f32.mrb[0].mxu0
    %v3328 = vadd.f32 0.0, %v3327
    %v3329 = vpop.f32.mrb[0].mxu0
    %v3330 = vpop.f32.mrb[0].mxu0
    %v3331 = vpop.f32.mrb[0].mxu0
    %3332 = vdwg.mxu0
    %v3334 = vrot.slane %v3328, 2
    %v3336 = vadd.f32 %v271, %v3334
    %v3337 = vxor.u32 %v3336, 2147483648
    %v3338 = vmul.f32 %v3337, 1.442695
    %v3339 = vpow.pop %v3338
    %v3340 = vadd.f32 %v3339, 1.0
    %v3341 = vrcp.pop %v3340
    %v3342 = vmul.f32 1.0, %v3341
    %v3343 = vtanh.pop %v3336
    %v3345 = vrot.slane %v3122, 2
    %v3347 = vmul.f32 %v3342, %v3345
    %3349 = vrot.lane.b32.xlu0 %v3343, 32
    %v3350 = vpop.permute.xlu0 %3349
    %v3352 = vmul.f32 %v3342, %v3350
    %3354 = vrot.lane.b32.xlu0 %v3352, 32
    %v3355 = vpop.permute.xlu0 %3354
    %v3357 = vadd.f32 %v3347, %v3355
    %v3358 = vtanh.pop %v3357
    %3360 = vrot.lane.b32.xlu0 %v3358, 32
    %v3361 = vpop.permute.xlu0 %3360
    %v3363 = vmul.f32 %v3342, %v3361
    %v3364 = vpack.c.bf16 %v3363, %v3363
    %v3366 = vrot.slane %v3364, 3
    %3367 = vrot.lane.b32.xlu0 %v3366, 64
    %v3368 = vpop.permute.xlu0 %3367
    %v3370 = vsel %vm287, %v3368, 0
    %3372 = vmatprep.subr.bf16.mxu0 0
    %3373 = vmatpush1.bf16.msra.mxu0 %v509
    %3374 = vmatprep.subr.bf16.mxu0 0
    %3375 = vmatpush1.bf16.msra.mxu0 %v510
    %3376 = vmatprep.subr.bf16.mxu0 0
    %3377 = vmatpush1.bf16.msra.mxu0 0
    %3378 = vmatprep.subr.bf16.mxu0 0
    %3379 = vmatpush1.bf16.msra.mxu0 0
    %3380 = vmatprep.subr.bf16.mxu0 0
    %3381 = vmatpush1.bf16.msra.mxu0 0
    %3382 = vmatprep.subr.bf16.mxu0 0
    %3383 = vmatpush1.bf16.msra.mxu0 0
    %3384 = vmatprep.subr.bf16.mxu0 0
    %3385 = vmatpush1.bf16.msra.mxu0 0
    %3386 = vmatprep.subr.bf16.mxu0 0
    %3387 = vmatpush1.bf16.msra.mxu0 0
    %3388 = vmatprep.subr.bf16.mxu0 0
    %3389 = vmatpush1.bf16.msra.mxu0 0
    %3390 = vmatprep.subr.bf16.mxu0 0
    %3391 = vmatpush1.bf16.msra.mxu0 0
    %3392 = vmatprep.subr.bf16.mxu0 0
    %3393 = vmatpush1.bf16.msra.mxu0 0
    %3394 = vmatprep.subr.bf16.mxu0 0
    %3395 = vmatpush1.bf16.msra.mxu0 0
    %3396 = vmatprep.subr.bf16.mxu0 0
    %3397 = vmatpush1.bf16.msra.mxu0 0
    %3398 = vmatprep.subr.bf16.mxu0 0
    %3399 = vmatpush1.bf16.msra.mxu0 0
    %3400 = vmatprep.subr.bf16.mxu0 0
    %3401 = vmatpush1.bf16.msra.mxu0 0
    %3402 = vmatprep.subr.bf16.mxu0 0
    %3403 = vmatpush1.bf16.msra.mxu0 0
    %3404 = vmatprep.mubr.bf16.mxu0 0
    %3405 = vmatmul.mubr.bf16.gmra.mrb[0].mxu0 %v3370
    %v3406 = vpop.f32.mrb[0].mxu0
    %v3407 = vadd.f32 0.0, %v3406
    %v3408 = vpop.f32.mrb[0].mxu0
    %v3409 = vpop.f32.mrb[0].mxu0
    %v3410 = vpop.f32.mrb[0].mxu0
    %3411 = vdwg.mxu0
    %3412 = vst [vmem:[#allocation3 + $0x6] sm:$0x3] %v3407
    %3413 = vmatprep.subr.bf16.mxu0 0
    %3414 = vmatpush1.bf16.msra.mxu0 %v283
    %3415 = vmatprep.subr.bf16.mxu0 0
    %3416 = vmatpush1.bf16.msra.mxu0 %v284
    %3417 = vmatprep.subr.bf16.mxu0 0
    %3418 = vmatpush1.bf16.msra.mxu0 0
    %3419 = vmatprep.subr.bf16.mxu0 0
    %3420 = vmatpush1.bf16.msra.mxu0 0
    %3421 = vmatprep.subr.bf16.mxu0 0
    %3422 = vmatpush1.bf16.msra.mxu0 0
    %3423 = vmatprep.subr.bf16.mxu0 0
    %3424 = vmatpush1.bf16.msra.mxu0 0
    %3425 = vmatprep.subr.bf16.mxu0 0
    %3426 = vmatpush1.bf16.msra.mxu0 0
    %3427 = vmatprep.subr.bf16.mxu0 0
    %3428 = vmatpush1.bf16.msra.mxu0 0
    %3429 = vmatprep.subr.bf16.mxu0 0
    %3430 = vmatpush1.bf16.msra.mxu0 0
    %3431 = vmatprep.subr.bf16.mxu0 0
    %3432 = vmatpush1.bf16.msra.mxu0 0
    %3433 = vmatprep.subr.bf16.mxu0 0
    %3434 = vmatpush1.bf16.msra.mxu0 0
    %3435 = vmatprep.subr.bf16.mxu0 0
    %3436 = vmatpush1.bf16.msra.mxu0 0
    %3437 = vmatprep.subr.bf16.mxu0 0
    %3438 = vmatpush1.bf16.msra.mxu0 0
    %3439 = vmatprep.subr.bf16.mxu0 0
    %3440 = vmatpush1.bf16.msra.mxu0 0
    %3441 = vmatprep.subr.bf16.mxu0 0
    %3442 = vmatpush1.bf16.msra.mxu0 0
    %3443 = vmatprep.subr.bf16.mxu0 0
    %3444 = vmatpush1.bf16.msra.mxu0 0
    %3445 = vmatprep.mubr.bf16.mxu0 0
    %3446 = vmatmul.mubr.bf16.gmra.mrb[0].mxu0 %v3250
    %v3447 = vpop.f32.mrb[0].mxu0
    %v3448 = vadd.f32 0.0, %v3447
    %v3449 = vpop.f32.mrb[0].mxu0
    %v3450 = vpop.f32.mrb[0].mxu0
    %v3451 = vpop.f32.mrb[0].mxu0
    %3452 = vdwg.mxu0
    %v3454 = vrot.slane %v3448, 6
    %v3456 = vadd.f32 %v258, %v3454
    %v3457 = vxor.u32 %v3456, 2147483648
    %v3458 = vmul.f32 %v3457, 1.442695
    %v3459 = vpow.pop %v3458
    %v3460 = vadd.f32 %v3459, 1.0
    %v3461 = vrcp.pop %v3460
    %v3462 = vmul.f32 1.0, %v3461
    %v3463 = vtanh.pop %v3456
    %v3465 = vrot.slane %v3238, 6
    %v3467 = vmul.f32 %v3462, %v3465
    %3469 = vrot.lane.b32.xlu0 %v3463, 32
    %v3470 = vpop.permute.xlu0 %3469
    %v3472 = vmul.f32 %v3462, %v3470
    %3474 = vrot.lane.b32.xlu0 %v3472, 32
    %v3475 = vpop.permute.xlu0 %3474
    %v3477 = vadd.f32 %v3467, %v3475
    %v3478 = vtanh.pop %v3477
    %3480 = vrot.lane.b32.xlu0 %v3478, 32
    %v3481 = vpop.permute.xlu0 %3480
    %v3483 = vmul.f32 %v3462, %v3481
    %v3484 = vpack.c.bf16 %v3483, %v3483
    %v3486 = vrot.slane %v3484, 1
    %3487 = vrot.lane.b32.xlu0 %v3486, 64
    %v3488 = vpop.permute.xlu0 %3487
    %v3490 = vsel %vm287, %v3488, 0
    %3492 = vmatprep.subr.bf16.mxu0 0
    %3493 = vmatpush1.bf16.msra.mxu0 %v368
    %3494 = vmatprep.subr.bf16.mxu0 0
    %3495 = vmatpush1.bf16.msra.mxu0 %v369
    %3496 = vmatprep.subr.bf16.mxu0 0
    %3497 = vmatpush1.bf16.msra.mxu0 0
    %3498 = vmatprep.subr.bf16.mxu0 0
    %3499 = vmatpush1.bf16.msra.mxu0 0
    %3500 = vmatprep.subr.bf16.mxu0 0
    %3501 = vmatpush1.bf16.msra.mxu0 0
    %3502 = vmatprep.subr.bf16.mxu0 0
    %3503 = vmatpush1.bf16.msra.mxu0 0
    %3504 = vmatprep.subr.bf16.mxu0 0
    %3505 = vmatpush1.bf16.msra.mxu0 0
    %3506 = vmatprep.subr.bf16.mxu0 0
    %3507 = vmatpush1.bf16.msra.mxu0 0
    %3508 = vmatprep.subr.bf16.mxu0 0
    %3509 = vmatpush1.bf16.msra.mxu0 0
    %3510 = vmatprep.subr.bf16.mxu0 0
    %3511 = vmatpush1.bf16.msra.mxu0 0
    %3512 = vmatprep.subr.bf16.mxu0 0
    %3513 = vmatpush1.bf16.msra.mxu0 0
    %3514 = vmatprep.subr.bf16.mxu0 0
    %3515 = vmatpush1.bf16.msra.mxu0 0
    %3516 = vmatprep.subr.bf16.mxu0 0
    %3517 = vmatpush1.bf16.msra.mxu0 0
    %3518 = vmatprep.subr.bf16.mxu0 0
    %3519 = vmatpush1.bf16.msra.mxu0 0
    %3520 = vmatprep.subr.bf16.mxu0 0
    %3521 = vmatpush1.bf16.msra.mxu0 0
    %3522 = vmatprep.subr.bf16.mxu0 0
    %3523 = vmatpush1.bf16.msra.mxu0 0
    %3524 = vmatprep.mubr.bf16.mxu0 0
    %3525 = vmatmul.mubr.bf16.gmra.mrb[0].mxu0 %v3490
    %v3526 = vpop.f32.mrb[0].mxu0
    %v3527 = vadd.f32 0.0, %v3526
    %v3528 = vpop.f32.mrb[0].mxu0
    %v3529 = vpop.f32.mrb[0].mxu0
    %v3530 = vpop.f32.mrb[0].mxu0
    %3531 = vdwg.mxu0
    %3532 = vst [vmem:[#allocation2 + $0x1a] sm:$0x3] %v3527
    %3533 = vmatprep.subr.bf16.mxu0 0
    %3534 = vmatpush1.bf16.msra.mxu0 %v424
    %3535 = vmatprep.subr.bf16.mxu0 0
    %3536 = vmatpush1.bf16.msra.mxu0 %v425
    %3537 = vmatprep.subr.bf16.mxu0 0
    %3538 = vmatpush1.bf16.msra.mxu0 0
    %3539 = vmatprep.subr.bf16.mxu0 0
    %3540 = vmatpush1.bf16.msra.mxu0 0
    %3541 = vmatprep.subr.bf16.mxu0 0
    %3542 = vmatpush1.bf16.msra.mxu0 0
    %3543 = vmatprep.subr.bf16.mxu0 0
    %3544 = vmatpush1.bf16.msra.mxu0 0
    %3545 = vmatprep.subr.bf16.mxu0 0
    %3546 = vmatpush1.bf16.msra.mxu0 0
    %3547 = vmatprep.subr.bf16.mxu0 0
    %3548 = vmatpush1.bf16.msra.mxu0 0
    %3549 = vmatprep.subr.bf16.mxu0 0
    %3550 = vmatpush1.bf16.msra.mxu0 0
    %3551 = vmatprep.subr.bf16.mxu0 0
    %3552 = vmatpush1.bf16.msra.mxu0 0
    %3553 = vmatprep.subr.bf16.mxu0 0
    %3554 = vmatpush1.bf16.msra.mxu0 0
    %3555 = vmatprep.subr.bf16.mxu0 0
    %3556 = vmatpush1.bf16.msra.mxu0 0
    %3557 = vmatprep.subr.bf16.mxu0 0
    %3558 = vmatpush1.bf16.msra.mxu0 0
    %3559 = vmatprep.subr.bf16.mxu0 0
    %3560 = vmatpush1.bf16.msra.mxu0 0
    %3561 = vmatprep.subr.bf16.mxu0 0
    %3562 = vmatpush1.bf16.msra.mxu0 0
    %3563 = vmatprep.subr.bf16.mxu0 0
    %3564 = vmatpush1.bf16.msra.mxu0 0
    %3565 = vmatprep.mubr.bf16.mxu0 0
    %3566 = vmatmul.mubr.bf16.gmra.mrb[0].mxu0 %v3370
    %v3567 = vpop.f32.mrb[0].mxu0
    %v3568 = vadd.f32 0.0, %v3567
    %v3569 = vpop.f32.mrb[0].mxu0
    %v3570 = vpop.f32.mrb[0].mxu0
    %v3571 = vpop.f32.mrb[0].mxu0
    %3572 = vdwg.mxu0
    %v3574 = vrot.slane %v3568, 4
    %v3576 = vadd.f32 %v271, %v3574
    %v3577 = vxor.u32 %v3576, 2147483648
    %v3578 = vmul.f32 %v3577, 1.442695
    %v3579 = vpow.pop %v3578
    %v3580 = vadd.f32 %v3579, 1.0
    %v3581 = vrcp.pop %v3580
    %v3582 = vmul.f32 1.0, %v3581
    %v3583 = vtanh.pop %v3576
    %v3585 = vrot.slane %v3357, 2
    %v3587 = vmul.f32 %v3582, %v3585
    %3589 = vrot.lane.b32.xlu0 %v3583, 32
    %v3590 = vpop.permute.xlu0 %3589
    %v3592 = vmul.f32 %v3582, %v3590
    %3594 = vrot.lane.b32.xlu0 %v3592, 32
    %v3595 = vpop.permute.xlu0 %3594
    %v3597 = vadd.f32 %v3587, %v3595
    %v3598 = vtanh.pop %v3597
    %3600 = vrot.lane.b32.xlu0 %v3598, 32
    %v3601 = vpop.permute.xlu0 %3600
    %v3603 = vmul.f32 %v3582, %v3601
    %v3604 = vpack.c.bf16 %v3603, %v3603
    %v3606 = vrot.slane %v3604, 2
    %3607 = vrot.lane.b32.xlu0 %v3606, 64
    %v3608 = vpop.permute.xlu0 %3607
    %v3610 = vsel %vm287, %v3608, 0
    %3612 = vmatprep.subr.bf16.mxu0 0
    %3613 = vmatpush1.bf16.msra.mxu0 %v509
    %3614 = vmatprep.subr.bf16.mxu0 0
    %3615 = vmatpush1.bf16.msra.mxu0 %v510
    %3616 = vmatprep.subr.bf16.mxu0 0
    %3617 = vmatpush1.bf16.msra.mxu0 0
    %3618 = vmatprep.subr.bf16.mxu0 0
    %3619 = vmatpush1.bf16.msra.mxu0 0
    %3620 = vmatprep.subr.bf16.mxu0 0
    %3621 = vmatpush1.bf16.msra.mxu0 0
    %3622 = vmatprep.subr.bf16.mxu0 0
    %3623 = vmatpush1.bf16.msra.mxu0 0
    %3624 = vmatprep.subr.bf16.mxu0 0
    %3625 = vmatpush1.bf16.msra.mxu0 0
    %3626 = vmatprep.subr.bf16.mxu0 0
    %3627 = vmatpush1.bf16.msra.mxu0 0
    %3628 = vmatprep.subr.bf16.mxu0 0
    %3629 = vmatpush1.bf16.msra.mxu0 0
    %3630 = vmatprep.subr.bf16.mxu0 0
    %3631 = vmatpush1.bf16.msra.mxu0 0
    %3632 = vmatprep.subr.bf16.mxu0 0
    %3633 = vmatpush1.bf16.msra.mxu0 0
    %3634 = vmatprep.subr.bf16.mxu0 0
    %3635 = vmatpush1.bf16.msra.mxu0 0
    %3636 = vmatprep.subr.bf16.mxu0 0
    %3637 = vmatpush1.bf16.msra.mxu0 0
    %3638 = vmatprep.subr.bf16.mxu0 0
    %3639 = vmatpush1.bf16.msra.mxu0 0
    %3640 = vmatprep.subr.bf16.mxu0 0
    %3641 = vmatpush1.bf16.msra.mxu0 0
    %3642 = vmatprep.subr.bf16.mxu0 0
    %3643 = vmatpush1.bf16.msra.mxu0 0
    %3644 = vmatprep.mubr.bf16.mxu0 0
    %3645 = vmatmul.mubr.bf16.gmra.mrb[0].mxu0 %v3610
    %v3646 = vpop.f32.mrb[0].mxu0
    %v3647 = vadd.f32 0.0, %v3646
    %v3648 = vpop.f32.mrb[0].mxu0
    %v3649 = vpop.f32.mrb[0].mxu0
    %v3650 = vpop.f32.mrb[0].mxu0
    %3651 = vdwg.mxu0
    %3652 = vst [vmem:[#allocation3 + $0x4] sm:$0x3] %v3647
    %3653 = vmatprep.subr.bf16.mxu0 0
    %3654 = vmatpush1.bf16.msra.mxu0 %v283
    %3655 = vmatprep.subr.bf16.mxu0 0
    %3656 = vmatpush1.bf16.msra.mxu0 %v284
    %3657 = vmatprep.subr.bf16.mxu0 0
    %3658 = vmatpush1.bf16.msra.mxu0 0
    %3659 = vmatprep.subr.bf16.mxu0 0
    %3660 = vmatpush1.bf16.msra.mxu0 0
    %3661 = vmatprep.subr.bf16.mxu0 0
    %3662 = vmatpush1.bf16.msra.mxu0 0
    %3663 = vmatprep.subr.bf16.mxu0 0
    %3664 = vmatpush1.bf16.msra.mxu0 0
    %3665 = vmatprep.subr.bf16.mxu0 0
    %3666 = vmatpush1.bf16.msra.mxu0 0
    %3667 = vmatprep.subr.bf16.mxu0 0
    %3668 = vmatpush1.bf16.msra.mxu0 0
    %3669 = vmatprep.subr.bf16.mxu0 0
    %3670 = vmatpush1.bf16.msra.mxu0 0
    %3671 = vmatprep.subr.bf16.mxu0 0
    %3672 = vmatpush1.bf16.msra.mxu0 0
    %3673 = vmatprep.subr.bf16.mxu0 0
    %3674 = vmatpush1.bf16.msra.mxu0 0
    %3675 = vmatprep.subr.bf16.mxu0 0
    %3676 = vmatpush1.bf16.msra.mxu0 0
    %3677 = vmatprep.subr.bf16.mxu0 0
    %3678 = vmatpush1.bf16.msra.mxu0 0
    %3679 = vmatprep.subr.bf16.mxu0 0
    %3680 = vmatpush1.bf16.msra.mxu0 0
    %3681 = vmatprep.subr.bf16.mxu0 0
    %3682 = vmatpush1.bf16.msra.mxu0 0
    %3683 = vmatprep.subr.bf16.mxu0 0
    %3684 = vmatpush1.bf16.msra.mxu0 0
    %3685 = vmatprep.mubr.bf16.mxu0 0
    %3686 = vmatmul.mubr.bf16.gmra.mrb[0].mxu0 %v3490
    %v3687 = vpop.f32.mrb[0].mxu0
    %v3688 = vadd.f32 0.0, %v3687
    %v3689 = vpop.f32.mrb[0].mxu0
    %v3690 = vpop.f32.mrb[0].mxu0
    %v3691 = vpop.f32.mrb[0].mxu0
    %3692 = vdwg.mxu0
    %v3694 = vrot.slane %v3688, 4
    %v3696 = vadd.f32 %v258, %v3694
    %v3697 = vxor.u32 %v3696, 2147483648
    %v3698 = vmul.f32 %v3697, 1.442695
    %v3699 = vpow.pop %v3698
    %v3700 = vadd.f32 %v3699, 1.0
    %v3701 = vrcp.pop %v3700
    %v3702 = vmul.f32 1.0, %v3701
    %v3703 = vtanh.pop %v3696
    %v3705 = vrot.slane %v3477, 6
    %v3707 = vmul.f32 %v3702, %v3705
    %3709 = vrot.lane.b32.xlu0 %v3703, 32
    %v3710 = vpop.permute.xlu0 %3709
    %v3712 = vmul.f32 %v3702, %v3710
    %3714 = vrot.lane.b32.xlu0 %v3712, 32
    %v3715 = vpop.permute.xlu0 %3714
    %v3717 = vadd.f32 %v3707, %v3715
    %v3718 = vtanh.pop %v3717
    %3720 = vrot.lane.b32.xlu0 %v3718, 32
    %v3721 = vpop.permute.xlu0 %3720
    %v3723 = vmul.f32 %v3702, %v3721
    %v3724 = vpack.c.bf16 %v3723, %v3723
    %v3726 = vrot.slane %v3724, 2
    %3727 = vrot.lane.b32.xlu0 %v3726, 64
    %v3728 = vpop.permute.xlu0 %3727
    %v3730 = vsel %vm287, %v3728, 0
    %3732 = vmatprep.subr.bf16.mxu0 0
    %3733 = vmatpush1.bf16.msra.mxu0 %v368
    %3734 = vmatprep.subr.bf16.mxu0 0
    %3735 = vmatpush1.bf16.msra.mxu0 %v369
    %3736 = vmatprep.subr.bf16.mxu0 0
    %3737 = vmatpush1.bf16.msra.mxu0 0
    %3738 = vmatprep.subr.bf16.mxu0 0
    %3739 = vmatpush1.bf16.msra.mxu0 0
    %3740 = vmatprep.subr.bf16.mxu0 0
    %3741 = vmatpush1.bf16.msra.mxu0 0
    %3742 = vmatprep.subr.bf16.mxu0 0
    %3743 = vmatpush1.bf16.msra.mxu0 0
    %3744 = vmatprep.subr.bf16.mxu0 0
    %3745 = vmatpush1.bf16.msra.mxu0 0
    %3746 = vmatprep.subr.bf16.mxu0 0
    %3747 = vmatpush1.bf16.msra.mxu0 0
    %3748 = vmatprep.subr.bf16.mxu0 0
    %3749 = vmatpush1.bf16.msra.mxu0 0
    %3750 = vmatprep.subr.bf16.mxu0 0
    %3751 = vmatpush1.bf16.msra.mxu0 0
    %3752 = vmatprep.subr.bf16.mxu0 0
    %3753 = vmatpush1.bf16.msra.mxu0 0
    %3754 = vmatprep.subr.bf16.mxu0 0
    %3755 = vmatpush1.bf16.msra.mxu0 0
    %3756 = vmatprep.subr.bf16.mxu0 0
    %3757 = vmatpush1.bf16.msra.mxu0 0
    %3758 = vmatprep.subr.bf16.mxu0 0
    %3759 = vmatpush1.bf16.msra.mxu0 0
    %3760 = vmatprep.subr.bf16.mxu0 0
    %3761 = vmatpush1.bf16.msra.mxu0 0
    %3762 = vmatprep.subr.bf16.mxu0 0
    %3763 = vmatpush1.bf16.msra.mxu0 0
    %3764 = vmatprep.mubr.bf16.mxu0 0
    %3765 = vmatmul.mubr.bf16.gmra.mrb[0].mxu0 %v3730
    %v3766 = vpop.f32.mrb[0].mxu0
    %v3767 = vadd.f32 0.0, %v3766
    %v3768 = vpop.f32.mrb[0].mxu0
    %v3769 = vpop.f32.mrb[0].mxu0
    %v3770 = vpop.f32.mrb[0].mxu0
    %3771 = vdwg.mxu0
    %3772 = vst [vmem:[#allocation2 + $0x1c] sm:$0x3] %v3767
    %3773 = vmatprep.subr.bf16.mxu0 0
    %3774 = vmatpush1.bf16.msra.mxu0 %v424
    %3775 = vmatprep.subr.bf16.mxu0 0
    %3776 = vmatpush1.bf16.msra.mxu0 %v425
    %3777 = vmatprep.subr.bf16.mxu0 0
    %3778 = vmatpush1.bf16.msra.mxu0 0
    %3779 = vmatprep.subr.bf16.mxu0 0
    %3780 = vmatpush1.bf16.msra.mxu0 0
    %3781 = vmatprep.subr.bf16.mxu0 0
    %3782 = vmatpush1.bf16.msra.mxu0 0
    %3783 = vmatprep.subr.bf16.mxu0 0
    %3784 = vmatpush1.bf16.msra.mxu0 0
    %3785 = vmatprep.subr.bf16.mxu0 0
    %3786 = vmatpush1.bf16.msra.mxu0 0
    %3787 = vmatprep.subr.bf16.mxu0 0
    %3788 = vmatpush1.bf16.msra.mxu0 0
    %3789 = vmatprep.subr.bf16.mxu0 0
    %3790 = vmatpush1.bf16.msra.mxu0 0
    %3791 = vmatprep.subr.bf16.mxu0 0
    %3792 = vmatpush1.bf16.msra.mxu0 0
    %3793 = vmatprep.subr.bf16.mxu0 0
    %3794 = vmatpush1.bf16.msra.mxu0 0
    %3795 = vmatprep.subr.bf16.mxu0 0
    %3796 = vmatpush1.bf16.msra.mxu0 0
    %3797 = vmatprep.subr.bf16.mxu0 0
    %3798 = vmatpush1.bf16.msra.mxu0 0
    %3799 = vmatprep.subr.bf16.mxu0 0
    %3800 = vmatpush1.bf16.msra.mxu0 0
    %3801 = vmatprep.subr.bf16.mxu0 0
    %3802 = vmatpush1.bf16.msra.mxu0 0
    %3803 = vmatprep.subr.bf16.mxu0 0
    %3804 = vmatpush1.bf16.msra.mxu0 0
    %3805 = vmatprep.mubr.bf16.mxu0 0
    %3806 = vmatmul.mubr.bf16.gmra.mrb[0].mxu0 %v3610
    %v3807 = vpop.f32.mrb[0].mxu0
    %v3808 = vadd.f32 0.0, %v3807
    %v3809 = vpop.f32.mrb[0].mxu0
    %v3810 = vpop.f32.mrb[0].mxu0
    %v3811 = vpop.f32.mrb[0].mxu0
    %3812 = vdwg.mxu0
    %v3814 = vrot.slane %v3808, 6
    %v3816 = vadd.f32 %v271, %v3814
    %v3817 = vxor.u32 %v3816, 2147483648
    %v3818 = vmul.f32 %v3817, 1.442695
    %v3819 = vpow.pop %v3818
    %v3820 = vadd.f32 %v3819, 1.0
    %v3821 = vrcp.pop %v3820
    %v3822 = vmul.f32 1.0, %v3821
    %v3823 = vtanh.pop %v3816
    %v3825 = vrot.slane %v3597, 2
    %v3827 = vmul.f32 %v3822, %v3825
    %3829 = vrot.lane.b32.xlu0 %v3823, 32
    %v3830 = vpop.permute.xlu0 %3829
    %v3832 = vmul.f32 %v3822, %v3830
    %3834 = vrot.lane.b32.xlu0 %v3832, 32
    %v3835 = vpop.permute.xlu0 %3834
    %v3837 = vadd.f32 %v3827, %v3835
    %v3838 = vtanh.pop %v3837
    %3840 = vrot.lane.b32.xlu0 %v3838, 32
    %v3841 = vpop.permute.xlu0 %3840
    %v3843 = vmul.f32 %v3822, %v3841
    %v3844 = vpack.c.bf16 %v3843, %v3843
    %v3846 = vrot.slane %v3844, 1
    %3847 = vrot.lane.b32.xlu0 %v3846, 64
    %v3848 = vpop.permute.xlu0 %3847
    %v3850 = vsel %vm287, %v3848, 0
    %3852 = vmatprep.subr.bf16.mxu0 0
    %3853 = vmatpush1.bf16.msra.mxu0 %v509
    %3854 = vmatprep.subr.bf16.mxu0 0
    %3855 = vmatpush1.bf16.msra.mxu0 %v510
    %3856 = vmatprep.subr.bf16.mxu0 0
    %3857 = vmatpush1.bf16.msra.mxu0 0
    %3858 = vmatprep.subr.bf16.mxu0 0
    %3859 = vmatpush1.bf16.msra.mxu0 0
    %3860 = vmatprep.subr.bf16.mxu0 0
    %3861 = vmatpush1.bf16.msra.mxu0 0
    %3862 = vmatprep.subr.bf16.mxu0 0
    %3863 = vmatpush1.bf16.msra.mxu0 0
    %3864 = vmatprep.subr.bf16.mxu0 0
    %3865 = vmatpush1.bf16.msra.mxu0 0
    %3866 = vmatprep.subr.bf16.mxu0 0
    %3867 = vmatpush1.bf16.msra.mxu0 0
    %3868 = vmatprep.subr.bf16.mxu0 0
    %3869 = vmatpush1.bf16.msra.mxu0 0
    %3870 = vmatprep.subr.bf16.mxu0 0
    %3871 = vmatpush1.bf16.msra.mxu0 0
    %3872 = vmatprep.subr.bf16.mxu0 0
    %3873 = vmatpush1.bf16.msra.mxu0 0
    %3874 = vmatprep.subr.bf16.mxu0 0
    %3875 = vmatpush1.bf16.msra.mxu0 0
    %3876 = vmatprep.subr.bf16.mxu0 0
    %3877 = vmatpush1.bf16.msra.mxu0 0
    %3878 = vmatprep.subr.bf16.mxu0 0
    %3879 = vmatpush1.bf16.msra.mxu0 0
    %3880 = vmatprep.subr.bf16.mxu0 0
    %3881 = vmatpush1.bf16.msra.mxu0 0
    %3882 = vmatprep.subr.bf16.mxu0 0
    %3883 = vmatpush1.bf16.msra.mxu0 0
    %3884 = vmatprep.mubr.bf16.mxu0 0
    %3885 = vmatmul.mubr.bf16.gmra.mrb[0].mxu0 %v3850
    %v3886 = vpop.f32.mrb[0].mxu0
    %v3887 = vadd.f32 0.0, %v3886
    %v3888 = vpop.f32.mrb[0].mxu0
    %v3889 = vpop.f32.mrb[0].mxu0
    %v3890 = vpop.f32.mrb[0].mxu0
    %3891 = vdwg.mxu0
    %3892 = vst [vmem:[#allocation3 + $0x2] sm:$0x3] %v3887
    %3893 = vmatprep.subr.bf16.mxu0 0
    %3894 = vmatpush1.bf16.msra.mxu0 %v283
    %3895 = vmatprep.subr.bf16.mxu0 0
    %3896 = vmatpush1.bf16.msra.mxu0 %v284
    %3897 = vmatprep.subr.bf16.mxu0 0
    %3898 = vmatpush1.bf16.msra.mxu0 0
    %3899 = vmatprep.subr.bf16.mxu0 0
    %3900 = vmatpush1.bf16.msra.mxu0 0
    %3901 = vmatprep.subr.bf16.mxu0 0
    %3902 = vmatpush1.bf16.msra.mxu0 0
    %3903 = vmatprep.subr.bf16.mxu0 0
    %3904 = vmatpush1.bf16.msra.mxu0 0
    %3905 = vmatprep.subr.bf16.mxu0 0
    %3906 = vmatpush1.bf16.msra.mxu0 0
    %3907 = vmatprep.subr.bf16.mxu0 0
    %3908 = vmatpush1.bf16.msra.mxu0 0
    %3909 = vmatprep.subr.bf16.mxu0 0
    %3910 = vmatpush1.bf16.msra.mxu0 0
    %3911 = vmatprep.subr.bf16.mxu0 0
    %3912 = vmatpush1.bf16.msra.mxu0 0
    %3913 = vmatprep.subr.bf16.mxu0 0
    %3914 = vmatpush1.bf16.msra.mxu0 0
    %3915 = vmatprep.subr.bf16.mxu0 0
    %3916 = vmatpush1.bf16.msra.mxu0 0
    %3917 = vmatprep.subr.bf16.mxu0 0
    %3918 = vmatpush1.bf16.msra.mxu0 0
    %3919 = vmatprep.subr.bf16.mxu0 0
    %3920 = vmatpush1.bf16.msra.mxu0 0
    %3921 = vmatprep.subr.bf16.mxu0 0
    %3922 = vmatpush1.bf16.msra.mxu0 0
    %3923 = vmatprep.subr.bf16.mxu0 0
    %3924 = vmatpush1.bf16.msra.mxu0 0
    %3925 = vmatprep.mubr.bf16.mxu0 0
    %3926 = vmatmul.mubr.bf16.gmra.mrb[0].mxu0 %v3730
    %v3927 = vpop.f32.mrb[0].mxu0
    %v3928 = vadd.f32 0.0, %v3927
    %v3929 = vpop.f32.mrb[0].mxu0
    %v3930 = vpop.f32.mrb[0].mxu0
    %v3931 = vpop.f32.mrb[0].mxu0
    %3932 = vdwg.mxu0
    %v3934 = vrot.slane %v3928, 2
    %v3936 = vadd.f32 %v258, %v3934
    %v3937 = vxor.u32 %v3936, 2147483648
    %v3938 = vmul.f32 %v3937, 1.442695
    %v3939 = vpow.pop %v3938
    %v3940 = vadd.f32 %v3939, 1.0
    %v3941 = vrcp.pop %v3940
    %v3942 = vmul.f32 1.0, %v3941
    %v3943 = vtanh.pop %v3936
    %v3945 = vrot.slane %v3717, 6
    %v3947 = vmul.f32 %v3942, %v3945
    %3949 = vrot.lane.b32.xlu0 %v3943, 32
    %v3950 = vpop.permute.xlu0 %3949
    %v3952 = vmul.f32 %v3942, %v3950
    %3954 = vrot.lane.b32.xlu0 %v3952, 32
    %v3955 = vpop.permute.xlu0 %3954
    %v3957 = vadd.f32 %v3947, %v3955
    %v3958 = vtanh.pop %v3957
    %3960 = vrot.lane.b32.xlu0 %v3958, 32
    %v3961 = vpop.permute.xlu0 %3960
    %v3963 = vmul.f32 %v3942, %v3961
    %v3964 = vpack.c.bf16 %v3963, %v3963
    %v3966 = vrot.slane %v3964, 3
    %3967 = vrot.lane.b32.xlu0 %v3966, 64
    %v3968 = vpop.permute.xlu0 %3967
    %v3970 = vsel %vm287, %v3968, 0
    %3972 = vmatprep.subr.bf16.mxu0 0
    %3973 = vmatpush1.bf16.msra.mxu0 %v368
    %3974 = vmatprep.subr.bf16.mxu0 0
    %3975 = vmatpush1.bf16.msra.mxu0 %v369
    %3976 = vmatprep.subr.bf16.mxu0 0
    %3977 = vmatpush1.bf16.msra.mxu0 0
    %3978 = vmatprep.subr.bf16.mxu0 0
    %3979 = vmatpush1.bf16.msra.mxu0 0
    %3980 = vmatprep.subr.bf16.mxu0 0
    %3981 = vmatpush1.bf16.msra.mxu0 0
    %3982 = vmatprep.subr.bf16.mxu0 0
    %3983 = vmatpush1.bf16.msra.mxu0 0
    %3984 = vmatprep.subr.bf16.mxu0 0
    %3985 = vmatpush1.bf16.msra.mxu0 0
    %3986 = vmatprep.subr.bf16.mxu0 0
    %3987 = vmatpush1.bf16.msra.mxu0 0
    %3988 = vmatprep.subr.bf16.mxu0 0
    %3989 = vmatpush1.bf16.msra.mxu0 0
    %3990 = vmatprep.subr.bf16.mxu0 0
    %3991 = vmatpush1.bf16.msra.mxu0 0
    %3992 = vmatprep.subr.bf16.mxu0 0
    %3993 = vmatpush1.bf16.msra.mxu0 0
    %3994 = vmatprep.subr.bf16.mxu0 0
    %3995 = vmatpush1.bf16.msra.mxu0 0
    %3996 = vmatprep.subr.bf16.mxu0 0
    %3997 = vmatpush1.bf16.msra.mxu0 0
    %3998 = vmatprep.subr.bf16.mxu0 0
    %3999 = vmatpush1.bf16.msra.mxu0 0
    %4000 = vmatprep.subr.bf16.mxu0 0
    %4001 = vmatpush1.bf16.msra.mxu0 0
    %4002 = vmatprep.subr.bf16.mxu0 0
    %4003 = vmatpush1.bf16.msra.mxu0 0
    %4004 = vmatprep.mubr.bf16.mxu0 0
    %4005 = vmatmul.mubr.bf16.gmra.mrb[0].mxu0 %v3970
    %v4006 = vpop.f32.mrb[0].mxu0
    %v4007 = vadd.f32 0.0, %v4006
    %v4008 = vpop.f32.mrb[0].mxu0
    %v4009 = vpop.f32.mrb[0].mxu0
    %v4010 = vpop.f32.mrb[0].mxu0
    %4011 = vdwg.mxu0
    %4012 = vst [vmem:[#allocation2 + $0x1e] sm:$0x3] %v4007
    %4013 = vmatprep.subr.bf16.mxu0 0
    %4014 = vmatpush1.bf16.msra.mxu0 %v424
    %4015 = vmatprep.subr.bf16.mxu0 0
    %4016 = vmatpush1.bf16.msra.mxu0 %v425
    %4017 = vmatprep.subr.bf16.mxu0 0
    %4018 = vmatpush1.bf16.msra.mxu0 0
    %4019 = vmatprep.subr.bf16.mxu0 0
    %4020 = vmatpush1.bf16.msra.mxu0 0
    %4021 = vmatprep.subr.bf16.mxu0 0
    %4022 = vmatpush1.bf16.msra.mxu0 0
    %4023 = vmatprep.subr.bf16.mxu0 0
    %4024 = vmatpush1.bf16.msra.mxu0 0
    %4025 = vmatprep.subr.bf16.mxu0 0
    %4026 = vmatpush1.bf16.msra.mxu0 0
    %4027 = vmatprep.subr.bf16.mxu0 0
    %4028 = vmatpush1.bf16.msra.mxu0 0
    %4029 = vmatprep.subr.bf16.mxu0 0
    %4030 = vmatpush1.bf16.msra.mxu0 0
    %4031 = vmatprep.subr.bf16.mxu0 0
    %4032 = vmatpush1.bf16.msra.mxu0 0
    %4033 = vmatprep.subr.bf16.mxu0 0
    %4034 = vmatpush1.bf16.msra.mxu0 0
    %4035 = vmatprep.subr.bf16.mxu0 0
    %4036 = vmatpush1.bf16.msra.mxu0 0
    %4037 = vmatprep.subr.bf16.mxu0 0
    %4038 = vmatpush1.bf16.msra.mxu0 0
    %4039 = vmatprep.subr.bf16.mxu0 0
    %4040 = vmatpush1.bf16.msra.mxu0 0
    %4041 = vmatprep.subr.bf16.mxu0 0
    %4042 = vmatpush1.bf16.msra.mxu0 0
    %4043 = vmatprep.subr.bf16.mxu0 0
    %4044 = vmatpush1.bf16.msra.mxu0 0
    %4045 = vmatprep.mubr.bf16.mxu0 0
    %4046 = vmatmul.mubr.bf16.gmra.mrb[0].mxu0 %v3850
    %v4047 = vpop.f32.mrb[0].mxu0
    %v4048 = vadd.f32 0.0, %v4047
    %v4049 = vpop.f32.mrb[0].mxu0
    %v4050 = vpop.f32.mrb[0].mxu0
    %v4051 = vpop.f32.mrb[0].mxu0
    %4052 = vdwg.mxu0
    %v4053 = vadd.f32 %v271, %v4048
    %v4054 = vxor.u32 %v4053, 2147483648
    %v4055 = vmul.f32 %v4054, 1.442695
    %v4056 = vpow.pop %v4055
    %v4057 = vadd.f32 %v4056, 1.0
    %v4058 = vrcp.pop %v4057
    %v4059 = vmul.f32 1.0, %v4058
    %v4060 = vtanh.pop %v4053
    %v4062 = vrot.slane %v3837, 2
    %v4064 = vmul.f32 %v4059, %v4062
    %4066 = vrot.lane.b32.xlu0 %v4060, 32
    %v4067 = vpop.permute.xlu0 %4066
    %v4069 = vmul.f32 %v4059, %v4067
    %4071 = vrot.lane.b32.xlu0 %v4069, 32
    %v4072 = vpop.permute.xlu0 %4071
    %v4074 = vadd.f32 %v4064, %v4072
    %v4075 = vtanh.pop %v4074
    %4077 = vrot.lane.b32.xlu0 %v4075, 32
    %v4078 = vpop.permute.xlu0 %4077
    %v4080 = vmul.f32 %v4059, %v4078
    %v4081 = vpack.c.bf16 %v4080, %v4080
    %4083 = vrot.lane.b32.xlu0 %v4081, 64
    %v4084 = vpop.permute.xlu0 %4083
    %v4086 = vsel %vm287, %v4084, 0
    %4088 = vmatprep.subr.bf16.mxu0 0
    %4089 = vmatpush1.bf16.msra.mxu0 %v509
    %4090 = vmatprep.subr.bf16.mxu0 0
    %4091 = vmatpush1.bf16.msra.mxu0 %v510
    %4092 = vmatprep.subr.bf16.mxu0 0
    %4093 = vmatpush1.bf16.msra.mxu0 0
    %4094 = vmatprep.subr.bf16.mxu0 0
    %4095 = vmatpush1.bf16.msra.mxu0 0
    %4096 = vmatprep.subr.bf16.mxu0 0
    %4097 = vmatpush1.bf16.msra.mxu0 0
    %4098 = vmatprep.subr.bf16.mxu0 0
    %4099 = vmatpush1.bf16.msra.mxu0 0
    %4100 = vmatprep.subr.bf16.mxu0 0
    %4101 = vmatpush1.bf16.msra.mxu0 0
    %4102 = vmatprep.subr.bf16.mxu0 0
    %4103 = vmatpush1.bf16.msra.mxu0 0
    %4104 = vmatprep.subr.bf16.mxu0 0
    %4105 = vmatpush1.bf16.msra.mxu0 0
    %4106 = vmatprep.subr.bf16.mxu0 0
    %4107 = vmatpush1.bf16.msra.mxu0 0
    %4108 = vmatprep.subr.bf16.mxu0 0
    %4109 = vmatpush1.bf16.msra.mxu0 0
    %4110 = vmatprep.subr.bf16.mxu0 0
    %4111 = vmatpush1.bf16.msra.mxu0 0
    %4112 = vmatprep.subr.bf16.mxu0 0
    %4113 = vmatpush1.bf16.msra.mxu0 0
    %4114 = vmatprep.subr.bf16.mxu0 0
    %4115 = vmatpush1.bf16.msra.mxu0 0
    %4116 = vmatprep.subr.bf16.mxu0 0
    %4117 = vmatpush1.bf16.msra.mxu0 0
    %4118 = vmatprep.subr.bf16.mxu0 0
    %4119 = vmatpush1.bf16.msra.mxu0 0
    %4120 = vmatprep.mubr.bf16.mxu0 0
    %4121 = vmatmul.mubr.bf16.gmra.mrb[0].mxu0 %v4086
    %v4122 = vpop.f32.mrb[0].mxu0
    %v4123 = vadd.f32 0.0, %v4122
    %v4124 = vpop.f32.mrb[0].mxu0
    %v4125 = vpop.f32.mrb[0].mxu0
    %v4126 = vpop.f32.mrb[0].mxu0
    %4127 = vdwg.mxu0
    %4128 = vst [vmem:[#allocation3] sm:$0x3] %v4123
    %v4129 = vld [vmem:[#allocation2] sm:$0x3]
    %v4130 = vld [vmem:[#allocation3] sm:$0x3]
    %v4131 = vadd.f32 %v4129, %v4130
    %v4132 = vlaneseq
    %v4133 = vshrl.u32 %v4132, 7
    %v4134 = vsub.s32 2, %v4133
    %v4135 = vrot.slane %v222, %v4134
    %v4136 = vadd.f32 %v4131, %v4135
    %v4141 = vunpack.c.l.b16 %v202
    %v4142 = vunpack.c.l.b16 %v203
    %v4143 = vunpack.c.l.b16 %v204
    %v4144 = vunpack.c.l.b16 %v205
    %v4145 = vpack.c.b16 %v4142, %v4141
    %v4146 = vpack.c.b16 %v4144, %v4143
    %4149 = vmatprep.subr.bf16.mxu0 0
    %4150 = vmatpush1.bf16.msra.mxu0 %v4145
    %4151 = vmatprep.subr.bf16.mxu0 0
    %4152 = vmatpush1.bf16.msra.mxu0 %v4146
    %4153 = vmatprep.subr.bf16.mxu0 0
    %4154 = vmatpush1.bf16.msra.mxu0 0
    %4155 = vmatprep.subr.bf16.mxu0 0
    %4156 = vmatpush1.bf16.msra.mxu0 0
    %4157 = vmatprep.subr.bf16.mxu0 0
    %4158 = vmatpush1.bf16.msra.mxu0 0
    %4159 = vmatprep.subr.bf16.mxu0 0
    %4160 = vmatpush1.bf16.msra.mxu0 0
    %4161 = vmatprep.subr.bf16.mxu0 0
    %4162 = vmatpush1.bf16.msra.mxu0 0
    %4163 = vmatprep.subr.bf16.mxu0 0
    %4164 = vmatpush1.bf16.msra.mxu0 0
    %4165 = vmatprep.subr.bf16.mxu0 0
    %4166 = vmatpush1.bf16.msra.mxu0 0
    %4167 = vmatprep.subr.bf16.mxu0 0
    %4168 = vmatpush1.bf16.msra.mxu0 0
    %4169 = vmatprep.subr.bf16.mxu0 0
    %4170 = vmatpush1.bf16.msra.mxu0 0
    %4171 = vmatprep.subr.bf16.mxu0 0
    %4172 = vmatpush1.bf16.msra.mxu0 0
    %4173 = vmatprep.subr.bf16.mxu0 0
    %4174 = vmatpush1.bf16.msra.mxu0 0
    %4175 = vmatprep.subr.bf16.mxu0 0
    %4176 = vmatpush1.bf16.msra.mxu0 0
    %4177 = vmatprep.subr.bf16.mxu0 0
    %4178 = vmatpush1.bf16.msra.mxu0 0
    %4179 = vmatprep.subr.bf16.mxu0 0
    %4180 = vmatpush1.bf16.msra.mxu0 0
    %4181 = vmatprep.mubr.bf16.mxu0 0
    %4182 = vmatmul.mubr.bf16.gmra.mrb[0].mxu0 %v289
    %v4183 = vpop.f32.mrb[0].mxu0
    %v4184 = vadd.f32 0.0, %v4183
    %v4185 = vpop.f32.mrb[0].mxu0
    %v4186 = vpop.f32.mrb[0].mxu0
    %v4187 = vpop.f32.mrb[0].mxu0
    %4188 = vdwg.mxu0
    %v4189 = vadd.f32 %v4136, %v4184
    %v4190 = vxor.u32 %v4189, 2147483648
    %v4191 = vmul.f32 %v4190, 1.442695
    %v4192 = vpow.pop %v4191
    %v4193 = vadd.f32 %v4192, 1.0
    %v4194 = vrcp.pop %v4193
    %v4195 = vmul.f32 1.0, %v4194
    %v4196 = vtanh.pop %v4189
    %v4197 = vmul.f32 %v4195, 0.0
    %4199 = vrot.lane.b32.xlu0 %v4196, 32
    %v4200 = vpop.permute.xlu0 %4199
    %v4202 = vmul.f32 %v4195, %v4200
    %4204 = vrot.lane.b32.xlu0 %v4202, 32
    %v4205 = vpop.permute.xlu0 %4204
    %v4207 = vadd.f32 %v4197, %v4205
    %v4208 = vtanh.pop %v4207
    %4210 = vrot.lane.b32.xlu0 %v4208, 32
    %v4211 = vpop.permute.xlu0 %4210
    %v4213 = vmul.f32 %v4195, %v4211
    %v4214 = vpack.c.bf16 %v4213, %v4213
    %v4215 = vld [vmem:[#allocation2 + $0x2] sm:$0x3]
    %v4216 = vld [vmem:[#allocation3 + $0x2] sm:$0x3]
    %v4217 = vadd.f32 %v4215, %v4216
    %v4218 = vadd.f32 %v4217, %v4135
    %4220 = vrot.lane.b32.xlu0 %v4214, 64
    %v4221 = vpop.permute.xlu0 %4220
    %v4223 = vsel %vm287, %v4221, 0
    %4225 = vmatprep.subr.bf16.mxu0 0
    %4226 = vmatpush1.bf16.msra.mxu0 %v4145
    %4227 = vmatprep.subr.bf16.mxu0 0
    %4228 = vmatpush1.bf16.msra.mxu0 %v4146
    %4229 = vmatprep.subr.bf16.mxu0 0
    %4230 = vmatpush1.bf16.msra.mxu0 0
    %4231 = vmatprep.subr.bf16.mxu0 0
    %4232 = vmatpush1.bf16.msra.mxu0 0
    %4233 = vmatprep.subr.bf16.mxu0 0
    %4234 = vmatpush1.bf16.msra.mxu0 0
    %4235 = vmatprep.subr.bf16.mxu0 0
    %4236 = vmatpush1.bf16.msra.mxu0 0
    %4237 = vmatprep.subr.bf16.mxu0 0
    %4238 = vmatpush1.bf16.msra.mxu0 0
    %4239 = vmatprep.subr.bf16.mxu0 0
    %4240 = vmatpush1.bf16.msra.mxu0 0
    %4241 = vmatprep.subr.bf16.mxu0 0
    %4242 = vmatpush1.bf16.msra.mxu0 0
    %4243 = vmatprep.subr.bf16.mxu0 0
    %4244 = vmatpush1.bf16.msra.mxu0 0
    %4245 = vmatprep.subr.bf16.mxu0 0
    %4246 = vmatpush1.bf16.msra.mxu0 0
    %4247 = vmatprep.subr.bf16.mxu0 0
    %4248 = vmatpush1.bf16.msra.mxu0 0
    %4249 = vmatprep.subr.bf16.mxu0 0
    %4250 = vmatpush1.bf16.msra.mxu0 0
    %4251 = vmatprep.subr.bf16.mxu0 0
    %4252 = vmatpush1.bf16.msra.mxu0 0
    %4253 = vmatprep.subr.bf16.mxu0 0
    %4254 = vmatpush1.bf16.msra.mxu0 0
    %4255 = vmatprep.subr.bf16.mxu0 0
    %4256 = vmatpush1.bf16.msra.mxu0 0
    %4257 = vmatprep.mubr.bf16.mxu0 0
    %4258 = vmatmul.mubr.bf16.gmra.mrb[0].mxu0 %v4223
    %v4259 = vpop.f32.mrb[0].mxu0
    %v4260 = vadd.f32 0.0, %v4259
    %v4261 = vpop.f32.mrb[0].mxu0
    %v4262 = vpop.f32.mrb[0].mxu0
    %v4263 = vpop.f32.mrb[0].mxu0
    %4264 = vdwg.mxu0
    %v4265 = vadd.f32 %v4218, %v4260
    %v4266 = vxor.u32 %v4265, 2147483648
    %v4267 = vmul.f32 %v4266, 1.442695
    %v4268 = vpow.pop %v4267
    %v4269 = vadd.f32 %v4268, 1.0
    %v4270 = vrcp.pop %v4269
    %v4271 = vmul.f32 1.0, %v4270
    %v4272 = vtanh.pop %v4265
    %v4273 = vmul.f32 %v4271, %v4207
    %4275 = vrot.lane.b32.xlu0 %v4272, 32
    %v4276 = vpop.permute.xlu0 %4275
    %v4278 = vmul.f32 %v4271, %v4276
    %4280 = vrot.lane.b32.xlu0 %v4278, 32
    %v4281 = vpop.permute.xlu0 %4280
    %v4283 = vadd.f32 %v4273, %v4281
    %v4284 = vtanh.pop %v4283
    %4286 = vrot.lane.b32.xlu0 %v4284, 32
    %v4287 = vpop.permute.xlu0 %4286
    %v4289 = vmul.f32 %v4271, %v4287
    %v4290 = vpack.c.bf16 %v4289, %v4289
    %v4291 = vld [vmem:[#allocation2 + $0x4] sm:$0x3]
    %v4292 = vld [vmem:[#allocation3 + $0x4] sm:$0x3]
    %v4293 = vadd.f32 %v4291, %v4292
    %v4294 = vadd.f32 %v4293, %v4135
    %4296 = vrot.lane.b32.xlu0 %v4290, 64
    %v4297 = vpop.permute.xlu0 %4296
    %v4299 = vsel %vm287, %v4297, 0
    %4301 = vmatprep.subr.bf16.mxu0 0
    %4302 = vmatpush1.bf16.msra.mxu0 %v4145
    %4303 = vmatprep.subr.bf16.mxu0 0
    %4304 = vmatpush1.bf16.msra.mxu0 %v4146
    %4305 = vmatprep.subr.bf16.mxu0 0
    %4306 = vmatpush1.bf16.msra.mxu0 0
    %4307 = vmatprep.subr.bf16.mxu0 0
    %4308 = vmatpush1.bf16.msra.mxu0 0
    %4309 = vmatprep.subr.bf16.mxu0 0
    %4310 = vmatpush1.bf16.msra.mxu0 0
    %4311 = vmatprep.subr.bf16.mxu0 0
    %4312 = vmatpush1.bf16.msra.mxu0 0
    %4313 = vmatprep.subr.bf16.mxu0 0
    %4314 = vmatpush1.bf16.msra.mxu0 0
    %4315 = vmatprep.subr.bf16.mxu0 0
    %4316 = vmatpush1.bf16.msra.mxu0 0
    %4317 = vmatprep.subr.bf16.mxu0 0
    %4318 = vmatpush1.bf16.msra.mxu0 0
    %4319 = vmatprep.subr.bf16.mxu0 0
    %4320 = vmatpush1.bf16.msra.mxu0 0
    %4321 = vmatprep.subr.bf16.mxu0 0
    %4322 = vmatpush1.bf16.msra.mxu0 0
    %4323 = vmatprep.subr.bf16.mxu0 0
    %4324 = vmatpush1.bf16.msra.mxu0 0
    %4325 = vmatprep.subr.bf16.mxu0 0
    %4326 = vmatpush1.bf16.msra.mxu0 0
    %4327 = vmatprep.subr.bf16.mxu0 0
    %4328 = vmatpush1.bf16.msra.mxu0 0
    %4329 = vmatprep.subr.bf16.mxu0 0
    %4330 = vmatpush1.bf16.msra.mxu0 0
    %4331 = vmatprep.subr.bf16.mxu0 0
    %4332 = vmatpush1.bf16.msra.mxu0 0
    %4333 = vmatprep.mubr.bf16.mxu0 0
    %4334 = vmatmul.mubr.bf16.gmra.mrb[0].mxu0 %v4299
    %v4335 = vpop.f32.mrb[0].mxu0
    %v4336 = vadd.f32 0.0, %v4335
    %v4337 = vpop.f32.mrb[0].mxu0
    %v4338 = vpop.f32.mrb[0].mxu0
    %v4339 = vpop.f32.mrb[0].mxu0
    %4340 = vdwg.mxu0
    %v4341 = vadd.f32 %v4294, %v4336
    %v4342 = vxor.u32 %v4341, 2147483648
    %v4343 = vmul.f32 %v4342, 1.442695
    %v4344 = vpow.pop %v4343
    %v4345 = vadd.f32 %v4344, 1.0
    %v4346 = vrcp.pop %v4345
    %v4347 = vmul.f32 1.0, %v4346
    %v4348 = vtanh.pop %v4341
    %v4349 = vmul.f32 %v4347, %v4283
    %4351 = vrot.lane.b32.xlu0 %v4348, 32
    %v4352 = vpop.permute.xlu0 %4351
    %v4354 = vmul.f32 %v4347, %v4352
    %4356 = vrot.lane.b32.xlu0 %v4354, 32
    %v4357 = vpop.permute.xlu0 %4356
    %v4359 = vadd.f32 %v4349, %v4357
    %v4360 = vtanh.pop %v4359
    %4362 = vrot.lane.b32.xlu0 %v4360, 32
    %v4363 = vpop.permute.xlu0 %4362
    %v4365 = vmul.f32 %v4347, %v4363
    %v4366 = vpack.c.bf16 %v4365, %v4365
    %v4367 = vld [vmem:[#allocation2 + $0x6] sm:$0x3]
    %v4368 = vld [vmem:[#allocation3 + $0x6] sm:$0x3]
    %v4369 = vadd.f32 %v4367, %v4368
    %v4370 = vadd.f32 %v4369, %v4135
    %4372 = vrot.lane.b32.xlu0 %v4366, 64
    %v4373 = vpop.permute.xlu0 %4372
    %v4375 = vsel %vm287, %v4373, 0
    %4377 = vmatprep.subr.bf16.mxu0 0
    %4378 = vmatpush1.bf16.msra.mxu0 %v4145
    %4379 = vmatprep.subr.bf16.mxu0 0
    %4380 = vmatpush1.bf16.msra.mxu0 %v4146
    %4381 = vmatprep.subr.bf16.mxu0 0
    %4382 = vmatpush1.bf16.msra.mxu0 0
    %4383 = vmatprep.subr.bf16.mxu0 0
    %4384 = vmatpush1.bf16.msra.mxu0 0
    %4385 = vmatprep.subr.bf16.mxu0 0
    %4386 = vmatpush1.bf16.msra.mxu0 0
    %4387 = vmatprep.subr.bf16.mxu0 0
    %4388 = vmatpush1.bf16.msra.mxu0 0
    %4389 = vmatprep.subr.bf16.mxu0 0
    %4390 = vmatpush1.bf16.msra.mxu0 0
    %4391 = vmatprep.subr.bf16.mxu0 0
    %4392 = vmatpush1.bf16.msra.mxu0 0
    %4393 = vmatprep.subr.bf16.mxu0 0
    %4394 = vmatpush1.bf16.msra.mxu0 0
    %4395 = vmatprep.subr.bf16.mxu0 0
    %4396 = vmatpush1.bf16.msra.mxu0 0
    %4397 = vmatprep.subr.bf16.mxu0 0
    %4398 = vmatpush1.bf16.msra.mxu0 0
    %4399 = vmatprep.subr.bf16.mxu0 0
    %4400 = vmatpush1.bf16.msra.mxu0 0
    %4401 = vmatprep.subr.bf16.mxu0 0
    %4402 = vmatpush1.bf16.msra.mxu0 0
    %4403 = vmatprep.subr.bf16.mxu0 0
    %4404 = vmatpush1.bf16.msra.mxu0 0
    %4405 = vmatprep.subr.bf16.mxu0 0
    %4406 = vmatpush1.bf16.msra.mxu0 0
    %4407 = vmatprep.subr.bf16.mxu0 0
    %4408 = vmatpush1.bf16.msra.mxu0 0
    %4409 = vmatprep.mubr.bf16.mxu0 0
    %4410 = vmatmul.mubr.bf16.gmra.mrb[0].mxu0 %v4375
    %v4411 = vpop.f32.mrb[0].mxu0
    %v4412 = vadd.f32 0.0, %v4411
    %v4413 = vpop.f32.mrb[0].mxu0
    %v4414 = vpop.f32.mrb[0].mxu0
    %v4415 = vpop.f32.mrb[0].mxu0
    %4416 = vdwg.mxu0
    %v4417 = vadd.f32 %v4370, %v4412
    %v4418 = vxor.u32 %v4417, 2147483648
    %v4419 = vmul.f32 %v4418, 1.442695
    %v4420 = vpow.pop %v4419
    %v4421 = vadd.f32 %v4420, 1.0
    %v4422 = vrcp.pop %v4421
    %v4423 = vmul.f32 1.0, %v4422
    %v4424 = vtanh.pop %v4417
    %v4425 = vmul.f32 %v4423, %v4359
    %4427 = vrot.lane.b32.xlu0 %v4424, 32
    %v4428 = vpop.permute.xlu0 %4427
    %v4430 = vmul.f32 %v4423, %v4428
    %4432 = vrot.lane.b32.xlu0 %v4430, 32
    %v4433 = vpop.permute.xlu0 %4432
    %v4435 = vadd.f32 %v4425, %v4433
    %v4436 = vtanh.pop %v4435
    %4438 = vrot.lane.b32.xlu0 %v4436, 32
    %v4439 = vpop.permute.xlu0 %4438
    %v4441 = vmul.f32 %v4423, %v4439
    %v4442 = vpack.c.bf16 %v4441, %v4441
    %v4443 = vld [vmem:[#allocation2 + $0x8] sm:$0x3]
    %v4444 = vld [vmem:[#allocation3 + $0x8] sm:$0x3]
    %v4445 = vadd.f32 %v4443, %v4444
    %v4446 = vadd.f32 %v4445, %v4135
    %4448 = vrot.lane.b32.xlu0 %v4442, 64
    %v4449 = vpop.permute.xlu0 %4448
    %v4451 = vsel %vm287, %v4449, 0
    %4453 = vmatprep.subr.bf16.mxu0 0
    %4454 = vmatpush1.bf16.msra.mxu0 %v4145
    %4455 = vmatprep.subr.bf16.mxu0 0
    %4456 = vmatpush1.bf16.msra.mxu0 %v4146
    %4457 = vmatprep.subr.bf16.mxu0 0
    %4458 = vmatpush1.bf16.msra.mxu0 0
    %4459 = vmatprep.subr.bf16.mxu0 0
    %4460 = vmatpush1.bf16.msra.mxu0 0
    %4461 = vmatprep.subr.bf16.mxu0 0
    %4462 = vmatpush1.bf16.msra.mxu0 0
    %4463 = vmatprep.subr.bf16.mxu0 0
    %4464 = vmatpush1.bf16.msra.mxu0 0
    %4465 = vmatprep.subr.bf16.mxu0 0
    %4466 = vmatpush1.bf16.msra.mxu0 0
    %4467 = vmatprep.subr.bf16.mxu0 0
    %4468 = vmatpush1.bf16.msra.mxu0 0
    %4469 = vmatprep.subr.bf16.mxu0 0
    %4470 = vmatpush1.bf16.msra.mxu0 0
    %4471 = vmatprep.subr.bf16.mxu0 0
    %4472 = vmatpush1.bf16.msra.mxu0 0
    %4473 = vmatprep.subr.bf16.mxu0 0
    %4474 = vmatpush1.bf16.msra.mxu0 0
    %4475 = vmatprep.subr.bf16.mxu0 0
    %4476 = vmatpush1.bf16.msra.mxu0 0
    %4477 = vmatprep.subr.bf16.mxu0 0
    %4478 = vmatpush1.bf16.msra.mxu0 0
    %4479 = vmatprep.subr.bf16.mxu0 0
    %4480 = vmatpush1.bf16.msra.mxu0 0
    %4481 = vmatprep.subr.bf16.mxu0 0
    %4482 = vmatpush1.bf16.msra.mxu0 0
    %4483 = vmatprep.subr.bf16.mxu0 0
    %4484 = vmatpush1.bf16.msra.mxu0 0
    %4485 = vmatprep.mubr.bf16.mxu0 0
    %4486 = vmatmul.mubr.bf16.gmra.mrb[0].mxu0 %v4451
    %v4487 = vpop.f32.mrb[0].mxu0
    %v4488 = vadd.f32 0.0, %v4487
    %v4489 = vpop.f32.mrb[0].mxu0
    %v4490 = vpop.f32.mrb[0].mxu0
    %v4491 = vpop.f32.mrb[0].mxu0
    %4492 = vdwg.mxu0
    %v4493 = vadd.f32 %v4446, %v4488
    %v4494 = vxor.u32 %v4493, 2147483648
    %v4495 = vmul.f32 %v4494, 1.442695
    %v4496 = vpow.pop %v4495
    %v4497 = vadd.f32 %v4496, 1.0
    %v4498 = vrcp.pop %v4497
    %v4499 = vmul.f32 1.0, %v4498
    %v4500 = vtanh.pop %v4493
    %v4501 = vmul.f32 %v4499, %v4435
    %4503 = vrot.lane.b32.xlu0 %v4500, 32
    %v4504 = vpop.permute.xlu0 %4503
    %v4506 = vmul.f32 %v4499, %v4504
    %4508 = vrot.lane.b32.xlu0 %v4506, 32
    %v4509 = vpop.permute.xlu0 %4508
    %v4511 = vadd.f32 %v4501, %v4509
    %v4512 = vtanh.pop %v4511
    %4514 = vrot.lane.b32.xlu0 %v4512, 32
    %v4515 = vpop.permute.xlu0 %4514
    %v4517 = vmul.f32 %v4499, %v4515
    %v4518 = vpack.c.bf16 %v4517, %v4517
    %v4519 = vld [vmem:[#allocation2 + $0xa] sm:$0x3]
    %v4520 = vld [vmem:[#allocation3 + $0xa] sm:$0x3]
    %v4521 = vadd.f32 %v4519, %v4520
    %v4522 = vadd.f32 %v4521, %v4135
    %4524 = vrot.lane.b32.xlu0 %v4518, 64
    %v4525 = vpop.permute.xlu0 %4524
    %v4527 = vsel %vm287, %v4525, 0
    %4529 = vmatprep.subr.bf16.mxu0 0
    %4530 = vmatpush1.bf16.msra.mxu0 %v4145
    %4531 = vmatprep.subr.bf16.mxu0 0
    %4532 = vmatpush1.bf16.msra.mxu0 %v4146
    %4533 = vmatprep.subr.bf16.mxu0 0
    %4534 = vmatpush1.bf16.msra.mxu0 0
    %4535 = vmatprep.subr.bf16.mxu0 0
    %4536 = vmatpush1.bf16.msra.mxu0 0
    %4537 = vmatprep.subr.bf16.mxu0 0
    %4538 = vmatpush1.bf16.msra.mxu0 0
    %4539 = vmatprep.subr.bf16.mxu0 0
    %4540 = vmatpush1.bf16.msra.mxu0 0
    %4541 = vmatprep.subr.bf16.mxu0 0
    %4542 = vmatpush1.bf16.msra.mxu0 0
    %4543 = vmatprep.subr.bf16.mxu0 0
    %4544 = vmatpush1.bf16.msra.mxu0 0
    %4545 = vmatprep.subr.bf16.mxu0 0
    %4546 = vmatpush1.bf16.msra.mxu0 0
    %4547 = vmatprep.subr.bf16.mxu0 0
    %4548 = vmatpush1.bf16.msra.mxu0 0
    %4549 = vmatprep.subr.bf16.mxu0 0
    %4550 = vmatpush1.bf16.msra.mxu0 0
    %4551 = vmatprep.subr.bf16.mxu0 0
    %4552 = vmatpush1.bf16.msra.mxu0 0
    %4553 = vmatprep.subr.bf16.mxu0 0
    %4554 = vmatpush1.bf16.msra.mxu0 0
    %4555 = vmatprep.subr.bf16.mxu0 0
    %4556 = vmatpush1.bf16.msra.mxu0 0
    %4557 = vmatprep.subr.bf16.mxu0 0
    %4558 = vmatpush1.bf16.msra.mxu0 0
    %4559 = vmatprep.subr.bf16.mxu0 0
    %4560 = vmatpush1.bf16.msra.mxu0 0
    %4561 = vmatprep.mubr.bf16.mxu0 0
    %4562 = vmatmul.mubr.bf16.gmra.mrb[0].mxu0 %v4527
    %v4563 = vpop.f32.mrb[0].mxu0
    %v4564 = vadd.f32 0.0, %v4563
    %v4565 = vpop.f32.mrb[0].mxu0
    %v4566 = vpop.f32.mrb[0].mxu0
    %v4567 = vpop.f32.mrb[0].mxu0
    %4568 = vdwg.mxu0
    %v4569 = vadd.f32 %v4522, %v4564
    %v4570 = vxor.u32 %v4569, 2147483648
    %v4571 = vmul.f32 %v4570, 1.442695
    %v4572 = vpow.pop %v4571
    %v4573 = vadd.f32 %v4572, 1.0
    %v4574 = vrcp.pop %v4573
    %v4575 = vmul.f32 1.0, %v4574
    %v4576 = vtanh.pop %v4569
    %v4577 = vmul.f32 %v4575, %v4511
    %4579 = vrot.lane.b32.xlu0 %v4576, 32
    %v4580 = vpop.permute.xlu0 %4579
    %v4582 = vmul.f32 %v4575, %v4580
    %4584 = vrot.lane.b32.xlu0 %v4582, 32
    %v4585 = vpop.permute.xlu0 %4584
    %v4587 = vadd.f32 %v4577, %v4585
    %v4588 = vtanh.pop %v4587
    %4590 = vrot.lane.b32.xlu0 %v4588, 32
    %v4591 = vpop.permute.xlu0 %4590
    %v4593 = vmul.f32 %v4575, %v4591
    %v4594 = vpack.c.bf16 %v4593, %v4593
    %v4595 = vld [vmem:[#allocation2 + $0xc] sm:$0x3]
    %v4596 = vld [vmem:[#allocation3 + $0xc] sm:$0x3]
    %v4597 = vadd.f32 %v4595, %v4596
    %v4598 = vadd.f32 %v4597, %v4135
    %4600 = vrot.lane.b32.xlu0 %v4594, 64
    %v4601 = vpop.permute.xlu0 %4600
    %v4603 = vsel %vm287, %v4601, 0
    %4605 = vmatprep.subr.bf16.mxu0 0
    %4606 = vmatpush1.bf16.msra.mxu0 %v4145
    %4607 = vmatprep.subr.bf16.mxu0 0
    %4608 = vmatpush1.bf16.msra.mxu0 %v4146
    %4609 = vmatprep.subr.bf16.mxu0 0
    %4610 = vmatpush1.bf16.msra.mxu0 0
    %4611 = vmatprep.subr.bf16.mxu0 0
    %4612 = vmatpush1.bf16.msra.mxu0 0
    %4613 = vmatprep.subr.bf16.mxu0 0
    %4614 = vmatpush1.bf16.msra.mxu0 0
    %4615 = vmatprep.subr.bf16.mxu0 0
    %4616 = vmatpush1.bf16.msra.mxu0 0
    %4617 = vmatprep.subr.bf16.mxu0 0
    %4618 = vmatpush1.bf16.msra.mxu0 0
    %4619 = vmatprep.subr.bf16.mxu0 0
    %4620 = vmatpush1.bf16.msra.mxu0 0
    %4621 = vmatprep.subr.bf16.mxu0 0
    %4622 = vmatpush1.bf16.msra.mxu0 0
    %4623 = vmatprep.subr.bf16.mxu0 0
    %4624 = vmatpush1.bf16.msra.mxu0 0
    %4625 = vmatprep.subr.bf16.mxu0 0
    %4626 = vmatpush1.bf16.msra.mxu0 0
    %4627 = vmatprep.subr.bf16.mxu0 0
    %4628 = vmatpush1.bf16.msra.mxu0 0
    %4629 = vmatprep.subr.bf16.mxu0 0
    %4630 = vmatpush1.bf16.msra.mxu0 0
    %4631 = vmatprep.subr.bf16.mxu0 0
    %4632 = vmatpush1.bf16.msra.mxu0 0
    %4633 = vmatprep.subr.bf16.mxu0 0
    %4634 = vmatpush1.bf16.msra.mxu0 0
    %4635 = vmatprep.subr.bf16.mxu0 0
    %4636 = vmatpush1.bf16.msra.mxu0 0
    %4637 = vmatprep.mubr.bf16.mxu0 0
    %4638 = vmatmul.mubr.bf16.gmra.mrb[0].mxu0 %v4603
    %v4639 = vpop.f32.mrb[0].mxu0
    %v4640 = vadd.f32 0.0, %v4639
    %v4641 = vpop.f32.mrb[0].mxu0
    %v4642 = vpop.f32.mrb[0].mxu0
    %v4643 = vpop.f32.mrb[0].mxu0
    %4644 = vdwg.mxu0
    %v4645 = vadd.f32 %v4598, %v4640
    %v4646 = vxor.u32 %v4645, 2147483648
    %v4647 = vmul.f32 %v4646, 1.442695
    %v4648 = vpow.pop %v4647
    %v4649 = vadd.f32 %v4648, 1.0
    %v4650 = vrcp.pop %v4649
    %v4651 = vmul.f32 1.0, %v4650
    %v4652 = vtanh.pop %v4645
    %v4653 = vmul.f32 %v4651, %v4587
    %4655 = vrot.lane.b32.xlu0 %v4652, 32
    %v4656 = vpop.permute.xlu0 %4655
    %v4658 = vmul.f32 %v4651, %v4656
    %4660 = vrot.lane.b32.xlu0 %v4658, 32
    %v4661 = vpop.permute.xlu0 %4660
    %v4663 = vadd.f32 %v4653, %v4661
    %v4664 = vtanh.pop %v4663
    %4666 = vrot.lane.b32.xlu0 %v4664, 32
    %v4667 = vpop.permute.xlu0 %4666
    %v4669 = vmul.f32 %v4651, %v4667
    %v4670 = vpack.c.bf16 %v4669, %v4669
    %v4671 = vld [vmem:[#allocation2 + $0xe] sm:$0x3]
    %v4672 = vld [vmem:[#allocation3 + $0xe] sm:$0x3]
    %v4673 = vadd.f32 %v4671, %v4672
    %v4674 = vadd.f32 %v4673, %v4135
    %4676 = vrot.lane.b32.xlu0 %v4670, 64
    %v4677 = vpop.permute.xlu0 %4676
    %v4679 = vsel %vm287, %v4677, 0
    %4681 = vmatprep.subr.bf16.mxu0 0
    %4682 = vmatpush1.bf16.msra.mxu0 %v4145
    %4683 = vmatprep.subr.bf16.mxu0 0
    %4684 = vmatpush1.bf16.msra.mxu0 %v4146
    %4685 = vmatprep.subr.bf16.mxu0 0
    %4686 = vmatpush1.bf16.msra.mxu0 0
    %4687 = vmatprep.subr.bf16.mxu0 0
    %4688 = vmatpush1.bf16.msra.mxu0 0
    %4689 = vmatprep.subr.bf16.mxu0 0
    %4690 = vmatpush1.bf16.msra.mxu0 0
    %4691 = vmatprep.subr.bf16.mxu0 0
    %4692 = vmatpush1.bf16.msra.mxu0 0
    %4693 = vmatprep.subr.bf16.mxu0 0
    %4694 = vmatpush1.bf16.msra.mxu0 0
    %4695 = vmatprep.subr.bf16.mxu0 0
    %4696 = vmatpush1.bf16.msra.mxu0 0
    %4697 = vmatprep.subr.bf16.mxu0 0
    %4698 = vmatpush1.bf16.msra.mxu0 0
    %4699 = vmatprep.subr.bf16.mxu0 0
    %4700 = vmatpush1.bf16.msra.mxu0 0
    %4701 = vmatprep.subr.bf16.mxu0 0
    %4702 = vmatpush1.bf16.msra.mxu0 0
    %4703 = vmatprep.subr.bf16.mxu0 0
    %4704 = vmatpush1.bf16.msra.mxu0 0
    %4705 = vmatprep.subr.bf16.mxu0 0
    %4706 = vmatpush1.bf16.msra.mxu0 0
    %4707 = vmatprep.subr.bf16.mxu0 0
    %4708 = vmatpush1.bf16.msra.mxu0 0
    %4709 = vmatprep.subr.bf16.mxu0 0
    %4710 = vmatpush1.bf16.msra.mxu0 0
    %4711 = vmatprep.subr.bf16.mxu0 0
    %4712 = vmatpush1.bf16.msra.mxu0 0
    %4713 = vmatprep.mubr.bf16.mxu0 0
    %4714 = vmatmul.mubr.bf16.gmra.mrb[0].mxu0 %v4679
    %v4715 = vpop.f32.mrb[0].mxu0
    %v4716 = vadd.f32 0.0, %v4715
    %v4717 = vpop.f32.mrb[0].mxu0
    %v4718 = vpop.f32.mrb[0].mxu0
    %v4719 = vpop.f32.mrb[0].mxu0
    %4720 = vdwg.mxu0
    %v4721 = vadd.f32 %v4674, %v4716
    %v4722 = vxor.u32 %v4721, 2147483648
    %v4723 = vmul.f32 %v4722, 1.442695
    %v4724 = vpow.pop %v4723
    %v4725 = vadd.f32 %v4724, 1.0
    %v4726 = vrcp.pop %v4725
    %v4727 = vmul.f32 1.0, %v4726
    %v4728 = vtanh.pop %v4721
    %v4729 = vmul.f32 %v4727, %v4663
    %4731 = vrot.lane.b32.xlu0 %v4728, 32
    %v4732 = vpop.permute.xlu0 %4731
    %v4734 = vmul.f32 %v4727, %v4732
    %4736 = vrot.lane.b32.xlu0 %v4734, 32
    %v4737 = vpop.permute.xlu0 %4736
    %v4739 = vadd.f32 %v4729, %v4737
    %v4740 = vtanh.pop %v4739
    %4742 = vrot.lane.b32.xlu0 %v4740, 32
    %v4743 = vpop.permute.xlu0 %4742
    %v4745 = vmul.f32 %v4727, %v4743
    %v4746 = vpack.c.bf16 %v4745, %v4745
    %v4747 = vld [vmem:[#allocation2 + $0x10] sm:$0x3]
    %v4748 = vld [vmem:[#allocation3 + $0x10] sm:$0x3]
    %v4749 = vadd.f32 %v4747, %v4748
    %v4750 = vadd.f32 %v4749, %v4135
    %4752 = vrot.lane.b32.xlu0 %v4746, 64
    %v4753 = vpop.permute.xlu0 %4752
    %v4755 = vsel %vm287, %v4753, 0
    %4757 = vmatprep.subr.bf16.mxu0 0
    %4758 = vmatpush1.bf16.msra.mxu0 %v4145
    %4759 = vmatprep.subr.bf16.mxu0 0
    %4760 = vmatpush1.bf16.msra.mxu0 %v4146
    %4761 = vmatprep.subr.bf16.mxu0 0
    %4762 = vmatpush1.bf16.msra.mxu0 0
    %4763 = vmatprep.subr.bf16.mxu0 0
    %4764 = vmatpush1.bf16.msra.mxu0 0
    %4765 = vmatprep.subr.bf16.mxu0 0
    %4766 = vmatpush1.bf16.msra.mxu0 0
    %4767 = vmatprep.subr.bf16.mxu0 0
    %4768 = vmatpush1.bf16.msra.mxu0 0
    %4769 = vmatprep.subr.bf16.mxu0 0
    %4770 = vmatpush1.bf16.msra.mxu0 0
    %4771 = vmatprep.subr.bf16.mxu0 0
    %4772 = vmatpush1.bf16.msra.mxu0 0
    %4773 = vmatprep.subr.bf16.mxu0 0
    %4774 = vmatpush1.bf16.msra.mxu0 0
    %4775 = vmatprep.subr.bf16.mxu0 0
    %4776 = vmatpush1.bf16.msra.mxu0 0
    %4777 = vmatprep.subr.bf16.mxu0 0
    %4778 = vmatpush1.bf16.msra.mxu0 0
    %4779 = vmatprep.subr.bf16.mxu0 0
    %4780 = vmatpush1.bf16.msra.mxu0 0
    %4781 = vmatprep.subr.bf16.mxu0 0
    %4782 = vmatpush1.bf16.msra.mxu0 0
    %4783 = vmatprep.subr.bf16.mxu0 0
    %4784 = vmatpush1.bf16.msra.mxu0 0
    %4785 = vmatprep.subr.bf16.mxu0 0
    %4786 = vmatpush1.bf16.msra.mxu0 0
    %4787 = vmatprep.subr.bf16.mxu0 0
    %4788 = vmatpush1.bf16.msra.mxu0 0
    %4789 = vmatprep.mubr.bf16.mxu0 0
    %4790 = vmatmul.mubr.bf16.gmra.mrb[0].mxu0 %v4755
    %v4791 = vpop.f32.mrb[0].mxu0
    %v4792 = vadd.f32 0.0, %v4791
    %v4793 = vpop.f32.mrb[0].mxu0
    %v4794 = vpop.f32.mrb[0].mxu0
    %v4795 = vpop.f32.mrb[0].mxu0
    %4796 = vdwg.mxu0
    %v4797 = vadd.f32 %v4750, %v4792
    %v4798 = vxor.u32 %v4797, 2147483648
    %v4799 = vmul.f32 %v4798, 1.442695
    %v4800 = vpow.pop %v4799
    %v4801 = vadd.f32 %v4800, 1.0
    %v4802 = vrcp.pop %v4801
    %v4803 = vmul.f32 1.0, %v4802
    %v4804 = vtanh.pop %v4797
    %v4805 = vmul.f32 %v4803, %v4739
    %4807 = vrot.lane.b32.xlu0 %v4804, 32
    %v4808 = vpop.permute.xlu0 %4807
    %v4810 = vmul.f32 %v4803, %v4808
    %4812 = vrot.lane.b32.xlu0 %v4810, 32
    %v4813 = vpop.permute.xlu0 %4812
    %v4815 = vadd.f32 %v4805, %v4813
    %v4816 = vtanh.pop %v4815
    %4818 = vrot.lane.b32.xlu0 %v4816, 32
    %v4819 = vpop.permute.xlu0 %4818
    %v4821 = vmul.f32 %v4803, %v4819
    %v4822 = vpack.c.bf16 %v4821, %v4821
    %v4823 = vld [vmem:[#allocation2 + $0x12] sm:$0x3]
    %v4824 = vld [vmem:[#allocation3 + $0x12] sm:$0x3]
    %v4825 = vadd.f32 %v4823, %v4824
    %v4826 = vadd.f32 %v4825, %v4135
    %4828 = vrot.lane.b32.xlu0 %v4822, 64
    %v4829 = vpop.permute.xlu0 %4828
    %v4831 = vsel %vm287, %v4829, 0
    %4833 = vmatprep.subr.bf16.mxu0 0
    %4834 = vmatpush1.bf16.msra.mxu0 %v4145
    %4835 = vmatprep.subr.bf16.mxu0 0
    %4836 = vmatpush1.bf16.msra.mxu0 %v4146
    %4837 = vmatprep.subr.bf16.mxu0 0
    %4838 = vmatpush1.bf16.msra.mxu0 0
    %4839 = vmatprep.subr.bf16.mxu0 0
    %4840 = vmatpush1.bf16.msra.mxu0 0
    %4841 = vmatprep.subr.bf16.mxu0 0
    %4842 = vmatpush1.bf16.msra.mxu0 0
    %4843 = vmatprep.subr.bf16.mxu0 0
    %4844 = vmatpush1.bf16.msra.mxu0 0
    %4845 = vmatprep.subr.bf16.mxu0 0
    %4846 = vmatpush1.bf16.msra.mxu0 0
    %4847 = vmatprep.subr.bf16.mxu0 0
    %4848 = vmatpush1.bf16.msra.mxu0 0
    %4849 = vmatprep.subr.bf16.mxu0 0
    %4850 = vmatpush1.bf16.msra.mxu0 0
    %4851 = vmatprep.subr.bf16.mxu0 0
    %4852 = vmatpush1.bf16.msra.mxu0 0
    %4853 = vmatprep.subr.bf16.mxu0 0
    %4854 = vmatpush1.bf16.msra.mxu0 0
    %4855 = vmatprep.subr.bf16.mxu0 0
    %4856 = vmatpush1.bf16.msra.mxu0 0
    %4857 = vmatprep.subr.bf16.mxu0 0
    %4858 = vmatpush1.bf16.msra.mxu0 0
    %4859 = vmatprep.subr.bf16.mxu0 0
    %4860 = vmatpush1.bf16.msra.mxu0 0
    %4861 = vmatprep.subr.bf16.mxu0 0
    %4862 = vmatpush1.bf16.msra.mxu0 0
    %4863 = vmatprep.subr.bf16.mxu0 0
    %4864 = vmatpush1.bf16.msra.mxu0 0
    %4865 = vmatprep.mubr.bf16.mxu0 0
    %4866 = vmatmul.mubr.bf16.gmra.mrb[0].mxu0 %v4831
    %v4867 = vpop.f32.mrb[0].mxu0
    %v4868 = vadd.f32 0.0, %v4867
    %v4869 = vpop.f32.mrb[0].mxu0
    %v4870 = vpop.f32.mrb[0].mxu0
    %v4871 = vpop.f32.mrb[0].mxu0
    %4872 = vdwg.mxu0
    %v4873 = vadd.f32 %v4826, %v4868
    %v4874 = vxor.u32 %v4873, 2147483648
    %v4875 = vmul.f32 %v4874, 1.442695
    %v4876 = vpow.pop %v4875
    %v4877 = vadd.f32 %v4876, 1.0
    %v4878 = vrcp.pop %v4877
    %v4879 = vmul.f32 1.0, %v4878
    %v4880 = vtanh.pop %v4873
    %v4881 = vmul.f32 %v4879, %v4815
    %4883 = vrot.lane.b32.xlu0 %v4880, 32
    %v4884 = vpop.permute.xlu0 %4883
    %v4886 = vmul.f32 %v4879, %v4884
    %4888 = vrot.lane.b32.xlu0 %v4886, 32
    %v4889 = vpop.permute.xlu0 %4888
    %v4891 = vadd.f32 %v4881, %v4889
    %v4892 = vtanh.pop %v4891
    %4894 = vrot.lane.b32.xlu0 %v4892, 32
    %v4895 = vpop.permute.xlu0 %4894
    %v4897 = vmul.f32 %v4879, %v4895
    %v4898 = vpack.c.bf16 %v4897, %v4897
    %v4899 = vld [vmem:[#allocation2 + $0x14] sm:$0x3]
    %v4900 = vld [vmem:[#allocation3 + $0x14] sm:$0x3]
    %v4901 = vadd.f32 %v4899, %v4900
    %v4902 = vadd.f32 %v4901, %v4135
    %4904 = vrot.lane.b32.xlu0 %v4898, 64
    %v4905 = vpop.permute.xlu0 %4904
    %v4907 = vsel %vm287, %v4905, 0
    %4909 = vmatprep.subr.bf16.mxu0 0
    %4910 = vmatpush1.bf16.msra.mxu0 %v4145
    %4911 = vmatprep.subr.bf16.mxu0 0
    %4912 = vmatpush1.bf16.msra.mxu0 %v4146
    %4913 = vmatprep.subr.bf16.mxu0 0
    %4914 = vmatpush1.bf16.msra.mxu0 0
    %4915 = vmatprep.subr.bf16.mxu0 0
    %4916 = vmatpush1.bf16.msra.mxu0 0
    %4917 = vmatprep.subr.bf16.mxu0 0
    %4918 = vmatpush1.bf16.msra.mxu0 0
    %4919 = vmatprep.subr.bf16.mxu0 0
    %4920 = vmatpush1.bf16.msra.mxu0 0
    %4921 = vmatprep.subr.bf16.mxu0 0
    %4922 = vmatpush1.bf16.msra.mxu0 0
    %4923 = vmatprep.subr.bf16.mxu0 0
    %4924 = vmatpush1.bf16.msra.mxu0 0
    %4925 = vmatprep.subr.bf16.mxu0 0
    %4926 = vmatpush1.bf16.msra.mxu0 0
    %4927 = vmatprep.subr.bf16.mxu0 0
    %4928 = vmatpush1.bf16.msra.mxu0 0
    %4929 = vmatprep.subr.bf16.mxu0 0
    %4930 = vmatpush1.bf16.msra.mxu0 0
    %4931 = vmatprep.subr.bf16.mxu0 0
    %4932 = vmatpush1.bf16.msra.mxu0 0
    %4933 = vmatprep.subr.bf16.mxu0 0
    %4934 = vmatpush1.bf16.msra.mxu0 0
    %4935 = vmatprep.subr.bf16.mxu0 0
    %4936 = vmatpush1.bf16.msra.mxu0 0
    %4937 = vmatprep.subr.bf16.mxu0 0
    %4938 = vmatpush1.bf16.msra.mxu0 0
    %4939 = vmatprep.subr.bf16.mxu0 0
    %4940 = vmatpush1.bf16.msra.mxu0 0
    %4941 = vmatprep.mubr.bf16.mxu0 0
    %4942 = vmatmul.mubr.bf16.gmra.mrb[0].mxu0 %v4907
    %v4943 = vpop.f32.mrb[0].mxu0
    %v4944 = vadd.f32 0.0, %v4943
    %v4945 = vpop.f32.mrb[0].mxu0
    %v4946 = vpop.f32.mrb[0].mxu0
    %v4947 = vpop.f32.mrb[0].mxu0
    %4948 = vdwg.mxu0
    %v4949 = vadd.f32 %v4902, %v4944
    %v4950 = vxor.u32 %v4949, 2147483648
    %v4951 = vmul.f32 %v4950, 1.442695
    %v4952 = vpow.pop %v4951
    %v4953 = vadd.f32 %v4952, 1.0
    %v4954 = vrcp.pop %v4953
    %v4955 = vmul.f32 1.0, %v4954
    %v4956 = vtanh.pop %v4949
    %v4957 = vmul.f32 %v4955, %v4891
    %4959 = vrot.lane.b32.xlu0 %v4956, 32
    %v4960 = vpop.permute.xlu0 %4959
    %v4962 = vmul.f32 %v4955, %v4960
    %4964 = vrot.lane.b32.xlu0 %v4962, 32
    %v4965 = vpop.permute.xlu0 %4964
    %v4967 = vadd.f32 %v4957, %v4965
    %v4968 = vtanh.pop %v4967
    %4970 = vrot.lane.b32.xlu0 %v4968, 32
    %v4971 = vpop.permute.xlu0 %4970
    %v4973 = vmul.f32 %v4955, %v4971
    %v4974 = vpack.c.bf16 %v4973, %v4973
    %v4975 = vld [vmem:[#allocation2 + $0x16] sm:$0x3]
    %v4976 = vld [vmem:[#allocation3 + $0x16] sm:$0x3]
    %v4977 = vadd.f32 %v4975, %v4976
    %v4978 = vadd.f32 %v4977, %v4135
    %4980 = vrot.lane.b32.xlu0 %v4974, 64
    %v4981 = vpop.permute.xlu0 %4980
    %v4983 = vsel %vm287, %v4981, 0
    %4985 = vmatprep.subr.bf16.mxu0 0
    %4986 = vmatpush1.bf16.msra.mxu0 %v4145
    %4987 = vmatprep.subr.bf16.mxu0 0
    %4988 = vmatpush1.bf16.msra.mxu0 %v4146
    %4989 = vmatprep.subr.bf16.mxu0 0
    %4990 = vmatpush1.bf16.msra.mxu0 0
    %4991 = vmatprep.subr.bf16.mxu0 0
    %4992 = vmatpush1.bf16.msra.mxu0 0
    %4993 = vmatprep.subr.bf16.mxu0 0
    %4994 = vmatpush1.bf16.msra.mxu0 0
    %4995 = vmatprep.subr.bf16.mxu0 0
    %4996 = vmatpush1.bf16.msra.mxu0 0
    %4997 = vmatprep.subr.bf16.mxu0 0
    %4998 = vmatpush1.bf16.msra.mxu0 0
    %4999 = vmatprep.subr.bf16.mxu0 0
    %5000 = vmatpush1.bf16.msra.mxu0 0
    %5001 = vmatprep.subr.bf16.mxu0 0
    %5002 = vmatpush1.bf16.msra.mxu0 0
    %5003 = vmatprep.subr.bf16.mxu0 0
    %5004 = vmatpush1.bf16.msra.mxu0 0
    %5005 = vmatprep.subr.bf16.mxu0 0
    %5006 = vmatpush1.bf16.msra.mxu0 0
    %5007 = vmatprep.subr.bf16.mxu0 0
    %5008 = vmatpush1.bf16.msra.mxu0 0
    %5009 = vmatprep.subr.bf16.mxu0 0
    %5010 = vmatpush1.bf16.msra.mxu0 0
    %5011 = vmatprep.subr.bf16.mxu0 0
    %5012 = vmatpush1.bf16.msra.mxu0 0
    %5013 = vmatprep.subr.bf16.mxu0 0
    %5014 = vmatpush1.bf16.msra.mxu0 0
    %5015 = vmatprep.subr.bf16.mxu0 0
    %5016 = vmatpush1.bf16.msra.mxu0 0
    %5017 = vmatprep.mubr.bf16.mxu0 0
    %5018 = vmatmul.mubr.bf16.gmra.mrb[0].mxu0 %v4983
    %v5019 = vpop.f32.mrb[0].mxu0
    %v5020 = vadd.f32 0.0, %v5019
    %v5021 = vpop.f32.mrb[0].mxu0
    %v5022 = vpop.f32.mrb[0].mxu0
    %v5023 = vpop.f32.mrb[0].mxu0
    %5024 = vdwg.mxu0
    %v5025 = vadd.f32 %v4978, %v5020
    %v5026 = vxor.u32 %v5025, 2147483648
    %v5027 = vmul.f32 %v5026, 1.442695
    %v5028 = vpow.pop %v5027
    %v5029 = vadd.f32 %v5028, 1.0
    %v5030 = vrcp.pop %v5029
    %v5031 = vmul.f32 1.0, %v5030
    %v5032 = vtanh.pop %v5025
    %v5033 = vmul.f32 %v5031, %v4967
    %5035 = vrot.lane.b32.xlu0 %v5032, 32
    %v5036 = vpop.permute.xlu0 %5035
    %v5038 = vmul.f32 %v5031, %v5036
    %5040 = vrot.lane.b32.xlu0 %v5038, 32
    %v5041 = vpop.permute.xlu0 %5040
    %v5043 = vadd.f32 %v5033, %v5041
    %v5044 = vtanh.pop %v5043
    %5046 = vrot.lane.b32.xlu0 %v5044, 32
    %v5047 = vpop.permute.xlu0 %5046
    %v5049 = vmul.f32 %v5031, %v5047
    %v5050 = vpack.c.bf16 %v5049, %v5049
    %v5051 = vld [vmem:[#allocation2 + $0x18] sm:$0x3]
    %v5052 = vld [vmem:[#allocation3 + $0x18] sm:$0x3]
    %v5053 = vadd.f32 %v5051, %v5052
    %v5054 = vadd.f32 %v5053, %v4135
    %5056 = vrot.lane.b32.xlu0 %v5050, 64
    %v5057 = vpop.permute.xlu0 %5056
    %v5059 = vsel %vm287, %v5057, 0
    %5061 = vmatprep.subr.bf16.mxu0 0
    %5062 = vmatpush1.bf16.msra.mxu0 %v4145
    %5063 = vmatprep.subr.bf16.mxu0 0
    %5064 = vmatpush1.bf16.msra.mxu0 %v4146
    %5065 = vmatprep.subr.bf16.mxu0 0
    %5066 = vmatpush1.bf16.msra.mxu0 0
    %5067 = vmatprep.subr.bf16.mxu0 0
    %5068 = vmatpush1.bf16.msra.mxu0 0
    %5069 = vmatprep.subr.bf16.mxu0 0
    %5070 = vmatpush1.bf16.msra.mxu0 0
    %5071 = vmatprep.subr.bf16.mxu0 0
    %5072 = vmatpush1.bf16.msra.mxu0 0
    %5073 = vmatprep.subr.bf16.mxu0 0
    %5074 = vmatpush1.bf16.msra.mxu0 0
    %5075 = vmatprep.subr.bf16.mxu0 0
    %5076 = vmatpush1.bf16.msra.mxu0 0
    %5077 = vmatprep.subr.bf16.mxu0 0
    %5078 = vmatpush1.bf16.msra.mxu0 0
    %5079 = vmatprep.subr.bf16.mxu0 0
    %5080 = vmatpush1.bf16.msra.mxu0 0
    %5081 = vmatprep.subr.bf16.mxu0 0
    %5082 = vmatpush1.bf16.msra.mxu0 0
    %5083 = vmatprep.subr.bf16.mxu0 0
    %5084 = vmatpush1.bf16.msra.mxu0 0
    %5085 = vmatprep.subr.bf16.mxu0 0
    %5086 = vmatpush1.bf16.msra.mxu0 0
    %5087 = vmatprep.subr.bf16.mxu0 0
    %5088 = vmatpush1.bf16.msra.mxu0 0
    %5089 = vmatprep.subr.bf16.mxu0 0
    %5090 = vmatpush1.bf16.msra.mxu0 0
    %5091 = vmatprep.subr.bf16.mxu0 0
    %5092 = vmatpush1.bf16.msra.mxu0 0
    %5093 = vmatprep.mubr.bf16.mxu0 0
    %5094 = vmatmul.mubr.bf16.gmra.mrb[0].mxu0 %v5059
    %v5095 = vpop.f32.mrb[0].mxu0
    %v5096 = vadd.f32 0.0, %v5095
    %v5097 = vpop.f32.mrb[0].mxu0
    %v5098 = vpop.f32.mrb[0].mxu0
    %v5099 = vpop.f32.mrb[0].mxu0
    %5100 = vdwg.mxu0
    %v5101 = vadd.f32 %v5054, %v5096
    %v5102 = vxor.u32 %v5101, 2147483648
    %v5103 = vmul.f32 %v5102, 1.442695
    %v5104 = vpow.pop %v5103
    %v5105 = vadd.f32 %v5104, 1.0
    %v5106 = vrcp.pop %v5105
    %v5107 = vmul.f32 1.0, %v5106
    %v5108 = vtanh.pop %v5101
    %v5109 = vmul.f32 %v5107, %v5043
    %5111 = vrot.lane.b32.xlu0 %v5108, 32
    %v5112 = vpop.permute.xlu0 %5111
    %v5114 = vmul.f32 %v5107, %v5112
    %5116 = vrot.lane.b32.xlu0 %v5114, 32
    %v5117 = vpop.permute.xlu0 %5116
    %v5119 = vadd.f32 %v5109, %v5117
    %v5120 = vtanh.pop %v5119
    %5122 = vrot.lane.b32.xlu0 %v5120, 32
    %v5123 = vpop.permute.xlu0 %5122
    %v5125 = vmul.f32 %v5107, %v5123
    %v5126 = vpack.c.bf16 %v5125, %v5125
    %v5127 = vld [vmem:[#allocation2 + $0x1a] sm:$0x3]
    %v5128 = vld [vmem:[#allocation3 + $0x1a] sm:$0x3]
    %v5129 = vadd.f32 %v5127, %v5128
    %v5130 = vadd.f32 %v5129, %v4135
    %5132 = vrot.lane.b32.xlu0 %v5126, 64
    %v5133 = vpop.permute.xlu0 %5132
    %v5135 = vsel %vm287, %v5133, 0
    %5137 = vmatprep.subr.bf16.mxu0 0
    %5138 = vmatpush1.bf16.msra.mxu0 %v4145
    %5139 = vmatprep.subr.bf16.mxu0 0
    %5140 = vmatpush1.bf16.msra.mxu0 %v4146
    %5141 = vmatprep.subr.bf16.mxu0 0
    %5142 = vmatpush1.bf16.msra.mxu0 0
    %5143 = vmatprep.subr.bf16.mxu0 0
    %5144 = vmatpush1.bf16.msra.mxu0 0
    %5145 = vmatprep.subr.bf16.mxu0 0
    %5146 = vmatpush1.bf16.msra.mxu0 0
    %5147 = vmatprep.subr.bf16.mxu0 0
    %5148 = vmatpush1.bf16.msra.mxu0 0
    %5149 = vmatprep.subr.bf16.mxu0 0
    %5150 = vmatpush1.bf16.msra.mxu0 0
    %5151 = vmatprep.subr.bf16.mxu0 0
    %5152 = vmatpush1.bf16.msra.mxu0 0
    %5153 = vmatprep.subr.bf16.mxu0 0
    %5154 = vmatpush1.bf16.msra.mxu0 0
    %5155 = vmatprep.subr.bf16.mxu0 0
    %5156 = vmatpush1.bf16.msra.mxu0 0
    %5157 = vmatprep.subr.bf16.mxu0 0
    %5158 = vmatpush1.bf16.msra.mxu0 0
    %5159 = vmatprep.subr.bf16.mxu0 0
    %5160 = vmatpush1.bf16.msra.mxu0 0
    %5161 = vmatprep.subr.bf16.mxu0 0
    %5162 = vmatpush1.bf16.msra.mxu0 0
    %5163 = vmatprep.subr.bf16.mxu0 0
    %5164 = vmatpush1.bf16.msra.mxu0 0
    %5165 = vmatprep.subr.bf16.mxu0 0
    %5166 = vmatpush1.bf16.msra.mxu0 0
    %5167 = vmatprep.subr.bf16.mxu0 0
    %5168 = vmatpush1.bf16.msra.mxu0 0
    %5169 = vmatprep.mubr.bf16.mxu0 0
    %5170 = vmatmul.mubr.bf16.gmra.mrb[0].mxu0 %v5135
    %v5171 = vpop.f32.mrb[0].mxu0
    %v5172 = vadd.f32 0.0, %v5171
    %v5173 = vpop.f32.mrb[0].mxu0
    %v5174 = vpop.f32.mrb[0].mxu0
    %v5175 = vpop.f32.mrb[0].mxu0
    %5176 = vdwg.mxu0
    %v5177 = vadd.f32 %v5130, %v5172
    %v5178 = vxor.u32 %v5177, 2147483648
    %v5179 = vmul.f32 %v5178, 1.442695
    %v5180 = vpow.pop %v5179
    %v5181 = vadd.f32 %v5180, 1.0
    %v5182 = vrcp.pop %v5181
    %v5183 = vmul.f32 1.0, %v5182
    %v5184 = vtanh.pop %v5177
    %v5185 = vmul.f32 %v5183, %v5119
    %5187 = vrot.lane.b32.xlu0 %v5184, 32
    %v5188 = vpop.permute.xlu0 %5187
    %v5190 = vmul.f32 %v5183, %v5188
    %5192 = vrot.lane.b32.xlu0 %v5190, 32
    %v5193 = vpop.permute.xlu0 %5192
    %v5195 = vadd.f32 %v5185, %v5193
    %v5196 = vtanh.pop %v5195
    %5198 = vrot.lane.b32.xlu0 %v5196, 32
    %v5199 = vpop.permute.xlu0 %5198
    %v5201 = vmul.f32 %v5183, %v5199
    %v5202 = vpack.c.bf16 %v5201, %v5201
    %v5203 = vld [vmem:[#allocation2 + $0x1c] sm:$0x3]
    %v5204 = vld [vmem:[#allocation3 + $0x1c] sm:$0x3]
    %v5205 = vadd.f32 %v5203, %v5204
    %v5206 = vadd.f32 %v5205, %v4135
    %5208 = vrot.lane.b32.xlu0 %v5202, 64
    %v5209 = vpop.permute.xlu0 %5208
    %v5211 = vsel %vm287, %v5209, 0
    %5213 = vmatprep.subr.bf16.mxu0 0
    %5214 = vmatpush1.bf16.msra.mxu0 %v4145
    %5215 = vmatprep.subr.bf16.mxu0 0
    %5216 = vmatpush1.bf16.msra.mxu0 %v4146
    %5217 = vmatprep.subr.bf16.mxu0 0
    %5218 = vmatpush1.bf16.msra.mxu0 0
    %5219 = vmatprep.subr.bf16.mxu0 0
    %5220 = vmatpush1.bf16.msra.mxu0 0
    %5221 = vmatprep.subr.bf16.mxu0 0
    %5222 = vmatpush1.bf16.msra.mxu0 0
    %5223 = vmatprep.subr.bf16.mxu0 0
    %5224 = vmatpush1.bf16.msra.mxu0 0
    %5225 = vmatprep.subr.bf16.mxu0 0
    %5226 = vmatpush1.bf16.msra.mxu0 0
    %5227 = vmatprep.subr.bf16.mxu0 0
    %5228 = vmatpush1.bf16.msra.mxu0 0
    %5229 = vmatprep.subr.bf16.mxu0 0
    %5230 = vmatpush1.bf16.msra.mxu0 0
    %5231 = vmatprep.subr.bf16.mxu0 0
    %5232 = vmatpush1.bf16.msra.mxu0 0
    %5233 = vmatprep.subr.bf16.mxu0 0
    %5234 = vmatpush1.bf16.msra.mxu0 0
    %5235 = vmatprep.subr.bf16.mxu0 0
    %5236 = vmatpush1.bf16.msra.mxu0 0
    %5237 = vmatprep.subr.bf16.mxu0 0
    %5238 = vmatpush1.bf16.msra.mxu0 0
    %5239 = vmatprep.subr.bf16.mxu0 0
    %5240 = vmatpush1.bf16.msra.mxu0 0
    %5241 = vmatprep.subr.bf16.mxu0 0
    %5242 = vmatpush1.bf16.msra.mxu0 0
    %5243 = vmatprep.subr.bf16.mxu0 0
    %5244 = vmatpush1.bf16.msra.mxu0 0
    %5245 = vmatprep.mubr.bf16.mxu0 0
    %5246 = vmatmul.mubr.bf16.gmra.mrb[0].mxu0 %v5211
    %v5247 = vpop.f32.mrb[0].mxu0
    %v5248 = vadd.f32 0.0, %v5247
    %v5249 = vpop.f32.mrb[0].mxu0
    %v5250 = vpop.f32.mrb[0].mxu0
    %v5251 = vpop.f32.mrb[0].mxu0
    %5252 = vdwg.mxu0
    %v5253 = vadd.f32 %v5206, %v5248
    %v5254 = vxor.u32 %v5253, 2147483648
    %v5255 = vmul.f32 %v5254, 1.442695
    %v5256 = vpow.pop %v5255
    %v5257 = vadd.f32 %v5256, 1.0
    %v5258 = vrcp.pop %v5257
    %v5259 = vmul.f32 1.0, %v5258
    %v5260 = vtanh.pop %v5253
    %v5261 = vmul.f32 %v5259, %v5195
    %5263 = vrot.lane.b32.xlu0 %v5260, 32
    %v5264 = vpop.permute.xlu0 %5263
    %v5266 = vmul.f32 %v5259, %v5264
    %5268 = vrot.lane.b32.xlu0 %v5266, 32
    %v5269 = vpop.permute.xlu0 %5268
    %v5271 = vadd.f32 %v5261, %v5269
    %v5272 = vtanh.pop %v5271
    %5274 = vrot.lane.b32.xlu0 %v5272, 32
    %v5275 = vpop.permute.xlu0 %5274
    %v5277 = vmul.f32 %v5259, %v5275
    %v5278 = vpack.c.bf16 %v5277, %v5277
    %v5279 = vld [vmem:[#allocation2 + $0x1e] sm:$0x3]
    %v5280 = vld [vmem:[#allocation3 + $0x1e] sm:$0x3]
    %v5281 = vadd.f32 %v5279, %v5280
    %v5282 = vadd.f32 %v5281, %v4135
    %5284 = vrot.lane.b32.xlu0 %v5278, 64
    %v5285 = vpop.permute.xlu0 %5284
    %v5287 = vsel %vm287, %v5285, 0
    %5289 = vmatprep.subr.bf16.mxu0 0
    %5290 = vmatpush1.bf16.msra.mxu0 %v4145
    %5291 = vmatprep.subr.bf16.mxu0 0
    %5292 = vmatpush1.bf16.msra.mxu0 %v4146
    %5293 = vmatprep.subr.bf16.mxu0 0
    %5294 = vmatpush1.bf16.msra.mxu0 0
    %5295 = vmatprep.subr.bf16.mxu0 0
    %5296 = vmatpush1.bf16.msra.mxu0 0
    %5297 = vmatprep.subr.bf16.mxu0 0
    %5298 = vmatpush1.bf16.msra.mxu0 0
    %5299 = vmatprep.subr.bf16.mxu0 0
    %5300 = vmatpush1.bf16.msra.mxu0 0
    %5301 = vmatprep.subr.bf16.mxu0 0
    %5302 = vmatpush1.bf16.msra.mxu0 0
    %5303 = vmatprep.subr.bf16.mxu0 0
    %5304 = vmatpush1.bf16.msra.mxu0 0
    %5305 = vmatprep.subr.bf16.mxu0 0
    %5306 = vmatpush1.bf16.msra.mxu0 0
    %5307 = vmatprep.subr.bf16.mxu0 0
    %5308 = vmatpush1.bf16.msra.mxu0 0
    %5309 = vmatprep.subr.bf16.mxu0 0
    %5310 = vmatpush1.bf16.msra.mxu0 0
    %5311 = vmatprep.subr.bf16.mxu0 0
    %5312 = vmatpush1.bf16.msra.mxu0 0
    %5313 = vmatprep.subr.bf16.mxu0 0
    %5314 = vmatpush1.bf16.msra.mxu0 0
    %5315 = vmatprep.subr.bf16.mxu0 0
    %5316 = vmatpush1.bf16.msra.mxu0 0
    %5317 = vmatprep.subr.bf16.mxu0 0
    %5318 = vmatpush1.bf16.msra.mxu0 0
    %5319 = vmatprep.subr.bf16.mxu0 0
    %5320 = vmatpush1.bf16.msra.mxu0 0
    %5321 = vmatprep.mubr.bf16.mxu0 0
    %5322 = vmatmul.mubr.bf16.gmra.mrb[0].mxu0 %v5287
    %v5323 = vpop.f32.mrb[0].mxu0
    %v5324 = vadd.f32 0.0, %v5323
    %v5325 = vpop.f32.mrb[0].mxu0
    %v5326 = vpop.f32.mrb[0].mxu0
    %v5327 = vpop.f32.mrb[0].mxu0
    %5328 = vdwg.mxu0
    %v5329 = vadd.f32 %v5282, %v5324
    %v5330 = vxor.u32 %v5329, 2147483648
    %v5331 = vmul.f32 %v5330, 1.442695
    %v5332 = vpow.pop %v5331
    %v5333 = vadd.f32 %v5332, 1.0
    %v5334 = vrcp.pop %v5333
    %v5335 = vmul.f32 1.0, %v5334
    %v5336 = vtanh.pop %v5329
    %v5337 = vmul.f32 %v5335, %v5271
    %5339 = vrot.lane.b32.xlu0 %v5336, 32
    %v5340 = vpop.permute.xlu0 %5339
    %v5342 = vmul.f32 %v5335, %v5340
    %5344 = vrot.lane.b32.xlu0 %v5342, 32
    %v5345 = vpop.permute.xlu0 %5344
    %v5347 = vadd.f32 %v5337, %v5345
    %v5348 = vtanh.pop %v5347
    %5350 = vrot.lane.b32.xlu0 %v5348, 32
    %v5351 = vpop.permute.xlu0 %5350
    %v5353 = vmul.f32 %v5335, %v5351
    %v5358 = vunpack.c.l.b16 %v218
    %v5359 = vunpack.c.l.b16 %v219
    %v5360 = vunpack.c.l.b16 %v220
    %v5361 = vunpack.c.l.b16 %v221
    %v5362 = vpack.c.b16 %v5359, %v5358
    %v5363 = vpack.c.b16 %v5361, %v5360
    %5366 = vmatprep.subr.bf16.mxu0 0
    %5367 = vmatpush1.bf16.msra.mxu0 %v5362
    %5368 = vmatprep.subr.bf16.mxu0 0
    %5369 = vmatpush1.bf16.msra.mxu0 %v5363
    %5370 = vmatprep.subr.bf16.mxu0 0
    %5371 = vmatpush1.bf16.msra.mxu0 0
    %5372 = vmatprep.subr.bf16.mxu0 0
    %5373 = vmatpush1.bf16.msra.mxu0 0
    %5374 = vmatprep.subr.bf16.mxu0 0
    %5375 = vmatpush1.bf16.msra.mxu0 0
    %5376 = vmatprep.subr.bf16.mxu0 0
    %5377 = vmatpush1.bf16.msra.mxu0 0
    %5378 = vmatprep.subr.bf16.mxu0 0
    %5379 = vmatpush1.bf16.msra.mxu0 0
    %5380 = vmatprep.subr.bf16.mxu0 0
    %5381 = vmatpush1.bf16.msra.mxu0 0
    %5382 = vmatprep.subr.bf16.mxu0 0
    %5383 = vmatpush1.bf16.msra.mxu0 0
    %5384 = vmatprep.subr.bf16.mxu0 0
    %5385 = vmatpush1.bf16.msra.mxu0 0
    %5386 = vmatprep.subr.bf16.mxu0 0
    %5387 = vmatpush1.bf16.msra.mxu0 0
    %5388 = vmatprep.subr.bf16.mxu0 0
    %5389 = vmatpush1.bf16.msra.mxu0 0
    %5390 = vmatprep.subr.bf16.mxu0 0
    %5391 = vmatpush1.bf16.msra.mxu0 0
    %5392 = vmatprep.subr.bf16.mxu0 0
    %5393 = vmatpush1.bf16.msra.mxu0 0
    %5394 = vmatprep.subr.bf16.mxu0 0
    %5395 = vmatpush1.bf16.msra.mxu0 0
    %5396 = vmatprep.subr.bf16.mxu0 0
    %5397 = vmatpush1.bf16.msra.mxu0 0
    %5398 = vmatprep.mubr.bf16.mxu0 0
    %5399 = vmatmul.mubr.bf16.gmra.mrb[0].mxu0 %v514
    %v5400 = vpop.f32.mrb[0].mxu0
    %v5401 = vadd.f32 0.0, %v5400
    %v5402 = vpop.f32.mrb[0].mxu0
    %v5403 = vpop.f32.mrb[0].mxu0
    %v5404 = vpop.f32.mrb[0].mxu0
    %5405 = vdwg.mxu0
    %v5410 = vunpack.c.l.b16 %v214
    %v5411 = vunpack.c.l.b16 %v215
    %v5412 = vunpack.c.l.b16 %v216
    %v5413 = vunpack.c.l.b16 %v217
    %v5414 = vpack.c.b16 %v5411, %v5410
    %v5415 = vpack.c.b16 %v5413, %v5412
    %5418 = vmatprep.subr.bf16.mxu0 0
    %5419 = vmatpush1.bf16.msra.mxu0 %v5414
    %5420 = vmatprep.subr.bf16.mxu0 0
    %5421 = vmatpush1.bf16.msra.mxu0 %v5415
    %5422 = vmatprep.subr.bf16.mxu0 0
    %5423 = vmatpush1.bf16.msra.mxu0 0
    %5424 = vmatprep.subr.bf16.mxu0 0
    %5425 = vmatpush1.bf16.msra.mxu0 0
    %5426 = vmatprep.subr.bf16.mxu0 0
    %5427 = vmatpush1.bf16.msra.mxu0 0
    %5428 = vmatprep.subr.bf16.mxu0 0
    %5429 = vmatpush1.bf16.msra.mxu0 0
    %5430 = vmatprep.subr.bf16.mxu0 0
    %5431 = vmatpush1.bf16.msra.mxu0 0
    %5432 = vmatprep.subr.bf16.mxu0 0
    %5433 = vmatpush1.bf16.msra.mxu0 0
    %5434 = vmatprep.subr.bf16.mxu0 0
    %5435 = vmatpush1.bf16.msra.mxu0 0
    %5436 = vmatprep.subr.bf16.mxu0 0
    %5437 = vmatpush1.bf16.msra.mxu0 0
    %5438 = vmatprep.subr.bf16.mxu0 0
    %5439 = vmatpush1.bf16.msra.mxu0 0
    %5440 = vmatprep.subr.bf16.mxu0 0
    %5441 = vmatpush1.bf16.msra.mxu0 0
    %5442 = vmatprep.subr.bf16.mxu0 0
    %5443 = vmatpush1.bf16.msra.mxu0 0
    %5444 = vmatprep.subr.bf16.mxu0 0
    %5445 = vmatpush1.bf16.msra.mxu0 0
    %5446 = vmatprep.subr.bf16.mxu0 0
    %5447 = vmatpush1.bf16.msra.mxu0 0
    %5448 = vmatprep.subr.bf16.mxu0 0
    %5449 = vmatpush1.bf16.msra.mxu0 0
    %5450 = vmatprep.mubr.bf16.mxu0 0
    %5451 = vmatmul.mubr.bf16.gmra.mrb[0].mxu0 %v3970
    %v5452 = vpop.f32.mrb[0].mxu0
    %v5453 = vadd.f32 %v5401, %v5452
    %v5454 = vpop.f32.mrb[0].mxu0
    %v5455 = vpop.f32.mrb[0].mxu0
    %v5456 = vpop.f32.mrb[0].mxu0
    %5457 = vdwg.mxu0
    %v5458 = vlaneseq
    %v5459 = vshrl.u32 %v5458, 7
    %v5460 = vsub.s32 3, %v5459
    %v5461 = vrot.slane %v222, %v5460
    %v5462 = vadd.f32 %v5453, %v5461
    %v5463 = vxor.u32 %v5462, 2147483648
    %v5464 = vmul.f32 %v5463, 1.442695
    %v5465 = vpow.pop %v5464
    %v5466 = vadd.f32 %v5465, 1.0
    %v5467 = vrcp.pop %v5466
    %v5468 = vmul.f32 1.0, %v5467
    %v5469 = vtanh.pop %v5462
    %v5470 = vmul.f32 %v5468, 0.0
    %5472 = vrot.lane.b32.xlu0 %v5469, 32
    %v5473 = vpop.permute.xlu0 %5472
    %v5475 = vmul.f32 %v5468, %v5473
    %5477 = vrot.lane.b32.xlu0 %v5475, 32
    %v5478 = vpop.permute.xlu0 %5477
    %v5480 = vadd.f32 %v5470, %v5478
    %v5481 = vtanh.pop %v5480
    %5483 = vrot.lane.b32.xlu0 %v5481, 32
    %v5484 = vpop.permute.xlu0 %5483
    %v5486 = vmul.f32 %v5468, %v5484
    %v5487 = vlaneseq
    %v5488 = vshrl.u32 %v5487, 7
    %v5489 = vsub.s32 6, %v5488
    %v5490 = vrot.slane %v222, %v5489
    %5492 = vrot.lane.b32.xlu0 %v5490, 64
    %v5493 = vpop.permute.xlu0 %5492
    %v5495 = vmul.f32 %v5353, %v5493
    %5496 = vrot.lane.b32.xlu0 %v5490, 32
    %v5497 = vpop.permute.xlu0 %5496
    %v5499 = vmul.f32 %v5486, %v5497
    %v5500 = vadd.f32 %v5495, %v5499
    %5502 = vrot.lane.b32.xlu0 %v5500, 64
    %v5503 = vpop.permute.xlu0 %5502
    %vm5505 = vcmask 254976
    %v5506 = vsel %vm5505, %v5503, 0.0
    %5507 = vadd.xlane.f32.xlu0 %v5506
    %v5508 = vpop.xlane.xlu0 %5507
    %v5509 = vstv %s54
    %v5510 = vadd.f32 %v5508, %v5509
    %vm5511 = vcmask 1024
    %5512 = vst.msk [vmem:[%s4] sm:$0x3] %vm5511, %v5510
    // Predicated region
    $region26: #{cnn_bilstm_forward.1} parent=1 // pred_check
      _
    $region27: #{cnn_bilstm_forward.1} parent=1 // pred_check_branch
      %5514 = sbr.rel (0) target = $region29
    $region28: #{cnn_bilstm_forward.1} parent=1 // pred_region
      _
    $region29: #{cnn_bilstm_forward.1} parent=1 // pred_fallthru
      _
    // Predicated region
    $region30: #{cnn_bilstm_forward.1} parent=1 // pred_check
      _
    $region31: #{cnn_bilstm_forward.1} parent=1 // pred_check_branch
      %5516 = sbr.rel (0) target = $region33
    $region32: #{cnn_bilstm_forward.1} parent=1 // pred_region
      _
    $region33: #{cnn_bilstm_forward.1} parent=1 // pred_fallthru
      _
    %5517 = vsyncpa [#allocation5], 1
    %5518 = vsyncpa [#allocation6], 1

</llo_original>
